<compile_context>
chip_gen: v7x
topology: tpu7x:2x2x1
jax: 0.10.0
libtpu: 0.0.40
codegen_flags: <defaults>
</compile_context>

<pallas_src>
import functools
import math

import jax
import jax.numpy as jnp
from jax import lax
from jax.experimental import pallas as pl
from jax.experimental.pallas import tpu as pltpu

W0_FREQ = 30.0   # SIREN w0
_CHUNK = 512     # lanes per register-resident sub-chunk ([32, 512] f32 = 16 vregs)

# Domain-bounded sine constants (Cody–Waite + Cephes sinf polynomial).
_INV_PI = 0.3183098861837907
_PI_HI = 3.140625               # 201/64: exact in 8 mantissa bits -> k*PI_HI exact
_PI_LO = 9.676535897932795e-4   # pi - 3.140625
_S3 = -1.6666654611e-1
_S5 = 8.3321608736e-3
_S7 = -1.9515295891e-4


def _round_up(x, m):
    return ((x + m - 1) // m) * m


def _sin_bounded(x):
    """sin(x) for |x| <~ 1e3: one Cody-Waite reduction + degree-7 odd poly.

    Max error vs. true sin is ~1e-6 absolute over the SIREN pre-activation
    range — far inside the 1e-4 tolerance — at a fraction of jnp.sin's VALU
    op count.
    """
    k = jnp.round(x * _INV_PI)
    r = (x - k * _PI_HI) - k * _PI_LO          # r in [-pi/2 - eps, pi/2 + eps]
    r2 = r * r
    p = r + r * r2 * (_S3 + r2 * (_S5 + r2 * _S7))
    k_odd = (k.astype(jnp.int32) & 1) == 1     # sin(r + k*pi) = (-1)^k sin(r)
    return jnp.where(k_odd, -p, p)


def _dot(a, b):
    # MXU has huge slack at hidden=32: full-f32 passes are free in wall clock.
    return jnp.dot(a, b, preferred_element_type=jnp.float32,
                   precision=lax.Precision.HIGHEST)


def _siren_kernel(x_ref,
                  w0_ref, b0_ref,
                  w1_ref, b1_ref,
                  w2_ref, b2_ref,
                  wf_ref, bf_ref,
                  o_ref):
    # x_ref: [input_dim, tile_n]; weights: [out_f, in_f]; biases: [out_f, 1].
    # Sine-layer weights/biases arrive pre-scaled by w0=30 so each sine layer
    # is simply sin(W @ h + b); final layer is plain linear (is_last=True).
    #
    # Hoist the tiny grid-resident weights/biases once (JAX doesn't CSE
    # broadcasts/loads inside the loop).
    w0 = w0_ref[...]; b0 = b0_ref[...]
    w1 = w1_ref[...]; b1 = b1_ref[...]
    w2 = w2_ref[...]; b2 = b2_ref[...]
    wf = wf_ref[...]; bf = bf_ref[...]

    n_chunks = x_ref.shape[1] // _CHUNK        # static (tile_n % _CHUNK == 0)

    def chunk_body(c, carry):
        j = pl.multiple_of(c * _CHUNK, _CHUNK)
        x = x_ref[:, pl.ds(j, _CHUNK)]                       # [in_dim, CHUNK]
        h = _sin_bounded(_dot(w0, x) + b0)                   # [hidden, CHUNK]
        h = _sin_bounded(_dot(w1, h) + b1)
        h = _sin_bounded(_dot(w2, h) + b2)
        out = _dot(wf, h) + bf                               # [out_dim, CHUNK]
        o_ref[:, pl.ds(j, _CHUNK)] = out.astype(o_ref.dtype)
        return carry

    lax.fori_loop(0, n_chunks, chunk_body, 0, unroll=True)


def _fold_w0(params):
    """Fold w0=30 into the sine layers' weights AND biases (final untouched)."""
    return (params["w0"] * W0_FREQ, params["b0"] * W0_FREQ,
            params["w1"] * W0_FREQ, params["b1"] * W0_FREQ,
            params["w2"] * W0_FREQ, params["b2"] * W0_FREQ,
            params["wf"], params["bf"])


def siren_ff_forward_t(x_t, params, *, tile_n=8192):
    """Pre-transposed, pre-padded entry point (hot path for fixed coord grids).

    x_t: [input_dim, N_pad] float32 with N_pad a multiple of 512.
    Returns [output_dim, N_pad] float32.
    """
    in_dim, n_pad = x_t.shape
    out_dim = params["wf"].shape[0]
    assert n_pad % _CHUNK == 0

    # Lane tile: multiple of the in-kernel chunk, no larger than the problem.
    tile_n = max(_CHUNK, min(_round_up(tile_n, _CHUNK), n_pad))
    assert n_pad % tile_n == 0
    grid = (n_pad // tile_n,)

    w0, b0, w1, b1, w2, b2, wf, bf = _fold_w0(params)

    def lane_spec(rows):
        return pl.BlockSpec((rows, tile_n), lambda i: (0, i))

    def full_spec(shape):
        # Constant index_map -> grid-resident operand (fetched once).
        return pl.BlockSpec(shape, lambda i: (0, 0))

    return pl.pallas_call(
        _siren_kernel,
        out_shape=jax.ShapeDtypeStruct((out_dim, n_pad), jnp.float32),
        grid_spec=pl.GridSpec(
            grid=grid,
            in_specs=[
                lane_spec(in_dim),
                full_spec(w0.shape), full_spec(b0.shape),
                full_spec(w1.shape), full_spec(b1.shape),
                full_spec(w2.shape), full_spec(b2.shape),
                full_spec(wf.shape), full_spec(bf.shape),
            ],
            out_specs=lane_spec(out_dim),
        ),
        compiler_params=pltpu.CompilerParams(
            dimension_semantics=("parallel",)),
    )(x_t, w0, b0, w1, b1, w2, b2, wf, bf)


def siren_ff_forward(x, params, *, tile_n=8192):
    """Fused SIRENFF forward. x: [N, input_dim] float32.

    params: dict with keys w0,b0,w1,b1,w2,b2,wf,bf; weights PyTorch-native
    [out_f, in_f], biases [out_f, 1]. Returns (out [N, output_dim], None) to
    mirror the PyTorch module's (x, y) return.
    """
    n, _ = x.shape
    n_pad = _round_up(n, _CHUNK)
    # Lane-dense layout: big N on the last (lane) axis; zero-pad to n_pad.
    x_t = jnp.pad(x.astype(jnp.float32).T, ((0, 0), (0, n_pad - n)))
    out_t = siren_ff_forward_t(x_t, params, tile_n=tile_n)
    out = out_t[:, :n].T
    return out, None


def init_siren_params(key, input_dim, hidden_dim, output_dim):
    """Deterministic SIREN init matching the PyTorch module's init scheme.

    Weight bound: 1/in_f for the first layer, sqrt(6/in_f)/w0 otherwise.
    Bias uses PyTorch nn.Linear default: uniform(-1/sqrt(in_f), 1/sqrt(in_f)).
    Weights stored PyTorch-native [out_f, in_f]; biases [out_f, 1].
    """
    keys = jax.random.split(key, 8)

    def layer(kw, kb, in_f, out_f, is_first):
        wb = (1.0 / in_f) if is_first else (math.sqrt(6.0 / in_f) / W0_FREQ)
        bb = 1.0 / math.sqrt(in_f)
        w = jax.random.uniform(kw, (out_f, in_f), jnp.float32, -wb, wb)
        b = jax.random.uniform(kb, (out_f, 1), jnp.float32, -bb, bb)
        return w, b

    w0, b0 = layer(keys[0], keys[1], input_dim, hidden_dim, True)
    w1, b1 = layer(keys[2], keys[3], hidden_dim, hidden_dim, False)
    w2, b2 = layer(keys[4], keys[5], hidden_dim, hidden_dim, False)
    wf, bf = layer(keys[6], keys[7], hidden_dim, output_dim, False)
    return dict(w0=w0, b0=b0, w1=w1, b1=b1, w2=w2, b2=b2, wf=wf, bf=bf)


def siren_ff_reference(x, params):
    def lin(h, w, b):
        return h @ w.T + b.reshape(1, -1)

    h = jnp.sin(W0_FREQ * lin(x, params["w0"], params["b0"]))
    h = jnp.sin(W0_FREQ * lin(h, params["w1"], params["b1"]))
    h = jnp.sin(W0_FREQ * lin(h, params["w2"], params["b2"]))
    return lin(h, params["wf"], params["bf"])


if __name__ == "__main__":
    # num_layers=4 -> first + 2 mid + final (matches SIRENFF(num_layers=4, ...))
    N = 1000         # deliberately NOT a multiple of the tile -> exercises padding
    INPUT_DIM = 2    # 2D coordinates (2D_experiments)
    HIDDEN_DIM = 32
    OUTPUT_DIM = 3

    key = jax.random.PRNGKey(0)
    kx, kp = jax.random.split(key)
    x = jax.random.uniform(kx, (N, INPUT_DIM), jnp.float32, -1.0, 1.0)
    params = init_siren_params(kp, INPUT_DIM, HIDDEN_DIM, OUTPUT_DIM)

    fwd = jax.jit(functools.partial(siren_ff_forward, tile_n=8192))
    out, y_none = fwd(x, params)
    out = jax.block_until_ready(out)
    assert y_none is None
    assert out.shape == (N, OUTPUT_DIM)

    ref = siren_ff_reference(x, params)
    max_err = float(jnp.max(jnp.abs(out - ref)))
    assert jnp.allclose(out, ref, atol=1e-4, rtol=1e-4), max_err

    print("KERNEL_OK")
</pallas_src>

<mosaic_0001>
module attributes {stable_mosaic.version = 11 : i64} {
  func.func @_siren_kernel(%arg0: i32, %arg1: memref<2x1024xf32, #tpu.memory_space<vmem>>, %arg2: memref<32x2xf32, #tpu.memory_space<vmem>>, %arg3: memref<32x1xf32, #tpu.memory_space<vmem>>, %arg4: memref<32x32xf32, #tpu.memory_space<vmem>>, %arg5: memref<32x1xf32, #tpu.memory_space<vmem>>, %arg6: memref<32x32xf32, #tpu.memory_space<vmem>>, %arg7: memref<32x1xf32, #tpu.memory_space<vmem>>, %arg8: memref<3x32xf32, #tpu.memory_space<vmem>>, %arg9: memref<3x1xf32, #tpu.memory_space<vmem>>, %arg10: memref<3x1024xf32, #tpu.memory_space<vmem>>) attributes {dimension_semantics = [#tpu.dimension_semantics<parallel>], iteration_bounds = array<i64: 1>, scalar_prefetch = 0 : i64, scratch_operands = 0 : i64, tpu.core_type = #tpu.core_type<tc>, window_params = [{transform_indices = @transform_0, window_bounds = array<i64: 2, 1024>}, {pipeline_mode = #tpu.pipeline_mode<synchronous>, transform_indices = @transform_1, window_bounds = array<i64: 32, 2>}, {pipeline_mode = #tpu.pipeline_mode<synchronous>, transform_indices = @transform_2, window_bounds = array<i64: 32, 1>}, {pipeline_mode = #tpu.pipeline_mode<synchronous>, transform_indices = @transform_3, window_bounds = array<i64: 32, 32>}, {pipeline_mode = #tpu.pipeline_mode<synchronous>, transform_indices = @transform_4, window_bounds = array<i64: 32, 1>}, {pipeline_mode = #tpu.pipeline_mode<synchronous>, transform_indices = @transform_5, window_bounds = array<i64: 32, 32>}, {pipeline_mode = #tpu.pipeline_mode<synchronous>, transform_indices = @transform_6, window_bounds = array<i64: 32, 1>}, {pipeline_mode = #tpu.pipeline_mode<synchronous>, transform_indices = @transform_7, window_bounds = array<i64: 3, 32>}, {pipeline_mode = #tpu.pipeline_mode<synchronous>, transform_indices = @transform_8, window_bounds = array<i64: 3, 1>}, {transform_indices = @transform_9, window_bounds = array<i64: 3, 1024>}]} {
    %c0 = arith.constant 0 : index
    %c0_0 = arith.constant 0 : index
    %0 = vector.load %arg2[%c0, %c0_0] : memref<32x2xf32, #tpu.memory_space<vmem>>, vector<32x2xf32>
    %c0_1 = arith.constant 0 : index
    %c0_2 = arith.constant 0 : index
    %1 = vector.load %arg3[%c0_1, %c0_2] : memref<32x1xf32, #tpu.memory_space<vmem>>, vector<32x1xf32>
    %c0_3 = arith.constant 0 : index
    %c0_4 = arith.constant 0 : index
    %2 = vector.load %arg4[%c0_3, %c0_4] : memref<32x32xf32, #tpu.memory_space<vmem>>, vector<32x32xf32>
    %c0_5 = arith.constant 0 : index
    %c0_6 = arith.constant 0 : index
    %3 = vector.load %arg5[%c0_5, %c0_6] : memref<32x1xf32, #tpu.memory_space<vmem>>, vector<32x1xf32>
    %c0_7 = arith.constant 0 : index
    %c0_8 = arith.constant 0 : index
    %4 = vector.load %arg6[%c0_7, %c0_8] : memref<32x32xf32, #tpu.memory_space<vmem>>, vector<32x32xf32>
    %c0_9 = arith.constant 0 : index
    %c0_10 = arith.constant 0 : index
    %5 = vector.load %arg7[%c0_9, %c0_10] : memref<32x1xf32, #tpu.memory_space<vmem>>, vector<32x1xf32>
    %c0_11 = arith.constant 0 : index
    %c0_12 = arith.constant 0 : index
    %6 = vector.load %arg8[%c0_11, %c0_12] : memref<3x32xf32, #tpu.memory_space<vmem>>, vector<3x32xf32>
    %c0_13 = arith.constant 0 : index
    %c0_14 = arith.constant 0 : index
    %7 = vector.load %arg9[%c0_13, %c0_14] : memref<3x1xf32, #tpu.memory_space<vmem>>, vector<3x1xf32>
    %c0_i32 = arith.constant 0 : i32
    %c512_i32 = arith.constant 512 : i32
    %8 = arith.muli %c0_i32, %c512_i32 : i32
    %9 = tpu.assume_multiple %8, 512 : i32
    %c0_15 = arith.constant 0 : index
    %10 = arith.index_cast %9 : i32 to index
    %11 = vector.load %arg1[%c0_15, %10] : memref<2x1024xf32, #tpu.memory_space<vmem>>, vector<2x512xf32>
    %cst = arith.constant dense<0.000000e+00> : vector<32x512xf32>
    %12 = tpu.matmul %0, %11, %cst {dimension_numbers = #tpu.dot_dimension_numbers<[1], [0], [0], [1], [0, 0, 1, 1], [], []>, precision = #tpu.contract_precision<fp32>} : vector<32x2xf32>, vector<2x512xf32>, vector<32x512xf32> -> vector<32x512xf32>
    %13 = vector.broadcast %1 : vector<32x1xf32> to vector<32x512xf32>
    %14 = arith.addf %12, %13 : vector<32x512xf32>
    %cst_16 = arith.constant 0.318309873 : f32
    %15 = vector.broadcast %cst_16 : f32 to vector<32x512xf32>
    %16 = arith.mulf %14, %15 : vector<32x512xf32>
    %17 = math.roundeven %16 : vector<32x512xf32>
    %cst_17 = arith.constant 3.140625 : f32
    %18 = vector.broadcast %cst_17 : f32 to vector<32x512xf32>
    %19 = arith.mulf %17, %18 : vector<32x512xf32>
    %20 = arith.subf %14, %19 : vector<32x512xf32>
    %cst_18 = arith.constant 9.67653584E-4 : f32
    %21 = vector.broadcast %cst_18 : f32 to vector<32x512xf32>
    %22 = arith.mulf %17, %21 : vector<32x512xf32>
    %23 = arith.subf %20, %22 : vector<32x512xf32>
    %24 = arith.mulf %23, %23 : vector<32x512xf32>
    %25 = arith.mulf %23, %24 : vector<32x512xf32>
    %cst_19 = arith.constant -1.95152956E-4 : f32
    %26 = vector.broadcast %cst_19 : f32 to vector<32x512xf32>
    %27 = arith.mulf %24, %26 : vector<32x512xf32>
    %cst_20 = arith.constant 0.00833216123 : f32
    %28 = vector.broadcast %cst_20 : f32 to vector<32x512xf32>
    %29 = arith.addf %28, %27 : vector<32x512xf32>
    %30 = arith.mulf %24, %29 : vector<32x512xf32>
    %cst_21 = arith.constant -0.166666552 : f32
    %31 = vector.broadcast %cst_21 : f32 to vector<32x512xf32>
    %32 = arith.addf %31, %30 : vector<32x512xf32>
    %33 = arith.mulf %25, %32 : vector<32x512xf32>
    %34 = arith.addf %23, %33 : vector<32x512xf32>
    %35 = arith.fptosi %17 : vector<32x512xf32> to vector<32x512xi32>
    %c1_i32 = arith.constant 1 : i32
    %36 = vector.broadcast %c1_i32 : i32 to vector<32x512xi32>
    %37 = arith.andi %35, %36 : vector<32x512xi32>
    %c1_i32_22 = arith.constant 1 : i32
    %38 = vector.broadcast %c1_i32_22 : i32 to vector<32x512xi32>
    %39 = arith.cmpi eq, %37, %38 : vector<32x512xi32>
    %cst_23 = arith.constant 0.000000e+00 : f32
    %40 = vector.broadcast %cst_23 : f32 to vector<32x512xf32>
    %41 = arith.subf %40, %34 : vector<32x512xf32>
    %42 = arith.select %39, %41, %34 : vector<32x512xi1>, vector<32x512xf32>
    %cst_24 = arith.constant dense<0.000000e+00> : vector<32x512xf32>
    %43 = tpu.matmul %2, %42, %cst_24 {dimension_numbers = #tpu.dot_dimension_numbers<[1], [0], [0], [1], [0, 0, 1, 1], [], []>, precision = #tpu.contract_precision<fp32>} : vector<32x32xf32>, vector<32x512xf32>, vector<32x512xf32> -> vector<32x512xf32>
    %44 = vector.broadcast %3 : vector<32x1xf32> to vector<32x512xf32>
    %45 = arith.addf %43, %44 : vector<32x512xf32>
    %cst_25 = arith.constant 0.318309873 : f32
    %46 = vector.broadcast %cst_25 : f32 to vector<32x512xf32>
    %47 = arith.mulf %45, %46 : vector<32x512xf32>
    %48 = math.roundeven %47 : vector<32x512xf32>
    %cst_26 = arith.constant 3.140625 : f32
    %49 = vector.broadcast %cst_26 : f32 to vector<32x512xf32>
    %50 = arith.mulf %48, %49 : vector<32x512xf32>
    %51 = arith.subf %45, %50 : vector<32x512xf32>
    %cst_27 = arith.constant 9.67653584E-4 : f32
    %52 = vector.broadcast %cst_27 : f32 to vector<32x512xf32>
    %53 = arith.mulf %48, %52 : vector<32x512xf32>
    %54 = arith.subf %51, %53 : vector<32x512xf32>
    %55 = arith.mulf %54, %54 : vector<32x512xf32>
    %56 = arith.mulf %54, %55 : vector<32x512xf32>
    %cst_28 = arith.constant -1.95152956E-4 : f32
    %57 = vector.broadcast %cst_28 : f32 to vector<32x512xf32>
    %58 = arith.mulf %55, %57 : vector<32x512xf32>
    %cst_29 = arith.constant 0.00833216123 : f32
    %59 = vector.broadcast %cst_29 : f32 to vector<32x512xf32>
    %60 = arith.addf %59, %58 : vector<32x512xf32>
    %61 = arith.mulf %55, %60 : vector<32x512xf32>
    %cst_30 = arith.constant -0.166666552 : f32
    %62 = vector.broadcast %cst_30 : f32 to vector<32x512xf32>
    %63 = arith.addf %62, %61 : vector<32x512xf32>
    %64 = arith.mulf %56, %63 : vector<32x512xf32>
    %65 = arith.addf %54, %64 : vector<32x512xf32>
    %66 = arith.fptosi %48 : vector<32x512xf32> to vector<32x512xi32>
    %c1_i32_31 = arith.constant 1 : i32
    %67 = vector.broadcast %c1_i32_31 : i32 to vector<32x512xi32>
    %68 = arith.andi %66, %67 : vector<32x512xi32>
    %c1_i32_32 = arith.constant 1 : i32
    %69 = vector.broadcast %c1_i32_32 : i32 to vector<32x512xi32>
    %70 = arith.cmpi eq, %68, %69 : vector<32x512xi32>
    %cst_33 = arith.constant 0.000000e+00 : f32
    %71 = vector.broadcast %cst_33 : f32 to vector<32x512xf32>
    %72 = arith.subf %71, %65 : vector<32x512xf32>
    %73 = arith.select %70, %72, %65 : vector<32x512xi1>, vector<32x512xf32>
    %cst_34 = arith.constant dense<0.000000e+00> : vector<32x512xf32>
    %74 = tpu.matmul %4, %73, %cst_34 {dimension_numbers = #tpu.dot_dimension_numbers<[1], [0], [0], [1], [0, 0, 1, 1], [], []>, precision = #tpu.contract_precision<fp32>} : vector<32x32xf32>, vector<32x512xf32>, vector<32x512xf32> -> vector<32x512xf32>
    %75 = vector.broadcast %5 : vector<32x1xf32> to vector<32x512xf32>
    %76 = arith.addf %74, %75 : vector<32x512xf32>
    %cst_35 = arith.constant 0.318309873 : f32
    %77 = vector.broadcast %cst_35 : f32 to vector<32x512xf32>
    %78 = arith.mulf %76, %77 : vector<32x512xf32>
    %79 = math.roundeven %78 : vector<32x512xf32>
    %cst_36 = arith.constant 3.140625 : f32
    %80 = vector.broadcast %cst_36 : f32 to vector<32x512xf32>
    %81 = arith.mulf %79, %80 : vector<32x512xf32>
    %82 = arith.subf %76, %81 : vector<32x512xf32>
    %cst_37 = arith.constant 9.67653584E-4 : f32
    %83 = vector.broadcast %cst_37 : f32 to vector<32x512xf32>
    %84 = arith.mulf %79, %83 : vector<32x512xf32>
    %85 = arith.subf %82, %84 : vector<32x512xf32>
    %86 = arith.mulf %85, %85 : vector<32x512xf32>
    %87 = arith.mulf %85, %86 : vector<32x512xf32>
    %cst_38 = arith.constant -1.95152956E-4 : f32
    %88 = vector.broadcast %cst_38 : f32 to vector<32x512xf32>
    %89 = arith.mulf %86, %88 : vector<32x512xf32>
    %cst_39 = arith.constant 0.00833216123 : f32
    %90 = vector.broadcast %cst_39 : f32 to vector<32x512xf32>
    %91 = arith.addf %90, %89 : vector<32x512xf32>
    %92 = arith.mulf %86, %91 : vector<32x512xf32>
    %cst_40 = arith.constant -0.166666552 : f32
    %93 = vector.broadcast %cst_40 : f32 to vector<32x512xf32>
    %94 = arith.addf %93, %92 : vector<32x512xf32>
    %95 = arith.mulf %87, %94 : vector<32x512xf32>
    %96 = arith.addf %85, %95 : vector<32x512xf32>
    %97 = arith.fptosi %79 : vector<32x512xf32> to vector<32x512xi32>
    %c1_i32_41 = arith.constant 1 : i32
    %98 = vector.broadcast %c1_i32_41 : i32 to vector<32x512xi32>
    %99 = arith.andi %97, %98 : vector<32x512xi32>
    %c1_i32_42 = arith.constant 1 : i32
    %100 = vector.broadcast %c1_i32_42 : i32 to vector<32x512xi32>
    %101 = arith.cmpi eq, %99, %100 : vector<32x512xi32>
    %cst_43 = arith.constant 0.000000e+00 : f32
    %102 = vector.broadcast %cst_43 : f32 to vector<32x512xf32>
    %103 = arith.subf %102, %96 : vector<32x512xf32>
    %104 = arith.select %101, %103, %96 : vector<32x512xi1>, vector<32x512xf32>
    %cst_44 = arith.constant dense<0.000000e+00> : vector<3x512xf32>
    %105 = tpu.matmul %6, %104, %cst_44 {dimension_numbers = #tpu.dot_dimension_numbers<[1], [0], [0], [1], [0, 0, 1, 1], [], []>, precision = #tpu.contract_precision<fp32>} : vector<3x32xf32>, vector<32x512xf32>, vector<3x512xf32> -> vector<3x512xf32>
    %106 = vector.broadcast %7 : vector<3x1xf32> to vector<3x512xf32>
    %107 = arith.addf %105, %106 : vector<3x512xf32>
    %c0_45 = arith.constant 0 : index
    %108 = arith.index_cast %9 : i32 to index
    %109 = vector.load %arg10[%c0_45, %108] : memref<3x1024xf32, #tpu.memory_space<vmem>>, vector<3x512xf32>
    tpu.vector_store %arg10[%c0_45, %108], %107 {strides = array<i32>} : memref<3x1024xf32, #tpu.memory_space<vmem>>, vector<3x512xf32>,
    %c1_i32_46 = arith.constant 1 : i32
    %c512_i32_47 = arith.constant 512 : i32
    %110 = arith.muli %c1_i32_46, %c512_i32_47 : i32
    %111 = tpu.assume_multiple %110, 512 : i32
    %c0_48 = arith.constant 0 : index
    %112 = arith.index_cast %111 : i32 to index
    %113 = vector.load %arg1[%c0_48, %112] : memref<2x1024xf32, #tpu.memory_space<vmem>>, vector<2x512xf32>
    %cst_49 = arith.constant dense<0.000000e+00> : vector<32x512xf32>
    %114 = tpu.matmul %0, %113, %cst_49 {dimension_numbers = #tpu.dot_dimension_numbers<[1], [0], [0], [1], [0, 0, 1, 1], [], []>, precision = #tpu.contract_precision<fp32>} : vector<32x2xf32>, vector<2x512xf32>, vector<32x512xf32> -> vector<32x512xf32>
    %115 = vector.broadcast %1 : vector<32x1xf32> to vector<32x512xf32>
    %116 = arith.addf %114, %115 : vector<32x512xf32>
    %cst_50 = arith.constant 0.318309873 : f32
    %117 = vector.broadcast %cst_50 : f32 to vector<32x512xf32>
    %118 = arith.mulf %116, %117 : vector<32x512xf32>
    %119 = math.roundeven %118 : vector<32x512xf32>
    %cst_51 = arith.constant 3.140625 : f32
    %120 = vector.broadcast %cst_51 : f32 to vector<32x512xf32>
    %121 = arith.mulf %119, %120 : vector<32x512xf32>
    %122 = arith.subf %116, %121 : vector<32x512xf32>
    %cst_52 = arith.constant 9.67653584E-4 : f32
    %123 = vector.broadcast %cst_52 : f32 to vector<32x512xf32>
    %124 = arith.mulf %119, %123 : vector<32x512xf32>
    %125 = arith.subf %122, %124 : vector<32x512xf32>
    %126 = arith.mulf %125, %125 : vector<32x512xf32>
    %127 = arith.mulf %125, %126 : vector<32x512xf32>
    %cst_53 = arith.constant -1.95152956E-4 : f32
    %128 = vector.broadcast %cst_53 : f32 to vector<32x512xf32>
    %129 = arith.mulf %126, %128 : vector<32x512xf32>
    %cst_54 = arith.constant 0.00833216123 : f32
    %130 = vector.broadcast %cst_54 : f32 to vector<32x512xf32>
    %131 = arith.addf %130, %129 : vector<32x512xf32>
    %132 = arith.mulf %126, %131 : vector<32x512xf32>
    %cst_55 = arith.constant -0.166666552 : f32
    %133 = vector.broadcast %cst_55 : f32 to vector<32x512xf32>
    %134 = arith.addf %133, %132 : vector<32x512xf32>
    %135 = arith.mulf %127, %134 : vector<32x512xf32>
    %136 = arith.addf %125, %135 : vector<32x512xf32>
    %137 = arith.fptosi %119 : vector<32x512xf32> to vector<32x512xi32>
    %c1_i32_56 = arith.constant 1 : i32
    %138 = vector.broadcast %c1_i32_56 : i32 to vector<32x512xi32>
    %139 = arith.andi %137, %138 : vector<32x512xi32>
    %c1_i32_57 = arith.constant 1 : i32
    %140 = vector.broadcast %c1_i32_57 : i32 to vector<32x512xi32>
    %141 = arith.cmpi eq, %139, %140 : vector<32x512xi32>
    %cst_58 = arith.constant 0.000000e+00 : f32
    %142 = vector.broadcast %cst_58 : f32 to vector<32x512xf32>
    %143 = arith.subf %142, %136 : vector<32x512xf32>
    %144 = arith.select %141, %143, %136 : vector<32x512xi1>, vector<32x512xf32>
    %cst_59 = arith.constant dense<0.000000e+00> : vector<32x512xf32>
    %145 = tpu.matmul %2, %144, %cst_59 {dimension_numbers = #tpu.dot_dimension_numbers<[1], [0], [0], [1], [0, 0, 1, 1], [], []>, precision = #tpu.contract_precision<fp32>} : vector<32x32xf32>, vector<32x512xf32>, vector<32x512xf32> -> vector<32x512xf32>
    %146 = vector.broadcast %3 : vector<32x1xf32> to vector<32x512xf32>
    %147 = arith.addf %145, %146 : vector<32x512xf32>
    %cst_60 = arith.constant 0.318309873 : f32
    %148 = vector.broadcast %cst_60 : f32 to vector<32x512xf32>
    %149 = arith.mulf %147, %148 : vector<32x512xf32>
    %150 = math.roundeven %149 : vector<32x512xf32>
    %cst_61 = arith.constant 3.140625 : f32
    %151 = vector.broadcast %cst_61 : f32 to vector<32x512xf32>
    %152 = arith.mulf %150, %151 : vector<32x512xf32>
    %153 = arith.subf %147, %152 : vector<32x512xf32>
    %cst_62 = arith.constant 9.67653584E-4 : f32
    %154 = vector.broadcast %cst_62 : f32 to vector<32x512xf32>
    %155 = arith.mulf %150, %154 : vector<32x512xf32>
    %156 = arith.subf %153, %155 : vector<32x512xf32>
    %157 = arith.mulf %156, %156 : vector<32x512xf32>
    %158 = arith.mulf %156, %157 : vector<32x512xf32>
    %cst_63 = arith.constant -1.95152956E-4 : f32
    %159 = vector.broadcast %cst_63 : f32 to vector<32x512xf32>
    %160 = arith.mulf %157, %159 : vector<32x512xf32>
    %cst_64 = arith.constant 0.00833216123 : f32
    %161 = vector.broadcast %cst_64 : f32 to vector<32x512xf32>
    %162 = arith.addf %161, %160 : vector<32x512xf32>
    %163 = arith.mulf %157, %162 : vector<32x512xf32>
    %cst_65 = arith.constant -0.166666552 : f32
    %164 = vector.broadcast %cst_65 : f32 to vector<32x512xf32>
    %165 = arith.addf %164, %163 : vector<32x512xf32>
    %166 = arith.mulf %158, %165 : vector<32x512xf32>
    %167 = arith.addf %156, %166 : vector<32x512xf32>
    %168 = arith.fptosi %150 : vector<32x512xf32> to vector<32x512xi32>
    %c1_i32_66 = arith.constant 1 : i32
    %169 = vector.broadcast %c1_i32_66 : i32 to vector<32x512xi32>
    %170 = arith.andi %168, %169 : vector<32x512xi32>
    %c1_i32_67 = arith.constant 1 : i32
    %171 = vector.broadcast %c1_i32_67 : i32 to vector<32x512xi32>
    %172 = arith.cmpi eq, %170, %171 : vector<32x512xi32>
    %cst_68 = arith.constant 0.000000e+00 : f32
    %173 = vector.broadcast %cst_68 : f32 to vector<32x512xf32>
    %174 = arith.subf %173, %167 : vector<32x512xf32>
    %175 = arith.select %172, %174, %167 : vector<32x512xi1>, vector<32x512xf32>
    %cst_69 = arith.constant dense<0.000000e+00> : vector<32x512xf32>
    %176 = tpu.matmul %4, %175, %cst_69 {dimension_numbers = #tpu.dot_dimension_numbers<[1], [0], [0], [1], [0, 0, 1, 1], [], []>, precision = #tpu.contract_precision<fp32>} : vector<32x32xf32>, vector<32x512xf32>, vector<32x512xf32> -> vector<32x512xf32>
    %177 = vector.broadcast %5 : vector<32x1xf32> to vector<32x512xf32>
    %178 = arith.addf %176, %177 : vector<32x512xf32>
    %cst_70 = arith.constant 0.318309873 : f32
    %179 = vector.broadcast %cst_70 : f32 to vector<32x512xf32>
    %180 = arith.mulf %178, %179 : vector<32x512xf32>
    %181 = math.roundeven %180 : vector<32x512xf32>
    %cst_71 = arith.constant 3.140625 : f32
    %182 = vector.broadcast %cst_71 : f32 to vector<32x512xf32>
    %183 = arith.mulf %181, %182 : vector<32x512xf32>
    %184 = arith.subf %178, %183 : vector<32x512xf32>
    %cst_72 = arith.constant 9.67653584E-4 : f32
    %185 = vector.broadcast %cst_72 : f32 to vector<32x512xf32>
    %186 = arith.mulf %181, %185 : vector<32x512xf32>
    %187 = arith.subf %184, %186 : vector<32x512xf32>
    %188 = arith.mulf %187, %187 : vector<32x512xf32>
    %189 = arith.mulf %187, %188 : vector<32x512xf32>
    %cst_73 = arith.constant -1.95152956E-4 : f32
    %190 = vector.broadcast %cst_73 : f32 to vector<32x512xf32>
    %191 = arith.mulf %188, %190 : vector<32x512xf32>
    %cst_74 = arith.constant 0.00833216123 : f32
    %192 = vector.broadcast %cst_74 : f32 to vector<32x512xf32>
    %193 = arith.addf %192, %191 : vector<32x512xf32>
    %194 = arith.mulf %188, %193 : vector<32x512xf32>
    %cst_75 = arith.constant -0.166666552 : f32
    %195 = vector.broadcast %cst_75 : f32 to vector<32x512xf32>
    %196 = arith.addf %195, %194 : vector<32x512xf32>
    %197 = arith.mulf %189, %196 : vector<32x512xf32>
    %198 = arith.addf %187, %197 : vector<32x512xf32>
    %199 = arith.fptosi %181 : vector<32x512xf32> to vector<32x512xi32>
    %c1_i32_76 = arith.constant 1 : i32
    %200 = vector.broadcast %c1_i32_76 : i32 to vector<32x512xi32>
    %201 = arith.andi %199, %200 : vector<32x512xi32>
    %c1_i32_77 = arith.constant 1 : i32
    %202 = vector.broadcast %c1_i32_77 : i32 to vector<32x512xi32>
    %203 = arith.cmpi eq, %201, %202 : vector<32x512xi32>
    %cst_78 = arith.constant 0.000000e+00 : f32
    %204 = vector.broadcast %cst_78 : f32 to vector<32x512xf32>
    %205 = arith.subf %204, %198 : vector<32x512xf32>
    %206 = arith.select %203, %205, %198 : vector<32x512xi1>, vector<32x512xf32>
    %cst_79 = arith.constant dense<0.000000e+00> : vector<3x512xf32>
    %207 = tpu.matmul %6, %206, %cst_79 {dimension_numbers = #tpu.dot_dimension_numbers<[1], [0], [0], [1], [0, 0, 1, 1], [], []>, precision = #tpu.contract_precision<fp32>} : vector<3x32xf32>, vector<32x512xf32>, vector<3x512xf32> -> vector<3x512xf32>
    %208 = vector.broadcast %7 : vector<3x1xf32> to vector<3x512xf32>
    %209 = arith.addf %207, %208 : vector<3x512xf32>
    %c0_80 = arith.constant 0 : index
    %210 = arith.index_cast %111 : i32 to index
    %211 = vector.load %arg10[%c0_80, %210] : memref<3x1024xf32, #tpu.memory_space<vmem>>, vector<3x512xf32>
    tpu.vector_store %arg10[%c0_80, %210], %209 {strides = array<i32>} : memref<3x1024xf32, #tpu.memory_space<vmem>>, vector<3x512xf32>,
    %c2_i32 = arith.constant 2 : i32
    return
  }
  func.func @transform_0(%arg0: i32) -> (i32, i32) {
    %c0_i32 = arith.constant 0 : i32
    %c0_i32_0 = arith.constant 0 : i32
    return %c0_i32, %arg0 : i32, i32
  }
  func.func @transform_1(%arg0: i32) -> (i32, i32) {
    %c0_i32 = arith.constant 0 : i32
    %c0_i32_0 = arith.constant 0 : i32
    %c0_i32_1 = arith.constant 0 : i32
    return %c0_i32, %c0_i32_0 : i32, i32
  }
  func.func @transform_2(%arg0: i32) -> (i32, i32) {
    %c0_i32 = arith.constant 0 : i32
    %c0_i32_0 = arith.constant 0 : i32
    %c0_i32_1 = arith.constant 0 : i32
    return %c0_i32, %c0_i32_0 : i32, i32
  }
  func.func @transform_3(%arg0: i32) -> (i32, i32) {
    %c0_i32 = arith.constant 0 : i32
    %c0_i32_0 = arith.constant 0 : i32
    %c0_i32_1 = arith.constant 0 : i32
    return %c0_i32, %c0_i32_0 : i32, i32
  }
  func.func @transform_4(%arg0: i32) -> (i32, i32) {
    %c0_i32 = arith.constant 0 : i32
    %c0_i32_0 = arith.constant 0 : i32
    %c0_i32_1 = arith.constant 0 : i32
    return %c0_i32, %c0_i32_0 : i32, i32
  }
  func.func @transform_5(%arg0: i32) -> (i32, i32) {
    %c0_i32 = arith.constant 0 : i32
    %c0_i32_0 = arith.constant 0 : i32
    %c0_i32_1 = arith.constant 0 : i32
    return %c0_i32, %c0_i32_0 : i32, i32
  }
  func.func @transform_6(%arg0: i32) -> (i32, i32) {
    %c0_i32 = arith.constant 0 : i32
    %c0_i32_0 = arith.constant 0 : i32
    %c0_i32_1 = arith.constant 0 : i32
    return %c0_i32, %c0_i32_0 : i32, i32
  }
  func.func @transform_7(%arg0: i32) -> (i32, i32) {
    %c0_i32 = arith.constant 0 : i32
    %c0_i32_0 = arith.constant 0 : i32
    %c0_i32_1 = arith.constant 0 : i32
    return %c0_i32, %c0_i32_0 : i32, i32
  }
  func.func @transform_8(%arg0: i32) -> (i32, i32) {
    %c0_i32 = arith.constant 0 : i32
    %c0_i32_0 = arith.constant 0 : i32
    %c0_i32_1 = arith.constant 0 : i32
    return %c0_i32, %c0_i32_0 : i32, i32
  }
  func.func @transform_9(%arg0: i32) -> (i32, i32) {
    %c0_i32 = arith.constant 0 : i32
    %c0_i32_0 = arith.constant 0 : i32
    return %c0_i32, %arg0 : i32, i32
  }
}

</mosaic_0001>

<llo_original>
// kernel: siren_ff_forward.1
$region0: #{siren_ff_forward.1}
  #allocation0 [shape = 'u32[]', space=smem, size = 0x4, offset = 0x4, fixed_abs, tag = 'smem constant byte address 0x4 - core index']
  #allocation1 [shape = 'u32[144,128]{1,0:T(1,128)}', space=vmem, size = 0x12000, scoped, tag = 'internal scratch']
  %s0 = inlined_call_operand.vmem [shape: f32[2,1024], index: 0, kind: input, shape index: {}]
  %s1 = inlined_call_operand.vmem [shape: f32[32,2], index: 1, kind: input, shape index: {}]
  %s2 = inlined_call_operand.vmem [shape: f32[32,1], index: 2, kind: input, shape index: {}]
  %s3 = inlined_call_operand.vmem [shape: f32[32,32], index: 3, kind: input, shape index: {}]
  %s4 = inlined_call_operand.vmem [shape: f32[32,1], index: 4, kind: input, shape index: {}]
  %s5 = inlined_call_operand.vmem [shape: f32[32,32], index: 5, kind: input, shape index: {}]
  %s6 = inlined_call_operand.vmem [shape: f32[32,1], index: 6, kind: input, shape index: {}]
  %s7 = inlined_call_operand.vmem [shape: f32[3,32], index: 7, kind: input, shape index: {}]
  %s8 = inlined_call_operand.vmem [shape: f32[3,1], index: 8, kind: input, shape index: {}]
  %s9 = inlined_call_operand.vmem [shape: f32[3,1024], index: 9, kind: output, shape index: {}]
  %s10 = sld [smem:[#allocation0]]
  $region46: #{siren_ff_forward.1} parent=0
    _
  %s12 = ssub.s32 1, %s10
  %s13 = scalar_select 0, %s12, %s10
  // Predicated region
  $region2: #{siren_ff_forward.1} parent=0 // pred_check
    _
  $region3: #{siren_ff_forward.1} parent=0 // pred_check_branch
    %15 = sbr.rel (0) target = $region5
  $region4: #{siren_ff_forward.1} parent=0 // pred_region
    _
  $region5: #{siren_ff_forward.1} parent=0 // pred_fallthru
    _
  // Predicated region
  $region6: #{siren_ff_forward.1} parent=0 // pred_check
    _
  $region7: #{siren_ff_forward.1} parent=0 // pred_check_branch
    %17 = sbr.rel (0) target = $region9
  $region8: #{siren_ff_forward.1} parent=0 // pred_region
    _
  $region9: #{siren_ff_forward.1} parent=0 // pred_fallthru
    _
  // Predicated region
  $region10: #{siren_ff_forward.1} parent=0 // pred_check
    _
  $region11: #{siren_ff_forward.1} parent=0 // pred_check_branch
    %19 = sbr.rel (0) target = $region13
  $region12: #{siren_ff_forward.1} parent=0 // pred_region
    _
  $region13: #{siren_ff_forward.1} parent=0 // pred_fallthru
    _
  // Predicated region
  $region14: #{siren_ff_forward.1} parent=0 // pred_check
    _
  $region15: #{siren_ff_forward.1} parent=0 // pred_check_branch
    %21 = sbr.rel (0) target = $region17
  $region16: #{siren_ff_forward.1} parent=0 // pred_region
    _
  $region17: #{siren_ff_forward.1} parent=0 // pred_fallthru
    _
  // Predicated region
  $region18: #{siren_ff_forward.1} parent=0 // pred_check
    _
  $region19: #{siren_ff_forward.1} parent=0 // pred_check_branch
    %23 = sbr.rel (0) target = $region21
  $region20: #{siren_ff_forward.1} parent=0 // pred_region
    _
  $region21: #{siren_ff_forward.1} parent=0 // pred_fallthru
    _
  // Predicated region
  $region22: #{siren_ff_forward.1} parent=0 // pred_check
    _
  $region23: #{siren_ff_forward.1} parent=0 // pred_check_branch
    %25 = sbr.rel (0) target = $region25
  $region24: #{siren_ff_forward.1} parent=0 // pred_region
    _
  $region25: #{siren_ff_forward.1} parent=0 // pred_fallthru
    _
  // Predicated region
  $region26: #{siren_ff_forward.1} parent=0 // pred_check
    _
  $region27: #{siren_ff_forward.1} parent=0 // pred_check_branch
    %27 = sbr.rel (0) target = $region29
  $region28: #{siren_ff_forward.1} parent=0 // pred_region
    _
  $region29: #{siren_ff_forward.1} parent=0 // pred_fallthru
    _
  // Predicated region
  $region30: #{siren_ff_forward.1} parent=0 // pred_check
    _
  $region31: #{siren_ff_forward.1} parent=0 // pred_check_branch
    %29 = sbr.rel (0) target = $region33
  $region32: #{siren_ff_forward.1} parent=0 // pred_region
    _
  $region33: #{siren_ff_forward.1} parent=0 // pred_fallthru
    _
  // Predicated region
  $region34: #{siren_ff_forward.1} parent=0 // pred_check
    _
  $region35: #{siren_ff_forward.1} parent=0 // pred_check_branch
    %31 = sbr.rel (0) target = $region37
  $region36: #{siren_ff_forward.1} parent=0 // pred_region
    _
  $region37: #{siren_ff_forward.1} parent=0 // pred_fallthru
    _
  %v32 = vld [vmem:[%s1] sm:$0xff]
  %v33 = vld [vmem:[%s1 + $0x8] sm:$0xff]
  %v34 = vld [vmem:[%s1 + $0x10] sm:$0xff]
  %v35 = vld [vmem:[%s1 + $0x18] sm:$0xff]
  %v36 = vld [vmem:[%s2] sm:$0xff]
  %v37 = vld [vmem:[%s2 + $0x8] sm:$0xff]
  %v38 = vld [vmem:[%s2 + $0x10] sm:$0xff]
  %v39 = vld [vmem:[%s2 + $0x18] sm:$0xff]
  %v40 = vld [vmem:[%s3] sm:$0xff]
  %v41 = vld [vmem:[%s3 + $0x8] sm:$0xff]
  %v42 = vld [vmem:[%s3 + $0x10] sm:$0xff]
  %v43 = vld [vmem:[%s3 + $0x18] sm:$0xff]
  %v44 = vld [vmem:[%s4] sm:$0xff]
  %v45 = vld [vmem:[%s4 + $0x8] sm:$0xff]
  %v46 = vld [vmem:[%s4 + $0x10] sm:$0xff]
  %v47 = vld [vmem:[%s4 + $0x18] sm:$0xff]
  %v48 = vld [vmem:[%s5] sm:$0xff]
  %v49 = vld [vmem:[%s5 + $0x8] sm:$0xff]
  %v50 = vld [vmem:[%s5 + $0x10] sm:$0xff]
  %v51 = vld [vmem:[%s5 + $0x18] sm:$0xff]
  %v52 = vld [vmem:[%s6] sm:$0xff]
  %v53 = vld [vmem:[%s6 + $0x8] sm:$0xff]
  %v54 = vld [vmem:[%s6 + $0x10] sm:$0xff]
  %v55 = vld [vmem:[%s6 + $0x18] sm:$0xff]
  %v56 = vld [vmem:[%s7] sm:$0x7]
  %v57 = vld [vmem:[%s8] sm:$0x7]
  %v58 = vld [vmem:[%s0] sm:$0xff]
  %60 = vset.pattern.permute.xlu0 0
  %61 = vperm.xlu0 %60, %v36
  %v62 = vpop.permute.xlu0 %61
  %65 = vset.pattern.permute.xlu0 0
  %66 = vperm.xlu0 %65, %v37
  %v67 = vpop.permute.xlu0 %66
  %70 = vset.pattern.permute.xlu0 0
  %71 = vperm.xlu0 %70, %v38
  %v72 = vpop.permute.xlu0 %71
  %75 = vset.pattern.permute.xlu0 0
  %76 = vperm.xlu0 %75, %v39
  %v77 = vpop.permute.xlu0 %76
  %v80 = vcombine.high %v58, %v58
  %v82 = vunpack.c.l.s4 1983009808
  %v83 = vunpack.c.0.s8 %v82
  %v84 = vlaneseq
  %v85 = vshrl.u32 %v84, 7
  %v86 = vsub.s32 %v83, %v85
  %v87 = vrot.slane %v58, %v86
  %v89 = vunpack.c.l.s4 1983009808
  %v90 = vunpack.c.0.s8 %v89
  %v91 = vlaneseq
  %v92 = vshrl.u32 %v91, 7
  %v93 = vsub.s32 %v90, %v92
  %v94 = vrot.slane %v80, %v93
  %v95 = vcombine.high %v87, %v87
  %v96 = vcombine.high %v94, %v94
  %vm97 = vcmask 15360
  %v99 = vsel %vm97, %v32, 0
  %v102 = vsel %vm97, %v33, 0
  %v105 = vsel %vm97, %v34, 0
  %v108 = vsel %vm97, %v35, 0
  %vm110 = vcmask 1041408
  %v111 = vsel %vm110, %v87, 0
  %v113 = vsel %vm110, %v95, 0
  %v115 = vsel %vm110, %v94, 0
  %v117 = vsel %vm110, %v96, 0
  %v119 = vand.u32 %v113, 4294901760
  %120 = vmatprep.subr.mxu0 %v119
  %v121 = vand.u32 %v111, 4294901760
  %122 = vmatpush1.msra.mxu0 %v121
  %123 = vmatprep.subr.mxu0 0.0
  %124 = vmatpush1.msra.mxu0 0.0
  %125 = vmatprep.subr.mxu0 0.0
  %126 = vmatpush1.msra.mxu0 0.0
  %127 = vmatprep.subr.mxu0 0.0
  %128 = vmatpush1.msra.mxu0 0.0
  %129 = vmatprep.subr.mxu0 0.0
  %130 = vmatpush1.msra.mxu0 0.0
  %131 = vmatprep.subr.mxu0 0.0
  %132 = vmatpush1.msra.mxu0 0.0
  %133 = vmatprep.subr.mxu0 0.0
  %134 = vmatpush1.msra.mxu0 0.0
  %135 = vmatprep.subr.mxu0 0.0
  %136 = vmatpush1.msra.mxu0 0.0
  %137 = vmatprep.subr.mxu0 0.0
  %138 = vmatpush1.msra.mxu0 0.0
  %139 = vmatprep.subr.mxu0 0.0
  %140 = vmatpush1.msra.mxu0 0.0
  %141 = vmatprep.subr.mxu0 0.0
  %142 = vmatpush1.msra.mxu0 0.0
  %143 = vmatprep.subr.mxu0 0.0
  %144 = vmatpush1.msra.mxu0 0.0
  %145 = vmatprep.subr.mxu0 0.0
  %146 = vmatpush1.msra.mxu0 0.0
  %147 = vmatprep.subr.mxu0 0.0
  %148 = vmatpush1.msra.mxu0 0.0
  %149 = vmatprep.subr.mxu0 0.0
  %150 = vmatpush1.msra.mxu0 0.0
  %151 = vmatprep.subr.mxu0 0.0
  %152 = vmatpush1.msra.mxu0 0.0
  %153 = vmatprep.subr.mxu0 0.0
  %154 = vmatpush1.msra.mxu0 0.0
  %155 = vmatprep.subr.mxu0 0.0
  %156 = vmatpush1.msra.mxu0 0.0
  %157 = vmatprep.subr.mxu0 0.0
  %158 = vmatpush1.msra.mxu0 0.0
  %159 = vmatprep.subr.mxu0 0.0
  %160 = vmatpush1.msra.mxu0 0.0
  %161 = vmatprep.subr.mxu0 0.0
  %162 = vmatpush1.msra.mxu0 0.0
  %163 = vmatprep.subr.mxu0 0.0
  %164 = vmatpush1.msra.mxu0 0.0
  %165 = vmatprep.subr.mxu0 0.0
  %166 = vmatpush1.msra.mxu0 0.0
  %167 = vmatprep.subr.mxu0 0.0
  %168 = vmatpush1.msra.mxu0 0.0
  %169 = vmatprep.subr.mxu0 0.0
  %170 = vmatpush1.msra.mxu0 0.0
  %171 = vmatprep.subr.mxu0 0.0
  %172 = vmatpush1.msra.mxu0 0.0
  %173 = vmatprep.subr.mxu0 0.0
  %174 = vmatpush1.msra.mxu0 0.0
  %175 = vmatprep.subr.mxu0 0.0
  %176 = vmatpush1.msra.mxu0 0.0
  %177 = vmatprep.subr.mxu0 0.0
  %178 = vmatpush1.msra.mxu0 0.0
  %179 = vmatprep.subr.mxu0 0.0
  %180 = vmatpush1.msra.mxu0 0.0
  %181 = vmatprep.subr.mxu0 0.0
  %182 = vmatpush1.msra.mxu0 0.0
  %183 = vmatprep.subr.mxu0 0.0
  %184 = vmatpush1.msra.mxu0 0.0
  %185 = vmatprep.mubr.f32.mxu0 0.0
  %v186 = vand.u32 %v99, 4294901760
  %v187 = vsub.f32 %v99, %v186
  %v188 = vand.u32 %v187, 4294901760
  %v189 = vsub.f32 %v187, %v188
  %v190 = vand.u32 %v189, 4294901760
  %191 = vmatmul.mubr.f32.gmra.mrb[0].mxu0 %v190
  %v192 = vpop.f32.mrb[0].mxu0
  %v193 = vadd.f32 %v62, %v192
  %v194 = vpop.f32.mrb[0].mxu0
  %v195 = vadd.f32 %v62, %v194
  %196 = vmatprep.mubr.f32.mxu0 0.0
  %v197 = vand.u32 %v102, 4294901760
  %v198 = vsub.f32 %v102, %v197
  %v199 = vand.u32 %v198, 4294901760
  %v200 = vsub.f32 %v198, %v199
  %v201 = vand.u32 %v200, 4294901760
  %202 = vmatmul.mubr.f32.gmra.mrb[0].mxu0 %v201
  %v203 = vpop.f32.mrb[0].mxu0
  %v204 = vadd.f32 %v67, %v203
  %v205 = vpop.f32.mrb[0].mxu0
  %v206 = vadd.f32 %v67, %v205
  %207 = vmatprep.mubr.f32.mxu0 0.0
  %v208 = vand.u32 %v105, 4294901760
  %v209 = vsub.f32 %v105, %v208
  %v210 = vand.u32 %v209, 4294901760
  %v211 = vsub.f32 %v209, %v210
  %v212 = vand.u32 %v211, 4294901760
  %213 = vmatmul.mubr.f32.gmra.mrb[0].mxu0 %v212
  %v214 = vpop.f32.mrb[0].mxu0
  %v215 = vadd.f32 %v72, %v214
  %v216 = vpop.f32.mrb[0].mxu0
  %v217 = vadd.f32 %v72, %v216
  %218 = vmatprep.mubr.f32.mxu0 0.0
  %v219 = vand.u32 %v108, 4294901760
  %v220 = vsub.f32 %v108, %v219
  %v221 = vand.u32 %v220, 4294901760
  %v222 = vsub.f32 %v220, %v221
  %v223 = vand.u32 %v222, 4294901760
  %224 = vmatmul.mubr.f32.gmra.mrb[0].mxu0 %v223
  %v225 = vpop.f32.mrb[0].mxu0
  %v226 = vadd.f32 %v77, %v225
  %v227 = vpop.f32.mrb[0].mxu0
  %v228 = vadd.f32 %v77, %v227
  %229 = vdwg.mxu0
  %v230 = vand.u32 %v113, 4294901760
  %v231 = vsub.f32 %v113, %v230
  %v232 = vand.u32 %v231, 4294901760
  %v233 = vsub.f32 %v231, %v232
  %v234 = vand.u32 %v233, 4294901760
  %235 = vmatprep.subr.mxu0 %v234
  %v236 = vand.u32 %v111, 4294901760
  %v237 = vsub.f32 %v111, %v236
  %v238 = vand.u32 %v237, 4294901760
  %v239 = vsub.f32 %v237, %v238
  %v240 = vand.u32 %v239, 4294901760
  %241 = vmatpush1.msra.mxu0 %v240
  %242 = vmatprep.subr.mxu0 0.0
  %243 = vmatpush1.msra.mxu0 0.0
  %244 = vmatprep.subr.mxu0 0.0
  %245 = vmatpush1.msra.mxu0 0.0
  %246 = vmatprep.subr.mxu0 0.0
  %247 = vmatpush1.msra.mxu0 0.0
  %248 = vmatprep.subr.mxu0 0.0
  %249 = vmatpush1.msra.mxu0 0.0
  %250 = vmatprep.subr.mxu0 0.0
  %251 = vmatpush1.msra.mxu0 0.0
  %252 = vmatprep.subr.mxu0 0.0
  %253 = vmatpush1.msra.mxu0 0.0
  %254 = vmatprep.subr.mxu0 0.0
  %255 = vmatpush1.msra.mxu0 0.0
  %256 = vmatprep.subr.mxu0 0.0
  %257 = vmatpush1.msra.mxu0 0.0
  %258 = vmatprep.subr.mxu0 0.0
  %259 = vmatpush1.msra.mxu0 0.0
  %260 = vmatprep.subr.mxu0 0.0
  %261 = vmatpush1.msra.mxu0 0.0
  %262 = vmatprep.subr.mxu0 0.0
  %263 = vmatpush1.msra.mxu0 0.0
  %264 = vmatprep.subr.mxu0 0.0
  %265 = vmatpush1.msra.mxu0 0.0
  %266 = vmatprep.subr.mxu0 0.0
  %267 = vmatpush1.msra.mxu0 0.0
  %268 = vmatprep.subr.mxu0 0.0
  %269 = vmatpush1.msra.mxu0 0.0
  %270 = vmatprep.subr.mxu0 0.0
  %271 = vmatpush1.msra.mxu0 0.0
  %272 = vmatprep.subr.mxu0 0.0
  %273 = vmatpush1.msra.mxu0 0.0
  %274 = vmatprep.subr.mxu0 0.0
  %275 = vmatpush1.msra.mxu0 0.0
  %276 = vmatprep.subr.mxu0 0.0
  %277 = vmatpush1.msra.mxu0 0.0
  %278 = vmatprep.subr.mxu0 0.0
  %279 = vmatpush1.msra.mxu0 0.0
  %280 = vmatprep.subr.mxu0 0.0
  %281 = vmatpush1.msra.mxu0 0.0
  %282 = vmatprep.subr.mxu0 0.0
  %283 = vmatpush1.msra.mxu0 0.0
  %284 = vmatprep.subr.mxu0 0.0
  %285 = vmatpush1.msra.mxu0 0.0
  %286 = vmatprep.subr.mxu0 0.0
  %287 = vmatpush1.msra.mxu0 0.0
  %288 = vmatprep.subr.mxu0 0.0
  %289 = vmatpush1.msra.mxu0 0.0
  %290 = vmatprep.subr.mxu0 0.0
  %291 = vmatpush1.msra.mxu0 0.0
  %292 = vmatprep.subr.mxu0 0.0
  %293 = vmatpush1.msra.mxu0 0.0
  %294 = vmatprep.subr.mxu0 0.0
  %295 = vmatpush1.msra.mxu0 0.0
  %296 = vmatprep.subr.mxu0 0.0
  %297 = vmatpush1.msra.mxu0 0.0
  %298 = vmatprep.subr.mxu0 0.0
  %299 = vmatpush1.msra.mxu0 0.0
  %300 = vmatprep.subr.mxu0 0.0
  %301 = vmatpush1.msra.mxu0 0.0
  %302 = vmatprep.subr.mxu0 0.0
  %303 = vmatpush1.msra.mxu0 0.0
  %304 = vmatprep.mubr.f32.mxu0 0.0
  %v305 = vand.u32 %v99, 4294901760
  %306 = vmatmul.mubr.f32.gmra.mrb[0].mxu0 %v305
  %v307 = vpop.f32.mrb[0].mxu0
  %v308 = vadd.f32 %v193, %v307
  %v309 = vpop.f32.mrb[0].mxu0
  %v310 = vadd.f32 %v195, %v309
  %311 = vmatprep.mubr.f32.mxu0 0.0
  %v312 = vand.u32 %v102, 4294901760
  %313 = vmatmul.mubr.f32.gmra.mrb[0].mxu0 %v312
  %v314 = vpop.f32.mrb[0].mxu0
  %v315 = vadd.f32 %v204, %v314
  %v316 = vpop.f32.mrb[0].mxu0
  %v317 = vadd.f32 %v206, %v316
  %318 = vmatprep.mubr.f32.mxu0 0.0
  %v319 = vand.u32 %v105, 4294901760
  %320 = vmatmul.mubr.f32.gmra.mrb[0].mxu0 %v319
  %v321 = vpop.f32.mrb[0].mxu0
  %v322 = vadd.f32 %v215, %v321
  %v323 = vpop.f32.mrb[0].mxu0
  %v324 = vadd.f32 %v217, %v323
  %325 = vmatprep.mubr.f32.mxu0 0.0
  %v326 = vand.u32 %v108, 4294901760
  %327 = vmatmul.mubr.f32.gmra.mrb[0].mxu0 %v326
  %v328 = vpop.f32.mrb[0].mxu0
  %v329 = vadd.f32 %v226, %v328
  %v330 = vpop.f32.mrb[0].mxu0
  %v331 = vadd.f32 %v228, %v330
  %332 = vdwg.mxu0
  %v333 = vand.u32 %v113, 4294901760
  %v334 = vsub.f32 %v113, %v333
  %335 = vmatprep.subr.mxu0 %v334
  %v336 = vand.u32 %v111, 4294901760
  %v337 = vsub.f32 %v111, %v336
  %338 = vmatpush1.msra.mxu0 %v337
  %339 = vmatprep.subr.mxu0 0.0
  %340 = vmatpush1.msra.mxu0 0.0
  %341 = vmatprep.subr.mxu0 0.0
  %342 = vmatpush1.msra.mxu0 0.0
  %343 = vmatprep.subr.mxu0 0.0
  %344 = vmatpush1.msra.mxu0 0.0
  %345 = vmatprep.subr.mxu0 0.0
  %346 = vmatpush1.msra.mxu0 0.0
  %347 = vmatprep.subr.mxu0 0.0
  %348 = vmatpush1.msra.mxu0 0.0
  %349 = vmatprep.subr.mxu0 0.0
  %350 = vmatpush1.msra.mxu0 0.0
  %351 = vmatprep.subr.mxu0 0.0
  %352 = vmatpush1.msra.mxu0 0.0
  %353 = vmatprep.subr.mxu0 0.0
  %354 = vmatpush1.msra.mxu0 0.0
  %355 = vmatprep.subr.mxu0 0.0
  %356 = vmatpush1.msra.mxu0 0.0
  %357 = vmatprep.subr.mxu0 0.0
  %358 = vmatpush1.msra.mxu0 0.0
  %359 = vmatprep.subr.mxu0 0.0
  %360 = vmatpush1.msra.mxu0 0.0
  %361 = vmatprep.subr.mxu0 0.0
  %362 = vmatpush1.msra.mxu0 0.0
  %363 = vmatprep.subr.mxu0 0.0
  %364 = vmatpush1.msra.mxu0 0.0
  %365 = vmatprep.subr.mxu0 0.0
  %366 = vmatpush1.msra.mxu0 0.0
  %367 = vmatprep.subr.mxu0 0.0
  %368 = vmatpush1.msra.mxu0 0.0
  %369 = vmatprep.subr.mxu0 0.0
  %370 = vmatpush1.msra.mxu0 0.0
  %371 = vmatprep.subr.mxu0 0.0
  %372 = vmatpush1.msra.mxu0 0.0
  %373 = vmatprep.subr.mxu0 0.0
  %374 = vmatpush1.msra.mxu0 0.0
  %375 = vmatprep.subr.mxu0 0.0
  %376 = vmatpush1.msra.mxu0 0.0
  %377 = vmatprep.subr.mxu0 0.0
  %378 = vmatpush1.msra.mxu0 0.0
  %379 = vmatprep.subr.mxu0 0.0
  %380 = vmatpush1.msra.mxu0 0.0
  %381 = vmatprep.subr.mxu0 0.0
  %382 = vmatpush1.msra.mxu0 0.0
  %383 = vmatprep.subr.mxu0 0.0
  %384 = vmatpush1.msra.mxu0 0.0
  %385 = vmatprep.subr.mxu0 0.0
  %386 = vmatpush1.msra.mxu0 0.0
  %387 = vmatprep.subr.mxu0 0.0
  %388 = vmatpush1.msra.mxu0 0.0
  %389 = vmatprep.subr.mxu0 0.0
  %390 = vmatpush1.msra.mxu0 0.0
  %391 = vmatprep.subr.mxu0 0.0
  %392 = vmatpush1.msra.mxu0 0.0
  %393 = vmatprep.subr.mxu0 0.0
  %394 = vmatpush1.msra.mxu0 0.0
  %395 = vmatprep.subr.mxu0 0.0
  %396 = vmatpush1.msra.mxu0 0.0
  %397 = vmatprep.subr.mxu0 0.0
  %398 = vmatpush1.msra.mxu0 0.0
  %399 = vmatprep.subr.mxu0 0.0
  %400 = vmatpush1.msra.mxu0 0.0
  %401 = vmatprep.mubr.f32.mxu0 0.0
  %v402 = vand.u32 %v99, 4294901760
  %v403 = vsub.f32 %v99, %v402
  %404 = vmatmul.mubr.f32.gmra.mrb[0].mxu0 %v403
  %v405 = vpop.f32.mrb[0].mxu0
  %v406 = vadd.f32 %v308, %v405
  %v407 = vpop.f32.mrb[0].mxu0
  %v408 = vadd.f32 %v310, %v407
  %409 = vmatprep.mubr.f32.mxu0 0.0
  %v410 = vand.u32 %v102, 4294901760
  %v411 = vsub.f32 %v102, %v410
  %412 = vmatmul.mubr.f32.gmra.mrb[0].mxu0 %v411
  %v413 = vpop.f32.mrb[0].mxu0
  %v414 = vadd.f32 %v315, %v413
  %v415 = vpop.f32.mrb[0].mxu0
  %v416 = vadd.f32 %v317, %v415
  %417 = vmatprep.mubr.f32.mxu0 0.0
  %v418 = vand.u32 %v105, 4294901760
  %v419 = vsub.f32 %v105, %v418
  %420 = vmatmul.mubr.f32.gmra.mrb[0].mxu0 %v419
  %v421 = vpop.f32.mrb[0].mxu0
  %v422 = vadd.f32 %v322, %v421
  %v423 = vpop.f32.mrb[0].mxu0
  %v424 = vadd.f32 %v324, %v423
  %425 = vmatprep.mubr.f32.mxu0 0.0
  %v426 = vand.u32 %v108, 4294901760
  %v427 = vsub.f32 %v108, %v426
  %428 = vmatmul.mubr.f32.gmra.mrb[0].mxu0 %v427
  %v429 = vpop.f32.mrb[0].mxu0
  %v430 = vadd.f32 %v329, %v429
  %v431 = vpop.f32.mrb[0].mxu0
  %v432 = vadd.f32 %v331, %v431
  %433 = vdwg.mxu0
  %v434 = vand.u32 %v113, 4294901760
  %435 = vmatprep.subr.mxu0 %v434
  %v436 = vand.u32 %v111, 4294901760
  %437 = vmatpush1.msra.mxu0 %v436
  %438 = vmatprep.subr.mxu0 0.0
  %439 = vmatpush1.msra.mxu0 0.0
  %440 = vmatprep.subr.mxu0 0.0
  %441 = vmatpush1.msra.mxu0 0.0
  %442 = vmatprep.subr.mxu0 0.0
  %443 = vmatpush1.msra.mxu0 0.0
  %444 = vmatprep.subr.mxu0 0.0
  %445 = vmatpush1.msra.mxu0 0.0
  %446 = vmatprep.subr.mxu0 0.0
  %447 = vmatpush1.msra.mxu0 0.0
  %448 = vmatprep.subr.mxu0 0.0
  %449 = vmatpush1.msra.mxu0 0.0
  %450 = vmatprep.subr.mxu0 0.0
  %451 = vmatpush1.msra.mxu0 0.0
  %452 = vmatprep.subr.mxu0 0.0
  %453 = vmatpush1.msra.mxu0 0.0
  %454 = vmatprep.subr.mxu0 0.0
  %455 = vmatpush1.msra.mxu0 0.0
  %456 = vmatprep.subr.mxu0 0.0
  %457 = vmatpush1.msra.mxu0 0.0
  %458 = vmatprep.subr.mxu0 0.0
  %459 = vmatpush1.msra.mxu0 0.0
  %460 = vmatprep.subr.mxu0 0.0
  %461 = vmatpush1.msra.mxu0 0.0
  %462 = vmatprep.subr.mxu0 0.0
  %463 = vmatpush1.msra.mxu0 0.0
  %464 = vmatprep.subr.mxu0 0.0
  %465 = vmatpush1.msra.mxu0 0.0
  %466 = vmatprep.subr.mxu0 0.0
  %467 = vmatpush1.msra.mxu0 0.0
  %468 = vmatprep.subr.mxu0 0.0
  %469 = vmatpush1.msra.mxu0 0.0
  %470 = vmatprep.subr.mxu0 0.0
  %471 = vmatpush1.msra.mxu0 0.0
  %472 = vmatprep.subr.mxu0 0.0
  %473 = vmatpush1.msra.mxu0 0.0
  %474 = vmatprep.subr.mxu0 0.0
  %475 = vmatpush1.msra.mxu0 0.0
  %476 = vmatprep.subr.mxu0 0.0
  %477 = vmatpush1.msra.mxu0 0.0
  %478 = vmatprep.subr.mxu0 0.0
  %479 = vmatpush1.msra.mxu0 0.0
  %480 = vmatprep.subr.mxu0 0.0
  %481 = vmatpush1.msra.mxu0 0.0
  %482 = vmatprep.subr.mxu0 0.0
  %483 = vmatpush1.msra.mxu0 0.0
  %484 = vmatprep.subr.mxu0 0.0
  %485 = vmatpush1.msra.mxu0 0.0
  %486 = vmatprep.subr.mxu0 0.0
  %487 = vmatpush1.msra.mxu0 0.0
  %488 = vmatprep.subr.mxu0 0.0
  %489 = vmatpush1.msra.mxu0 0.0
  %490 = vmatprep.subr.mxu0 0.0
  %491 = vmatpush1.msra.mxu0 0.0
  %492 = vmatprep.subr.mxu0 0.0
  %493 = vmatpush1.msra.mxu0 0.0
  %494 = vmatprep.subr.mxu0 0.0
  %495 = vmatpush1.msra.mxu0 0.0
  %496 = vmatprep.subr.mxu0 0.0
  %497 = vmatpush1.msra.mxu0 0.0
  %498 = vmatprep.subr.mxu0 0.0
  %499 = vmatpush1.msra.mxu0 0.0
  %500 = vmatprep.mubr.f32.mxu0 0.0
  %v501 = vand.u32 %v99, 4294901760
  %v502 = vsub.f32 %v99, %v501
  %v503 = vand.u32 %v502, 4294901760
  %504 = vmatmul.mubr.f32.gmra.mrb[0].mxu0 %v503
  %v505 = vpop.f32.mrb[0].mxu0
  %v506 = vadd.f32 %v406, %v505
  %v507 = vpop.f32.mrb[0].mxu0
  %v508 = vadd.f32 %v408, %v507
  %509 = vmatprep.mubr.f32.mxu0 0.0
  %v510 = vand.u32 %v102, 4294901760
  %v511 = vsub.f32 %v102, %v510
  %v512 = vand.u32 %v511, 4294901760
  %513 = vmatmul.mubr.f32.gmra.mrb[0].mxu0 %v512
  %v514 = vpop.f32.mrb[0].mxu0
  %v515 = vadd.f32 %v414, %v514
  %v516 = vpop.f32.mrb[0].mxu0
  %v517 = vadd.f32 %v416, %v516
  %518 = vmatprep.mubr.f32.mxu0 0.0
  %v519 = vand.u32 %v105, 4294901760
  %v520 = vsub.f32 %v105, %v519
  %v521 = vand.u32 %v520, 4294901760
  %522 = vmatmul.mubr.f32.gmra.mrb[0].mxu0 %v521
  %v523 = vpop.f32.mrb[0].mxu0
  %v524 = vadd.f32 %v422, %v523
  %v525 = vpop.f32.mrb[0].mxu0
  %v526 = vadd.f32 %v424, %v525
  %527 = vmatprep.mubr.f32.mxu0 0.0
  %v528 = vand.u32 %v108, 4294901760
  %v529 = vsub.f32 %v108, %v528
  %v530 = vand.u32 %v529, 4294901760
  %531 = vmatmul.mubr.f32.gmra.mrb[0].mxu0 %v530
  %v532 = vpop.f32.mrb[0].mxu0
  %v533 = vadd.f32 %v430, %v532
  %v534 = vpop.f32.mrb[0].mxu0
  %v535 = vadd.f32 %v432, %v534
  %536 = vdwg.mxu0
  %v537 = vand.u32 %v113, 4294901760
  %v538 = vsub.f32 %v113, %v537
  %v539 = vand.u32 %v538, 4294901760
  %540 = vmatprep.subr.mxu0 %v539
  %v541 = vand.u32 %v111, 4294901760
  %v542 = vsub.f32 %v111, %v541
  %v543 = vand.u32 %v542, 4294901760
  %544 = vmatpush1.msra.mxu0 %v543
  %545 = vmatprep.subr.mxu0 0.0
  %546 = vmatpush1.msra.mxu0 0.0
  %547 = vmatprep.subr.mxu0 0.0
  %548 = vmatpush1.msra.mxu0 0.0
  %549 = vmatprep.subr.mxu0 0.0
  %550 = vmatpush1.msra.mxu0 0.0
  %551 = vmatprep.subr.mxu0 0.0
  %552 = vmatpush1.msra.mxu0 0.0
  %553 = vmatprep.subr.mxu0 0.0
  %554 = vmatpush1.msra.mxu0 0.0
  %555 = vmatprep.subr.mxu0 0.0
  %556 = vmatpush1.msra.mxu0 0.0
  %557 = vmatprep.subr.mxu0 0.0
  %558 = vmatpush1.msra.mxu0 0.0
  %559 = vmatprep.subr.mxu0 0.0
  %560 = vmatpush1.msra.mxu0 0.0
  %561 = vmatprep.subr.mxu0 0.0
  %562 = vmatpush1.msra.mxu0 0.0
  %563 = vmatprep.subr.mxu0 0.0
  %564 = vmatpush1.msra.mxu0 0.0
  %565 = vmatprep.subr.mxu0 0.0
  %566 = vmatpush1.msra.mxu0 0.0
  %567 = vmatprep.subr.mxu0 0.0
  %568 = vmatpush1.msra.mxu0 0.0
  %569 = vmatprep.subr.mxu0 0.0
  %570 = vmatpush1.msra.mxu0 0.0
  %571 = vmatprep.subr.mxu0 0.0
  %572 = vmatpush1.msra.mxu0 0.0
  %573 = vmatprep.subr.mxu0 0.0
  %574 = vmatpush1.msra.mxu0 0.0
  %575 = vmatprep.subr.mxu0 0.0
  %576 = vmatpush1.msra.mxu0 0.0
  %577 = vmatprep.subr.mxu0 0.0
  %578 = vmatpush1.msra.mxu0 0.0
  %579 = vmatprep.subr.mxu0 0.0
  %580 = vmatpush1.msra.mxu0 0.0
  %581 = vmatprep.subr.mxu0 0.0
  %582 = vmatpush1.msra.mxu0 0.0
  %583 = vmatprep.subr.mxu0 0.0
  %584 = vmatpush1.msra.mxu0 0.0
  %585 = vmatprep.subr.mxu0 0.0
  %586 = vmatpush1.msra.mxu0 0.0
  %587 = vmatprep.subr.mxu0 0.0
  %588 = vmatpush1.msra.mxu0 0.0
  %589 = vmatprep.subr.mxu0 0.0
  %590 = vmatpush1.msra.mxu0 0.0
  %591 = vmatprep.subr.mxu0 0.0
  %592 = vmatpush1.msra.mxu0 0.0
  %593 = vmatprep.subr.mxu0 0.0
  %594 = vmatpush1.msra.mxu0 0.0
  %595 = vmatprep.subr.mxu0 0.0
  %596 = vmatpush1.msra.mxu0 0.0
  %597 = vmatprep.subr.mxu0 0.0
  %598 = vmatpush1.msra.mxu0 0.0
  %599 = vmatprep.subr.mxu0 0.0
  %600 = vmatpush1.msra.mxu0 0.0
  %601 = vmatprep.subr.mxu0 0.0
  %602 = vmatpush1.msra.mxu0 0.0
  %603 = vmatprep.subr.mxu0 0.0
  %604 = vmatpush1.msra.mxu0 0.0
  %605 = vmatprep.subr.mxu0 0.0
  %606 = vmatpush1.msra.mxu0 0.0
  %607 = vmatprep.mubr.f32.mxu0 0.0
  %v608 = vand.u32 %v99, 4294901760
  %609 = vmatmul.mubr.f32.gmra.mrb[0].mxu0 %v608
  %v610 = vpop.f32.mrb[0].mxu0
  %v611 = vadd.f32 %v506, %v610
  %v612 = vpop.f32.mrb[0].mxu0
  %v613 = vadd.f32 %v508, %v612
  %614 = vmatprep.mubr.f32.mxu0 0.0
  %v615 = vand.u32 %v102, 4294901760
  %616 = vmatmul.mubr.f32.gmra.mrb[0].mxu0 %v615
  %v617 = vpop.f32.mrb[0].mxu0
  %v618 = vadd.f32 %v515, %v617
  %v619 = vpop.f32.mrb[0].mxu0
  %v620 = vadd.f32 %v517, %v619
  %621 = vmatprep.mubr.f32.mxu0 0.0
  %v622 = vand.u32 %v105, 4294901760
  %623 = vmatmul.mubr.f32.gmra.mrb[0].mxu0 %v622
  %v624 = vpop.f32.mrb[0].mxu0
  %v625 = vadd.f32 %v524, %v624
  %v626 = vpop.f32.mrb[0].mxu0
  %v627 = vadd.f32 %v526, %v626
  %628 = vmatprep.mubr.f32.mxu0 0.0
  %v629 = vand.u32 %v108, 4294901760
  %630 = vmatmul.mubr.f32.gmra.mrb[0].mxu0 %v629
  %v631 = vpop.f32.mrb[0].mxu0
  %v632 = vadd.f32 %v533, %v631
  %v633 = vpop.f32.mrb[0].mxu0
  %v634 = vadd.f32 %v535, %v633
  %635 = vdwg.mxu0
  %v636 = vand.u32 %v113, 4294901760
  %637 = vmatprep.subr.mxu0 %v636
  %v638 = vand.u32 %v111, 4294901760
  %639 = vmatpush1.msra.mxu0 %v638
  %640 = vmatprep.subr.mxu0 0.0
  %641 = vmatpush1.msra.mxu0 0.0
  %642 = vmatprep.subr.mxu0 0.0
  %643 = vmatpush1.msra.mxu0 0.0
  %644 = vmatprep.subr.mxu0 0.0
  %645 = vmatpush1.msra.mxu0 0.0
  %646 = vmatprep.subr.mxu0 0.0
  %647 = vmatpush1.msra.mxu0 0.0
  %648 = vmatprep.subr.mxu0 0.0
  %649 = vmatpush1.msra.mxu0 0.0
  %650 = vmatprep.subr.mxu0 0.0
  %651 = vmatpush1.msra.mxu0 0.0
  %652 = vmatprep.subr.mxu0 0.0
  %653 = vmatpush1.msra.mxu0 0.0
  %654 = vmatprep.subr.mxu0 0.0
  %655 = vmatpush1.msra.mxu0 0.0
  %656 = vmatprep.subr.mxu0 0.0
  %657 = vmatpush1.msra.mxu0 0.0
  %658 = vmatprep.subr.mxu0 0.0
  %659 = vmatpush1.msra.mxu0 0.0
  %660 = vmatprep.subr.mxu0 0.0
  %661 = vmatpush1.msra.mxu0 0.0
  %662 = vmatprep.subr.mxu0 0.0
  %663 = vmatpush1.msra.mxu0 0.0
  %664 = vmatprep.subr.mxu0 0.0
  %665 = vmatpush1.msra.mxu0 0.0
  %666 = vmatprep.subr.mxu0 0.0
  %667 = vmatpush1.msra.mxu0 0.0
  %668 = vmatprep.subr.mxu0 0.0
  %669 = vmatpush1.msra.mxu0 0.0
  %670 = vmatprep.subr.mxu0 0.0
  %671 = vmatpush1.msra.mxu0 0.0
  %672 = vmatprep.subr.mxu0 0.0
  %673 = vmatpush1.msra.mxu0 0.0
  %674 = vmatprep.subr.mxu0 0.0
  %675 = vmatpush1.msra.mxu0 0.0
  %676 = vmatprep.subr.mxu0 0.0
  %677 = vmatpush1.msra.mxu0 0.0
  %678 = vmatprep.subr.mxu0 0.0
  %679 = vmatpush1.msra.mxu0 0.0
  %680 = vmatprep.subr.mxu0 0.0
  %681 = vmatpush1.msra.mxu0 0.0
  %682 = vmatprep.subr.mxu0 0.0
  %683 = vmatpush1.msra.mxu0 0.0
  %684 = vmatprep.subr.mxu0 0.0
  %685 = vmatpush1.msra.mxu0 0.0
  %686 = vmatprep.subr.mxu0 0.0
  %687 = vmatpush1.msra.mxu0 0.0
  %688 = vmatprep.subr.mxu0 0.0
  %689 = vmatpush1.msra.mxu0 0.0
  %690 = vmatprep.subr.mxu0 0.0
  %691 = vmatpush1.msra.mxu0 0.0
  %692 = vmatprep.subr.mxu0 0.0
  %693 = vmatpush1.msra.mxu0 0.0
  %694 = vmatprep.subr.mxu0 0.0
  %695 = vmatpush1.msra.mxu0 0.0
  %696 = vmatprep.subr.mxu0 0.0
  %697 = vmatpush1.msra.mxu0 0.0
  %698 = vmatprep.subr.mxu0 0.0
  %699 = vmatpush1.msra.mxu0 0.0
  %700 = vmatprep.subr.mxu0 0.0
  %701 = vmatpush1.msra.mxu0 0.0
  %702 = vmatprep.mubr.f32.mxu0 0.0
  %v703 = vand.u32 %v99, 4294901760
  %704 = vmatmul.mubr.f32.gmra.mrb[0].mxu0 %v703
  %v705 = vpop.f32.mrb[0].mxu0
  %v706 = vadd.f32 %v611, %v705
  %v707 = vpop.f32.mrb[0].mxu0
  %v708 = vadd.f32 %v613, %v707
  %709 = vmatprep.mubr.f32.mxu0 0.0
  %v710 = vand.u32 %v102, 4294901760
  %711 = vmatmul.mubr.f32.gmra.mrb[0].mxu0 %v710
  %v712 = vpop.f32.mrb[0].mxu0
  %v713 = vadd.f32 %v618, %v712
  %v714 = vpop.f32.mrb[0].mxu0
  %v715 = vadd.f32 %v620, %v714
  %716 = vmatprep.mubr.f32.mxu0 0.0
  %v717 = vand.u32 %v105, 4294901760
  %718 = vmatmul.mubr.f32.gmra.mrb[0].mxu0 %v717
  %v719 = vpop.f32.mrb[0].mxu0
  %v720 = vadd.f32 %v625, %v719
  %v721 = vpop.f32.mrb[0].mxu0
  %v722 = vadd.f32 %v627, %v721
  %723 = vmatprep.mubr.f32.mxu0 0.0
  %v724 = vand.u32 %v108, 4294901760
  %725 = vmatmul.mubr.f32.gmra.mrb[0].mxu0 %v724
  %v726 = vpop.f32.mrb[0].mxu0
  %v727 = vadd.f32 %v632, %v726
  %v728 = vpop.f32.mrb[0].mxu0
  %v729 = vadd.f32 %v634, %v728
  %730 = vdwg.mxu0
  %v731 = vand.u32 %v117, 4294901760
  %732 = vmatprep.subr.mxu0 %v731
  %v733 = vand.u32 %v115, 4294901760
  %734 = vmatpush1.msra.mxu0 %v733
  %735 = vmatprep.subr.mxu0 0.0
  %736 = vmatpush1.msra.mxu0 0.0
  %737 = vmatprep.subr.mxu0 0.0
  %738 = vmatpush1.msra.mxu0 0.0
  %739 = vmatprep.subr.mxu0 0.0
  %740 = vmatpush1.msra.mxu0 0.0
  %741 = vmatprep.subr.mxu0 0.0
  %742 = vmatpush1.msra.mxu0 0.0
  %743 = vmatprep.subr.mxu0 0.0
  %744 = vmatpush1.msra.mxu0 0.0
  %745 = vmatprep.subr.mxu0 0.0
  %746 = vmatpush1.msra.mxu0 0.0
  %747 = vmatprep.subr.mxu0 0.0
  %748 = vmatpush1.msra.mxu0 0.0
  %749 = vmatprep.subr.mxu0 0.0
  %750 = vmatpush1.msra.mxu0 0.0
  %751 = vmatprep.subr.mxu0 0.0
  %752 = vmatpush1.msra.mxu0 0.0
  %753 = vmatprep.subr.mxu0 0.0
  %754 = vmatpush1.msra.mxu0 0.0
  %755 = vmatprep.subr.mxu0 0.0
  %756 = vmatpush1.msra.mxu0 0.0
  %757 = vmatprep.subr.mxu0 0.0
  %758 = vmatpush1.msra.mxu0 0.0
  %759 = vmatprep.subr.mxu0 0.0
  %760 = vmatpush1.msra.mxu0 0.0
  %761 = vmatprep.subr.mxu0 0.0
  %762 = vmatpush1.msra.mxu0 0.0
  %763 = vmatprep.subr.mxu0 0.0
  %764 = vmatpush1.msra.mxu0 0.0
  %765 = vmatprep.subr.mxu0 0.0
  %766 = vmatpush1.msra.mxu0 0.0
  %767 = vmatprep.subr.mxu0 0.0
  %768 = vmatpush1.msra.mxu0 0.0
  %769 = vmatprep.subr.mxu0 0.0
  %770 = vmatpush1.msra.mxu0 0.0
  %771 = vmatprep.subr.mxu0 0.0
  %772 = vmatpush1.msra.mxu0 0.0
  %773 = vmatprep.subr.mxu0 0.0
  %774 = vmatpush1.msra.mxu0 0.0
  %775 = vmatprep.subr.mxu0 0.0
  %776 = vmatpush1.msra.mxu0 0.0
  %777 = vmatprep.subr.mxu0 0.0
  %778 = vmatpush1.msra.mxu0 0.0
  %779 = vmatprep.subr.mxu0 0.0
  %780 = vmatpush1.msra.mxu0 0.0
  %781 = vmatprep.subr.mxu0 0.0
  %782 = vmatpush1.msra.mxu0 0.0
  %783 = vmatprep.subr.mxu0 0.0
  %784 = vmatpush1.msra.mxu0 0.0
  %785 = vmatprep.subr.mxu0 0.0
  %786 = vmatpush1.msra.mxu0 0.0
  %787 = vmatprep.subr.mxu0 0.0
  %788 = vmatpush1.msra.mxu0 0.0
  %789 = vmatprep.subr.mxu0 0.0
  %790 = vmatpush1.msra.mxu0 0.0
  %791 = vmatprep.subr.mxu0 0.0
  %792 = vmatpush1.msra.mxu0 0.0
  %793 = vmatprep.subr.mxu0 0.0
  %794 = vmatpush1.msra.mxu0 0.0
  %795 = vmatprep.subr.mxu0 0.0
  %796 = vmatpush1.msra.mxu0 0.0
  %797 = vmatprep.mubr.f32.mxu0 0.0
  %v798 = vand.u32 %v99, 4294901760
  %v799 = vsub.f32 %v99, %v798
  %v800 = vand.u32 %v799, 4294901760
  %v801 = vsub.f32 %v799, %v800
  %v802 = vand.u32 %v801, 4294901760
  %803 = vmatmul.mubr.f32.gmra.mrb[0].mxu0 %v802
  %v804 = vpop.f32.mrb[0].mxu0
  %v805 = vadd.f32 %v62, %v804
  %v806 = vpop.f32.mrb[0].mxu0
  %v807 = vadd.f32 %v62, %v806
  %808 = vmatprep.mubr.f32.mxu0 0.0
  %v809 = vand.u32 %v102, 4294901760
  %v810 = vsub.f32 %v102, %v809
  %v811 = vand.u32 %v810, 4294901760
  %v812 = vsub.f32 %v810, %v811
  %v813 = vand.u32 %v812, 4294901760
  %814 = vmatmul.mubr.f32.gmra.mrb[0].mxu0 %v813
  %v815 = vpop.f32.mrb[0].mxu0
  %v816 = vadd.f32 %v67, %v815
  %v817 = vpop.f32.mrb[0].mxu0
  %v818 = vadd.f32 %v67, %v817
  %819 = vmatprep.mubr.f32.mxu0 0.0
  %v820 = vand.u32 %v105, 4294901760
  %v821 = vsub.f32 %v105, %v820
  %v822 = vand.u32 %v821, 4294901760
  %v823 = vsub.f32 %v821, %v822
  %v824 = vand.u32 %v823, 4294901760
  %825 = vmatmul.mubr.f32.gmra.mrb[0].mxu0 %v824
  %v826 = vpop.f32.mrb[0].mxu0
  %v827 = vadd.f32 %v72, %v826
  %v828 = vpop.f32.mrb[0].mxu0
  %v829 = vadd.f32 %v72, %v828
  %830 = vmatprep.mubr.f32.mxu0 0.0
  %v831 = vand.u32 %v108, 4294901760
  %v832 = vsub.f32 %v108, %v831
  %v833 = vand.u32 %v832, 4294901760
  %v834 = vsub.f32 %v832, %v833
  %v835 = vand.u32 %v834, 4294901760
  %836 = vmatmul.mubr.f32.gmra.mrb[0].mxu0 %v835
  %v837 = vpop.f32.mrb[0].mxu0
  %v838 = vadd.f32 %v77, %v837
  %v839 = vpop.f32.mrb[0].mxu0
  %v840 = vadd.f32 %v77, %v839
  %841 = vdwg.mxu0
  %v842 = vand.u32 %v117, 4294901760
  %v843 = vsub.f32 %v117, %v842
  %v844 = vand.u32 %v843, 4294901760
  %v845 = vsub.f32 %v843, %v844
  %v846 = vand.u32 %v845, 4294901760
  %847 = vmatprep.subr.mxu0 %v846
  %v848 = vand.u32 %v115, 4294901760
  %v849 = vsub.f32 %v115, %v848
  %v850 = vand.u32 %v849, 4294901760
  %v851 = vsub.f32 %v849, %v850
  %v852 = vand.u32 %v851, 4294901760
  %853 = vmatpush1.msra.mxu0 %v852
  %854 = vmatprep.subr.mxu0 0.0
  %855 = vmatpush1.msra.mxu0 0.0
  %856 = vmatprep.subr.mxu0 0.0
  %857 = vmatpush1.msra.mxu0 0.0
  %858 = vmatprep.subr.mxu0 0.0
  %859 = vmatpush1.msra.mxu0 0.0
  %860 = vmatprep.subr.mxu0 0.0
  %861 = vmatpush1.msra.mxu0 0.0
  %862 = vmatprep.subr.mxu0 0.0
  %863 = vmatpush1.msra.mxu0 0.0
  %864 = vmatprep.subr.mxu0 0.0
  %865 = vmatpush1.msra.mxu0 0.0
  %866 = vmatprep.subr.mxu0 0.0
  %867 = vmatpush1.msra.mxu0 0.0
  %868 = vmatprep.subr.mxu0 0.0
  %869 = vmatpush1.msra.mxu0 0.0
  %870 = vmatprep.subr.mxu0 0.0
  %871 = vmatpush1.msra.mxu0 0.0
  %872 = vmatprep.subr.mxu0 0.0
  %873 = vmatpush1.msra.mxu0 0.0
  %874 = vmatprep.subr.mxu0 0.0
  %875 = vmatpush1.msra.mxu0 0.0
  %876 = vmatprep.subr.mxu0 0.0
  %877 = vmatpush1.msra.mxu0 0.0
  %878 = vmatprep.subr.mxu0 0.0
  %879 = vmatpush1.msra.mxu0 0.0
  %880 = vmatprep.subr.mxu0 0.0
  %881 = vmatpush1.msra.mxu0 0.0
  %882 = vmatprep.subr.mxu0 0.0
  %883 = vmatpush1.msra.mxu0 0.0
  %884 = vmatprep.subr.mxu0 0.0
  %885 = vmatpush1.msra.mxu0 0.0
  %886 = vmatprep.subr.mxu0 0.0
  %887 = vmatpush1.msra.mxu0 0.0
  %888 = vmatprep.subr.mxu0 0.0
  %889 = vmatpush1.msra.mxu0 0.0
  %890 = vmatprep.subr.mxu0 0.0
  %891 = vmatpush1.msra.mxu0 0.0
  %892 = vmatprep.subr.mxu0 0.0
  %893 = vmatpush1.msra.mxu0 0.0
  %894 = vmatprep.subr.mxu0 0.0
  %895 = vmatpush1.msra.mxu0 0.0
  %896 = vmatprep.subr.mxu0 0.0
  %897 = vmatpush1.msra.mxu0 0.0
  %898 = vmatprep.subr.mxu0 0.0
  %899 = vmatpush1.msra.mxu0 0.0
  %900 = vmatprep.subr.mxu0 0.0
  %901 = vmatpush1.msra.mxu0 0.0
  %902 = vmatprep.subr.mxu0 0.0
  %903 = vmatpush1.msra.mxu0 0.0
  %904 = vmatprep.subr.mxu0 0.0
  %905 = vmatpush1.msra.mxu0 0.0
  %906 = vmatprep.subr.mxu0 0.0
  %907 = vmatpush1.msra.mxu0 0.0
  %908 = vmatprep.subr.mxu0 0.0
  %909 = vmatpush1.msra.mxu0 0.0
  %910 = vmatprep.subr.mxu0 0.0
  %911 = vmatpush1.msra.mxu0 0.0
  %912 = vmatprep.subr.mxu0 0.0
  %913 = vmatpush1.msra.mxu0 0.0
  %914 = vmatprep.subr.mxu0 0.0
  %915 = vmatpush1.msra.mxu0 0.0
  %916 = vmatprep.mubr.f32.mxu0 0.0
  %v917 = vand.u32 %v99, 4294901760
  %918 = vmatmul.mubr.f32.gmra.mrb[0].mxu0 %v917
  %v919 = vpop.f32.mrb[0].mxu0
  %v920 = vadd.f32 %v805, %v919
  %v921 = vpop.f32.mrb[0].mxu0
  %v922 = vadd.f32 %v807, %v921
  %923 = vmatprep.mubr.f32.mxu0 0.0
  %v924 = vand.u32 %v102, 4294901760
  %925 = vmatmul.mubr.f32.gmra.mrb[0].mxu0 %v924
  %v926 = vpop.f32.mrb[0].mxu0
  %v927 = vadd.f32 %v816, %v926
  %v928 = vpop.f32.mrb[0].mxu0
  %v929 = vadd.f32 %v818, %v928
  %930 = vmatprep.mubr.f32.mxu0 0.0
  %v931 = vand.u32 %v105, 4294901760
  %932 = vmatmul.mubr.f32.gmra.mrb[0].mxu0 %v931
  %v933 = vpop.f32.mrb[0].mxu0
  %v934 = vadd.f32 %v827, %v933
  %v935 = vpop.f32.mrb[0].mxu0
  %v936 = vadd.f32 %v829, %v935
  %937 = vmatprep.mubr.f32.mxu0 0.0
  %v938 = vand.u32 %v108, 4294901760
  %939 = vmatmul.mubr.f32.gmra.mrb[0].mxu0 %v938
  %v940 = vpop.f32.mrb[0].mxu0
  %v941 = vadd.f32 %v838, %v940
  %v942 = vpop.f32.mrb[0].mxu0
  %v943 = vadd.f32 %v840, %v942
  %944 = vdwg.mxu0
  %v945 = vand.u32 %v117, 4294901760
  %v946 = vsub.f32 %v117, %v945
  %947 = vmatprep.subr.mxu0 %v946
  %v948 = vand.u32 %v115, 4294901760
  %v949 = vsub.f32 %v115, %v948
  %950 = vmatpush1.msra.mxu0 %v949
  %951 = vmatprep.subr.mxu0 0.0
  %952 = vmatpush1.msra.mxu0 0.0
  %953 = vmatprep.subr.mxu0 0.0
  %954 = vmatpush1.msra.mxu0 0.0
  %955 = vmatprep.subr.mxu0 0.0
  %956 = vmatpush1.msra.mxu0 0.0
  %957 = vmatprep.subr.mxu0 0.0
  %958 = vmatpush1.msra.mxu0 0.0
  %959 = vmatprep.subr.mxu0 0.0
  %960 = vmatpush1.msra.mxu0 0.0
  %961 = vmatprep.subr.mxu0 0.0
  %962 = vmatpush1.msra.mxu0 0.0
  %963 = vmatprep.subr.mxu0 0.0
  %964 = vmatpush1.msra.mxu0 0.0
  %965 = vmatprep.subr.mxu0 0.0
  %966 = vmatpush1.msra.mxu0 0.0
  %967 = vmatprep.subr.mxu0 0.0
  %968 = vmatpush1.msra.mxu0 0.0
  %969 = vmatprep.subr.mxu0 0.0
  %970 = vmatpush1.msra.mxu0 0.0
  %971 = vmatprep.subr.mxu0 0.0
  %972 = vmatpush1.msra.mxu0 0.0
  %973 = vmatprep.subr.mxu0 0.0
  %974 = vmatpush1.msra.mxu0 0.0
  %975 = vmatprep.subr.mxu0 0.0
  %976 = vmatpush1.msra.mxu0 0.0
  %977 = vmatprep.subr.mxu0 0.0
  %978 = vmatpush1.msra.mxu0 0.0
  %979 = vmatprep.subr.mxu0 0.0
  %980 = vmatpush1.msra.mxu0 0.0
  %981 = vmatprep.subr.mxu0 0.0
  %982 = vmatpush1.msra.mxu0 0.0
  %983 = vmatprep.subr.mxu0 0.0
  %984 = vmatpush1.msra.mxu0 0.0
  %985 = vmatprep.subr.mxu0 0.0
  %986 = vmatpush1.msra.mxu0 0.0
  %987 = vmatprep.subr.mxu0 0.0
  %988 = vmatpush1.msra.mxu0 0.0
  %989 = vmatprep.subr.mxu0 0.0
  %990 = vmatpush1.msra.mxu0 0.0
  %991 = vmatprep.subr.mxu0 0.0
  %992 = vmatpush1.msra.mxu0 0.0
  %993 = vmatprep.subr.mxu0 0.0
  %994 = vmatpush1.msra.mxu0 0.0
  %995 = vmatprep.subr.mxu0 0.0
  %996 = vmatpush1.msra.mxu0 0.0
  %997 = vmatprep.subr.mxu0 0.0
  %998 = vmatpush1.msra.mxu0 0.0
  %999 = vmatprep.subr.mxu0 0.0
  %1000 = vmatpush1.msra.mxu0 0.0
  %1001 = vmatprep.subr.mxu0 0.0
  %1002 = vmatpush1.msra.mxu0 0.0
  %1003 = vmatprep.subr.mxu0 0.0
  %1004 = vmatpush1.msra.mxu0 0.0
  %1005 = vmatprep.subr.mxu0 0.0
  %1006 = vmatpush1.msra.mxu0 0.0
  %1007 = vmatprep.subr.mxu0 0.0
  %1008 = vmatpush1.msra.mxu0 0.0
  %1009 = vmatprep.subr.mxu0 0.0
  %1010 = vmatpush1.msra.mxu0 0.0
  %1011 = vmatprep.subr.mxu0 0.0
  %1012 = vmatpush1.msra.mxu0 0.0
  %1013 = vmatprep.mubr.f32.mxu0 0.0
  %v1014 = vand.u32 %v99, 4294901760
  %v1015 = vsub.f32 %v99, %v1014
  %1016 = vmatmul.mubr.f32.gmra.mrb[0].mxu0 %v1015
  %v1017 = vpop.f32.mrb[0].mxu0
  %v1018 = vadd.f32 %v920, %v1017
  %v1019 = vpop.f32.mrb[0].mxu0
  %v1020 = vadd.f32 %v922, %v1019
  %1021 = vmatprep.mubr.f32.mxu0 0.0
  %v1022 = vand.u32 %v102, 4294901760
  %v1023 = vsub.f32 %v102, %v1022
  %1024 = vmatmul.mubr.f32.gmra.mrb[0].mxu0 %v1023
  %v1025 = vpop.f32.mrb[0].mxu0
  %v1026 = vadd.f32 %v927, %v1025
  %v1027 = vpop.f32.mrb[0].mxu0
  %v1028 = vadd.f32 %v929, %v1027
  %1029 = vmatprep.mubr.f32.mxu0 0.0
  %v1030 = vand.u32 %v105, 4294901760
  %v1031 = vsub.f32 %v105, %v1030
  %1032 = vmatmul.mubr.f32.gmra.mrb[0].mxu0 %v1031
  %v1033 = vpop.f32.mrb[0].mxu0
  %v1034 = vadd.f32 %v934, %v1033
  %v1035 = vpop.f32.mrb[0].mxu0
  %v1036 = vadd.f32 %v936, %v1035
  %1037 = vmatprep.mubr.f32.mxu0 0.0
  %v1038 = vand.u32 %v108, 4294901760
  %v1039 = vsub.f32 %v108, %v1038
  %1040 = vmatmul.mubr.f32.gmra.mrb[0].mxu0 %v1039
  %v1041 = vpop.f32.mrb[0].mxu0
  %v1042 = vadd.f32 %v941, %v1041
  %v1043 = vpop.f32.mrb[0].mxu0
  %v1044 = vadd.f32 %v943, %v1043
  %1045 = vdwg.mxu0
  %v1046 = vand.u32 %v117, 4294901760
  %1047 = vmatprep.subr.mxu0 %v1046
  %v1048 = vand.u32 %v115, 4294901760
  %1049 = vmatpush1.msra.mxu0 %v1048
  %1050 = vmatprep.subr.mxu0 0.0
  %1051 = vmatpush1.msra.mxu0 0.0
  %1052 = vmatprep.subr.mxu0 0.0
  %1053 = vmatpush1.msra.mxu0 0.0
  %1054 = vmatprep.subr.mxu0 0.0
  %1055 = vmatpush1.msra.mxu0 0.0
  %1056 = vmatprep.subr.mxu0 0.0
  %1057 = vmatpush1.msra.mxu0 0.0
  %1058 = vmatprep.subr.mxu0 0.0
  %1059 = vmatpush1.msra.mxu0 0.0
  %1060 = vmatprep.subr.mxu0 0.0
  %1061 = vmatpush1.msra.mxu0 0.0
  %1062 = vmatprep.subr.mxu0 0.0
  %1063 = vmatpush1.msra.mxu0 0.0
  %1064 = vmatprep.subr.mxu0 0.0
  %1065 = vmatpush1.msra.mxu0 0.0
  %1066 = vmatprep.subr.mxu0 0.0
  %1067 = vmatpush1.msra.mxu0 0.0
  %1068 = vmatprep.subr.mxu0 0.0
  %1069 = vmatpush1.msra.mxu0 0.0
  %1070 = vmatprep.subr.mxu0 0.0
  %1071 = vmatpush1.msra.mxu0 0.0
  %1072 = vmatprep.subr.mxu0 0.0
  %1073 = vmatpush1.msra.mxu0 0.0
  %1074 = vmatprep.subr.mxu0 0.0
  %1075 = vmatpush1.msra.mxu0 0.0
  %1076 = vmatprep.subr.mxu0 0.0
  %1077 = vmatpush1.msra.mxu0 0.0
  %1078 = vmatprep.subr.mxu0 0.0
  %1079 = vmatpush1.msra.mxu0 0.0
  %1080 = vmatprep.subr.mxu0 0.0
  %1081 = vmatpush1.msra.mxu0 0.0
  %1082 = vmatprep.subr.mxu0 0.0
  %1083 = vmatpush1.msra.mxu0 0.0
  %1084 = vmatprep.subr.mxu0 0.0
  %1085 = vmatpush1.msra.mxu0 0.0
  %1086 = vmatprep.subr.mxu0 0.0
  %1087 = vmatpush1.msra.mxu0 0.0
  %1088 = vmatprep.subr.mxu0 0.0
  %1089 = vmatpush1.msra.mxu0 0.0
  %1090 = vmatprep.subr.mxu0 0.0
  %1091 = vmatpush1.msra.mxu0 0.0
  %1092 = vmatprep.subr.mxu0 0.0
  %1093 = vmatpush1.msra.mxu0 0.0
  %1094 = vmatprep.subr.mxu0 0.0
  %1095 = vmatpush1.msra.mxu0 0.0
  %1096 = vmatprep.subr.mxu0 0.0
  %1097 = vmatpush1.msra.mxu0 0.0
  %1098 = vmatprep.subr.mxu0 0.0
  %1099 = vmatpush1.msra.mxu0 0.0
  %1100 = vmatprep.subr.mxu0 0.0
  %1101 = vmatpush1.msra.mxu0 0.0
  %1102 = vmatprep.subr.mxu0 0.0
  %1103 = vmatpush1.msra.mxu0 0.0
  %1104 = vmatprep.subr.mxu0 0.0
  %1105 = vmatpush1.msra.mxu0 0.0
  %1106 = vmatprep.subr.mxu0 0.0
  %1107 = vmatpush1.msra.mxu0 0.0
  %1108 = vmatprep.subr.mxu0 0.0
  %1109 = vmatpush1.msra.mxu0 0.0
  %1110 = vmatprep.subr.mxu0 0.0
  %1111 = vmatpush1.msra.mxu0 0.0
  %1112 = vmatprep.mubr.f32.mxu0 0.0
  %v1113 = vand.u32 %v99, 4294901760
  %v1114 = vsub.f32 %v99, %v1113
  %v1115 = vand.u32 %v1114, 4294901760
  %1116 = vmatmul.mubr.f32.gmra.mrb[0].mxu0 %v1115
  %v1117 = vpop.f32.mrb[0].mxu0
  %v1118 = vadd.f32 %v1018, %v1117
  %v1119 = vpop.f32.mrb[0].mxu0
  %v1120 = vadd.f32 %v1020, %v1119
  %1121 = vmatprep.mubr.f32.mxu0 0.0
  %v1122 = vand.u32 %v102, 4294901760
  %v1123 = vsub.f32 %v102, %v1122
  %v1124 = vand.u32 %v1123, 4294901760
  %1125 = vmatmul.mubr.f32.gmra.mrb[0].mxu0 %v1124
  %v1126 = vpop.f32.mrb[0].mxu0
  %v1127 = vadd.f32 %v1026, %v1126
  %v1128 = vpop.f32.mrb[0].mxu0
  %v1129 = vadd.f32 %v1028, %v1128
  %1130 = vmatprep.mubr.f32.mxu0 0.0
  %v1131 = vand.u32 %v105, 4294901760
  %v1132 = vsub.f32 %v105, %v1131
  %v1133 = vand.u32 %v1132, 4294901760
  %1134 = vmatmul.mubr.f32.gmra.mrb[0].mxu0 %v1133
  %v1135 = vpop.f32.mrb[0].mxu0
  %v1136 = vadd.f32 %v1034, %v1135
  %v1137 = vpop.f32.mrb[0].mxu0
  %v1138 = vadd.f32 %v1036, %v1137
  %1139 = vmatprep.mubr.f32.mxu0 0.0
  %v1140 = vand.u32 %v108, 4294901760
  %v1141 = vsub.f32 %v108, %v1140
  %v1142 = vand.u32 %v1141, 4294901760
  %1143 = vmatmul.mubr.f32.gmra.mrb[0].mxu0 %v1142
  %v1144 = vpop.f32.mrb[0].mxu0
  %v1145 = vadd.f32 %v1042, %v1144
  %v1146 = vpop.f32.mrb[0].mxu0
  %v1147 = vadd.f32 %v1044, %v1146
  %1148 = vdwg.mxu0
  %v1149 = vand.u32 %v117, 4294901760
  %v1150 = vsub.f32 %v117, %v1149
  %v1151 = vand.u32 %v1150, 4294901760
  %1152 = vmatprep.subr.mxu0 %v1151
  %v1153 = vand.u32 %v115, 4294901760
  %v1154 = vsub.f32 %v115, %v1153
  %v1155 = vand.u32 %v1154, 4294901760
  %1156 = vmatpush1.msra.mxu0 %v1155
  %1157 = vmatprep.subr.mxu0 0.0
  %1158 = vmatpush1.msra.mxu0 0.0
  %1159 = vmatprep.subr.mxu0 0.0
  %1160 = vmatpush1.msra.mxu0 0.0
  %1161 = vmatprep.subr.mxu0 0.0
  %1162 = vmatpush1.msra.mxu0 0.0
  %1163 = vmatprep.subr.mxu0 0.0
  %1164 = vmatpush1.msra.mxu0 0.0
  %1165 = vmatprep.subr.mxu0 0.0
  %1166 = vmatpush1.msra.mxu0 0.0
  %1167 = vmatprep.subr.mxu0 0.0
  %1168 = vmatpush1.msra.mxu0 0.0
  %1169 = vmatprep.subr.mxu0 0.0
  %1170 = vmatpush1.msra.mxu0 0.0
  %1171 = vmatprep.subr.mxu0 0.0
  %1172 = vmatpush1.msra.mxu0 0.0
  %1173 = vmatprep.subr.mxu0 0.0
  %1174 = vmatpush1.msra.mxu0 0.0
  %1175 = vmatprep.subr.mxu0 0.0
  %1176 = vmatpush1.msra.mxu0 0.0
  %1177 = vmatprep.subr.mxu0 0.0
  %1178 = vmatpush1.msra.mxu0 0.0
  %1179 = vmatprep.subr.mxu0 0.0
  %1180 = vmatpush1.msra.mxu0 0.0
  %1181 = vmatprep.subr.mxu0 0.0
  %1182 = vmatpush1.msra.mxu0 0.0
  %1183 = vmatprep.subr.mxu0 0.0
  %1184 = vmatpush1.msra.mxu0 0.0
  %1185 = vmatprep.subr.mxu0 0.0
  %1186 = vmatpush1.msra.mxu0 0.0
  %1187 = vmatprep.subr.mxu0 0.0
  %1188 = vmatpush1.msra.mxu0 0.0
  %1189 = vmatprep.subr.mxu0 0.0
  %1190 = vmatpush1.msra.mxu0 0.0
  %1191 = vmatprep.subr.mxu0 0.0
  %1192 = vmatpush1.msra.mxu0 0.0
  %1193 = vmatprep.subr.mxu0 0.0
  %1194 = vmatpush1.msra.mxu0 0.0
  %1195 = vmatprep.subr.mxu0 0.0
  %1196 = vmatpush1.msra.mxu0 0.0
  %1197 = vmatprep.subr.mxu0 0.0
  %1198 = vmatpush1.msra.mxu0 0.0
  %1199 = vmatprep.subr.mxu0 0.0
  %1200 = vmatpush1.msra.mxu0 0.0
  %1201 = vmatprep.subr.mxu0 0.0
  %1202 = vmatpush1.msra.mxu0 0.0
  %1203 = vmatprep.subr.mxu0 0.0
  %1204 = vmatpush1.msra.mxu0 0.0
  %1205 = vmatprep.subr.mxu0 0.0
  %1206 = vmatpush1.msra.mxu0 0.0
  %1207 = vmatprep.subr.mxu0 0.0
  %1208 = vmatpush1.msra.mxu0 0.0
  %1209 = vmatprep.subr.mxu0 0.0
  %1210 = vmatpush1.msra.mxu0 0.0
  %1211 = vmatprep.subr.mxu0 0.0
  %1212 = vmatpush1.msra.mxu0 0.0
  %1213 = vmatprep.subr.mxu0 0.0
  %1214 = vmatpush1.msra.mxu0 0.0
  %1215 = vmatprep.subr.mxu0 0.0
  %1216 = vmatpush1.msra.mxu0 0.0
  %1217 = vmatprep.subr.mxu0 0.0
  %1218 = vmatpush1.msra.mxu0 0.0
  %1219 = vmatprep.mubr.f32.mxu0 0.0
  %v1220 = vand.u32 %v99, 4294901760
  %1221 = vmatmul.mubr.f32.gmra.mrb[0].mxu0 %v1220
  %v1222 = vpop.f32.mrb[0].mxu0
  %v1223 = vadd.f32 %v1118, %v1222
  %v1224 = vpop.f32.mrb[0].mxu0
  %v1225 = vadd.f32 %v1120, %v1224
  %1226 = vmatprep.mubr.f32.mxu0 0.0
  %v1227 = vand.u32 %v102, 4294901760
  %1228 = vmatmul.mubr.f32.gmra.mrb[0].mxu0 %v1227
  %v1229 = vpop.f32.mrb[0].mxu0
  %v1230 = vadd.f32 %v1127, %v1229
  %v1231 = vpop.f32.mrb[0].mxu0
  %v1232 = vadd.f32 %v1129, %v1231
  %1233 = vmatprep.mubr.f32.mxu0 0.0
  %v1234 = vand.u32 %v105, 4294901760
  %1235 = vmatmul.mubr.f32.gmra.mrb[0].mxu0 %v1234
  %v1236 = vpop.f32.mrb[0].mxu0
  %v1237 = vadd.f32 %v1136, %v1236
  %v1238 = vpop.f32.mrb[0].mxu0
  %v1239 = vadd.f32 %v1138, %v1238
  %1240 = vmatprep.mubr.f32.mxu0 0.0
  %v1241 = vand.u32 %v108, 4294901760
  %1242 = vmatmul.mubr.f32.gmra.mrb[0].mxu0 %v1241
  %v1243 = vpop.f32.mrb[0].mxu0
  %v1244 = vadd.f32 %v1145, %v1243
  %v1245 = vpop.f32.mrb[0].mxu0
  %v1246 = vadd.f32 %v1147, %v1245
  %1247 = vdwg.mxu0
  %v1248 = vand.u32 %v117, 4294901760
  %1249 = vmatprep.subr.mxu0 %v1248
  %v1250 = vand.u32 %v115, 4294901760
  %1251 = vmatpush1.msra.mxu0 %v1250
  %1252 = vmatprep.subr.mxu0 0.0
  %1253 = vmatpush1.msra.mxu0 0.0
  %1254 = vmatprep.subr.mxu0 0.0
  %1255 = vmatpush1.msra.mxu0 0.0
  %1256 = vmatprep.subr.mxu0 0.0
  %1257 = vmatpush1.msra.mxu0 0.0
  %1258 = vmatprep.subr.mxu0 0.0
  %1259 = vmatpush1.msra.mxu0 0.0
  %1260 = vmatprep.subr.mxu0 0.0
  %1261 = vmatpush1.msra.mxu0 0.0
  %1262 = vmatprep.subr.mxu0 0.0
  %1263 = vmatpush1.msra.mxu0 0.0
  %1264 = vmatprep.subr.mxu0 0.0
  %1265 = vmatpush1.msra.mxu0 0.0
  %1266 = vmatprep.subr.mxu0 0.0
  %1267 = vmatpush1.msra.mxu0 0.0
  %1268 = vmatprep.subr.mxu0 0.0
  %1269 = vmatpush1.msra.mxu0 0.0
  %1270 = vmatprep.subr.mxu0 0.0
  %1271 = vmatpush1.msra.mxu0 0.0
  %1272 = vmatprep.subr.mxu0 0.0
  %1273 = vmatpush1.msra.mxu0 0.0
  %1274 = vmatprep.subr.mxu0 0.0
  %1275 = vmatpush1.msra.mxu0 0.0
  %1276 = vmatprep.subr.mxu0 0.0
  %1277 = vmatpush1.msra.mxu0 0.0
  %1278 = vmatprep.subr.mxu0 0.0
  %1279 = vmatpush1.msra.mxu0 0.0
  %1280 = vmatprep.subr.mxu0 0.0
  %1281 = vmatpush1.msra.mxu0 0.0
  %1282 = vmatprep.subr.mxu0 0.0
  %1283 = vmatpush1.msra.mxu0 0.0
  %1284 = vmatprep.subr.mxu0 0.0
  %1285 = vmatpush1.msra.mxu0 0.0
  %1286 = vmatprep.subr.mxu0 0.0
  %1287 = vmatpush1.msra.mxu0 0.0
  %1288 = vmatprep.subr.mxu0 0.0
  %1289 = vmatpush1.msra.mxu0 0.0
  %1290 = vmatprep.subr.mxu0 0.0
  %1291 = vmatpush1.msra.mxu0 0.0
  %1292 = vmatprep.subr.mxu0 0.0
  %1293 = vmatpush1.msra.mxu0 0.0
  %1294 = vmatprep.subr.mxu0 0.0
  %1295 = vmatpush1.msra.mxu0 0.0
  %1296 = vmatprep.subr.mxu0 0.0
  %1297 = vmatpush1.msra.mxu0 0.0
  %1298 = vmatprep.subr.mxu0 0.0
  %1299 = vmatpush1.msra.mxu0 0.0
  %1300 = vmatprep.subr.mxu0 0.0
  %1301 = vmatpush1.msra.mxu0 0.0
  %1302 = vmatprep.subr.mxu0 0.0
  %1303 = vmatpush1.msra.mxu0 0.0
  %1304 = vmatprep.subr.mxu0 0.0
  %1305 = vmatpush1.msra.mxu0 0.0
  %1306 = vmatprep.subr.mxu0 0.0
  %1307 = vmatpush1.msra.mxu0 0.0
  %1308 = vmatprep.subr.mxu0 0.0
  %1309 = vmatpush1.msra.mxu0 0.0
  %1310 = vmatprep.subr.mxu0 0.0
  %1311 = vmatpush1.msra.mxu0 0.0
  %1312 = vmatprep.subr.mxu0 0.0
  %1313 = vmatpush1.msra.mxu0 0.0
  %1314 = vmatprep.mubr.f32.mxu0 0.0
  %v1315 = vand.u32 %v99, 4294901760
  %1316 = vmatmul.mubr.f32.gmra.mrb[0].mxu0 %v1315
  %v1317 = vpop.f32.mrb[0].mxu0
  %v1318 = vadd.f32 %v1223, %v1317
  %v1319 = vpop.f32.mrb[0].mxu0
  %v1320 = vadd.f32 %v1225, %v1319
  %1321 = vmatprep.mubr.f32.mxu0 0.0
  %v1322 = vand.u32 %v102, 4294901760
  %1323 = vmatmul.mubr.f32.gmra.mrb[0].mxu0 %v1322
  %v1324 = vpop.f32.mrb[0].mxu0
  %v1325 = vadd.f32 %v1230, %v1324
  %v1326 = vpop.f32.mrb[0].mxu0
  %v1327 = vadd.f32 %v1232, %v1326
  %1328 = vmatprep.mubr.f32.mxu0 0.0
  %v1329 = vand.u32 %v105, 4294901760
  %1330 = vmatmul.mubr.f32.gmra.mrb[0].mxu0 %v1329
  %v1331 = vpop.f32.mrb[0].mxu0
  %v1332 = vadd.f32 %v1237, %v1331
  %v1333 = vpop.f32.mrb[0].mxu0
  %v1334 = vadd.f32 %v1239, %v1333
  %1335 = vmatprep.mubr.f32.mxu0 0.0
  %v1336 = vand.u32 %v108, 4294901760
  %1337 = vmatmul.mubr.f32.gmra.mrb[0].mxu0 %v1336
  %v1338 = vpop.f32.mrb[0].mxu0
  %v1339 = vadd.f32 %v1244, %v1338
  %v1340 = vpop.f32.mrb[0].mxu0
  %v1341 = vadd.f32 %v1246, %v1340
  %1342 = vdwg.mxu0
  %v1343 = vmul.f32 %v706, 0.31830987
  %v1344 = vmul.f32 %v708, 0.31830987
  %v1345 = vmul.f32 %v1318, 0.31830987
  %v1346 = vmul.f32 %v1320, 0.31830987
  %v1347 = vmul.f32 %v713, 0.31830987
  %v1348 = vmul.f32 %v715, 0.31830987
  %v1349 = vmul.f32 %v1325, 0.31830987
  %v1350 = vmul.f32 %v1327, 0.31830987
  %v1351 = vmul.f32 %v720, 0.31830987
  %v1352 = vmul.f32 %v722, 0.31830987
  %v1353 = vmul.f32 %v1332, 0.31830987
  %v1354 = vmul.f32 %v1334, 0.31830987
  %v1355 = vmul.f32 %v727, 0.31830987
  %v1356 = vmul.f32 %v729, 0.31830987
  %v1357 = vmul.f32 %v1339, 0.31830987
  %v1358 = vmul.f32 %v1341, 0.31830987
  %v1359 = vround.ne.pseudo %v1343
  %v1360 = vround.ne.pseudo %v1344
  %v1361 = vround.ne.pseudo %v1345
  %v1362 = vround.ne.pseudo %v1346
  %v1363 = vround.ne.pseudo %v1347
  %v1364 = vround.ne.pseudo %v1348
  %v1365 = vround.ne.pseudo %v1349
  %v1366 = vround.ne.pseudo %v1350
  %v1367 = vround.ne.pseudo %v1351
  %v1368 = vround.ne.pseudo %v1352
  %v1369 = vround.ne.pseudo %v1353
  %v1370 = vround.ne.pseudo %v1354
  %v1371 = vround.ne.pseudo %v1355
  %v1372 = vround.ne.pseudo %v1356
  %v1373 = vround.ne.pseudo %v1357
  %v1374 = vround.ne.pseudo %v1358
  %v1375 = vmul.f32 %v1359, 3.140625
  %v1376 = vmul.f32 %v1360, 3.140625
  %v1377 = vmul.f32 %v1361, 3.140625
  %v1378 = vmul.f32 %v1362, 3.140625
  %v1379 = vmul.f32 %v1363, 3.140625
  %v1380 = vmul.f32 %v1364, 3.140625
  %v1381 = vmul.f32 %v1365, 3.140625
  %v1382 = vmul.f32 %v1366, 3.140625
  %v1383 = vmul.f32 %v1367, 3.140625
  %v1384 = vmul.f32 %v1368, 3.140625
  %v1385 = vmul.f32 %v1369, 3.140625
  %v1386 = vmul.f32 %v1370, 3.140625
  %v1387 = vmul.f32 %v1371, 3.140625
  %v1388 = vmul.f32 %v1372, 3.140625
  %v1389 = vmul.f32 %v1373, 3.140625
  %v1390 = vmul.f32 %v1374, 3.140625
  %v1391 = vsub.f32 %v706, %v1375
  %v1392 = vsub.f32 %v708, %v1376
  %v1393 = vsub.f32 %v1318, %v1377
  %v1394 = vsub.f32 %v1320, %v1378
  %v1395 = vsub.f32 %v713, %v1379
  %v1396 = vsub.f32 %v715, %v1380
  %v1397 = vsub.f32 %v1325, %v1381
  %v1398 = vsub.f32 %v1327, %v1382
  %v1399 = vsub.f32 %v720, %v1383
  %v1400 = vsub.f32 %v722, %v1384
  %v1401 = vsub.f32 %v1332, %v1385
  %v1402 = vsub.f32 %v1334, %v1386
  %v1403 = vsub.f32 %v727, %v1387
  %v1404 = vsub.f32 %v729, %v1388
  %v1405 = vsub.f32 %v1339, %v1389
  %v1406 = vsub.f32 %v1341, %v1390
  %v1407 = vmul.f32 %v1359, 0.0009676536
  %v1408 = vmul.f32 %v1360, 0.0009676536
  %v1409 = vmul.f32 %v1361, 0.0009676536
  %v1410 = vmul.f32 %v1362, 0.0009676536
  %v1411 = vmul.f32 %v1363, 0.0009676536
  %v1412 = vmul.f32 %v1364, 0.0009676536
  %v1413 = vmul.f32 %v1365, 0.0009676536
  %v1414 = vmul.f32 %v1366, 0.0009676536
  %v1415 = vmul.f32 %v1367, 0.0009676536
  %v1416 = vmul.f32 %v1368, 0.0009676536
  %v1417 = vmul.f32 %v1369, 0.0009676536
  %v1418 = vmul.f32 %v1370, 0.0009676536
  %v1419 = vmul.f32 %v1371, 0.0009676536
  %v1420 = vmul.f32 %v1372, 0.0009676536
  %v1421 = vmul.f32 %v1373, 0.0009676536
  %v1422 = vmul.f32 %v1374, 0.0009676536
  %v1423 = vsub.f32 %v1391, %v1407
  %v1424 = vsub.f32 %v1392, %v1408
  %v1425 = vsub.f32 %v1393, %v1409
  %v1426 = vsub.f32 %v1394, %v1410
  %v1427 = vsub.f32 %v1395, %v1411
  %v1428 = vsub.f32 %v1396, %v1412
  %v1429 = vsub.f32 %v1397, %v1413
  %v1430 = vsub.f32 %v1398, %v1414
  %v1431 = vsub.f32 %v1399, %v1415
  %v1432 = vsub.f32 %v1400, %v1416
  %v1433 = vsub.f32 %v1401, %v1417
  %v1434 = vsub.f32 %v1402, %v1418
  %v1435 = vsub.f32 %v1403, %v1419
  %v1436 = vsub.f32 %v1404, %v1420
  %v1437 = vsub.f32 %v1405, %v1421
  %v1438 = vsub.f32 %v1406, %v1422
  %v1439 = vmul.f32 %v1423, %v1423
  %v1440 = vmul.f32 %v1424, %v1424
  %v1441 = vmul.f32 %v1425, %v1425
  %v1442 = vmul.f32 %v1426, %v1426
  %v1443 = vmul.f32 %v1427, %v1427
  %v1444 = vmul.f32 %v1428, %v1428
  %v1445 = vmul.f32 %v1429, %v1429
  %v1446 = vmul.f32 %v1430, %v1430
  %v1447 = vmul.f32 %v1431, %v1431
  %v1448 = vmul.f32 %v1432, %v1432
  %v1449 = vmul.f32 %v1433, %v1433
  %v1450 = vmul.f32 %v1434, %v1434
  %v1451 = vmul.f32 %v1435, %v1435
  %v1452 = vmul.f32 %v1436, %v1436
  %v1453 = vmul.f32 %v1437, %v1437
  %v1454 = vmul.f32 %v1438, %v1438
  %v1455 = vmul.f32 %v1423, %v1439
  %v1456 = vmul.f32 %v1424, %v1440
  %v1457 = vmul.f32 %v1425, %v1441
  %v1458 = vmul.f32 %v1426, %v1442
  %v1459 = vmul.f32 %v1427, %v1443
  %v1460 = vmul.f32 %v1428, %v1444
  %v1461 = vmul.f32 %v1429, %v1445
  %v1462 = vmul.f32 %v1430, %v1446
  %v1463 = vmul.f32 %v1431, %v1447
  %v1464 = vmul.f32 %v1432, %v1448
  %v1465 = vmul.f32 %v1433, %v1449
  %v1466 = vmul.f32 %v1434, %v1450
  %v1467 = vmul.f32 %v1435, %v1451
  %v1468 = vmul.f32 %v1436, %v1452
  %v1469 = vmul.f32 %v1437, %v1453
  %v1470 = vmul.f32 %v1438, %v1454
  %v1471 = vmul.f32 %v1439, -0.00019515296
  %v1472 = vmul.f32 %v1440, -0.00019515296
  %v1473 = vmul.f32 %v1441, -0.00019515296
  %v1474 = vmul.f32 %v1442, -0.00019515296
  %v1475 = vmul.f32 %v1443, -0.00019515296
  %v1476 = vmul.f32 %v1444, -0.00019515296
  %v1477 = vmul.f32 %v1445, -0.00019515296
  %v1478 = vmul.f32 %v1446, -0.00019515296
  %v1479 = vmul.f32 %v1447, -0.00019515296
  %v1480 = vmul.f32 %v1448, -0.00019515296
  %v1481 = vmul.f32 %v1449, -0.00019515296
  %v1482 = vmul.f32 %v1450, -0.00019515296
  %v1483 = vmul.f32 %v1451, -0.00019515296
  %v1484 = vmul.f32 %v1452, -0.00019515296
  %v1485 = vmul.f32 %v1453, -0.00019515296
  %v1486 = vmul.f32 %v1454, -0.00019515296
  %v1487 = vadd.f32 %v1471, 0.008332161
  %v1488 = vadd.f32 %v1472, 0.008332161
  %v1489 = vadd.f32 %v1473, 0.008332161
  %v1490 = vadd.f32 %v1474, 0.008332161
  %v1491 = vadd.f32 %v1475, 0.008332161
  %v1492 = vadd.f32 %v1476, 0.008332161
  %v1493 = vadd.f32 %v1477, 0.008332161
  %v1494 = vadd.f32 %v1478, 0.008332161
  %v1495 = vadd.f32 %v1479, 0.008332161
  %v1496 = vadd.f32 %v1480, 0.008332161
  %v1497 = vadd.f32 %v1481, 0.008332161
  %v1498 = vadd.f32 %v1482, 0.008332161
  %v1499 = vadd.f32 %v1483, 0.008332161
  %v1500 = vadd.f32 %v1484, 0.008332161
  %v1501 = vadd.f32 %v1485, 0.008332161
  %v1502 = vadd.f32 %v1486, 0.008332161
  %v1503 = vmul.f32 %v1439, %v1487
  %v1504 = vmul.f32 %v1440, %v1488
  %v1505 = vmul.f32 %v1441, %v1489
  %v1506 = vmul.f32 %v1442, %v1490
  %v1507 = vmul.f32 %v1443, %v1491
  %v1508 = vmul.f32 %v1444, %v1492
  %v1509 = vmul.f32 %v1445, %v1493
  %v1510 = vmul.f32 %v1446, %v1494
  %v1511 = vmul.f32 %v1447, %v1495
  %v1512 = vmul.f32 %v1448, %v1496
  %v1513 = vmul.f32 %v1449, %v1497
  %v1514 = vmul.f32 %v1450, %v1498
  %v1515 = vmul.f32 %v1451, %v1499
  %v1516 = vmul.f32 %v1452, %v1500
  %v1517 = vmul.f32 %v1453, %v1501
  %v1518 = vmul.f32 %v1454, %v1502
  %v1519 = vadd.f32 %v1503, -0.16666655
  %v1520 = vadd.f32 %v1504, -0.16666655
  %v1521 = vadd.f32 %v1505, -0.16666655
  %v1522 = vadd.f32 %v1506, -0.16666655
  %v1523 = vadd.f32 %v1507, -0.16666655
  %v1524 = vadd.f32 %v1508, -0.16666655
  %v1525 = vadd.f32 %v1509, -0.16666655
  %v1526 = vadd.f32 %v1510, -0.16666655
  %v1527 = vadd.f32 %v1511, -0.16666655
  %v1528 = vadd.f32 %v1512, -0.16666655
  %v1529 = vadd.f32 %v1513, -0.16666655
  %v1530 = vadd.f32 %v1514, -0.16666655
  %v1531 = vadd.f32 %v1515, -0.16666655
  %v1532 = vadd.f32 %v1516, -0.16666655
  %v1533 = vadd.f32 %v1517, -0.16666655
  %v1534 = vadd.f32 %v1518, -0.16666655
  %v1535 = vmul.f32 %v1455, %v1519
  %v1536 = vmul.f32 %v1456, %v1520
  %v1537 = vmul.f32 %v1457, %v1521
  %v1538 = vmul.f32 %v1458, %v1522
  %v1539 = vmul.f32 %v1459, %v1523
  %v1540 = vmul.f32 %v1460, %v1524
  %v1541 = vmul.f32 %v1461, %v1525
  %v1542 = vmul.f32 %v1462, %v1526
  %v1543 = vmul.f32 %v1463, %v1527
  %v1544 = vmul.f32 %v1464, %v1528
  %v1545 = vmul.f32 %v1465, %v1529
  %v1546 = vmul.f32 %v1466, %v1530
  %v1547 = vmul.f32 %v1467, %v1531
  %v1548 = vmul.f32 %v1468, %v1532
  %v1549 = vmul.f32 %v1469, %v1533
  %v1550 = vmul.f32 %v1470, %v1534
  %v1551 = vadd.f32 %v1423, %v1535
  %v1552 = vadd.f32 %v1424, %v1536
  %v1553 = vadd.f32 %v1425, %v1537
  %v1554 = vadd.f32 %v1426, %v1538
  %v1555 = vadd.f32 %v1427, %v1539
  %v1556 = vadd.f32 %v1428, %v1540
  %v1557 = vadd.f32 %v1429, %v1541
  %v1558 = vadd.f32 %v1430, %v1542
  %v1559 = vadd.f32 %v1431, %v1543
  %v1560 = vadd.f32 %v1432, %v1544
  %v1561 = vadd.f32 %v1433, %v1545
  %v1562 = vadd.f32 %v1434, %v1546
  %v1563 = vadd.f32 %v1435, %v1547
  %v1564 = vadd.f32 %v1436, %v1548
  %v1565 = vadd.f32 %v1437, %v1549
  %v1566 = vadd.f32 %v1438, %v1550
  %v1567 = vcvt.f32.s32.ties.to.even %v1343
  %v1568 = vcvt.f32.s32.ties.to.even %v1344
  %v1569 = vcvt.f32.s32.ties.to.even %v1345
  %v1570 = vcvt.f32.s32.ties.to.even %v1346
  %v1571 = vcvt.f32.s32.ties.to.even %v1347
  %v1572 = vcvt.f32.s32.ties.to.even %v1348
  %v1573 = vcvt.f32.s32.ties.to.even %v1349
  %v1574 = vcvt.f32.s32.ties.to.even %v1350
  %v1575 = vcvt.f32.s32.ties.to.even %v1351
  %v1576 = vcvt.f32.s32.ties.to.even %v1352
  %v1577 = vcvt.f32.s32.ties.to.even %v1353
  %v1578 = vcvt.f32.s32.ties.to.even %v1354
  %v1579 = vcvt.f32.s32.ties.to.even %v1355
  %v1580 = vcvt.f32.s32.ties.to.even %v1356
  %v1581 = vcvt.f32.s32.ties.to.even %v1357
  %v1582 = vcvt.f32.s32.ties.to.even %v1358
  %v1583 = vand.u32 %v1567, 1
  %v1584 = vand.u32 %v1568, 1
  %v1585 = vand.u32 %v1569, 1
  %v1586 = vand.u32 %v1570, 1
  %v1587 = vand.u32 %v1571, 1
  %v1588 = vand.u32 %v1572, 1
  %v1589 = vand.u32 %v1573, 1
  %v1590 = vand.u32 %v1574, 1
  %v1591 = vand.u32 %v1575, 1
  %v1592 = vand.u32 %v1576, 1
  %v1593 = vand.u32 %v1577, 1
  %v1594 = vand.u32 %v1578, 1
  %v1595 = vand.u32 %v1579, 1
  %v1596 = vand.u32 %v1580, 1
  %v1597 = vand.u32 %v1581, 1
  %v1598 = vand.u32 %v1582, 1
  %vm1599 = vcmp.eq.s32.totalorder %v1583, 1
  %vm1600 = vcmp.eq.s32.totalorder %v1584, 1
  %vm1601 = vcmp.eq.s32.totalorder %v1585, 1
  %vm1602 = vcmp.eq.s32.totalorder %v1586, 1
  %vm1603 = vcmp.eq.s32.totalorder %v1587, 1
  %vm1604 = vcmp.eq.s32.totalorder %v1588, 1
  %vm1605 = vcmp.eq.s32.totalorder %v1589, 1
  %vm1606 = vcmp.eq.s32.totalorder %v1590, 1
  %vm1607 = vcmp.eq.s32.totalorder %v1591, 1
  %vm1608 = vcmp.eq.s32.totalorder %v1592, 1
  %vm1609 = vcmp.eq.s32.totalorder %v1593, 1
  %vm1610 = vcmp.eq.s32.totalorder %v1594, 1
  %vm1611 = vcmp.eq.s32.totalorder %v1595, 1
  %vm1612 = vcmp.eq.s32.totalorder %v1596, 1
  %vm1613 = vcmp.eq.s32.totalorder %v1597, 1
  %vm1614 = vcmp.eq.s32.totalorder %v1598, 1
  %v1615 = vsub.f32 0.0, %v1551
  %v1616 = vsub.f32 0.0, %v1552
  %v1617 = vsub.f32 0.0, %v1553
  %v1618 = vsub.f32 0.0, %v1554
  %v1619 = vsub.f32 0.0, %v1555
  %v1620 = vsub.f32 0.0, %v1556
  %v1621 = vsub.f32 0.0, %v1557
  %v1622 = vsub.f32 0.0, %v1558
  %v1623 = vsub.f32 0.0, %v1559
  %v1624 = vsub.f32 0.0, %v1560
  %v1625 = vsub.f32 0.0, %v1561
  %v1626 = vsub.f32 0.0, %v1562
  %v1627 = vsub.f32 0.0, %v1563
  %v1628 = vsub.f32 0.0, %v1564
  %v1629 = vsub.f32 0.0, %v1565
  %v1630 = vsub.f32 0.0, %v1566
  %v1631 = vsel %vm1599, %v1615, %v1551
  %v1632 = vsel %vm1600, %v1616, %v1552
  %v1633 = vsel %vm1601, %v1617, %v1553
  %v1634 = vsel %vm1602, %v1618, %v1554
  %v1635 = vsel %vm1603, %v1619, %v1555
  %v1636 = vsel %vm1604, %v1620, %v1556
  %v1637 = vsel %vm1605, %v1621, %v1557
  %v1638 = vsel %vm1606, %v1622, %v1558
  %v1639 = vsel %vm1607, %v1623, %v1559
  %v1640 = vsel %vm1608, %v1624, %v1560
  %v1641 = vsel %vm1609, %v1625, %v1561
  %v1642 = vsel %vm1610, %v1626, %v1562
  %v1643 = vsel %vm1611, %v1627, %v1563
  %v1644 = vsel %vm1612, %v1628, %v1564
  %v1645 = vsel %vm1613, %v1629, %v1565
  %v1646 = vsel %vm1614, %v1630, %v1566
  %1648 = vset.pattern.permute.xlu0 0
  %1649 = vperm.xlu0 %1648, %v44
  %v1650 = vpop.permute.xlu0 %1649
  %1653 = vset.pattern.permute.xlu0 0
  %1654 = vperm.xlu0 %1653, %v45
  %v1655 = vpop.permute.xlu0 %1654
  %1658 = vset.pattern.permute.xlu0 0
  %1659 = vperm.xlu0 %1658, %v46
  %v1660 = vpop.permute.xlu0 %1659
  %1663 = vset.pattern.permute.xlu0 0
  %1664 = vperm.xlu0 %1663, %v47
  %v1665 = vpop.permute.xlu0 %1664
  %vm1667 = vcmask 261120
  %v1669 = vsel %vm1667, %v40, 0
  %v1672 = vsel %vm1667, %v41, 0
  %v1675 = vsel %vm1667, %v42, 0
  %v1678 = vsel %vm1667, %v43, 0
  %v1680 = vand.u32 %v1632, 4294901760
  %1681 = vmatprep.subr.mxu0 %v1680
  %v1682 = vand.u32 %v1631, 4294901760
  %1683 = vmatpush1.msra.mxu0 %v1682
  %v1684 = vand.u32 %v1636, 4294901760
  %1685 = vmatprep.subr.mxu0 %v1684
  %v1686 = vand.u32 %v1635, 4294901760
  %1687 = vmatpush1.msra.mxu0 %v1686
  %v1688 = vand.u32 %v1640, 4294901760
  %1689 = vmatprep.subr.mxu0 %v1688
  %v1690 = vand.u32 %v1639, 4294901760
  %1691 = vmatpush1.msra.mxu0 %v1690
  %v1692 = vand.u32 %v1644, 4294901760
  %1693 = vmatprep.subr.mxu0 %v1692
  %v1694 = vand.u32 %v1643, 4294901760
  %1695 = vmatpush1.msra.mxu0 %v1694
  %1696 = vmatprep.subr.mxu0 0.0
  %1697 = vmatpush1.msra.mxu0 0.0
  %1698 = vmatprep.subr.mxu0 0.0
  %1699 = vmatpush1.msra.mxu0 0.0
  %1700 = vmatprep.subr.mxu0 0.0
  %1701 = vmatpush1.msra.mxu0 0.0
  %1702 = vmatprep.subr.mxu0 0.0
  %1703 = vmatpush1.msra.mxu0 0.0
  %1704 = vmatprep.subr.mxu0 0.0
  %1705 = vmatpush1.msra.mxu0 0.0
  %1706 = vmatprep.subr.mxu0 0.0
  %1707 = vmatpush1.msra.mxu0 0.0
  %1708 = vmatprep.subr.mxu0 0.0
  %1709 = vmatpush1.msra.mxu0 0.0
  %1710 = vmatprep.subr.mxu0 0.0
  %1711 = vmatpush1.msra.mxu0 0.0
  %1712 = vmatprep.subr.mxu0 0.0
  %1713 = vmatpush1.msra.mxu0 0.0
  %1714 = vmatprep.subr.mxu0 0.0
  %1715 = vmatpush1.msra.mxu0 0.0
  %1716 = vmatprep.subr.mxu0 0.0
  %1717 = vmatpush1.msra.mxu0 0.0
  %1718 = vmatprep.subr.mxu0 0.0
  %1719 = vmatpush1.msra.mxu0 0.0
  %1720 = vmatprep.subr.mxu0 0.0
  %1721 = vmatpush1.msra.mxu0 0.0
  %1722 = vmatprep.subr.mxu0 0.0
  %1723 = vmatpush1.msra.mxu0 0.0
  %1724 = vmatprep.subr.mxu0 0.0
  %1725 = vmatpush1.msra.mxu0 0.0
  %1726 = vmatprep.subr.mxu0 0.0
  %1727 = vmatpush1.msra.mxu0 0.0
  %1728 = vmatprep.subr.mxu0 0.0
  %1729 = vmatpush1.msra.mxu0 0.0
  %1730 = vmatprep.subr.mxu0 0.0
  %1731 = vmatpush1.msra.mxu0 0.0
  %1732 = vmatprep.subr.mxu0 0.0
  %1733 = vmatpush1.msra.mxu0 0.0
  %1734 = vmatprep.subr.mxu0 0.0
  %1735 = vmatpush1.msra.mxu0 0.0
  %1736 = vmatprep.subr.mxu0 0.0
  %1737 = vmatpush1.msra.mxu0 0.0
  %1738 = vmatprep.subr.mxu0 0.0
  %1739 = vmatpush1.msra.mxu0 0.0
  %1740 = vmatprep.subr.mxu0 0.0
  %1741 = vmatpush1.msra.mxu0 0.0
  %1742 = vmatprep.subr.mxu0 0.0
  %1743 = vmatpush1.msra.mxu0 0.0
  %1744 = vmatprep.subr.mxu0 0.0
  %1745 = vmatpush1.msra.mxu0 0.0
  %1746 = vmatprep.subr.mxu0 0.0
  %1747 = vmatpush1.msra.mxu0 0.0
  %1748 = vmatprep.subr.mxu0 0.0
  %1749 = vmatpush1.msra.mxu0 0.0
  %1750 = vmatprep.subr.mxu0 0.0
  %1751 = vmatpush1.msra.mxu0 0.0
  %1752 = vmatprep.mubr.f32.mxu0 0.0
  %v1753 = vand.u32 %v1669, 4294901760
  %v1754 = vsub.f32 %v1669, %v1753
  %v1755 = vand.u32 %v1754, 4294901760
  %v1756 = vsub.f32 %v1754, %v1755
  %v1757 = vand.u32 %v1756, 4294901760
  %1758 = vmatmul.mubr.f32.gmra.mrb[0].mxu0 %v1757
  %v1759 = vpop.f32.mrb[0].mxu0
  %v1760 = vadd.f32 %v1650, %v1759
  %v1761 = vpop.f32.mrb[0].mxu0
  %v1762 = vadd.f32 %v1650, %v1761
  %1763 = vmatprep.mubr.f32.mxu0 0.0
  %v1764 = vand.u32 %v1672, 4294901760
  %v1765 = vsub.f32 %v1672, %v1764
  %v1766 = vand.u32 %v1765, 4294901760
  %v1767 = vsub.f32 %v1765, %v1766
  %v1768 = vand.u32 %v1767, 4294901760
  %1769 = vmatmul.mubr.f32.gmra.mrb[0].mxu0 %v1768
  %v1770 = vpop.f32.mrb[0].mxu0
  %v1771 = vadd.f32 %v1655, %v1770
  %v1772 = vpop.f32.mrb[0].mxu0
  %v1773 = vadd.f32 %v1655, %v1772
  %1774 = vmatprep.mubr.f32.mxu0 0.0
  %v1775 = vand.u32 %v1675, 4294901760
  %v1776 = vsub.f32 %v1675, %v1775
  %v1777 = vand.u32 %v1776, 4294901760
  %v1778 = vsub.f32 %v1776, %v1777
  %v1779 = vand.u32 %v1778, 4294901760
  %1780 = vmatmul.mubr.f32.gmra.mrb[0].mxu0 %v1779
  %v1781 = vpop.f32.mrb[0].mxu0
  %v1782 = vadd.f32 %v1660, %v1781
  %v1783 = vpop.f32.mrb[0].mxu0
  %v1784 = vadd.f32 %v1660, %v1783
  %1785 = vmatprep.mubr.f32.mxu0 0.0
  %v1786 = vand.u32 %v1678, 4294901760
  %v1787 = vsub.f32 %v1678, %v1786
  %v1788 = vand.u32 %v1787, 4294901760
  %v1789 = vsub.f32 %v1787, %v1788
  %v1790 = vand.u32 %v1789, 4294901760
  %1791 = vmatmul.mubr.f32.gmra.mrb[0].mxu0 %v1790
  %v1792 = vpop.f32.mrb[0].mxu0
  %v1793 = vadd.f32 %v1665, %v1792
  %v1794 = vpop.f32.mrb[0].mxu0
  %v1795 = vadd.f32 %v1665, %v1794
  %1796 = vdwg.mxu0
  %v1797 = vand.u32 %v1632, 4294901760
  %v1798 = vsub.f32 %v1632, %v1797
  %v1799 = vand.u32 %v1798, 4294901760
  %v1800 = vsub.f32 %v1798, %v1799
  %v1801 = vand.u32 %v1800, 4294901760
  %1802 = vmatprep.subr.mxu0 %v1801
  %v1803 = vand.u32 %v1631, 4294901760
  %v1804 = vsub.f32 %v1631, %v1803
  %v1805 = vand.u32 %v1804, 4294901760
  %v1806 = vsub.f32 %v1804, %v1805
  %v1807 = vand.u32 %v1806, 4294901760
  %1808 = vmatpush1.msra.mxu0 %v1807
  %v1809 = vand.u32 %v1636, 4294901760
  %v1810 = vsub.f32 %v1636, %v1809
  %v1811 = vand.u32 %v1810, 4294901760
  %v1812 = vsub.f32 %v1810, %v1811
  %v1813 = vand.u32 %v1812, 4294901760
  %1814 = vmatprep.subr.mxu0 %v1813
  %v1815 = vand.u32 %v1635, 4294901760
  %v1816 = vsub.f32 %v1635, %v1815
  %v1817 = vand.u32 %v1816, 4294901760
  %v1818 = vsub.f32 %v1816, %v1817
  %v1819 = vand.u32 %v1818, 4294901760
  %1820 = vmatpush1.msra.mxu0 %v1819
  %v1821 = vand.u32 %v1640, 4294901760
  %v1822 = vsub.f32 %v1640, %v1821
  %v1823 = vand.u32 %v1822, 4294901760
  %v1824 = vsub.f32 %v1822, %v1823
  %v1825 = vand.u32 %v1824, 4294901760
  %1826 = vmatprep.subr.mxu0 %v1825
  %v1827 = vand.u32 %v1639, 4294901760
  %v1828 = vsub.f32 %v1639, %v1827
  %v1829 = vand.u32 %v1828, 4294901760
  %v1830 = vsub.f32 %v1828, %v1829
  %v1831 = vand.u32 %v1830, 4294901760
  %1832 = vmatpush1.msra.mxu0 %v1831
  %v1833 = vand.u32 %v1644, 4294901760
  %v1834 = vsub.f32 %v1644, %v1833
  %v1835 = vand.u32 %v1834, 4294901760
  %v1836 = vsub.f32 %v1834, %v1835
  %v1837 = vand.u32 %v1836, 4294901760
  %1838 = vmatprep.subr.mxu0 %v1837
  %v1839 = vand.u32 %v1643, 4294901760
  %v1840 = vsub.f32 %v1643, %v1839
  %v1841 = vand.u32 %v1840, 4294901760
  %v1842 = vsub.f32 %v1840, %v1841
  %v1843 = vand.u32 %v1842, 4294901760
  %1844 = vmatpush1.msra.mxu0 %v1843
  %1845 = vmatprep.subr.mxu0 0.0
  %1846 = vmatpush1.msra.mxu0 0.0
  %1847 = vmatprep.subr.mxu0 0.0
  %1848 = vmatpush1.msra.mxu0 0.0
  %1849 = vmatprep.subr.mxu0 0.0
  %1850 = vmatpush1.msra.mxu0 0.0
  %1851 = vmatprep.subr.mxu0 0.0
  %1852 = vmatpush1.msra.mxu0 0.0
  %1853 = vmatprep.subr.mxu0 0.0
  %1854 = vmatpush1.msra.mxu0 0.0
  %1855 = vmatprep.subr.mxu0 0.0
  %1856 = vmatpush1.msra.mxu0 0.0
  %1857 = vmatprep.subr.mxu0 0.0
  %1858 = vmatpush1.msra.mxu0 0.0
  %1859 = vmatprep.subr.mxu0 0.0
  %1860 = vmatpush1.msra.mxu0 0.0
  %1861 = vmatprep.subr.mxu0 0.0
  %1862 = vmatpush1.msra.mxu0 0.0
  %1863 = vmatprep.subr.mxu0 0.0
  %1864 = vmatpush1.msra.mxu0 0.0
  %1865 = vmatprep.subr.mxu0 0.0
  %1866 = vmatpush1.msra.mxu0 0.0
  %1867 = vmatprep.subr.mxu0 0.0
  %1868 = vmatpush1.msra.mxu0 0.0
  %1869 = vmatprep.subr.mxu0 0.0
  %1870 = vmatpush1.msra.mxu0 0.0
  %1871 = vmatprep.subr.mxu0 0.0
  %1872 = vmatpush1.msra.mxu0 0.0
  %1873 = vmatprep.subr.mxu0 0.0
  %1874 = vmatpush1.msra.mxu0 0.0
  %1875 = vmatprep.subr.mxu0 0.0
  %1876 = vmatpush1.msra.mxu0 0.0
  %1877 = vmatprep.subr.mxu0 0.0
  %1878 = vmatpush1.msra.mxu0 0.0
  %1879 = vmatprep.subr.mxu0 0.0
  %1880 = vmatpush1.msra.mxu0 0.0
  %1881 = vmatprep.subr.mxu0 0.0
  %1882 = vmatpush1.msra.mxu0 0.0
  %1883 = vmatprep.subr.mxu0 0.0
  %1884 = vmatpush1.msra.mxu0 0.0
  %1885 = vmatprep.subr.mxu0 0.0
  %1886 = vmatpush1.msra.mxu0 0.0
  %1887 = vmatprep.subr.mxu0 0.0
  %1888 = vmatpush1.msra.mxu0 0.0
  %1889 = vmatprep.subr.mxu0 0.0
  %1890 = vmatpush1.msra.mxu0 0.0
  %1891 = vmatprep.subr.mxu0 0.0
  %1892 = vmatpush1.msra.mxu0 0.0
  %1893 = vmatprep.subr.mxu0 0.0
  %1894 = vmatpush1.msra.mxu0 0.0
  %1895 = vmatprep.subr.mxu0 0.0
  %1896 = vmatpush1.msra.mxu0 0.0
  %1897 = vmatprep.subr.mxu0 0.0
  %1898 = vmatpush1.msra.mxu0 0.0
  %1899 = vmatprep.subr.mxu0 0.0
  %1900 = vmatpush1.msra.mxu0 0.0
  %1901 = vmatprep.mubr.f32.mxu0 0.0
  %v1902 = vand.u32 %v1669, 4294901760
  %1903 = vmatmul.mubr.f32.gmra.mrb[0].mxu0 %v1902
  %v1904 = vpop.f32.mrb[0].mxu0
  %v1905 = vadd.f32 %v1760, %v1904
  %v1906 = vpop.f32.mrb[0].mxu0
  %v1907 = vadd.f32 %v1762, %v1906
  %1908 = vmatprep.mubr.f32.mxu0 0.0
  %v1909 = vand.u32 %v1672, 4294901760
  %1910 = vmatmul.mubr.f32.gmra.mrb[0].mxu0 %v1909
  %v1911 = vpop.f32.mrb[0].mxu0
  %v1912 = vadd.f32 %v1771, %v1911
  %v1913 = vpop.f32.mrb[0].mxu0
  %v1914 = vadd.f32 %v1773, %v1913
  %1915 = vmatprep.mubr.f32.mxu0 0.0
  %v1916 = vand.u32 %v1675, 4294901760
  %1917 = vmatmul.mubr.f32.gmra.mrb[0].mxu0 %v1916
  %v1918 = vpop.f32.mrb[0].mxu0
  %v1919 = vadd.f32 %v1782, %v1918
  %v1920 = vpop.f32.mrb[0].mxu0
  %v1921 = vadd.f32 %v1784, %v1920
  %1922 = vmatprep.mubr.f32.mxu0 0.0
  %v1923 = vand.u32 %v1678, 4294901760
  %1924 = vmatmul.mubr.f32.gmra.mrb[0].mxu0 %v1923
  %v1925 = vpop.f32.mrb[0].mxu0
  %v1926 = vadd.f32 %v1793, %v1925
  %v1927 = vpop.f32.mrb[0].mxu0
  %v1928 = vadd.f32 %v1795, %v1927
  %1929 = vdwg.mxu0
  %v1930 = vand.u32 %v1632, 4294901760
  %v1931 = vsub.f32 %v1632, %v1930
  %1932 = vmatprep.subr.mxu0 %v1931
  %v1933 = vand.u32 %v1631, 4294901760
  %v1934 = vsub.f32 %v1631, %v1933
  %1935 = vmatpush1.msra.mxu0 %v1934
  %v1936 = vand.u32 %v1636, 4294901760
  %v1937 = vsub.f32 %v1636, %v1936
  %1938 = vmatprep.subr.mxu0 %v1937
  %v1939 = vand.u32 %v1635, 4294901760
  %v1940 = vsub.f32 %v1635, %v1939
  %1941 = vmatpush1.msra.mxu0 %v1940
  %v1942 = vand.u32 %v1640, 4294901760
  %v1943 = vsub.f32 %v1640, %v1942
  %1944 = vmatprep.subr.mxu0 %v1943
  %v1945 = vand.u32 %v1639, 4294901760
  %v1946 = vsub.f32 %v1639, %v1945
  %1947 = vmatpush1.msra.mxu0 %v1946
  %v1948 = vand.u32 %v1644, 4294901760
  %v1949 = vsub.f32 %v1644, %v1948
  %1950 = vmatprep.subr.mxu0 %v1949
  %v1951 = vand.u32 %v1643, 4294901760
  %v1952 = vsub.f32 %v1643, %v1951
  %1953 = vmatpush1.msra.mxu0 %v1952
  %1954 = vmatprep.subr.mxu0 0.0
  %1955 = vmatpush1.msra.mxu0 0.0
  %1956 = vmatprep.subr.mxu0 0.0
  %1957 = vmatpush1.msra.mxu0 0.0
  %1958 = vmatprep.subr.mxu0 0.0
  %1959 = vmatpush1.msra.mxu0 0.0
  %1960 = vmatprep.subr.mxu0 0.0
  %1961 = vmatpush1.msra.mxu0 0.0
  %1962 = vmatprep.subr.mxu0 0.0
  %1963 = vmatpush1.msra.mxu0 0.0
  %1964 = vmatprep.subr.mxu0 0.0
  %1965 = vmatpush1.msra.mxu0 0.0
  %1966 = vmatprep.subr.mxu0 0.0
  %1967 = vmatpush1.msra.mxu0 0.0
  %1968 = vmatprep.subr.mxu0 0.0
  %1969 = vmatpush1.msra.mxu0 0.0
  %1970 = vmatprep.subr.mxu0 0.0
  %1971 = vmatpush1.msra.mxu0 0.0
  %1972 = vmatprep.subr.mxu0 0.0
  %1973 = vmatpush1.msra.mxu0 0.0
  %1974 = vmatprep.subr.mxu0 0.0
  %1975 = vmatpush1.msra.mxu0 0.0
  %1976 = vmatprep.subr.mxu0 0.0
  %1977 = vmatpush1.msra.mxu0 0.0
  %1978 = vmatprep.subr.mxu0 0.0
  %1979 = vmatpush1.msra.mxu0 0.0
  %1980 = vmatprep.subr.mxu0 0.0
  %1981 = vmatpush1.msra.mxu0 0.0
  %1982 = vmatprep.subr.mxu0 0.0
  %1983 = vmatpush1.msra.mxu0 0.0
  %1984 = vmatprep.subr.mxu0 0.0
  %1985 = vmatpush1.msra.mxu0 0.0
  %1986 = vmatprep.subr.mxu0 0.0
  %1987 = vmatpush1.msra.mxu0 0.0
  %1988 = vmatprep.subr.mxu0 0.0
  %1989 = vmatpush1.msra.mxu0 0.0
  %1990 = vmatprep.subr.mxu0 0.0
  %1991 = vmatpush1.msra.mxu0 0.0
  %1992 = vmatprep.subr.mxu0 0.0
  %1993 = vmatpush1.msra.mxu0 0.0
  %1994 = vmatprep.subr.mxu0 0.0
  %1995 = vmatpush1.msra.mxu0 0.0
  %1996 = vmatprep.subr.mxu0 0.0
  %1997 = vmatpush1.msra.mxu0 0.0
  %1998 = vmatprep.subr.mxu0 0.0
  %1999 = vmatpush1.msra.mxu0 0.0
  %2000 = vmatprep.subr.mxu0 0.0
  %2001 = vmatpush1.msra.mxu0 0.0
  %2002 = vmatprep.subr.mxu0 0.0
  %2003 = vmatpush1.msra.mxu0 0.0
  %2004 = vmatprep.subr.mxu0 0.0
  %2005 = vmatpush1.msra.mxu0 0.0
  %2006 = vmatprep.subr.mxu0 0.0
  %2007 = vmatpush1.msra.mxu0 0.0
  %2008 = vmatprep.subr.mxu0 0.0
  %2009 = vmatpush1.msra.mxu0 0.0
  %2010 = vmatprep.mubr.f32.mxu0 0.0
  %v2011 = vand.u32 %v1669, 4294901760
  %v2012 = vsub.f32 %v1669, %v2011
  %2013 = vmatmul.mubr.f32.gmra.mrb[0].mxu0 %v2012
  %v2014 = vpop.f32.mrb[0].mxu0
  %v2015 = vadd.f32 %v1905, %v2014
  %v2016 = vpop.f32.mrb[0].mxu0
  %v2017 = vadd.f32 %v1907, %v2016
  %2018 = vmatprep.mubr.f32.mxu0 0.0
  %v2019 = vand.u32 %v1672, 4294901760
  %v2020 = vsub.f32 %v1672, %v2019
  %2021 = vmatmul.mubr.f32.gmra.mrb[0].mxu0 %v2020
  %v2022 = vpop.f32.mrb[0].mxu0
  %v2023 = vadd.f32 %v1912, %v2022
  %v2024 = vpop.f32.mrb[0].mxu0
  %v2025 = vadd.f32 %v1914, %v2024
  %2026 = vmatprep.mubr.f32.mxu0 0.0
  %v2027 = vand.u32 %v1675, 4294901760
  %v2028 = vsub.f32 %v1675, %v2027
  %2029 = vmatmul.mubr.f32.gmra.mrb[0].mxu0 %v2028
  %v2030 = vpop.f32.mrb[0].mxu0
  %v2031 = vadd.f32 %v1919, %v2030
  %v2032 = vpop.f32.mrb[0].mxu0
  %v2033 = vadd.f32 %v1921, %v2032
  %2034 = vmatprep.mubr.f32.mxu0 0.0
  %v2035 = vand.u32 %v1678, 4294901760
  %v2036 = vsub.f32 %v1678, %v2035
  %2037 = vmatmul.mubr.f32.gmra.mrb[0].mxu0 %v2036
  %v2038 = vpop.f32.mrb[0].mxu0
  %v2039 = vadd.f32 %v1926, %v2038
  %v2040 = vpop.f32.mrb[0].mxu0
  %v2041 = vadd.f32 %v1928, %v2040
  %2042 = vdwg.mxu0
  %v2043 = vand.u32 %v1632, 4294901760
  %2044 = vmatprep.subr.mxu0 %v2043
  %v2045 = vand.u32 %v1631, 4294901760
  %2046 = vmatpush1.msra.mxu0 %v2045
  %v2047 = vand.u32 %v1636, 4294901760
  %2048 = vmatprep.subr.mxu0 %v2047
  %v2049 = vand.u32 %v1635, 4294901760
  %2050 = vmatpush1.msra.mxu0 %v2049
  %v2051 = vand.u32 %v1640, 4294901760
  %2052 = vmatprep.subr.mxu0 %v2051
  %v2053 = vand.u32 %v1639, 4294901760
  %2054 = vmatpush1.msra.mxu0 %v2053
  %v2055 = vand.u32 %v1644, 4294901760
  %2056 = vmatprep.subr.mxu0 %v2055
  %v2057 = vand.u32 %v1643, 4294901760
  %2058 = vmatpush1.msra.mxu0 %v2057
  %2059 = vmatprep.subr.mxu0 0.0
  %2060 = vmatpush1.msra.mxu0 0.0
  %2061 = vmatprep.subr.mxu0 0.0
  %2062 = vmatpush1.msra.mxu0 0.0
  %2063 = vmatprep.subr.mxu0 0.0
  %2064 = vmatpush1.msra.mxu0 0.0
  %2065 = vmatprep.subr.mxu0 0.0
  %2066 = vmatpush1.msra.mxu0 0.0
  %2067 = vmatprep.subr.mxu0 0.0
  %2068 = vmatpush1.msra.mxu0 0.0
  %2069 = vmatprep.subr.mxu0 0.0
  %2070 = vmatpush1.msra.mxu0 0.0
  %2071 = vmatprep.subr.mxu0 0.0
  %2072 = vmatpush1.msra.mxu0 0.0
  %2073 = vmatprep.subr.mxu0 0.0
  %2074 = vmatpush1.msra.mxu0 0.0
  %2075 = vmatprep.subr.mxu0 0.0
  %2076 = vmatpush1.msra.mxu0 0.0
  %2077 = vmatprep.subr.mxu0 0.0
  %2078 = vmatpush1.msra.mxu0 0.0
  %2079 = vmatprep.subr.mxu0 0.0
  %2080 = vmatpush1.msra.mxu0 0.0
  %2081 = vmatprep.subr.mxu0 0.0
  %2082 = vmatpush1.msra.mxu0 0.0
  %2083 = vmatprep.subr.mxu0 0.0
  %2084 = vmatpush1.msra.mxu0 0.0
  %2085 = vmatprep.subr.mxu0 0.0
  %2086 = vmatpush1.msra.mxu0 0.0
  %2087 = vmatprep.subr.mxu0 0.0
  %2088 = vmatpush1.msra.mxu0 0.0
  %2089 = vmatprep.subr.mxu0 0.0
  %2090 = vmatpush1.msra.mxu0 0.0
  %2091 = vmatprep.subr.mxu0 0.0
  %2092 = vmatpush1.msra.mxu0 0.0
  %2093 = vmatprep.subr.mxu0 0.0
  %2094 = vmatpush1.msra.mxu0 0.0
  %2095 = vmatprep.subr.mxu0 0.0
  %2096 = vmatpush1.msra.mxu0 0.0
  %2097 = vmatprep.subr.mxu0 0.0
  %2098 = vmatpush1.msra.mxu0 0.0
  %2099 = vmatprep.subr.mxu0 0.0
  %2100 = vmatpush1.msra.mxu0 0.0
  %2101 = vmatprep.subr.mxu0 0.0
  %2102 = vmatpush1.msra.mxu0 0.0
  %2103 = vmatprep.subr.mxu0 0.0
  %2104 = vmatpush1.msra.mxu0 0.0
  %2105 = vmatprep.subr.mxu0 0.0
  %2106 = vmatpush1.msra.mxu0 0.0
  %2107 = vmatprep.subr.mxu0 0.0
  %2108 = vmatpush1.msra.mxu0 0.0
  %2109 = vmatprep.subr.mxu0 0.0
  %2110 = vmatpush1.msra.mxu0 0.0
  %2111 = vmatprep.subr.mxu0 0.0
  %2112 = vmatpush1.msra.mxu0 0.0
  %2113 = vmatprep.subr.mxu0 0.0
  %2114 = vmatpush1.msra.mxu0 0.0
  %2115 = vmatprep.mubr.f32.mxu0 0.0
  %v2116 = vand.u32 %v1669, 4294901760
  %v2117 = vsub.f32 %v1669, %v2116
  %v2118 = vand.u32 %v2117, 4294901760
  %2119 = vmatmul.mubr.f32.gmra.mrb[0].mxu0 %v2118
  %v2120 = vpop.f32.mrb[0].mxu0
  %v2121 = vadd.f32 %v2015, %v2120
  %v2122 = vpop.f32.mrb[0].mxu0
  %v2123 = vadd.f32 %v2017, %v2122
  %2124 = vmatprep.mubr.f32.mxu0 0.0
  %v2125 = vand.u32 %v1672, 4294901760
  %v2126 = vsub.f32 %v1672, %v2125
  %v2127 = vand.u32 %v2126, 4294901760
  %2128 = vmatmul.mubr.f32.gmra.mrb[0].mxu0 %v2127
  %v2129 = vpop.f32.mrb[0].mxu0
  %v2130 = vadd.f32 %v2023, %v2129
  %v2131 = vpop.f32.mrb[0].mxu0
  %v2132 = vadd.f32 %v2025, %v2131
  %2133 = vmatprep.mubr.f32.mxu0 0.0
  %v2134 = vand.u32 %v1675, 4294901760
  %v2135 = vsub.f32 %v1675, %v2134
  %v2136 = vand.u32 %v2135, 4294901760
  %2137 = vmatmul.mubr.f32.gmra.mrb[0].mxu0 %v2136
  %v2138 = vpop.f32.mrb[0].mxu0
  %v2139 = vadd.f32 %v2031, %v2138
  %v2140 = vpop.f32.mrb[0].mxu0
  %v2141 = vadd.f32 %v2033, %v2140
  %2142 = vmatprep.mubr.f32.mxu0 0.0
  %v2143 = vand.u32 %v1678, 4294901760
  %v2144 = vsub.f32 %v1678, %v2143
  %v2145 = vand.u32 %v2144, 4294901760
  %2146 = vmatmul.mubr.f32.gmra.mrb[0].mxu0 %v2145
  %v2147 = vpop.f32.mrb[0].mxu0
  %v2148 = vadd.f32 %v2039, %v2147
  %v2149 = vpop.f32.mrb[0].mxu0
  %v2150 = vadd.f32 %v2041, %v2149
  %2151 = vdwg.mxu0
  %v2152 = vand.u32 %v1632, 4294901760
  %v2153 = vsub.f32 %v1632, %v2152
  %v2154 = vand.u32 %v2153, 4294901760
  %2155 = vmatprep.subr.mxu0 %v2154
  %v2156 = vand.u32 %v1631, 4294901760
  %v2157 = vsub.f32 %v1631, %v2156
  %v2158 = vand.u32 %v2157, 4294901760
  %2159 = vmatpush1.msra.mxu0 %v2158
  %v2160 = vand.u32 %v1636, 4294901760
  %v2161 = vsub.f32 %v1636, %v2160
  %v2162 = vand.u32 %v2161, 4294901760
  %2163 = vmatprep.subr.mxu0 %v2162
  %v2164 = vand.u32 %v1635, 4294901760
  %v2165 = vsub.f32 %v1635, %v2164
  %v2166 = vand.u32 %v2165, 4294901760
  %2167 = vmatpush1.msra.mxu0 %v2166
  %v2168 = vand.u32 %v1640, 4294901760
  %v2169 = vsub.f32 %v1640, %v2168
  %v2170 = vand.u32 %v2169, 4294901760
  %2171 = vmatprep.subr.mxu0 %v2170
  %v2172 = vand.u32 %v1639, 4294901760
  %v2173 = vsub.f32 %v1639, %v2172
  %v2174 = vand.u32 %v2173, 4294901760
  %2175 = vmatpush1.msra.mxu0 %v2174
  %v2176 = vand.u32 %v1644, 4294901760
  %v2177 = vsub.f32 %v1644, %v2176
  %v2178 = vand.u32 %v2177, 4294901760
  %2179 = vmatprep.subr.mxu0 %v2178
  %v2180 = vand.u32 %v1643, 4294901760
  %v2181 = vsub.f32 %v1643, %v2180
  %v2182 = vand.u32 %v2181, 4294901760
  %2183 = vmatpush1.msra.mxu0 %v2182
  %2184 = vmatprep.subr.mxu0 0.0
  %2185 = vmatpush1.msra.mxu0 0.0
  %2186 = vmatprep.subr.mxu0 0.0
  %2187 = vmatpush1.msra.mxu0 0.0
  %2188 = vmatprep.subr.mxu0 0.0
  %2189 = vmatpush1.msra.mxu0 0.0
  %2190 = vmatprep.subr.mxu0 0.0
  %2191 = vmatpush1.msra.mxu0 0.0
  %2192 = vmatprep.subr.mxu0 0.0
  %2193 = vmatpush1.msra.mxu0 0.0
  %2194 = vmatprep.subr.mxu0 0.0
  %2195 = vmatpush1.msra.mxu0 0.0
  %2196 = vmatprep.subr.mxu0 0.0
  %2197 = vmatpush1.msra.mxu0 0.0
  %2198 = vmatprep.subr.mxu0 0.0
  %2199 = vmatpush1.msra.mxu0 0.0
  %2200 = vmatprep.subr.mxu0 0.0
  %2201 = vmatpush1.msra.mxu0 0.0
  %2202 = vmatprep.subr.mxu0 0.0
  %2203 = vmatpush1.msra.mxu0 0.0
  %2204 = vmatprep.subr.mxu0 0.0
  %2205 = vmatpush1.msra.mxu0 0.0
  %2206 = vmatprep.subr.mxu0 0.0
  %2207 = vmatpush1.msra.mxu0 0.0
  %2208 = vmatprep.subr.mxu0 0.0
  %2209 = vmatpush1.msra.mxu0 0.0
  %2210 = vmatprep.subr.mxu0 0.0
  %2211 = vmatpush1.msra.mxu0 0.0
  %2212 = vmatprep.subr.mxu0 0.0
  %2213 = vmatpush1.msra.mxu0 0.0
  %2214 = vmatprep.subr.mxu0 0.0
  %2215 = vmatpush1.msra.mxu0 0.0
  %2216 = vmatprep.subr.mxu0 0.0
  %2217 = vmatpush1.msra.mxu0 0.0
  %2218 = vmatprep.subr.mxu0 0.0
  %2219 = vmatpush1.msra.mxu0 0.0
  %2220 = vmatprep.subr.mxu0 0.0
  %2221 = vmatpush1.msra.mxu0 0.0
  %2222 = vmatprep.subr.mxu0 0.0
  %2223 = vmatpush1.msra.mxu0 0.0
  %2224 = vmatprep.subr.mxu0 0.0
  %2225 = vmatpush1.msra.mxu0 0.0
  %2226 = vmatprep.subr.mxu0 0.0
  %2227 = vmatpush1.msra.mxu0 0.0
  %2228 = vmatprep.subr.mxu0 0.0
  %2229 = vmatpush1.msra.mxu0 0.0
  %2230 = vmatprep.subr.mxu0 0.0
  %2231 = vmatpush1.msra.mxu0 0.0
  %2232 = vmatprep.subr.mxu0 0.0
  %2233 = vmatpush1.msra.mxu0 0.0
  %2234 = vmatprep.subr.mxu0 0.0
  %2235 = vmatpush1.msra.mxu0 0.0
  %2236 = vmatprep.subr.mxu0 0.0
  %2237 = vmatpush1.msra.mxu0 0.0
  %2238 = vmatprep.subr.mxu0 0.0
  %2239 = vmatpush1.msra.mxu0 0.0
  %2240 = vmatprep.mubr.f32.mxu0 0.0
  %v2241 = vand.u32 %v1669, 4294901760
  %2242 = vmatmul.mubr.f32.gmra.mrb[0].mxu0 %v2241
  %v2243 = vpop.f32.mrb[0].mxu0
  %v2244 = vadd.f32 %v2121, %v2243
  %v2245 = vpop.f32.mrb[0].mxu0
  %v2246 = vadd.f32 %v2123, %v2245
  %2247 = vmatprep.mubr.f32.mxu0 0.0
  %v2248 = vand.u32 %v1672, 4294901760
  %2249 = vmatmul.mubr.f32.gmra.mrb[0].mxu0 %v2248
  %v2250 = vpop.f32.mrb[0].mxu0
  %v2251 = vadd.f32 %v2130, %v2250
  %v2252 = vpop.f32.mrb[0].mxu0
  %v2253 = vadd.f32 %v2132, %v2252
  %2254 = vmatprep.mubr.f32.mxu0 0.0
  %v2255 = vand.u32 %v1675, 4294901760
  %2256 = vmatmul.mubr.f32.gmra.mrb[0].mxu0 %v2255
  %v2257 = vpop.f32.mrb[0].mxu0
  %v2258 = vadd.f32 %v2139, %v2257
  %v2259 = vpop.f32.mrb[0].mxu0
  %v2260 = vadd.f32 %v2141, %v2259
  %2261 = vmatprep.mubr.f32.mxu0 0.0
  %v2262 = vand.u32 %v1678, 4294901760
  %2263 = vmatmul.mubr.f32.gmra.mrb[0].mxu0 %v2262
  %v2264 = vpop.f32.mrb[0].mxu0
  %v2265 = vadd.f32 %v2148, %v2264
  %v2266 = vpop.f32.mrb[0].mxu0
  %v2267 = vadd.f32 %v2150, %v2266
  %2268 = vdwg.mxu0
  %v2269 = vand.u32 %v1632, 4294901760
  %2270 = vmatprep.subr.mxu0 %v2269
  %v2271 = vand.u32 %v1631, 4294901760
  %2272 = vmatpush1.msra.mxu0 %v2271
  %v2273 = vand.u32 %v1636, 4294901760
  %2274 = vmatprep.subr.mxu0 %v2273
  %v2275 = vand.u32 %v1635, 4294901760
  %2276 = vmatpush1.msra.mxu0 %v2275
  %v2277 = vand.u32 %v1640, 4294901760
  %2278 = vmatprep.subr.mxu0 %v2277
  %v2279 = vand.u32 %v1639, 4294901760
  %2280 = vmatpush1.msra.mxu0 %v2279
  %v2281 = vand.u32 %v1644, 4294901760
  %2282 = vmatprep.subr.mxu0 %v2281
  %v2283 = vand.u32 %v1643, 4294901760
  %2284 = vmatpush1.msra.mxu0 %v2283
  %2285 = vmatprep.subr.mxu0 0.0
  %2286 = vmatpush1.msra.mxu0 0.0
  %2287 = vmatprep.subr.mxu0 0.0
  %2288 = vmatpush1.msra.mxu0 0.0
  %2289 = vmatprep.subr.mxu0 0.0
  %2290 = vmatpush1.msra.mxu0 0.0
  %2291 = vmatprep.subr.mxu0 0.0
  %2292 = vmatpush1.msra.mxu0 0.0
  %2293 = vmatprep.subr.mxu0 0.0
  %2294 = vmatpush1.msra.mxu0 0.0
  %2295 = vmatprep.subr.mxu0 0.0
  %2296 = vmatpush1.msra.mxu0 0.0
  %2297 = vmatprep.subr.mxu0 0.0
  %2298 = vmatpush1.msra.mxu0 0.0
  %2299 = vmatprep.subr.mxu0 0.0
  %2300 = vmatpush1.msra.mxu0 0.0
  %2301 = vmatprep.subr.mxu0 0.0
  %2302 = vmatpush1.msra.mxu0 0.0
  %2303 = vmatprep.subr.mxu0 0.0
  %2304 = vmatpush1.msra.mxu0 0.0
  %2305 = vmatprep.subr.mxu0 0.0
  %2306 = vmatpush1.msra.mxu0 0.0
  %2307 = vmatprep.subr.mxu0 0.0
  %2308 = vmatpush1.msra.mxu0 0.0
  %2309 = vmatprep.subr.mxu0 0.0
  %2310 = vmatpush1.msra.mxu0 0.0
  %2311 = vmatprep.subr.mxu0 0.0
  %2312 = vmatpush1.msra.mxu0 0.0
  %2313 = vmatprep.subr.mxu0 0.0
  %2314 = vmatpush1.msra.mxu0 0.0
  %2315 = vmatprep.subr.mxu0 0.0
  %2316 = vmatpush1.msra.mxu0 0.0
  %2317 = vmatprep.subr.mxu0 0.0
  %2318 = vmatpush1.msra.mxu0 0.0
  %2319 = vmatprep.subr.mxu0 0.0
  %2320 = vmatpush1.msra.mxu0 0.0
  %2321 = vmatprep.subr.mxu0 0.0
  %2322 = vmatpush1.msra.mxu0 0.0
  %2323 = vmatprep.subr.mxu0 0.0
  %2324 = vmatpush1.msra.mxu0 0.0
  %2325 = vmatprep.subr.mxu0 0.0
  %2326 = vmatpush1.msra.mxu0 0.0
  %2327 = vmatprep.subr.mxu0 0.0
  %2328 = vmatpush1.msra.mxu0 0.0
  %2329 = vmatprep.subr.mxu0 0.0
  %2330 = vmatpush1.msra.mxu0 0.0
  %2331 = vmatprep.subr.mxu0 0.0
  %2332 = vmatpush1.msra.mxu0 0.0
  %2333 = vmatprep.subr.mxu0 0.0
  %2334 = vmatpush1.msra.mxu0 0.0
  %2335 = vmatprep.subr.mxu0 0.0
  %2336 = vmatpush1.msra.mxu0 0.0
  %2337 = vmatprep.subr.mxu0 0.0
  %2338 = vmatpush1.msra.mxu0 0.0
  %2339 = vmatprep.subr.mxu0 0.0
  %2340 = vmatpush1.msra.mxu0 0.0
  %2341 = vmatprep.mubr.f32.mxu0 0.0
  %v2342 = vand.u32 %v1669, 4294901760
  %2343 = vmatmul.mubr.f32.gmra.mrb[0].mxu0 %v2342
  %v2344 = vpop.f32.mrb[0].mxu0
  %v2345 = vadd.f32 %v2244, %v2344
  %v2346 = vpop.f32.mrb[0].mxu0
  %v2347 = vadd.f32 %v2246, %v2346
  %2348 = vmatprep.mubr.f32.mxu0 0.0
  %v2349 = vand.u32 %v1672, 4294901760
  %2350 = vmatmul.mubr.f32.gmra.mrb[0].mxu0 %v2349
  %v2351 = vpop.f32.mrb[0].mxu0
  %v2352 = vadd.f32 %v2251, %v2351
  %v2353 = vpop.f32.mrb[0].mxu0
  %v2354 = vadd.f32 %v2253, %v2353
  %2355 = vmatprep.mubr.f32.mxu0 0.0
  %v2356 = vand.u32 %v1675, 4294901760
  %2357 = vmatmul.mubr.f32.gmra.mrb[0].mxu0 %v2356
  %v2358 = vpop.f32.mrb[0].mxu0
  %v2359 = vadd.f32 %v2258, %v2358
  %v2360 = vpop.f32.mrb[0].mxu0
  %v2361 = vadd.f32 %v2260, %v2360
  %2362 = vmatprep.mubr.f32.mxu0 0.0
  %v2363 = vand.u32 %v1678, 4294901760
  %2364 = vmatmul.mubr.f32.gmra.mrb[0].mxu0 %v2363
  %v2365 = vpop.f32.mrb[0].mxu0
  %v2366 = vadd.f32 %v2265, %v2365
  %v2367 = vpop.f32.mrb[0].mxu0
  %v2368 = vadd.f32 %v2267, %v2367
  %2369 = vdwg.mxu0
  %v2370 = vand.u32 %v1634, 4294901760
  %2371 = vmatprep.subr.mxu0 %v2370
  %v2372 = vand.u32 %v1633, 4294901760
  %2373 = vmatpush1.msra.mxu0 %v2372
  %v2374 = vand.u32 %v1638, 4294901760
  %2375 = vmatprep.subr.mxu0 %v2374
  %v2376 = vand.u32 %v1637, 4294901760
  %2377 = vmatpush1.msra.mxu0 %v2376
  %v2378 = vand.u32 %v1642, 4294901760
  %2379 = vmatprep.subr.mxu0 %v2378
  %v2380 = vand.u32 %v1641, 4294901760
  %2381 = vmatpush1.msra.mxu0 %v2380
  %v2382 = vand.u32 %v1646, 4294901760
  %2383 = vmatprep.subr.mxu0 %v2382
  %v2384 = vand.u32 %v1645, 4294901760
  %2385 = vmatpush1.msra.mxu0 %v2384
  %2386 = vmatprep.subr.mxu0 0.0
  %2387 = vmatpush1.msra.mxu0 0.0
  %2388 = vmatprep.subr.mxu0 0.0
  %2389 = vmatpush1.msra.mxu0 0.0
  %2390 = vmatprep.subr.mxu0 0.0
  %2391 = vmatpush1.msra.mxu0 0.0
  %2392 = vmatprep.subr.mxu0 0.0
  %2393 = vmatpush1.msra.mxu0 0.0
  %2394 = vmatprep.subr.mxu0 0.0
  %2395 = vmatpush1.msra.mxu0 0.0
  %2396 = vmatprep.subr.mxu0 0.0
  %2397 = vmatpush1.msra.mxu0 0.0
  %2398 = vmatprep.subr.mxu0 0.0
  %2399 = vmatpush1.msra.mxu0 0.0
  %2400 = vmatprep.subr.mxu0 0.0
  %2401 = vmatpush1.msra.mxu0 0.0
  %2402 = vmatprep.subr.mxu0 0.0
  %2403 = vmatpush1.msra.mxu0 0.0
  %2404 = vmatprep.subr.mxu0 0.0
  %2405 = vmatpush1.msra.mxu0 0.0
  %2406 = vmatprep.subr.mxu0 0.0
  %2407 = vmatpush1.msra.mxu0 0.0
  %2408 = vmatprep.subr.mxu0 0.0
  %2409 = vmatpush1.msra.mxu0 0.0
  %2410 = vmatprep.subr.mxu0 0.0
  %2411 = vmatpush1.msra.mxu0 0.0
  %2412 = vmatprep.subr.mxu0 0.0
  %2413 = vmatpush1.msra.mxu0 0.0
  %2414 = vmatprep.subr.mxu0 0.0
  %2415 = vmatpush1.msra.mxu0 0.0
  %2416 = vmatprep.subr.mxu0 0.0
  %2417 = vmatpush1.msra.mxu0 0.0
  %2418 = vmatprep.subr.mxu0 0.0
  %2419 = vmatpush1.msra.mxu0 0.0
  %2420 = vmatprep.subr.mxu0 0.0
  %2421 = vmatpush1.msra.mxu0 0.0
  %2422 = vmatprep.subr.mxu0 0.0
  %2423 = vmatpush1.msra.mxu0 0.0
  %2424 = vmatprep.subr.mxu0 0.0
  %2425 = vmatpush1.msra.mxu0 0.0
  %2426 = vmatprep.subr.mxu0 0.0
  %2427 = vmatpush1.msra.mxu0 0.0
  %2428 = vmatprep.subr.mxu0 0.0
  %2429 = vmatpush1.msra.mxu0 0.0
  %2430 = vmatprep.subr.mxu0 0.0
  %2431 = vmatpush1.msra.mxu0 0.0
  %2432 = vmatprep.subr.mxu0 0.0
  %2433 = vmatpush1.msra.mxu0 0.0
  %2434 = vmatprep.subr.mxu0 0.0
  %2435 = vmatpush1.msra.mxu0 0.0
  %2436 = vmatprep.subr.mxu0 0.0
  %2437 = vmatpush1.msra.mxu0 0.0
  %2438 = vmatprep.subr.mxu0 0.0
  %2439 = vmatpush1.msra.mxu0 0.0
  %2440 = vmatprep.subr.mxu0 0.0
  %2441 = vmatpush1.msra.mxu0 0.0
  %2442 = vmatprep.mubr.f32.mxu0 0.0
  %v2443 = vand.u32 %v1669, 4294901760
  %v2444 = vsub.f32 %v1669, %v2443
  %v2445 = vand.u32 %v2444, 4294901760
  %v2446 = vsub.f32 %v2444, %v2445
  %v2447 = vand.u32 %v2446, 4294901760
  %2448 = vmatmul.mubr.f32.gmra.mrb[0].mxu0 %v2447
  %v2449 = vpop.f32.mrb[0].mxu0
  %v2450 = vadd.f32 %v1650, %v2449
  %v2451 = vpop.f32.mrb[0].mxu0
  %v2452 = vadd.f32 %v1650, %v2451
  %2453 = vmatprep.mubr.f32.mxu0 0.0
  %v2454 = vand.u32 %v1672, 4294901760
  %v2455 = vsub.f32 %v1672, %v2454
  %v2456 = vand.u32 %v2455, 4294901760
  %v2457 = vsub.f32 %v2455, %v2456
  %v2458 = vand.u32 %v2457, 4294901760
  %2459 = vmatmul.mubr.f32.gmra.mrb[0].mxu0 %v2458
  %v2460 = vpop.f32.mrb[0].mxu0
  %v2461 = vadd.f32 %v1655, %v2460
  %v2462 = vpop.f32.mrb[0].mxu0
  %v2463 = vadd.f32 %v1655, %v2462
  %2464 = vmatprep.mubr.f32.mxu0 0.0
  %v2465 = vand.u32 %v1675, 4294901760
  %v2466 = vsub.f32 %v1675, %v2465
  %v2467 = vand.u32 %v2466, 4294901760
  %v2468 = vsub.f32 %v2466, %v2467
  %v2469 = vand.u32 %v2468, 4294901760
  %2470 = vmatmul.mubr.f32.gmra.mrb[0].mxu0 %v2469
  %v2471 = vpop.f32.mrb[0].mxu0
  %v2472 = vadd.f32 %v1660, %v2471
  %v2473 = vpop.f32.mrb[0].mxu0
  %v2474 = vadd.f32 %v1660, %v2473
  %2475 = vmatprep.mubr.f32.mxu0 0.0
  %v2476 = vand.u32 %v1678, 4294901760
  %v2477 = vsub.f32 %v1678, %v2476
  %v2478 = vand.u32 %v2477, 4294901760
  %v2479 = vsub.f32 %v2477, %v2478
  %v2480 = vand.u32 %v2479, 4294901760
  %2481 = vmatmul.mubr.f32.gmra.mrb[0].mxu0 %v2480
  %v2482 = vpop.f32.mrb[0].mxu0
  %v2483 = vadd.f32 %v1665, %v2482
  %v2484 = vpop.f32.mrb[0].mxu0
  %v2485 = vadd.f32 %v1665, %v2484
  %2486 = vdwg.mxu0
  %v2487 = vand.u32 %v1634, 4294901760
  %v2488 = vsub.f32 %v1634, %v2487
  %v2489 = vand.u32 %v2488, 4294901760
  %v2490 = vsub.f32 %v2488, %v2489
  %v2491 = vand.u32 %v2490, 4294901760
  %2492 = vmatprep.subr.mxu0 %v2491
  %v2493 = vand.u32 %v1633, 4294901760
  %v2494 = vsub.f32 %v1633, %v2493
  %v2495 = vand.u32 %v2494, 4294901760
  %v2496 = vsub.f32 %v2494, %v2495
  %v2497 = vand.u32 %v2496, 4294901760
  %2498 = vmatpush1.msra.mxu0 %v2497
  %v2499 = vand.u32 %v1638, 4294901760
  %v2500 = vsub.f32 %v1638, %v2499
  %v2501 = vand.u32 %v2500, 4294901760
  %v2502 = vsub.f32 %v2500, %v2501
  %v2503 = vand.u32 %v2502, 4294901760
  %2504 = vmatprep.subr.mxu0 %v2503
  %v2505 = vand.u32 %v1637, 4294901760
  %v2506 = vsub.f32 %v1637, %v2505
  %v2507 = vand.u32 %v2506, 4294901760
  %v2508 = vsub.f32 %v2506, %v2507
  %v2509 = vand.u32 %v2508, 4294901760
  %2510 = vmatpush1.msra.mxu0 %v2509
  %v2511 = vand.u32 %v1642, 4294901760
  %v2512 = vsub.f32 %v1642, %v2511
  %v2513 = vand.u32 %v2512, 4294901760
  %v2514 = vsub.f32 %v2512, %v2513
  %v2515 = vand.u32 %v2514, 4294901760
  %2516 = vmatprep.subr.mxu0 %v2515
  %v2517 = vand.u32 %v1641, 4294901760
  %v2518 = vsub.f32 %v1641, %v2517
  %v2519 = vand.u32 %v2518, 4294901760
  %v2520 = vsub.f32 %v2518, %v2519
  %v2521 = vand.u32 %v2520, 4294901760
  %2522 = vmatpush1.msra.mxu0 %v2521
  %v2523 = vand.u32 %v1646, 4294901760
  %v2524 = vsub.f32 %v1646, %v2523
  %v2525 = vand.u32 %v2524, 4294901760
  %v2526 = vsub.f32 %v2524, %v2525
  %v2527 = vand.u32 %v2526, 4294901760
  %2528 = vmatprep.subr.mxu0 %v2527
  %v2529 = vand.u32 %v1645, 4294901760
  %v2530 = vsub.f32 %v1645, %v2529
  %v2531 = vand.u32 %v2530, 4294901760
  %v2532 = vsub.f32 %v2530, %v2531
  %v2533 = vand.u32 %v2532, 4294901760
  %2534 = vmatpush1.msra.mxu0 %v2533
  %2535 = vmatprep.subr.mxu0 0.0
  %2536 = vmatpush1.msra.mxu0 0.0
  %2537 = vmatprep.subr.mxu0 0.0
  %2538 = vmatpush1.msra.mxu0 0.0
  %2539 = vmatprep.subr.mxu0 0.0
  %2540 = vmatpush1.msra.mxu0 0.0
  %2541 = vmatprep.subr.mxu0 0.0
  %2542 = vmatpush1.msra.mxu0 0.0
  %2543 = vmatprep.subr.mxu0 0.0
  %2544 = vmatpush1.msra.mxu0 0.0
  %2545 = vmatprep.subr.mxu0 0.0
  %2546 = vmatpush1.msra.mxu0 0.0
  %2547 = vmatprep.subr.mxu0 0.0
  %2548 = vmatpush1.msra.mxu0 0.0
  %2549 = vmatprep.subr.mxu0 0.0
  %2550 = vmatpush1.msra.mxu0 0.0
  %2551 = vmatprep.subr.mxu0 0.0
  %2552 = vmatpush1.msra.mxu0 0.0
  %2553 = vmatprep.subr.mxu0 0.0
  %2554 = vmatpush1.msra.mxu0 0.0
  %2555 = vmatprep.subr.mxu0 0.0
  %2556 = vmatpush1.msra.mxu0 0.0
  %2557 = vmatprep.subr.mxu0 0.0
  %2558 = vmatpush1.msra.mxu0 0.0
  %2559 = vmatprep.subr.mxu0 0.0
  %2560 = vmatpush1.msra.mxu0 0.0
  %2561 = vmatprep.subr.mxu0 0.0
  %2562 = vmatpush1.msra.mxu0 0.0
  %2563 = vmatprep.subr.mxu0 0.0
  %2564 = vmatpush1.msra.mxu0 0.0
  %2565 = vmatprep.subr.mxu0 0.0
  %2566 = vmatpush1.msra.mxu0 0.0
  %2567 = vmatprep.subr.mxu0 0.0
  %2568 = vmatpush1.msra.mxu0 0.0
  %2569 = vmatprep.subr.mxu0 0.0
  %2570 = vmatpush1.msra.mxu0 0.0
  %2571 = vmatprep.subr.mxu0 0.0
  %2572 = vmatpush1.msra.mxu0 0.0
  %2573 = vmatprep.subr.mxu0 0.0
  %2574 = vmatpush1.msra.mxu0 0.0
  %2575 = vmatprep.subr.mxu0 0.0
  %2576 = vmatpush1.msra.mxu0 0.0
  %2577 = vmatprep.subr.mxu0 0.0
  %2578 = vmatpush1.msra.mxu0 0.0
  %2579 = vmatprep.subr.mxu0 0.0
  %2580 = vmatpush1.msra.mxu0 0.0
  %2581 = vmatprep.subr.mxu0 0.0
  %2582 = vmatpush1.msra.mxu0 0.0
  %2583 = vmatprep.subr.mxu0 0.0
  %2584 = vmatpush1.msra.mxu0 0.0
  %2585 = vmatprep.subr.mxu0 0.0
  %2586 = vmatpush1.msra.mxu0 0.0
  %2587 = vmatprep.subr.mxu0 0.0
  %2588 = vmatpush1.msra.mxu0 0.0
  %2589 = vmatprep.subr.mxu0 0.0
  %2590 = vmatpush1.msra.mxu0 0.0
  %2591 = vmatprep.mubr.f32.mxu0 0.0
  %v2592 = vand.u32 %v1669, 4294901760
  %2593 = vmatmul.mubr.f32.gmra.mrb[0].mxu0 %v2592
  %v2594 = vpop.f32.mrb[0].mxu0
  %v2595 = vadd.f32 %v2450, %v2594
  %v2596 = vpop.f32.mrb[0].mxu0
  %v2597 = vadd.f32 %v2452, %v2596
  %2598 = vmatprep.mubr.f32.mxu0 0.0
  %v2599 = vand.u32 %v1672, 4294901760
  %2600 = vmatmul.mubr.f32.gmra.mrb[0].mxu0 %v2599
  %v2601 = vpop.f32.mrb[0].mxu0
  %v2602 = vadd.f32 %v2461, %v2601
  %v2603 = vpop.f32.mrb[0].mxu0
  %v2604 = vadd.f32 %v2463, %v2603
  %2605 = vmatprep.mubr.f32.mxu0 0.0
  %v2606 = vand.u32 %v1675, 4294901760
  %2607 = vmatmul.mubr.f32.gmra.mrb[0].mxu0 %v2606
  %v2608 = vpop.f32.mrb[0].mxu0
  %v2609 = vadd.f32 %v2472, %v2608
  %v2610 = vpop.f32.mrb[0].mxu0
  %v2611 = vadd.f32 %v2474, %v2610
  %2612 = vmatprep.mubr.f32.mxu0 0.0
  %v2613 = vand.u32 %v1678, 4294901760
  %2614 = vmatmul.mubr.f32.gmra.mrb[0].mxu0 %v2613
  %v2615 = vpop.f32.mrb[0].mxu0
  %v2616 = vadd.f32 %v2483, %v2615
  %v2617 = vpop.f32.mrb[0].mxu0
  %v2618 = vadd.f32 %v2485, %v2617
  %2619 = vdwg.mxu0
  %v2620 = vand.u32 %v1634, 4294901760
  %v2621 = vsub.f32 %v1634, %v2620
  %2622 = vmatprep.subr.mxu0 %v2621
  %v2623 = vand.u32 %v1633, 4294901760
  %v2624 = vsub.f32 %v1633, %v2623
  %2625 = vmatpush1.msra.mxu0 %v2624
  %v2626 = vand.u32 %v1638, 4294901760
  %v2627 = vsub.f32 %v1638, %v2626
  %2628 = vmatprep.subr.mxu0 %v2627
  %v2629 = vand.u32 %v1637, 4294901760
  %v2630 = vsub.f32 %v1637, %v2629
  %2631 = vmatpush1.msra.mxu0 %v2630
  %v2632 = vand.u32 %v1642, 4294901760
  %v2633 = vsub.f32 %v1642, %v2632
  %2634 = vmatprep.subr.mxu0 %v2633
  %v2635 = vand.u32 %v1641, 4294901760
  %v2636 = vsub.f32 %v1641, %v2635
  %2637 = vmatpush1.msra.mxu0 %v2636
  %v2638 = vand.u32 %v1646, 4294901760
  %v2639 = vsub.f32 %v1646, %v2638
  %2640 = vmatprep.subr.mxu0 %v2639
  %v2641 = vand.u32 %v1645, 4294901760
  %v2642 = vsub.f32 %v1645, %v2641
  %2643 = vmatpush1.msra.mxu0 %v2642
  %2644 = vmatprep.subr.mxu0 0.0
  %2645 = vmatpush1.msra.mxu0 0.0
  %2646 = vmatprep.subr.mxu0 0.0
  %2647 = vmatpush1.msra.mxu0 0.0
  %2648 = vmatprep.subr.mxu0 0.0
  %2649 = vmatpush1.msra.mxu0 0.0
  %2650 = vmatprep.subr.mxu0 0.0
  %2651 = vmatpush1.msra.mxu0 0.0
  %2652 = vmatprep.subr.mxu0 0.0
  %2653 = vmatpush1.msra.mxu0 0.0
  %2654 = vmatprep.subr.mxu0 0.0
  %2655 = vmatpush1.msra.mxu0 0.0
  %2656 = vmatprep.subr.mxu0 0.0
  %2657 = vmatpush1.msra.mxu0 0.0
  %2658 = vmatprep.subr.mxu0 0.0
  %2659 = vmatpush1.msra.mxu0 0.0
  %2660 = vmatprep.subr.mxu0 0.0
  %2661 = vmatpush1.msra.mxu0 0.0
  %2662 = vmatprep.subr.mxu0 0.0
  %2663 = vmatpush1.msra.mxu0 0.0
  %2664 = vmatprep.subr.mxu0 0.0
  %2665 = vmatpush1.msra.mxu0 0.0
  %2666 = vmatprep.subr.mxu0 0.0
  %2667 = vmatpush1.msra.mxu0 0.0
  %2668 = vmatprep.subr.mxu0 0.0
  %2669 = vmatpush1.msra.mxu0 0.0
  %2670 = vmatprep.subr.mxu0 0.0
  %2671 = vmatpush1.msra.mxu0 0.0
  %2672 = vmatprep.subr.mxu0 0.0
  %2673 = vmatpush1.msra.mxu0 0.0
  %2674 = vmatprep.subr.mxu0 0.0
  %2675 = vmatpush1.msra.mxu0 0.0
  %2676 = vmatprep.subr.mxu0 0.0
  %2677 = vmatpush1.msra.mxu0 0.0
  %2678 = vmatprep.subr.mxu0 0.0
  %2679 = vmatpush1.msra.mxu0 0.0
  %2680 = vmatprep.subr.mxu0 0.0
  %2681 = vmatpush1.msra.mxu0 0.0
  %2682 = vmatprep.subr.mxu0 0.0
  %2683 = vmatpush1.msra.mxu0 0.0
  %2684 = vmatprep.subr.mxu0 0.0
  %2685 = vmatpush1.msra.mxu0 0.0
  %2686 = vmatprep.subr.mxu0 0.0
  %2687 = vmatpush1.msra.mxu0 0.0
  %2688 = vmatprep.subr.mxu0 0.0
  %2689 = vmatpush1.msra.mxu0 0.0
  %2690 = vmatprep.subr.mxu0 0.0
  %2691 = vmatpush1.msra.mxu0 0.0
  %2692 = vmatprep.subr.mxu0 0.0
  %2693 = vmatpush1.msra.mxu0 0.0
  %2694 = vmatprep.subr.mxu0 0.0
  %2695 = vmatpush1.msra.mxu0 0.0
  %2696 = vmatprep.subr.mxu0 0.0
  %2697 = vmatpush1.msra.mxu0 0.0
  %2698 = vmatprep.subr.mxu0 0.0
  %2699 = vmatpush1.msra.mxu0 0.0
  %2700 = vmatprep.mubr.f32.mxu0 0.0
  %v2701 = vand.u32 %v1669, 4294901760
  %v2702 = vsub.f32 %v1669, %v2701
  %2703 = vmatmul.mubr.f32.gmra.mrb[0].mxu0 %v2702
  %v2704 = vpop.f32.mrb[0].mxu0
  %v2705 = vadd.f32 %v2595, %v2704
  %v2706 = vpop.f32.mrb[0].mxu0
  %v2707 = vadd.f32 %v2597, %v2706
  %2708 = vmatprep.mubr.f32.mxu0 0.0
  %v2709 = vand.u32 %v1672, 4294901760
  %v2710 = vsub.f32 %v1672, %v2709
  %2711 = vmatmul.mubr.f32.gmra.mrb[0].mxu0 %v2710
  %v2712 = vpop.f32.mrb[0].mxu0
  %v2713 = vadd.f32 %v2602, %v2712
  %v2714 = vpop.f32.mrb[0].mxu0
  %v2715 = vadd.f32 %v2604, %v2714
  %2716 = vmatprep.mubr.f32.mxu0 0.0
  %v2717 = vand.u32 %v1675, 4294901760
  %v2718 = vsub.f32 %v1675, %v2717
  %2719 = vmatmul.mubr.f32.gmra.mrb[0].mxu0 %v2718
  %v2720 = vpop.f32.mrb[0].mxu0
  %v2721 = vadd.f32 %v2609, %v2720
  %v2722 = vpop.f32.mrb[0].mxu0
  %v2723 = vadd.f32 %v2611, %v2722
  %2724 = vmatprep.mubr.f32.mxu0 0.0
  %v2725 = vand.u32 %v1678, 4294901760
  %v2726 = vsub.f32 %v1678, %v2725
  %2727 = vmatmul.mubr.f32.gmra.mrb[0].mxu0 %v2726
  %v2728 = vpop.f32.mrb[0].mxu0
  %v2729 = vadd.f32 %v2616, %v2728
  %v2730 = vpop.f32.mrb[0].mxu0
  %v2731 = vadd.f32 %v2618, %v2730
  %2732 = vdwg.mxu0
  %v2733 = vand.u32 %v1634, 4294901760
  %2734 = vmatprep.subr.mxu0 %v2733
  %v2735 = vand.u32 %v1633, 4294901760
  %2736 = vmatpush1.msra.mxu0 %v2735
  %v2737 = vand.u32 %v1638, 4294901760
  %2738 = vmatprep.subr.mxu0 %v2737
  %v2739 = vand.u32 %v1637, 4294901760
  %2740 = vmatpush1.msra.mxu0 %v2739
  %v2741 = vand.u32 %v1642, 4294901760
  %2742 = vmatprep.subr.mxu0 %v2741
  %v2743 = vand.u32 %v1641, 4294901760
  %2744 = vmatpush1.msra.mxu0 %v2743
  %v2745 = vand.u32 %v1646, 4294901760
  %2746 = vmatprep.subr.mxu0 %v2745
  %v2747 = vand.u32 %v1645, 4294901760
  %2748 = vmatpush1.msra.mxu0 %v2747
  %2749 = vmatprep.subr.mxu0 0.0
  %2750 = vmatpush1.msra.mxu0 0.0
  %2751 = vmatprep.subr.mxu0 0.0
  %2752 = vmatpush1.msra.mxu0 0.0
  %2753 = vmatprep.subr.mxu0 0.0
  %2754 = vmatpush1.msra.mxu0 0.0
  %2755 = vmatprep.subr.mxu0 0.0
  %2756 = vmatpush1.msra.mxu0 0.0
  %2757 = vmatprep.subr.mxu0 0.0
  %2758 = vmatpush1.msra.mxu0 0.0
  %2759 = vmatprep.subr.mxu0 0.0
  %2760 = vmatpush1.msra.mxu0 0.0
  %2761 = vmatprep.subr.mxu0 0.0
  %2762 = vmatpush1.msra.mxu0 0.0
  %2763 = vmatprep.subr.mxu0 0.0
  %2764 = vmatpush1.msra.mxu0 0.0
  %2765 = vmatprep.subr.mxu0 0.0
  %2766 = vmatpush1.msra.mxu0 0.0
  %2767 = vmatprep.subr.mxu0 0.0
  %2768 = vmatpush1.msra.mxu0 0.0
  %2769 = vmatprep.subr.mxu0 0.0
  %2770 = vmatpush1.msra.mxu0 0.0
  %2771 = vmatprep.subr.mxu0 0.0
  %2772 = vmatpush1.msra.mxu0 0.0
  %2773 = vmatprep.subr.mxu0 0.0
  %2774 = vmatpush1.msra.mxu0 0.0
  %2775 = vmatprep.subr.mxu0 0.0
  %2776 = vmatpush1.msra.mxu0 0.0
  %2777 = vmatprep.subr.mxu0 0.0
  %2778 = vmatpush1.msra.mxu0 0.0
  %2779 = vmatprep.subr.mxu0 0.0
  %2780 = vmatpush1.msra.mxu0 0.0
  %2781 = vmatprep.subr.mxu0 0.0
  %2782 = vmatpush1.msra.mxu0 0.0
  %2783 = vmatprep.subr.mxu0 0.0
  %2784 = vmatpush1.msra.mxu0 0.0
  %2785 = vmatprep.subr.mxu0 0.0
  %2786 = vmatpush1.msra.mxu0 0.0
  %2787 = vmatprep.subr.mxu0 0.0
  %2788 = vmatpush1.msra.mxu0 0.0
  %2789 = vmatprep.subr.mxu0 0.0
  %2790 = vmatpush1.msra.mxu0 0.0
  %2791 = vmatprep.subr.mxu0 0.0
  %2792 = vmatpush1.msra.mxu0 0.0
  %2793 = vmatprep.subr.mxu0 0.0
  %2794 = vmatpush1.msra.mxu0 0.0
  %2795 = vmatprep.subr.mxu0 0.0
  %2796 = vmatpush1.msra.mxu0 0.0
  %2797 = vmatprep.subr.mxu0 0.0
  %2798 = vmatpush1.msra.mxu0 0.0
  %2799 = vmatprep.subr.mxu0 0.0
  %2800 = vmatpush1.msra.mxu0 0.0
  %2801 = vmatprep.subr.mxu0 0.0
  %2802 = vmatpush1.msra.mxu0 0.0
  %2803 = vmatprep.subr.mxu0 0.0
  %2804 = vmatpush1.msra.mxu0 0.0
  %2805 = vmatprep.mubr.f32.mxu0 0.0
  %v2806 = vand.u32 %v1669, 4294901760
  %v2807 = vsub.f32 %v1669, %v2806
  %v2808 = vand.u32 %v2807, 4294901760
  %2809 = vmatmul.mubr.f32.gmra.mrb[0].mxu0 %v2808
  %v2810 = vpop.f32.mrb[0].mxu0
  %v2811 = vadd.f32 %v2705, %v2810
  %v2812 = vpop.f32.mrb[0].mxu0
  %v2813 = vadd.f32 %v2707, %v2812
  %2814 = vmatprep.mubr.f32.mxu0 0.0
  %v2815 = vand.u32 %v1672, 4294901760
  %v2816 = vsub.f32 %v1672, %v2815
  %v2817 = vand.u32 %v2816, 4294901760
  %2818 = vmatmul.mubr.f32.gmra.mrb[0].mxu0 %v2817
  %v2819 = vpop.f32.mrb[0].mxu0
  %v2820 = vadd.f32 %v2713, %v2819
  %v2821 = vpop.f32.mrb[0].mxu0
  %v2822 = vadd.f32 %v2715, %v2821
  %2823 = vmatprep.mubr.f32.mxu0 0.0
  %v2824 = vand.u32 %v1675, 4294901760
  %v2825 = vsub.f32 %v1675, %v2824
  %v2826 = vand.u32 %v2825, 4294901760
  %2827 = vmatmul.mubr.f32.gmra.mrb[0].mxu0 %v2826
  %v2828 = vpop.f32.mrb[0].mxu0
  %v2829 = vadd.f32 %v2721, %v2828
  %v2830 = vpop.f32.mrb[0].mxu0
  %v2831 = vadd.f32 %v2723, %v2830
  %2832 = vmatprep.mubr.f32.mxu0 0.0
  %v2833 = vand.u32 %v1678, 4294901760
  %v2834 = vsub.f32 %v1678, %v2833
  %v2835 = vand.u32 %v2834, 4294901760
  %2836 = vmatmul.mubr.f32.gmra.mrb[0].mxu0 %v2835
  %v2837 = vpop.f32.mrb[0].mxu0
  %v2838 = vadd.f32 %v2729, %v2837
  %v2839 = vpop.f32.mrb[0].mxu0
  %v2840 = vadd.f32 %v2731, %v2839
  %2841 = vdwg.mxu0
  %v2842 = vand.u32 %v1634, 4294901760
  %v2843 = vsub.f32 %v1634, %v2842
  %v2844 = vand.u32 %v2843, 4294901760
  %2845 = vmatprep.subr.mxu0 %v2844
  %v2846 = vand.u32 %v1633, 4294901760
  %v2847 = vsub.f32 %v1633, %v2846
  %v2848 = vand.u32 %v2847, 4294901760
  %2849 = vmatpush1.msra.mxu0 %v2848
  %v2850 = vand.u32 %v1638, 4294901760
  %v2851 = vsub.f32 %v1638, %v2850
  %v2852 = vand.u32 %v2851, 4294901760
  %2853 = vmatprep.subr.mxu0 %v2852
  %v2854 = vand.u32 %v1637, 4294901760
  %v2855 = vsub.f32 %v1637, %v2854
  %v2856 = vand.u32 %v2855, 4294901760
  %2857 = vmatpush1.msra.mxu0 %v2856
  %v2858 = vand.u32 %v1642, 4294901760
  %v2859 = vsub.f32 %v1642, %v2858
  %v2860 = vand.u32 %v2859, 4294901760
  %2861 = vmatprep.subr.mxu0 %v2860
  %v2862 = vand.u32 %v1641, 4294901760
  %v2863 = vsub.f32 %v1641, %v2862
  %v2864 = vand.u32 %v2863, 4294901760
  %2865 = vmatpush1.msra.mxu0 %v2864
  %v2866 = vand.u32 %v1646, 4294901760
  %v2867 = vsub.f32 %v1646, %v2866
  %v2868 = vand.u32 %v2867, 4294901760
  %2869 = vmatprep.subr.mxu0 %v2868
  %v2870 = vand.u32 %v1645, 4294901760
  %v2871 = vsub.f32 %v1645, %v2870
  %v2872 = vand.u32 %v2871, 4294901760
  %2873 = vmatpush1.msra.mxu0 %v2872
  %2874 = vmatprep.subr.mxu0 0.0
  %2875 = vmatpush1.msra.mxu0 0.0
  %2876 = vmatprep.subr.mxu0 0.0
  %2877 = vmatpush1.msra.mxu0 0.0
  %2878 = vmatprep.subr.mxu0 0.0
  %2879 = vmatpush1.msra.mxu0 0.0
  %2880 = vmatprep.subr.mxu0 0.0
  %2881 = vmatpush1.msra.mxu0 0.0
  %2882 = vmatprep.subr.mxu0 0.0
  %2883 = vmatpush1.msra.mxu0 0.0
  %2884 = vmatprep.subr.mxu0 0.0
  %2885 = vmatpush1.msra.mxu0 0.0
  %2886 = vmatprep.subr.mxu0 0.0
  %2887 = vmatpush1.msra.mxu0 0.0
  %2888 = vmatprep.subr.mxu0 0.0
  %2889 = vmatpush1.msra.mxu0 0.0
  %2890 = vmatprep.subr.mxu0 0.0
  %2891 = vmatpush1.msra.mxu0 0.0
  %2892 = vmatprep.subr.mxu0 0.0
  %2893 = vmatpush1.msra.mxu0 0.0
  %2894 = vmatprep.subr.mxu0 0.0
  %2895 = vmatpush1.msra.mxu0 0.0
  %2896 = vmatprep.subr.mxu0 0.0
  %2897 = vmatpush1.msra.mxu0 0.0
  %2898 = vmatprep.subr.mxu0 0.0
  %2899 = vmatpush1.msra.mxu0 0.0
  %2900 = vmatprep.subr.mxu0 0.0
  %2901 = vmatpush1.msra.mxu0 0.0
  %2902 = vmatprep.subr.mxu0 0.0
  %2903 = vmatpush1.msra.mxu0 0.0
  %2904 = vmatprep.subr.mxu0 0.0
  %2905 = vmatpush1.msra.mxu0 0.0
  %2906 = vmatprep.subr.mxu0 0.0
  %2907 = vmatpush1.msra.mxu0 0.0
  %2908 = vmatprep.subr.mxu0 0.0
  %2909 = vmatpush1.msra.mxu0 0.0
  %2910 = vmatprep.subr.mxu0 0.0
  %2911 = vmatpush1.msra.mxu0 0.0
  %2912 = vmatprep.subr.mxu0 0.0
  %2913 = vmatpush1.msra.mxu0 0.0
  %2914 = vmatprep.subr.mxu0 0.0
  %2915 = vmatpush1.msra.mxu0 0.0
  %2916 = vmatprep.subr.mxu0 0.0
  %2917 = vmatpush1.msra.mxu0 0.0
  %2918 = vmatprep.subr.mxu0 0.0
  %2919 = vmatpush1.msra.mxu0 0.0
  %2920 = vmatprep.subr.mxu0 0.0
  %2921 = vmatpush1.msra.mxu0 0.0
  %2922 = vmatprep.subr.mxu0 0.0
  %2923 = vmatpush1.msra.mxu0 0.0
  %2924 = vmatprep.subr.mxu0 0.0
  %2925 = vmatpush1.msra.mxu0 0.0
  %2926 = vmatprep.subr.mxu0 0.0
  %2927 = vmatpush1.msra.mxu0 0.0
  %2928 = vmatprep.subr.mxu0 0.0
  %2929 = vmatpush1.msra.mxu0 0.0
  %2930 = vmatprep.mubr.f32.mxu0 0.0
  %v2931 = vand.u32 %v1669, 4294901760
  %2932 = vmatmul.mubr.f32.gmra.mrb[0].mxu0 %v2931
  %v2933 = vpop.f32.mrb[0].mxu0
  %v2934 = vadd.f32 %v2811, %v2933
  %v2935 = vpop.f32.mrb[0].mxu0
  %v2936 = vadd.f32 %v2813, %v2935
  %2937 = vmatprep.mubr.f32.mxu0 0.0
  %v2938 = vand.u32 %v1672, 4294901760
  %2939 = vmatmul.mubr.f32.gmra.mrb[0].mxu0 %v2938
  %v2940 = vpop.f32.mrb[0].mxu0
  %v2941 = vadd.f32 %v2820, %v2940
  %v2942 = vpop.f32.mrb[0].mxu0
  %v2943 = vadd.f32 %v2822, %v2942
  %2944 = vmatprep.mubr.f32.mxu0 0.0
  %v2945 = vand.u32 %v1675, 4294901760
  %2946 = vmatmul.mubr.f32.gmra.mrb[0].mxu0 %v2945
  %v2947 = vpop.f32.mrb[0].mxu0
  %v2948 = vadd.f32 %v2829, %v2947
  %v2949 = vpop.f32.mrb[0].mxu0
  %v2950 = vadd.f32 %v2831, %v2949
  %2951 = vmatprep.mubr.f32.mxu0 0.0
  %v2952 = vand.u32 %v1678, 4294901760
  %2953 = vmatmul.mubr.f32.gmra.mrb[0].mxu0 %v2952
  %v2954 = vpop.f32.mrb[0].mxu0
  %v2955 = vadd.f32 %v2838, %v2954
  %v2956 = vpop.f32.mrb[0].mxu0
  %v2957 = vadd.f32 %v2840, %v2956
  %2958 = vdwg.mxu0
  %v2959 = vand.u32 %v1634, 4294901760
  %2960 = vmatprep.subr.mxu0 %v2959
  %v2961 = vand.u32 %v1633, 4294901760
  %2962 = vmatpush1.msra.mxu0 %v2961
  %v2963 = vand.u32 %v1638, 4294901760
  %2964 = vmatprep.subr.mxu0 %v2963
  %v2965 = vand.u32 %v1637, 4294901760
  %2966 = vmatpush1.msra.mxu0 %v2965
  %v2967 = vand.u32 %v1642, 4294901760
  %2968 = vmatprep.subr.mxu0 %v2967
  %v2969 = vand.u32 %v1641, 4294901760
  %2970 = vmatpush1.msra.mxu0 %v2969
  %v2971 = vand.u32 %v1646, 4294901760
  %2972 = vmatprep.subr.mxu0 %v2971
  %v2973 = vand.u32 %v1645, 4294901760
  %2974 = vmatpush1.msra.mxu0 %v2973
  %2975 = vmatprep.subr.mxu0 0.0
  %2976 = vmatpush1.msra.mxu0 0.0
  %2977 = vmatprep.subr.mxu0 0.0
  %2978 = vmatpush1.msra.mxu0 0.0
  %2979 = vmatprep.subr.mxu0 0.0
  %2980 = vmatpush1.msra.mxu0 0.0
  %2981 = vmatprep.subr.mxu0 0.0
  %2982 = vmatpush1.msra.mxu0 0.0
  %2983 = vmatprep.subr.mxu0 0.0
  %2984 = vmatpush1.msra.mxu0 0.0
  %2985 = vmatprep.subr.mxu0 0.0
  %2986 = vmatpush1.msra.mxu0 0.0
  %2987 = vmatprep.subr.mxu0 0.0
  %2988 = vmatpush1.msra.mxu0 0.0
  %2989 = vmatprep.subr.mxu0 0.0
  %2990 = vmatpush1.msra.mxu0 0.0
  %2991 = vmatprep.subr.mxu0 0.0
  %2992 = vmatpush1.msra.mxu0 0.0
  %2993 = vmatprep.subr.mxu0 0.0
  %2994 = vmatpush1.msra.mxu0 0.0
  %2995 = vmatprep.subr.mxu0 0.0
  %2996 = vmatpush1.msra.mxu0 0.0
  %2997 = vmatprep.subr.mxu0 0.0
  %2998 = vmatpush1.msra.mxu0 0.0
  %2999 = vmatprep.subr.mxu0 0.0
  %3000 = vmatpush1.msra.mxu0 0.0
  %3001 = vmatprep.subr.mxu0 0.0
  %3002 = vmatpush1.msra.mxu0 0.0
  %3003 = vmatprep.subr.mxu0 0.0
  %3004 = vmatpush1.msra.mxu0 0.0
  %3005 = vmatprep.subr.mxu0 0.0
  %3006 = vmatpush1.msra.mxu0 0.0
  %3007 = vmatprep.subr.mxu0 0.0
  %3008 = vmatpush1.msra.mxu0 0.0
  %3009 = vmatprep.subr.mxu0 0.0
  %3010 = vmatpush1.msra.mxu0 0.0
  %3011 = vmatprep.subr.mxu0 0.0
  %3012 = vmatpush1.msra.mxu0 0.0
  %3013 = vmatprep.subr.mxu0 0.0
  %3014 = vmatpush1.msra.mxu0 0.0
  %3015 = vmatprep.subr.mxu0 0.0
  %3016 = vmatpush1.msra.mxu0 0.0
  %3017 = vmatprep.subr.mxu0 0.0
  %3018 = vmatpush1.msra.mxu0 0.0
  %3019 = vmatprep.subr.mxu0 0.0
  %3020 = vmatpush1.msra.mxu0 0.0
  %3021 = vmatprep.subr.mxu0 0.0
  %3022 = vmatpush1.msra.mxu0 0.0
  %3023 = vmatprep.subr.mxu0 0.0
  %3024 = vmatpush1.msra.mxu0 0.0
  %3025 = vmatprep.subr.mxu0 0.0
  %3026 = vmatpush1.msra.mxu0 0.0
  %3027 = vmatprep.subr.mxu0 0.0
  %3028 = vmatpush1.msra.mxu0 0.0
  %3029 = vmatprep.subr.mxu0 0.0
  %3030 = vmatpush1.msra.mxu0 0.0
  %3031 = vmatprep.mubr.f32.mxu0 0.0
  %v3032 = vand.u32 %v1669, 4294901760
  %3033 = vmatmul.mubr.f32.gmra.mrb[0].mxu0 %v3032
  %v3034 = vpop.f32.mrb[0].mxu0
  %v3035 = vadd.f32 %v2934, %v3034
  %v3036 = vpop.f32.mrb[0].mxu0
  %v3037 = vadd.f32 %v2936, %v3036
  %3038 = vmatprep.mubr.f32.mxu0 0.0
  %v3039 = vand.u32 %v1672, 4294901760
  %3040 = vmatmul.mubr.f32.gmra.mrb[0].mxu0 %v3039
  %v3041 = vpop.f32.mrb[0].mxu0
  %v3042 = vadd.f32 %v2941, %v3041
  %v3043 = vpop.f32.mrb[0].mxu0
  %v3044 = vadd.f32 %v2943, %v3043
  %3045 = vmatprep.mubr.f32.mxu0 0.0
  %v3046 = vand.u32 %v1675, 4294901760
  %3047 = vmatmul.mubr.f32.gmra.mrb[0].mxu0 %v3046
  %v3048 = vpop.f32.mrb[0].mxu0
  %v3049 = vadd.f32 %v2948, %v3048
  %v3050 = vpop.f32.mrb[0].mxu0
  %v3051 = vadd.f32 %v2950, %v3050
  %3052 = vmatprep.mubr.f32.mxu0 0.0
  %v3053 = vand.u32 %v1678, 4294901760
  %3054 = vmatmul.mubr.f32.gmra.mrb[0].mxu0 %v3053
  %v3055 = vpop.f32.mrb[0].mxu0
  %v3056 = vadd.f32 %v2955, %v3055
  %v3057 = vpop.f32.mrb[0].mxu0
  %v3058 = vadd.f32 %v2957, %v3057
  %3059 = vdwg.mxu0
  %v3060 = vmul.f32 %v2345, 0.31830987
  %v3061 = vmul.f32 %v2347, 0.31830987
  %v3062 = vmul.f32 %v3035, 0.31830987
  %v3063 = vmul.f32 %v3037, 0.31830987
  %v3064 = vmul.f32 %v2352, 0.31830987
  %v3065 = vmul.f32 %v2354, 0.31830987
  %v3066 = vmul.f32 %v3042, 0.31830987
  %v3067 = vmul.f32 %v3044, 0.31830987
  %v3068 = vmul.f32 %v2359, 0.31830987
  %v3069 = vmul.f32 %v2361, 0.31830987
  %v3070 = vmul.f32 %v3049, 0.31830987
  %v3071 = vmul.f32 %v3051, 0.31830987
  %v3072 = vmul.f32 %v2366, 0.31830987
  %v3073 = vmul.f32 %v2368, 0.31830987
  %v3074 = vmul.f32 %v3056, 0.31830987
  %v3075 = vmul.f32 %v3058, 0.31830987
  %v3076 = vround.ne.pseudo %v3060
  %v3077 = vround.ne.pseudo %v3061
  %v3078 = vround.ne.pseudo %v3062
  %v3079 = vround.ne.pseudo %v3063
  %v3080 = vround.ne.pseudo %v3064
  %v3081 = vround.ne.pseudo %v3065
  %v3082 = vround.ne.pseudo %v3066
  %v3083 = vround.ne.pseudo %v3067
  %v3084 = vround.ne.pseudo %v3068
  %v3085 = vround.ne.pseudo %v3069
  %v3086 = vround.ne.pseudo %v3070
  %v3087 = vround.ne.pseudo %v3071
  %v3088 = vround.ne.pseudo %v3072
  %v3089 = vround.ne.pseudo %v3073
  %v3090 = vround.ne.pseudo %v3074
  %v3091 = vround.ne.pseudo %v3075
  %v3092 = vmul.f32 %v3076, 3.140625
  %v3093 = vmul.f32 %v3077, 3.140625
  %v3094 = vmul.f32 %v3078, 3.140625
  %v3095 = vmul.f32 %v3079, 3.140625
  %v3096 = vmul.f32 %v3080, 3.140625
  %v3097 = vmul.f32 %v3081, 3.140625
  %v3098 = vmul.f32 %v3082, 3.140625
  %v3099 = vmul.f32 %v3083, 3.140625
  %v3100 = vmul.f32 %v3084, 3.140625
  %v3101 = vmul.f32 %v3085, 3.140625
  %v3102 = vmul.f32 %v3086, 3.140625
  %v3103 = vmul.f32 %v3087, 3.140625
  %v3104 = vmul.f32 %v3088, 3.140625
  %v3105 = vmul.f32 %v3089, 3.140625
  %v3106 = vmul.f32 %v3090, 3.140625
  %v3107 = vmul.f32 %v3091, 3.140625
  %v3108 = vsub.f32 %v2345, %v3092
  %v3109 = vsub.f32 %v2347, %v3093
  %v3110 = vsub.f32 %v3035, %v3094
  %v3111 = vsub.f32 %v3037, %v3095
  %v3112 = vsub.f32 %v2352, %v3096
  %v3113 = vsub.f32 %v2354, %v3097
  %v3114 = vsub.f32 %v3042, %v3098
  %v3115 = vsub.f32 %v3044, %v3099
  %v3116 = vsub.f32 %v2359, %v3100
  %v3117 = vsub.f32 %v2361, %v3101
  %v3118 = vsub.f32 %v3049, %v3102
  %v3119 = vsub.f32 %v3051, %v3103
  %v3120 = vsub.f32 %v2366, %v3104
  %v3121 = vsub.f32 %v2368, %v3105
  %v3122 = vsub.f32 %v3056, %v3106
  %v3123 = vsub.f32 %v3058, %v3107
  %v3124 = vmul.f32 %v3076, 0.0009676536
  %v3125 = vmul.f32 %v3077, 0.0009676536
  %v3126 = vmul.f32 %v3078, 0.0009676536
  %v3127 = vmul.f32 %v3079, 0.0009676536
  %v3128 = vmul.f32 %v3080, 0.0009676536
  %v3129 = vmul.f32 %v3081, 0.0009676536
  %v3130 = vmul.f32 %v3082, 0.0009676536
  %v3131 = vmul.f32 %v3083, 0.0009676536
  %v3132 = vmul.f32 %v3084, 0.0009676536
  %v3133 = vmul.f32 %v3085, 0.0009676536
  %v3134 = vmul.f32 %v3086, 0.0009676536
  %v3135 = vmul.f32 %v3087, 0.0009676536
  %v3136 = vmul.f32 %v3088, 0.0009676536
  %v3137 = vmul.f32 %v3089, 0.0009676536
  %v3138 = vmul.f32 %v3090, 0.0009676536
  %v3139 = vmul.f32 %v3091, 0.0009676536
  %v3140 = vsub.f32 %v3108, %v3124
  %v3141 = vsub.f32 %v3109, %v3125
  %v3142 = vsub.f32 %v3110, %v3126
  %v3143 = vsub.f32 %v3111, %v3127
  %v3144 = vsub.f32 %v3112, %v3128
  %v3145 = vsub.f32 %v3113, %v3129
  %v3146 = vsub.f32 %v3114, %v3130
  %v3147 = vsub.f32 %v3115, %v3131
  %v3148 = vsub.f32 %v3116, %v3132
  %v3149 = vsub.f32 %v3117, %v3133
  %v3150 = vsub.f32 %v3118, %v3134
  %v3151 = vsub.f32 %v3119, %v3135
  %v3152 = vsub.f32 %v3120, %v3136
  %v3153 = vsub.f32 %v3121, %v3137
  %v3154 = vsub.f32 %v3122, %v3138
  %v3155 = vsub.f32 %v3123, %v3139
  %v3156 = vmul.f32 %v3140, %v3140
  %v3157 = vmul.f32 %v3141, %v3141
  %v3158 = vmul.f32 %v3142, %v3142
  %v3159 = vmul.f32 %v3143, %v3143
  %v3160 = vmul.f32 %v3144, %v3144
  %v3161 = vmul.f32 %v3145, %v3145
  %v3162 = vmul.f32 %v3146, %v3146
  %v3163 = vmul.f32 %v3147, %v3147
  %v3164 = vmul.f32 %v3148, %v3148
  %v3165 = vmul.f32 %v3149, %v3149
  %v3166 = vmul.f32 %v3150, %v3150
  %v3167 = vmul.f32 %v3151, %v3151
  %v3168 = vmul.f32 %v3152, %v3152
  %v3169 = vmul.f32 %v3153, %v3153
  %v3170 = vmul.f32 %v3154, %v3154
  %v3171 = vmul.f32 %v3155, %v3155
  %v3172 = vmul.f32 %v3140, %v3156
  %v3173 = vmul.f32 %v3141, %v3157
  %v3174 = vmul.f32 %v3142, %v3158
  %v3175 = vmul.f32 %v3143, %v3159
  %v3176 = vmul.f32 %v3144, %v3160
  %v3177 = vmul.f32 %v3145, %v3161
  %v3178 = vmul.f32 %v3146, %v3162
  %v3179 = vmul.f32 %v3147, %v3163
  %v3180 = vmul.f32 %v3148, %v3164
  %v3181 = vmul.f32 %v3149, %v3165
  %v3182 = vmul.f32 %v3150, %v3166
  %v3183 = vmul.f32 %v3151, %v3167
  %v3184 = vmul.f32 %v3152, %v3168
  %v3185 = vmul.f32 %v3153, %v3169
  %v3186 = vmul.f32 %v3154, %v3170
  %v3187 = vmul.f32 %v3155, %v3171
  %v3188 = vmul.f32 %v3156, -0.00019515296
  %v3189 = vmul.f32 %v3157, -0.00019515296
  %v3190 = vmul.f32 %v3158, -0.00019515296
  %v3191 = vmul.f32 %v3159, -0.00019515296
  %v3192 = vmul.f32 %v3160, -0.00019515296
  %v3193 = vmul.f32 %v3161, -0.00019515296
  %v3194 = vmul.f32 %v3162, -0.00019515296
  %v3195 = vmul.f32 %v3163, -0.00019515296
  %v3196 = vmul.f32 %v3164, -0.00019515296
  %v3197 = vmul.f32 %v3165, -0.00019515296
  %v3198 = vmul.f32 %v3166, -0.00019515296
  %v3199 = vmul.f32 %v3167, -0.00019515296
  %v3200 = vmul.f32 %v3168, -0.00019515296
  %v3201 = vmul.f32 %v3169, -0.00019515296
  %v3202 = vmul.f32 %v3170, -0.00019515296
  %v3203 = vmul.f32 %v3171, -0.00019515296
  %v3204 = vadd.f32 %v3188, 0.008332161
  %v3205 = vadd.f32 %v3189, 0.008332161
  %v3206 = vadd.f32 %v3190, 0.008332161
  %v3207 = vadd.f32 %v3191, 0.008332161
  %v3208 = vadd.f32 %v3192, 0.008332161
  %v3209 = vadd.f32 %v3193, 0.008332161
  %v3210 = vadd.f32 %v3194, 0.008332161
  %v3211 = vadd.f32 %v3195, 0.008332161
  %v3212 = vadd.f32 %v3196, 0.008332161
  %v3213 = vadd.f32 %v3197, 0.008332161
  %v3214 = vadd.f32 %v3198, 0.008332161
  %v3215 = vadd.f32 %v3199, 0.008332161
  %v3216 = vadd.f32 %v3200, 0.008332161
  %v3217 = vadd.f32 %v3201, 0.008332161
  %v3218 = vadd.f32 %v3202, 0.008332161
  %v3219 = vadd.f32 %v3203, 0.008332161
  %v3220 = vmul.f32 %v3156, %v3204
  %v3221 = vmul.f32 %v3157, %v3205
  %v3222 = vmul.f32 %v3158, %v3206
  %v3223 = vmul.f32 %v3159, %v3207
  %v3224 = vmul.f32 %v3160, %v3208
  %v3225 = vmul.f32 %v3161, %v3209
  %v3226 = vmul.f32 %v3162, %v3210
  %v3227 = vmul.f32 %v3163, %v3211
  %v3228 = vmul.f32 %v3164, %v3212
  %v3229 = vmul.f32 %v3165, %v3213
  %v3230 = vmul.f32 %v3166, %v3214
  %v3231 = vmul.f32 %v3167, %v3215
  %v3232 = vmul.f32 %v3168, %v3216
  %v3233 = vmul.f32 %v3169, %v3217
  %v3234 = vmul.f32 %v3170, %v3218
  %v3235 = vmul.f32 %v3171, %v3219
  %v3236 = vadd.f32 %v3220, -0.16666655
  %v3237 = vadd.f32 %v3221, -0.16666655
  %v3238 = vadd.f32 %v3222, -0.16666655
  %v3239 = vadd.f32 %v3223, -0.16666655
  %v3240 = vadd.f32 %v3224, -0.16666655
  %v3241 = vadd.f32 %v3225, -0.16666655
  %v3242 = vadd.f32 %v3226, -0.16666655
  %v3243 = vadd.f32 %v3227, -0.16666655
  %v3244 = vadd.f32 %v3228, -0.16666655
  %v3245 = vadd.f32 %v3229, -0.16666655
  %v3246 = vadd.f32 %v3230, -0.16666655
  %v3247 = vadd.f32 %v3231, -0.16666655
  %v3248 = vadd.f32 %v3232, -0.16666655
  %v3249 = vadd.f32 %v3233, -0.16666655
  %v3250 = vadd.f32 %v3234, -0.16666655
  %v3251 = vadd.f32 %v3235, -0.16666655
  %v3252 = vmul.f32 %v3172, %v3236
  %v3253 = vmul.f32 %v3173, %v3237
  %v3254 = vmul.f32 %v3174, %v3238
  %v3255 = vmul.f32 %v3175, %v3239
  %v3256 = vmul.f32 %v3176, %v3240
  %v3257 = vmul.f32 %v3177, %v3241
  %v3258 = vmul.f32 %v3178, %v3242
  %v3259 = vmul.f32 %v3179, %v3243
  %v3260 = vmul.f32 %v3180, %v3244
  %v3261 = vmul.f32 %v3181, %v3245
  %v3262 = vmul.f32 %v3182, %v3246
  %v3263 = vmul.f32 %v3183, %v3247
  %v3264 = vmul.f32 %v3184, %v3248
  %v3265 = vmul.f32 %v3185, %v3249
  %v3266 = vmul.f32 %v3186, %v3250
  %v3267 = vmul.f32 %v3187, %v3251
  %v3268 = vadd.f32 %v3140, %v3252
  %v3269 = vadd.f32 %v3141, %v3253
  %v3270 = vadd.f32 %v3142, %v3254
  %v3271 = vadd.f32 %v3143, %v3255
  %v3272 = vadd.f32 %v3144, %v3256
  %v3273 = vadd.f32 %v3145, %v3257
  %v3274 = vadd.f32 %v3146, %v3258
  %v3275 = vadd.f32 %v3147, %v3259
  %v3276 = vadd.f32 %v3148, %v3260
  %v3277 = vadd.f32 %v3149, %v3261
  %v3278 = vadd.f32 %v3150, %v3262
  %v3279 = vadd.f32 %v3151, %v3263
  %v3280 = vadd.f32 %v3152, %v3264
  %v3281 = vadd.f32 %v3153, %v3265
  %v3282 = vadd.f32 %v3154, %v3266
  %v3283 = vadd.f32 %v3155, %v3267
  %v3284 = vcvt.f32.s32.ties.to.even %v3060
  %v3285 = vcvt.f32.s32.ties.to.even %v3061
  %v3286 = vcvt.f32.s32.ties.to.even %v3062
  %v3287 = vcvt.f32.s32.ties.to.even %v3063
  %v3288 = vcvt.f32.s32.ties.to.even %v3064
  %v3289 = vcvt.f32.s32.ties.to.even %v3065
  %v3290 = vcvt.f32.s32.ties.to.even %v3066
  %v3291 = vcvt.f32.s32.ties.to.even %v3067
  %v3292 = vcvt.f32.s32.ties.to.even %v3068
  %v3293 = vcvt.f32.s32.ties.to.even %v3069
  %v3294 = vcvt.f32.s32.ties.to.even %v3070
  %v3295 = vcvt.f32.s32.ties.to.even %v3071
  %v3296 = vcvt.f32.s32.ties.to.even %v3072
  %v3297 = vcvt.f32.s32.ties.to.even %v3073
  %v3298 = vcvt.f32.s32.ties.to.even %v3074
  %v3299 = vcvt.f32.s32.ties.to.even %v3075
  %v3300 = vand.u32 %v3284, 1
  %v3301 = vand.u32 %v3285, 1
  %v3302 = vand.u32 %v3286, 1
  %v3303 = vand.u32 %v3287, 1
  %v3304 = vand.u32 %v3288, 1
  %v3305 = vand.u32 %v3289, 1
  %v3306 = vand.u32 %v3290, 1
  %v3307 = vand.u32 %v3291, 1
  %v3308 = vand.u32 %v3292, 1
  %v3309 = vand.u32 %v3293, 1
  %v3310 = vand.u32 %v3294, 1
  %v3311 = vand.u32 %v3295, 1
  %v3312 = vand.u32 %v3296, 1
  %v3313 = vand.u32 %v3297, 1
  %v3314 = vand.u32 %v3298, 1
  %v3315 = vand.u32 %v3299, 1
  %vm3316 = vcmp.eq.s32.totalorder %v3300, 1
  %vm3317 = vcmp.eq.s32.totalorder %v3301, 1
  %vm3318 = vcmp.eq.s32.totalorder %v3302, 1
  %vm3319 = vcmp.eq.s32.totalorder %v3303, 1
  %vm3320 = vcmp.eq.s32.totalorder %v3304, 1
  %vm3321 = vcmp.eq.s32.totalorder %v3305, 1
  %vm3322 = vcmp.eq.s32.totalorder %v3306, 1
  %vm3323 = vcmp.eq.s32.totalorder %v3307, 1
  %vm3324 = vcmp.eq.s32.totalorder %v3308, 1
  %vm3325 = vcmp.eq.s32.totalorder %v3309, 1
  %vm3326 = vcmp.eq.s32.totalorder %v3310, 1
  %vm3327 = vcmp.eq.s32.totalorder %v3311, 1
  %vm3328 = vcmp.eq.s32.totalorder %v3312, 1
  %vm3329 = vcmp.eq.s32.totalorder %v3313, 1
  %vm3330 = vcmp.eq.s32.totalorder %v3314, 1
  %vm3331 = vcmp.eq.s32.totalorder %v3315, 1
  %v3332 = vsub.f32 0.0, %v3268
  %v3333 = vsub.f32 0.0, %v3269
  %v3334 = vsub.f32 0.0, %v3270
  %v3335 = vsub.f32 0.0, %v3271
  %v3336 = vsub.f32 0.0, %v3272
  %v3337 = vsub.f32 0.0, %v3273
  %v3338 = vsub.f32 0.0, %v3274
  %v3339 = vsub.f32 0.0, %v3275
  %v3340 = vsub.f32 0.0, %v3276
  %v3341 = vsub.f32 0.0, %v3277
  %v3342 = vsub.f32 0.0, %v3278
  %v3343 = vsub.f32 0.0, %v3279
  %v3344 = vsub.f32 0.0, %v3280
  %v3345 = vsub.f32 0.0, %v3281
  %v3346 = vsub.f32 0.0, %v3282
  %v3347 = vsub.f32 0.0, %v3283
  %v3348 = vsel %vm3316, %v3332, %v3268
  %v3349 = vsel %vm3317, %v3333, %v3269
  %v3350 = vsel %vm3318, %v3334, %v3270
  %v3351 = vsel %vm3319, %v3335, %v3271
  %v3352 = vsel %vm3320, %v3336, %v3272
  %v3353 = vsel %vm3321, %v3337, %v3273
  %v3354 = vsel %vm3322, %v3338, %v3274
  %v3355 = vsel %vm3323, %v3339, %v3275
  %v3356 = vsel %vm3324, %v3340, %v3276
  %v3357 = vsel %vm3325, %v3341, %v3277
  %v3358 = vsel %vm3326, %v3342, %v3278
  %v3359 = vsel %vm3327, %v3343, %v3279
  %v3360 = vsel %vm3328, %v3344, %v3280
  %v3361 = vsel %vm3329, %v3345, %v3281
  %v3362 = vsel %vm3330, %v3346, %v3282
  %v3363 = vsel %vm3331, %v3347, %v3283
  %3365 = vset.pattern.permute.xlu0 0
  %3366 = vperm.xlu0 %3365, %v52
  %v3367 = vpop.permute.xlu0 %3366
  %3370 = vset.pattern.permute.xlu0 0
  %3371 = vperm.xlu0 %3370, %v53
  %v3372 = vpop.permute.xlu0 %3371
  %3375 = vset.pattern.permute.xlu0 0
  %3376 = vperm.xlu0 %3375, %v54
  %v3377 = vpop.permute.xlu0 %3376
  %3380 = vset.pattern.permute.xlu0 0
  %3381 = vperm.xlu0 %3380, %v55
  %v3382 = vpop.permute.xlu0 %3381
  %v3385 = vsel %vm1667, %v48, 0
  %v3388 = vsel %vm1667, %v49, 0
  %v3391 = vsel %vm1667, %v50, 0
  %v3394 = vsel %vm1667, %v51, 0
  %v3396 = vand.u32 %v3349, 4294901760
  %3397 = vmatprep.subr.mxu0 %v3396
  %v3398 = vand.u32 %v3348, 4294901760
  %3399 = vmatpush1.msra.mxu0 %v3398
  %v3400 = vand.u32 %v3353, 4294901760
  %3401 = vmatprep.subr.mxu0 %v3400
  %v3402 = vand.u32 %v3352, 4294901760
  %3403 = vmatpush1.msra.mxu0 %v3402
  %v3404 = vand.u32 %v3357, 4294901760
  %3405 = vmatprep.subr.mxu0 %v3404
  %v3406 = vand.u32 %v3356, 4294901760
  %3407 = vmatpush1.msra.mxu0 %v3406
  %v3408 = vand.u32 %v3361, 4294901760
  %3409 = vmatprep.subr.mxu0 %v3408
  %v3410 = vand.u32 %v3360, 4294901760
  %3411 = vmatpush1.msra.mxu0 %v3410
  %3412 = vmatprep.subr.mxu0 0.0
  %3413 = vmatpush1.msra.mxu0 0.0
  %3414 = vmatprep.subr.mxu0 0.0
  %3415 = vmatpush1.msra.mxu0 0.0
  %3416 = vmatprep.subr.mxu0 0.0
  %3417 = vmatpush1.msra.mxu0 0.0
  %3418 = vmatprep.subr.mxu0 0.0
  %3419 = vmatpush1.msra.mxu0 0.0
  %3420 = vmatprep.subr.mxu0 0.0
  %3421 = vmatpush1.msra.mxu0 0.0
  %3422 = vmatprep.subr.mxu0 0.0
  %3423 = vmatpush1.msra.mxu0 0.0
  %3424 = vmatprep.subr.mxu0 0.0
  %3425 = vmatpush1.msra.mxu0 0.0
  %3426 = vmatprep.subr.mxu0 0.0
  %3427 = vmatpush1.msra.mxu0 0.0
  %3428 = vmatprep.subr.mxu0 0.0
  %3429 = vmatpush1.msra.mxu0 0.0
  %3430 = vmatprep.subr.mxu0 0.0
  %3431 = vmatpush1.msra.mxu0 0.0
  %3432 = vmatprep.subr.mxu0 0.0
  %3433 = vmatpush1.msra.mxu0 0.0
  %3434 = vmatprep.subr.mxu0 0.0
  %3435 = vmatpush1.msra.mxu0 0.0
  %3436 = vmatprep.subr.mxu0 0.0
  %3437 = vmatpush1.msra.mxu0 0.0
  %3438 = vmatprep.subr.mxu0 0.0
  %3439 = vmatpush1.msra.mxu0 0.0
  %3440 = vmatprep.subr.mxu0 0.0
  %3441 = vmatpush1.msra.mxu0 0.0
  %3442 = vmatprep.subr.mxu0 0.0
  %3443 = vmatpush1.msra.mxu0 0.0
  %3444 = vmatprep.subr.mxu0 0.0
  %3445 = vmatpush1.msra.mxu0 0.0
  %3446 = vmatprep.subr.mxu0 0.0
  %3447 = vmatpush1.msra.mxu0 0.0
  %3448 = vmatprep.subr.mxu0 0.0
  %3449 = vmatpush1.msra.mxu0 0.0
  %3450 = vmatprep.subr.mxu0 0.0
  %3451 = vmatpush1.msra.mxu0 0.0
  %3452 = vmatprep.subr.mxu0 0.0
  %3453 = vmatpush1.msra.mxu0 0.0
  %3454 = vmatprep.subr.mxu0 0.0
  %3455 = vmatpush1.msra.mxu0 0.0
  %3456 = vmatprep.subr.mxu0 0.0
  %3457 = vmatpush1.msra.mxu0 0.0
  %3458 = vmatprep.subr.mxu0 0.0
  %3459 = vmatpush1.msra.mxu0 0.0
  %3460 = vmatprep.subr.mxu0 0.0
  %3461 = vmatpush1.msra.mxu0 0.0
  %3462 = vmatprep.subr.mxu0 0.0
  %3463 = vmatpush1.msra.mxu0 0.0
  %3464 = vmatprep.subr.mxu0 0.0
  %3465 = vmatpush1.msra.mxu0 0.0
  %3466 = vmatprep.subr.mxu0 0.0
  %3467 = vmatpush1.msra.mxu0 0.0
  %3468 = vmatprep.mubr.f32.mxu0 0.0
  %v3469 = vand.u32 %v3385, 4294901760
  %v3470 = vsub.f32 %v3385, %v3469
  %v3471 = vand.u32 %v3470, 4294901760
  %v3472 = vsub.f32 %v3470, %v3471
  %v3473 = vand.u32 %v3472, 4294901760
  %3474 = vmatmul.mubr.f32.gmra.mrb[0].mxu0 %v3473
  %v3475 = vpop.f32.mrb[0].mxu0
  %v3476 = vadd.f32 %v3367, %v3475
  %v3477 = vpop.f32.mrb[0].mxu0
  %v3478 = vadd.f32 %v3367, %v3477
  %3479 = vmatprep.mubr.f32.mxu0 0.0
  %v3480 = vand.u32 %v3388, 4294901760
  %v3481 = vsub.f32 %v3388, %v3480
  %v3482 = vand.u32 %v3481, 4294901760
  %v3483 = vsub.f32 %v3481, %v3482
  %v3484 = vand.u32 %v3483, 4294901760
  %3485 = vmatmul.mubr.f32.gmra.mrb[0].mxu0 %v3484
  %v3486 = vpop.f32.mrb[0].mxu0
  %v3487 = vadd.f32 %v3372, %v3486
  %v3488 = vpop.f32.mrb[0].mxu0
  %v3489 = vadd.f32 %v3372, %v3488
  %3490 = vmatprep.mubr.f32.mxu0 0.0
  %v3491 = vand.u32 %v3391, 4294901760
  %v3492 = vsub.f32 %v3391, %v3491
  %v3493 = vand.u32 %v3492, 4294901760
  %v3494 = vsub.f32 %v3492, %v3493
  %v3495 = vand.u32 %v3494, 4294901760
  %3496 = vmatmul.mubr.f32.gmra.mrb[0].mxu0 %v3495
  %v3497 = vpop.f32.mrb[0].mxu0
  %v3498 = vadd.f32 %v3377, %v3497
  %v3499 = vpop.f32.mrb[0].mxu0
  %v3500 = vadd.f32 %v3377, %v3499
  %3501 = vmatprep.mubr.f32.mxu0 0.0
  %v3502 = vand.u32 %v3394, 4294901760
  %v3503 = vsub.f32 %v3394, %v3502
  %v3504 = vand.u32 %v3503, 4294901760
  %v3505 = vsub.f32 %v3503, %v3504
  %v3506 = vand.u32 %v3505, 4294901760
  %3507 = vmatmul.mubr.f32.gmra.mrb[0].mxu0 %v3506
  %v3508 = vpop.f32.mrb[0].mxu0
  %v3509 = vadd.f32 %v3382, %v3508
  %v3510 = vpop.f32.mrb[0].mxu0
  %v3511 = vadd.f32 %v3382, %v3510
  %3512 = vdwg.mxu0
  %v3513 = vand.u32 %v3349, 4294901760
  %v3514 = vsub.f32 %v3349, %v3513
  %v3515 = vand.u32 %v3514, 4294901760
  %v3516 = vsub.f32 %v3514, %v3515
  %v3517 = vand.u32 %v3516, 4294901760
  %3518 = vmatprep.subr.mxu0 %v3517
  %v3519 = vand.u32 %v3348, 4294901760
  %v3520 = vsub.f32 %v3348, %v3519
  %v3521 = vand.u32 %v3520, 4294901760
  %v3522 = vsub.f32 %v3520, %v3521
  %v3523 = vand.u32 %v3522, 4294901760
  %3524 = vmatpush1.msra.mxu0 %v3523
  %v3525 = vand.u32 %v3353, 4294901760
  %v3526 = vsub.f32 %v3353, %v3525
  %v3527 = vand.u32 %v3526, 4294901760
  %v3528 = vsub.f32 %v3526, %v3527
  %v3529 = vand.u32 %v3528, 4294901760
  %3530 = vmatprep.subr.mxu0 %v3529
  %v3531 = vand.u32 %v3352, 4294901760
  %v3532 = vsub.f32 %v3352, %v3531
  %v3533 = vand.u32 %v3532, 4294901760
  %v3534 = vsub.f32 %v3532, %v3533
  %v3535 = vand.u32 %v3534, 4294901760
  %3536 = vmatpush1.msra.mxu0 %v3535
  %v3537 = vand.u32 %v3357, 4294901760
  %v3538 = vsub.f32 %v3357, %v3537
  %v3539 = vand.u32 %v3538, 4294901760
  %v3540 = vsub.f32 %v3538, %v3539
  %v3541 = vand.u32 %v3540, 4294901760
  %3542 = vmatprep.subr.mxu0 %v3541
  %v3543 = vand.u32 %v3356, 4294901760
  %v3544 = vsub.f32 %v3356, %v3543
  %v3545 = vand.u32 %v3544, 4294901760
  %v3546 = vsub.f32 %v3544, %v3545
  %v3547 = vand.u32 %v3546, 4294901760
  %3548 = vmatpush1.msra.mxu0 %v3547
  %v3549 = vand.u32 %v3361, 4294901760
  %v3550 = vsub.f32 %v3361, %v3549
  %v3551 = vand.u32 %v3550, 4294901760
  %v3552 = vsub.f32 %v3550, %v3551
  %v3553 = vand.u32 %v3552, 4294901760
  %3554 = vmatprep.subr.mxu0 %v3553
  %v3555 = vand.u32 %v3360, 4294901760
  %v3556 = vsub.f32 %v3360, %v3555
  %v3557 = vand.u32 %v3556, 4294901760
  %v3558 = vsub.f32 %v3556, %v3557
  %v3559 = vand.u32 %v3558, 4294901760
  %3560 = vmatpush1.msra.mxu0 %v3559
  %3561 = vmatprep.subr.mxu0 0.0
  %3562 = vmatpush1.msra.mxu0 0.0
  %3563 = vmatprep.subr.mxu0 0.0
  %3564 = vmatpush1.msra.mxu0 0.0
  %3565 = vmatprep.subr.mxu0 0.0
  %3566 = vmatpush1.msra.mxu0 0.0
  %3567 = vmatprep.subr.mxu0 0.0
  %3568 = vmatpush1.msra.mxu0 0.0
  %3569 = vmatprep.subr.mxu0 0.0
  %3570 = vmatpush1.msra.mxu0 0.0
  %3571 = vmatprep.subr.mxu0 0.0
  %3572 = vmatpush1.msra.mxu0 0.0
  %3573 = vmatprep.subr.mxu0 0.0
  %3574 = vmatpush1.msra.mxu0 0.0
  %3575 = vmatprep.subr.mxu0 0.0
  %3576 = vmatpush1.msra.mxu0 0.0
  %3577 = vmatprep.subr.mxu0 0.0
  %3578 = vmatpush1.msra.mxu0 0.0
  %3579 = vmatprep.subr.mxu0 0.0
  %3580 = vmatpush1.msra.mxu0 0.0
  %3581 = vmatprep.subr.mxu0 0.0
  %3582 = vmatpush1.msra.mxu0 0.0
  %3583 = vmatprep.subr.mxu0 0.0
  %3584 = vmatpush1.msra.mxu0 0.0
  %3585 = vmatprep.subr.mxu0 0.0
  %3586 = vmatpush1.msra.mxu0 0.0
  %3587 = vmatprep.subr.mxu0 0.0
  %3588 = vmatpush1.msra.mxu0 0.0
  %3589 = vmatprep.subr.mxu0 0.0
  %3590 = vmatpush1.msra.mxu0 0.0
  %3591 = vmatprep.subr.mxu0 0.0
  %3592 = vmatpush1.msra.mxu0 0.0
  %3593 = vmatprep.subr.mxu0 0.0
  %3594 = vmatpush1.msra.mxu0 0.0
  %3595 = vmatprep.subr.mxu0 0.0
  %3596 = vmatpush1.msra.mxu0 0.0
  %3597 = vmatprep.subr.mxu0 0.0
  %3598 = vmatpush1.msra.mxu0 0.0
  %3599 = vmatprep.subr.mxu0 0.0
  %3600 = vmatpush1.msra.mxu0 0.0
  %3601 = vmatprep.subr.mxu0 0.0
  %3602 = vmatpush1.msra.mxu0 0.0
  %3603 = vmatprep.subr.mxu0 0.0
  %3604 = vmatpush1.msra.mxu0 0.0
  %3605 = vmatprep.subr.mxu0 0.0
  %3606 = vmatpush1.msra.mxu0 0.0
  %3607 = vmatprep.subr.mxu0 0.0
  %3608 = vmatpush1.msra.mxu0 0.0
  %3609 = vmatprep.subr.mxu0 0.0
  %3610 = vmatpush1.msra.mxu0 0.0
  %3611 = vmatprep.subr.mxu0 0.0
  %3612 = vmatpush1.msra.mxu0 0.0
  %3613 = vmatprep.subr.mxu0 0.0
  %3614 = vmatpush1.msra.mxu0 0.0
  %3615 = vmatprep.subr.mxu0 0.0
  %3616 = vmatpush1.msra.mxu0 0.0
  %3617 = vmatprep.mubr.f32.mxu0 0.0
  %v3618 = vand.u32 %v3385, 4294901760
  %3619 = vmatmul.mubr.f32.gmra.mrb[0].mxu0 %v3618
  %v3620 = vpop.f32.mrb[0].mxu0
  %v3621 = vadd.f32 %v3476, %v3620
  %v3622 = vpop.f32.mrb[0].mxu0
  %v3623 = vadd.f32 %v3478, %v3622
  %3624 = vmatprep.mubr.f32.mxu0 0.0
  %v3625 = vand.u32 %v3388, 4294901760
  %3626 = vmatmul.mubr.f32.gmra.mrb[0].mxu0 %v3625
  %v3627 = vpop.f32.mrb[0].mxu0
  %v3628 = vadd.f32 %v3487, %v3627
  %v3629 = vpop.f32.mrb[0].mxu0
  %v3630 = vadd.f32 %v3489, %v3629
  %3631 = vmatprep.mubr.f32.mxu0 0.0
  %v3632 = vand.u32 %v3391, 4294901760
  %3633 = vmatmul.mubr.f32.gmra.mrb[0].mxu0 %v3632
  %v3634 = vpop.f32.mrb[0].mxu0
  %v3635 = vadd.f32 %v3498, %v3634
  %v3636 = vpop.f32.mrb[0].mxu0
  %v3637 = vadd.f32 %v3500, %v3636
  %3638 = vmatprep.mubr.f32.mxu0 0.0
  %v3639 = vand.u32 %v3394, 4294901760
  %3640 = vmatmul.mubr.f32.gmra.mrb[0].mxu0 %v3639
  %v3641 = vpop.f32.mrb[0].mxu0
  %v3642 = vadd.f32 %v3509, %v3641
  %v3643 = vpop.f32.mrb[0].mxu0
  %v3644 = vadd.f32 %v3511, %v3643
  %3645 = vdwg.mxu0
  %v3646 = vand.u32 %v3349, 4294901760
  %v3647 = vsub.f32 %v3349, %v3646
  %3648 = vmatprep.subr.mxu0 %v3647
  %v3649 = vand.u32 %v3348, 4294901760
  %v3650 = vsub.f32 %v3348, %v3649
  %3651 = vmatpush1.msra.mxu0 %v3650
  %v3652 = vand.u32 %v3353, 4294901760
  %v3653 = vsub.f32 %v3353, %v3652
  %3654 = vmatprep.subr.mxu0 %v3653
  %v3655 = vand.u32 %v3352, 4294901760
  %v3656 = vsub.f32 %v3352, %v3655
  %3657 = vmatpush1.msra.mxu0 %v3656
  %v3658 = vand.u32 %v3357, 4294901760
  %v3659 = vsub.f32 %v3357, %v3658
  %3660 = vmatprep.subr.mxu0 %v3659
  %v3661 = vand.u32 %v3356, 4294901760
  %v3662 = vsub.f32 %v3356, %v3661
  %3663 = vmatpush1.msra.mxu0 %v3662
  %v3664 = vand.u32 %v3361, 4294901760
  %v3665 = vsub.f32 %v3361, %v3664
  %3666 = vmatprep.subr.mxu0 %v3665
  %v3667 = vand.u32 %v3360, 4294901760
  %v3668 = vsub.f32 %v3360, %v3667
  %3669 = vmatpush1.msra.mxu0 %v3668
  %3670 = vmatprep.subr.mxu0 0.0
  %3671 = vmatpush1.msra.mxu0 0.0
  %3672 = vmatprep.subr.mxu0 0.0
  %3673 = vmatpush1.msra.mxu0 0.0
  %3674 = vmatprep.subr.mxu0 0.0
  %3675 = vmatpush1.msra.mxu0 0.0
  %3676 = vmatprep.subr.mxu0 0.0
  %3677 = vmatpush1.msra.mxu0 0.0
  %3678 = vmatprep.subr.mxu0 0.0
  %3679 = vmatpush1.msra.mxu0 0.0
  %3680 = vmatprep.subr.mxu0 0.0
  %3681 = vmatpush1.msra.mxu0 0.0
  %3682 = vmatprep.subr.mxu0 0.0
  %3683 = vmatpush1.msra.mxu0 0.0
  %3684 = vmatprep.subr.mxu0 0.0
  %3685 = vmatpush1.msra.mxu0 0.0
  %3686 = vmatprep.subr.mxu0 0.0
  %3687 = vmatpush1.msra.mxu0 0.0
  %3688 = vmatprep.subr.mxu0 0.0
  %3689 = vmatpush1.msra.mxu0 0.0
  %3690 = vmatprep.subr.mxu0 0.0
  %3691 = vmatpush1.msra.mxu0 0.0
  %3692 = vmatprep.subr.mxu0 0.0
  %3693 = vmatpush1.msra.mxu0 0.0
  %3694 = vmatprep.subr.mxu0 0.0
  %3695 = vmatpush1.msra.mxu0 0.0
  %3696 = vmatprep.subr.mxu0 0.0
  %3697 = vmatpush1.msra.mxu0 0.0
  %3698 = vmatprep.subr.mxu0 0.0
  %3699 = vmatpush1.msra.mxu0 0.0
  %3700 = vmatprep.subr.mxu0 0.0
  %3701 = vmatpush1.msra.mxu0 0.0
  %3702 = vmatprep.subr.mxu0 0.0
  %3703 = vmatpush1.msra.mxu0 0.0
  %3704 = vmatprep.subr.mxu0 0.0
  %3705 = vmatpush1.msra.mxu0 0.0
  %3706 = vmatprep.subr.mxu0 0.0
  %3707 = vmatpush1.msra.mxu0 0.0
  %3708 = vmatprep.subr.mxu0 0.0
  %3709 = vmatpush1.msra.mxu0 0.0
  %3710 = vmatprep.subr.mxu0 0.0
  %3711 = vmatpush1.msra.mxu0 0.0
  %3712 = vmatprep.subr.mxu0 0.0
  %3713 = vmatpush1.msra.mxu0 0.0
  %3714 = vmatprep.subr.mxu0 0.0
  %3715 = vmatpush1.msra.mxu0 0.0
  %3716 = vmatprep.subr.mxu0 0.0
  %3717 = vmatpush1.msra.mxu0 0.0
  %3718 = vmatprep.subr.mxu0 0.0
  %3719 = vmatpush1.msra.mxu0 0.0
  %3720 = vmatprep.subr.mxu0 0.0
  %3721 = vmatpush1.msra.mxu0 0.0
  %3722 = vmatprep.subr.mxu0 0.0
  %3723 = vmatpush1.msra.mxu0 0.0
  %3724 = vmatprep.subr.mxu0 0.0
  %3725 = vmatpush1.msra.mxu0 0.0
  %3726 = vmatprep.mubr.f32.mxu0 0.0
  %v3727 = vand.u32 %v3385, 4294901760
  %v3728 = vsub.f32 %v3385, %v3727
  %3729 = vmatmul.mubr.f32.gmra.mrb[0].mxu0 %v3728
  %v3730 = vpop.f32.mrb[0].mxu0
  %v3731 = vadd.f32 %v3621, %v3730
  %v3732 = vpop.f32.mrb[0].mxu0
  %v3733 = vadd.f32 %v3623, %v3732
  %3734 = vmatprep.mubr.f32.mxu0 0.0
  %v3735 = vand.u32 %v3388, 4294901760
  %v3736 = vsub.f32 %v3388, %v3735
  %3737 = vmatmul.mubr.f32.gmra.mrb[0].mxu0 %v3736
  %v3738 = vpop.f32.mrb[0].mxu0
  %v3739 = vadd.f32 %v3628, %v3738
  %v3740 = vpop.f32.mrb[0].mxu0
  %v3741 = vadd.f32 %v3630, %v3740
  %3742 = vmatprep.mubr.f32.mxu0 0.0
  %v3743 = vand.u32 %v3391, 4294901760
  %v3744 = vsub.f32 %v3391, %v3743
  %3745 = vmatmul.mubr.f32.gmra.mrb[0].mxu0 %v3744
  %v3746 = vpop.f32.mrb[0].mxu0
  %v3747 = vadd.f32 %v3635, %v3746
  %v3748 = vpop.f32.mrb[0].mxu0
  %v3749 = vadd.f32 %v3637, %v3748
  %3750 = vmatprep.mubr.f32.mxu0 0.0
  %v3751 = vand.u32 %v3394, 4294901760
  %v3752 = vsub.f32 %v3394, %v3751
  %3753 = vmatmul.mubr.f32.gmra.mrb[0].mxu0 %v3752
  %v3754 = vpop.f32.mrb[0].mxu0
  %v3755 = vadd.f32 %v3642, %v3754
  %v3756 = vpop.f32.mrb[0].mxu0
  %v3757 = vadd.f32 %v3644, %v3756
  %3758 = vdwg.mxu0
  %v3759 = vand.u32 %v3349, 4294901760
  %3760 = vmatprep.subr.mxu0 %v3759
  %v3761 = vand.u32 %v3348, 4294901760
  %3762 = vmatpush1.msra.mxu0 %v3761
  %v3763 = vand.u32 %v3353, 4294901760
  %3764 = vmatprep.subr.mxu0 %v3763
  %v3765 = vand.u32 %v3352, 4294901760
  %3766 = vmatpush1.msra.mxu0 %v3765
  %v3767 = vand.u32 %v3357, 4294901760
  %3768 = vmatprep.subr.mxu0 %v3767
  %v3769 = vand.u32 %v3356, 4294901760
  %3770 = vmatpush1.msra.mxu0 %v3769
  %v3771 = vand.u32 %v3361, 4294901760
  %3772 = vmatprep.subr.mxu0 %v3771
  %v3773 = vand.u32 %v3360, 4294901760
  %3774 = vmatpush1.msra.mxu0 %v3773
  %3775 = vmatprep.subr.mxu0 0.0
  %3776 = vmatpush1.msra.mxu0 0.0
  %3777 = vmatprep.subr.mxu0 0.0
  %3778 = vmatpush1.msra.mxu0 0.0
  %3779 = vmatprep.subr.mxu0 0.0
  %3780 = vmatpush1.msra.mxu0 0.0
  %3781 = vmatprep.subr.mxu0 0.0
  %3782 = vmatpush1.msra.mxu0 0.0
  %3783 = vmatprep.subr.mxu0 0.0
  %3784 = vmatpush1.msra.mxu0 0.0
  %3785 = vmatprep.subr.mxu0 0.0
  %3786 = vmatpush1.msra.mxu0 0.0
  %3787 = vmatprep.subr.mxu0 0.0
  %3788 = vmatpush1.msra.mxu0 0.0
  %3789 = vmatprep.subr.mxu0 0.0
  %3790 = vmatpush1.msra.mxu0 0.0
  %3791 = vmatprep.subr.mxu0 0.0
  %3792 = vmatpush1.msra.mxu0 0.0
  %3793 = vmatprep.subr.mxu0 0.0
  %3794 = vmatpush1.msra.mxu0 0.0
  %3795 = vmatprep.subr.mxu0 0.0
  %3796 = vmatpush1.msra.mxu0 0.0
  %3797 = vmatprep.subr.mxu0 0.0
  %3798 = vmatpush1.msra.mxu0 0.0
  %3799 = vmatprep.subr.mxu0 0.0
  %3800 = vmatpush1.msra.mxu0 0.0
  %3801 = vmatprep.subr.mxu0 0.0
  %3802 = vmatpush1.msra.mxu0 0.0
  %3803 = vmatprep.subr.mxu0 0.0
  %3804 = vmatpush1.msra.mxu0 0.0
  %3805 = vmatprep.subr.mxu0 0.0
  %3806 = vmatpush1.msra.mxu0 0.0
  %3807 = vmatprep.subr.mxu0 0.0
  %3808 = vmatpush1.msra.mxu0 0.0
  %3809 = vmatprep.subr.mxu0 0.0
  %3810 = vmatpush1.msra.mxu0 0.0
  %3811 = vmatprep.subr.mxu0 0.0
  %3812 = vmatpush1.msra.mxu0 0.0
  %3813 = vmatprep.subr.mxu0 0.0
  %3814 = vmatpush1.msra.mxu0 0.0
  %3815 = vmatprep.subr.mxu0 0.0
  %3816 = vmatpush1.msra.mxu0 0.0
  %3817 = vmatprep.subr.mxu0 0.0
  %3818 = vmatpush1.msra.mxu0 0.0
  %3819 = vmatprep.subr.mxu0 0.0
  %3820 = vmatpush1.msra.mxu0 0.0
  %3821 = vmatprep.subr.mxu0 0.0
  %3822 = vmatpush1.msra.mxu0 0.0
  %3823 = vmatprep.subr.mxu0 0.0
  %3824 = vmatpush1.msra.mxu0 0.0
  %3825 = vmatprep.subr.mxu0 0.0
  %3826 = vmatpush1.msra.mxu0 0.0
  %3827 = vmatprep.subr.mxu0 0.0
  %3828 = vmatpush1.msra.mxu0 0.0
  %3829 = vmatprep.subr.mxu0 0.0
  %3830 = vmatpush1.msra.mxu0 0.0
  %3831 = vmatprep.mubr.f32.mxu0 0.0
  %v3832 = vand.u32 %v3385, 4294901760
  %v3833 = vsub.f32 %v3385, %v3832
  %v3834 = vand.u32 %v3833, 4294901760
  %3835 = vmatmul.mubr.f32.gmra.mrb[0].mxu0 %v3834
  %v3836 = vpop.f32.mrb[0].mxu0
  %v3837 = vadd.f32 %v3731, %v3836
  %v3838 = vpop.f32.mrb[0].mxu0
  %v3839 = vadd.f32 %v3733, %v3838
  %3840 = vmatprep.mubr.f32.mxu0 0.0
  %v3841 = vand.u32 %v3388, 4294901760
  %v3842 = vsub.f32 %v3388, %v3841
  %v3843 = vand.u32 %v3842, 4294901760
  %3844 = vmatmul.mubr.f32.gmra.mrb[0].mxu0 %v3843
  %v3845 = vpop.f32.mrb[0].mxu0
  %v3846 = vadd.f32 %v3739, %v3845
  %v3847 = vpop.f32.mrb[0].mxu0
  %v3848 = vadd.f32 %v3741, %v3847
  %3849 = vmatprep.mubr.f32.mxu0 0.0
  %v3850 = vand.u32 %v3391, 4294901760
  %v3851 = vsub.f32 %v3391, %v3850
  %v3852 = vand.u32 %v3851, 4294901760
  %3853 = vmatmul.mubr.f32.gmra.mrb[0].mxu0 %v3852
  %v3854 = vpop.f32.mrb[0].mxu0
  %v3855 = vadd.f32 %v3747, %v3854
  %v3856 = vpop.f32.mrb[0].mxu0
  %v3857 = vadd.f32 %v3749, %v3856
  %3858 = vmatprep.mubr.f32.mxu0 0.0
  %v3859 = vand.u32 %v3394, 4294901760
  %v3860 = vsub.f32 %v3394, %v3859
  %v3861 = vand.u32 %v3860, 4294901760
  %3862 = vmatmul.mubr.f32.gmra.mrb[0].mxu0 %v3861
  %v3863 = vpop.f32.mrb[0].mxu0
  %v3864 = vadd.f32 %v3755, %v3863
  %v3865 = vpop.f32.mrb[0].mxu0
  %v3866 = vadd.f32 %v3757, %v3865
  %3867 = vdwg.mxu0
  %v3868 = vand.u32 %v3349, 4294901760
  %v3869 = vsub.f32 %v3349, %v3868
  %v3870 = vand.u32 %v3869, 4294901760
  %3871 = vmatprep.subr.mxu0 %v3870
  %v3872 = vand.u32 %v3348, 4294901760
  %v3873 = vsub.f32 %v3348, %v3872
  %v3874 = vand.u32 %v3873, 4294901760
  %3875 = vmatpush1.msra.mxu0 %v3874
  %v3876 = vand.u32 %v3353, 4294901760
  %v3877 = vsub.f32 %v3353, %v3876
  %v3878 = vand.u32 %v3877, 4294901760
  %3879 = vmatprep.subr.mxu0 %v3878
  %v3880 = vand.u32 %v3352, 4294901760
  %v3881 = vsub.f32 %v3352, %v3880
  %v3882 = vand.u32 %v3881, 4294901760
  %3883 = vmatpush1.msra.mxu0 %v3882
  %v3884 = vand.u32 %v3357, 4294901760
  %v3885 = vsub.f32 %v3357, %v3884
  %v3886 = vand.u32 %v3885, 4294901760
  %3887 = vmatprep.subr.mxu0 %v3886
  %v3888 = vand.u32 %v3356, 4294901760
  %v3889 = vsub.f32 %v3356, %v3888
  %v3890 = vand.u32 %v3889, 4294901760
  %3891 = vmatpush1.msra.mxu0 %v3890
  %v3892 = vand.u32 %v3361, 4294901760
  %v3893 = vsub.f32 %v3361, %v3892
  %v3894 = vand.u32 %v3893, 4294901760
  %3895 = vmatprep.subr.mxu0 %v3894
  %v3896 = vand.u32 %v3360, 4294901760
  %v3897 = vsub.f32 %v3360, %v3896
  %v3898 = vand.u32 %v3897, 4294901760
  %3899 = vmatpush1.msra.mxu0 %v3898
  %3900 = vmatprep.subr.mxu0 0.0
  %3901 = vmatpush1.msra.mxu0 0.0
  %3902 = vmatprep.subr.mxu0 0.0
  %3903 = vmatpush1.msra.mxu0 0.0
  %3904 = vmatprep.subr.mxu0 0.0
  %3905 = vmatpush1.msra.mxu0 0.0
  %3906 = vmatprep.subr.mxu0 0.0
  %3907 = vmatpush1.msra.mxu0 0.0
  %3908 = vmatprep.subr.mxu0 0.0
  %3909 = vmatpush1.msra.mxu0 0.0
  %3910 = vmatprep.subr.mxu0 0.0
  %3911 = vmatpush1.msra.mxu0 0.0
  %3912 = vmatprep.subr.mxu0 0.0
  %3913 = vmatpush1.msra.mxu0 0.0
  %3914 = vmatprep.subr.mxu0 0.0
  %3915 = vmatpush1.msra.mxu0 0.0
  %3916 = vmatprep.subr.mxu0 0.0
  %3917 = vmatpush1.msra.mxu0 0.0
  %3918 = vmatprep.subr.mxu0 0.0
  %3919 = vmatpush1.msra.mxu0 0.0
  %3920 = vmatprep.subr.mxu0 0.0
  %3921 = vmatpush1.msra.mxu0 0.0
  %3922 = vmatprep.subr.mxu0 0.0
  %3923 = vmatpush1.msra.mxu0 0.0
  %3924 = vmatprep.subr.mxu0 0.0
  %3925 = vmatpush1.msra.mxu0 0.0
  %3926 = vmatprep.subr.mxu0 0.0
  %3927 = vmatpush1.msra.mxu0 0.0
  %3928 = vmatprep.subr.mxu0 0.0
  %3929 = vmatpush1.msra.mxu0 0.0
  %3930 = vmatprep.subr.mxu0 0.0
  %3931 = vmatpush1.msra.mxu0 0.0
  %3932 = vmatprep.subr.mxu0 0.0
  %3933 = vmatpush1.msra.mxu0 0.0
  %3934 = vmatprep.subr.mxu0 0.0
  %3935 = vmatpush1.msra.mxu0 0.0
  %3936 = vmatprep.subr.mxu0 0.0
  %3937 = vmatpush1.msra.mxu0 0.0
  %3938 = vmatprep.subr.mxu0 0.0
  %3939 = vmatpush1.msra.mxu0 0.0
  %3940 = vmatprep.subr.mxu0 0.0
  %3941 = vmatpush1.msra.mxu0 0.0
  %3942 = vmatprep.subr.mxu0 0.0
  %3943 = vmatpush1.msra.mxu0 0.0
  %3944 = vmatprep.subr.mxu0 0.0
  %3945 = vmatpush1.msra.mxu0 0.0
  %3946 = vmatprep.subr.mxu0 0.0
  %3947 = vmatpush1.msra.mxu0 0.0
  %3948 = vmatprep.subr.mxu0 0.0
  %3949 = vmatpush1.msra.mxu0 0.0
  %3950 = vmatprep.subr.mxu0 0.0
  %3951 = vmatpush1.msra.mxu0 0.0
  %3952 = vmatprep.subr.mxu0 0.0
  %3953 = vmatpush1.msra.mxu0 0.0
  %3954 = vmatprep.subr.mxu0 0.0
  %3955 = vmatpush1.msra.mxu0 0.0
  %3956 = vmatprep.mubr.f32.mxu0 0.0
  %v3957 = vand.u32 %v3385, 4294901760
  %3958 = vmatmul.mubr.f32.gmra.mrb[0].mxu0 %v3957
  %v3959 = vpop.f32.mrb[0].mxu0
  %v3960 = vadd.f32 %v3837, %v3959
  %v3961 = vpop.f32.mrb[0].mxu0
  %v3962 = vadd.f32 %v3839, %v3961
  %3963 = vmatprep.mubr.f32.mxu0 0.0
  %v3964 = vand.u32 %v3388, 4294901760
  %3965 = vmatmul.mubr.f32.gmra.mrb[0].mxu0 %v3964
  %v3966 = vpop.f32.mrb[0].mxu0
  %v3967 = vadd.f32 %v3846, %v3966
  %v3968 = vpop.f32.mrb[0].mxu0
  %v3969 = vadd.f32 %v3848, %v3968
  %3970 = vmatprep.mubr.f32.mxu0 0.0
  %v3971 = vand.u32 %v3391, 4294901760
  %3972 = vmatmul.mubr.f32.gmra.mrb[0].mxu0 %v3971
  %v3973 = vpop.f32.mrb[0].mxu0
  %v3974 = vadd.f32 %v3855, %v3973
  %v3975 = vpop.f32.mrb[0].mxu0
  %v3976 = vadd.f32 %v3857, %v3975
  %3977 = vmatprep.mubr.f32.mxu0 0.0
  %v3978 = vand.u32 %v3394, 4294901760
  %3979 = vmatmul.mubr.f32.gmra.mrb[0].mxu0 %v3978
  %v3980 = vpop.f32.mrb[0].mxu0
  %v3981 = vadd.f32 %v3864, %v3980
  %v3982 = vpop.f32.mrb[0].mxu0
  %v3983 = vadd.f32 %v3866, %v3982
  %3984 = vdwg.mxu0
  %v3985 = vand.u32 %v3349, 4294901760
  %3986 = vmatprep.subr.mxu0 %v3985
  %v3987 = vand.u32 %v3348, 4294901760
  %3988 = vmatpush1.msra.mxu0 %v3987
  %v3989 = vand.u32 %v3353, 4294901760
  %3990 = vmatprep.subr.mxu0 %v3989
  %v3991 = vand.u32 %v3352, 4294901760
  %3992 = vmatpush1.msra.mxu0 %v3991
  %v3993 = vand.u32 %v3357, 4294901760
  %3994 = vmatprep.subr.mxu0 %v3993
  %v3995 = vand.u32 %v3356, 4294901760
  %3996 = vmatpush1.msra.mxu0 %v3995
  %v3997 = vand.u32 %v3361, 4294901760
  %3998 = vmatprep.subr.mxu0 %v3997
  %v3999 = vand.u32 %v3360, 4294901760
  %4000 = vmatpush1.msra.mxu0 %v3999
  %4001 = vmatprep.subr.mxu0 0.0
  %4002 = vmatpush1.msra.mxu0 0.0
  %4003 = vmatprep.subr.mxu0 0.0
  %4004 = vmatpush1.msra.mxu0 0.0
  %4005 = vmatprep.subr.mxu0 0.0
  %4006 = vmatpush1.msra.mxu0 0.0
  %4007 = vmatprep.subr.mxu0 0.0
  %4008 = vmatpush1.msra.mxu0 0.0
  %4009 = vmatprep.subr.mxu0 0.0
  %4010 = vmatpush1.msra.mxu0 0.0
  %4011 = vmatprep.subr.mxu0 0.0
  %4012 = vmatpush1.msra.mxu0 0.0
  %4013 = vmatprep.subr.mxu0 0.0
  %4014 = vmatpush1.msra.mxu0 0.0
  %4015 = vmatprep.subr.mxu0 0.0
  %4016 = vmatpush1.msra.mxu0 0.0
  %4017 = vmatprep.subr.mxu0 0.0
  %4018 = vmatpush1.msra.mxu0 0.0
  %4019 = vmatprep.subr.mxu0 0.0
  %4020 = vmatpush1.msra.mxu0 0.0
  %4021 = vmatprep.subr.mxu0 0.0
  %4022 = vmatpush1.msra.mxu0 0.0
  %4023 = vmatprep.subr.mxu0 0.0
  %4024 = vmatpush1.msra.mxu0 0.0
  %4025 = vmatprep.subr.mxu0 0.0
  %4026 = vmatpush1.msra.mxu0 0.0
  %4027 = vmatprep.subr.mxu0 0.0
  %4028 = vmatpush1.msra.mxu0 0.0
  %4029 = vmatprep.subr.mxu0 0.0
  %4030 = vmatpush1.msra.mxu0 0.0
  %4031 = vmatprep.subr.mxu0 0.0
  %4032 = vmatpush1.msra.mxu0 0.0
  %4033 = vmatprep.subr.mxu0 0.0
  %4034 = vmatpush1.msra.mxu0 0.0
  %4035 = vmatprep.subr.mxu0 0.0
  %4036 = vmatpush1.msra.mxu0 0.0
  %4037 = vmatprep.subr.mxu0 0.0
  %4038 = vmatpush1.msra.mxu0 0.0
  %4039 = vmatprep.subr.mxu0 0.0
  %4040 = vmatpush1.msra.mxu0 0.0
  %4041 = vmatprep.subr.mxu0 0.0
  %4042 = vmatpush1.msra.mxu0 0.0
  %4043 = vmatprep.subr.mxu0 0.0
  %4044 = vmatpush1.msra.mxu0 0.0
  %4045 = vmatprep.subr.mxu0 0.0
  %4046 = vmatpush1.msra.mxu0 0.0
  %4047 = vmatprep.subr.mxu0 0.0
  %4048 = vmatpush1.msra.mxu0 0.0
  %4049 = vmatprep.subr.mxu0 0.0
  %4050 = vmatpush1.msra.mxu0 0.0
  %4051 = vmatprep.subr.mxu0 0.0
  %4052 = vmatpush1.msra.mxu0 0.0
  %4053 = vmatprep.subr.mxu0 0.0
  %4054 = vmatpush1.msra.mxu0 0.0
  %4055 = vmatprep.subr.mxu0 0.0
  %4056 = vmatpush1.msra.mxu0 0.0
  %4057 = vmatprep.mubr.f32.mxu0 0.0
  %v4058 = vand.u32 %v3385, 4294901760
  %4059 = vmatmul.mubr.f32.gmra.mrb[0].mxu0 %v4058
  %v4060 = vpop.f32.mrb[0].mxu0
  %v4061 = vadd.f32 %v3960, %v4060
  %v4062 = vpop.f32.mrb[0].mxu0
  %v4063 = vadd.f32 %v3962, %v4062
  %4064 = vmatprep.mubr.f32.mxu0 0.0
  %v4065 = vand.u32 %v3388, 4294901760
  %4066 = vmatmul.mubr.f32.gmra.mrb[0].mxu0 %v4065
  %v4067 = vpop.f32.mrb[0].mxu0
  %v4068 = vadd.f32 %v3967, %v4067
  %v4069 = vpop.f32.mrb[0].mxu0
  %v4070 = vadd.f32 %v3969, %v4069
  %4071 = vmatprep.mubr.f32.mxu0 0.0
  %v4072 = vand.u32 %v3391, 4294901760
  %4073 = vmatmul.mubr.f32.gmra.mrb[0].mxu0 %v4072
  %v4074 = vpop.f32.mrb[0].mxu0
  %v4075 = vadd.f32 %v3974, %v4074
  %v4076 = vpop.f32.mrb[0].mxu0
  %v4077 = vadd.f32 %v3976, %v4076
  %4078 = vmatprep.mubr.f32.mxu0 0.0
  %v4079 = vand.u32 %v3394, 4294901760
  %4080 = vmatmul.mubr.f32.gmra.mrb[0].mxu0 %v4079
  %v4081 = vpop.f32.mrb[0].mxu0
  %v4082 = vadd.f32 %v3981, %v4081
  %v4083 = vpop.f32.mrb[0].mxu0
  %v4084 = vadd.f32 %v3983, %v4083
  %4085 = vdwg.mxu0
  %v4086 = vand.u32 %v3351, 4294901760
  %4087 = vmatprep.subr.mxu0 %v4086
  %v4088 = vand.u32 %v3350, 4294901760
  %4089 = vmatpush1.msra.mxu0 %v4088
  %v4090 = vand.u32 %v3355, 4294901760
  %4091 = vmatprep.subr.mxu0 %v4090
  %v4092 = vand.u32 %v3354, 4294901760
  %4093 = vmatpush1.msra.mxu0 %v4092
  %v4094 = vand.u32 %v3359, 4294901760
  %4095 = vmatprep.subr.mxu0 %v4094
  %v4096 = vand.u32 %v3358, 4294901760
  %4097 = vmatpush1.msra.mxu0 %v4096
  %v4098 = vand.u32 %v3363, 4294901760
  %4099 = vmatprep.subr.mxu0 %v4098
  %v4100 = vand.u32 %v3362, 4294901760
  %4101 = vmatpush1.msra.mxu0 %v4100
  %4102 = vmatprep.subr.mxu0 0.0
  %4103 = vmatpush1.msra.mxu0 0.0
  %4104 = vmatprep.subr.mxu0 0.0
  %4105 = vmatpush1.msra.mxu0 0.0
  %4106 = vmatprep.subr.mxu0 0.0
  %4107 = vmatpush1.msra.mxu0 0.0
  %4108 = vmatprep.subr.mxu0 0.0
  %4109 = vmatpush1.msra.mxu0 0.0
  %4110 = vmatprep.subr.mxu0 0.0
  %4111 = vmatpush1.msra.mxu0 0.0
  %4112 = vmatprep.subr.mxu0 0.0
  %4113 = vmatpush1.msra.mxu0 0.0
  %4114 = vmatprep.subr.mxu0 0.0
  %4115 = vmatpush1.msra.mxu0 0.0
  %4116 = vmatprep.subr.mxu0 0.0
  %4117 = vmatpush1.msra.mxu0 0.0
  %4118 = vmatprep.subr.mxu0 0.0
  %4119 = vmatpush1.msra.mxu0 0.0
  %4120 = vmatprep.subr.mxu0 0.0
  %4121 = vmatpush1.msra.mxu0 0.0
  %4122 = vmatprep.subr.mxu0 0.0
  %4123 = vmatpush1.msra.mxu0 0.0
  %4124 = vmatprep.subr.mxu0 0.0
  %4125 = vmatpush1.msra.mxu0 0.0
  %4126 = vmatprep.subr.mxu0 0.0
  %4127 = vmatpush1.msra.mxu0 0.0
  %4128 = vmatprep.subr.mxu0 0.0
  %4129 = vmatpush1.msra.mxu0 0.0
  %4130 = vmatprep.subr.mxu0 0.0
  %4131 = vmatpush1.msra.mxu0 0.0
  %4132 = vmatprep.subr.mxu0 0.0
  %4133 = vmatpush1.msra.mxu0 0.0
  %4134 = vmatprep.subr.mxu0 0.0
  %4135 = vmatpush1.msra.mxu0 0.0
  %4136 = vmatprep.subr.mxu0 0.0
  %4137 = vmatpush1.msra.mxu0 0.0
  %4138 = vmatprep.subr.mxu0 0.0
  %4139 = vmatpush1.msra.mxu0 0.0
  %4140 = vmatprep.subr.mxu0 0.0
  %4141 = vmatpush1.msra.mxu0 0.0
  %4142 = vmatprep.subr.mxu0 0.0
  %4143 = vmatpush1.msra.mxu0 0.0
  %4144 = vmatprep.subr.mxu0 0.0
  %4145 = vmatpush1.msra.mxu0 0.0
  %4146 = vmatprep.subr.mxu0 0.0
  %4147 = vmatpush1.msra.mxu0 0.0
  %4148 = vmatprep.subr.mxu0 0.0
  %4149 = vmatpush1.msra.mxu0 0.0
  %4150 = vmatprep.subr.mxu0 0.0
  %4151 = vmatpush1.msra.mxu0 0.0
  %4152 = vmatprep.subr.mxu0 0.0
  %4153 = vmatpush1.msra.mxu0 0.0
  %4154 = vmatprep.subr.mxu0 0.0
  %4155 = vmatpush1.msra.mxu0 0.0
  %4156 = vmatprep.subr.mxu0 0.0
  %4157 = vmatpush1.msra.mxu0 0.0
  %4158 = vmatprep.mubr.f32.mxu0 0.0
  %v4159 = vand.u32 %v3385, 4294901760
  %v4160 = vsub.f32 %v3385, %v4159
  %v4161 = vand.u32 %v4160, 4294901760
  %v4162 = vsub.f32 %v4160, %v4161
  %v4163 = vand.u32 %v4162, 4294901760
  %4164 = vmatmul.mubr.f32.gmra.mrb[0].mxu0 %v4163
  %v4165 = vpop.f32.mrb[0].mxu0
  %v4166 = vadd.f32 %v3367, %v4165
  %v4167 = vpop.f32.mrb[0].mxu0
  %v4168 = vadd.f32 %v3367, %v4167
  %4169 = vmatprep.mubr.f32.mxu0 0.0
  %v4170 = vand.u32 %v3388, 4294901760
  %v4171 = vsub.f32 %v3388, %v4170
  %v4172 = vand.u32 %v4171, 4294901760
  %v4173 = vsub.f32 %v4171, %v4172
  %v4174 = vand.u32 %v4173, 4294901760
  %4175 = vmatmul.mubr.f32.gmra.mrb[0].mxu0 %v4174
  %v4176 = vpop.f32.mrb[0].mxu0
  %v4177 = vadd.f32 %v3372, %v4176
  %v4178 = vpop.f32.mrb[0].mxu0
  %v4179 = vadd.f32 %v3372, %v4178
  %4180 = vmatprep.mubr.f32.mxu0 0.0
  %v4181 = vand.u32 %v3391, 4294901760
  %v4182 = vsub.f32 %v3391, %v4181
  %v4183 = vand.u32 %v4182, 4294901760
  %v4184 = vsub.f32 %v4182, %v4183
  %v4185 = vand.u32 %v4184, 4294901760
  %4186 = vmatmul.mubr.f32.gmra.mrb[0].mxu0 %v4185
  %v4187 = vpop.f32.mrb[0].mxu0
  %v4188 = vadd.f32 %v3377, %v4187
  %v4189 = vpop.f32.mrb[0].mxu0
  %v4190 = vadd.f32 %v3377, %v4189
  %4191 = vmatprep.mubr.f32.mxu0 0.0
  %v4192 = vand.u32 %v3394, 4294901760
  %v4193 = vsub.f32 %v3394, %v4192
  %v4194 = vand.u32 %v4193, 4294901760
  %v4195 = vsub.f32 %v4193, %v4194
  %v4196 = vand.u32 %v4195, 4294901760
  %4197 = vmatmul.mubr.f32.gmra.mrb[0].mxu0 %v4196
  %v4198 = vpop.f32.mrb[0].mxu0
  %v4199 = vadd.f32 %v3382, %v4198
  %v4200 = vpop.f32.mrb[0].mxu0
  %v4201 = vadd.f32 %v3382, %v4200
  %4202 = vdwg.mxu0
  %v4203 = vand.u32 %v3351, 4294901760
  %v4204 = vsub.f32 %v3351, %v4203
  %v4205 = vand.u32 %v4204, 4294901760
  %v4206 = vsub.f32 %v4204, %v4205
  %v4207 = vand.u32 %v4206, 4294901760
  %4208 = vmatprep.subr.mxu0 %v4207
  %v4209 = vand.u32 %v3350, 4294901760
  %v4210 = vsub.f32 %v3350, %v4209
  %v4211 = vand.u32 %v4210, 4294901760
  %v4212 = vsub.f32 %v4210, %v4211
  %v4213 = vand.u32 %v4212, 4294901760
  %4214 = vmatpush1.msra.mxu0 %v4213
  %v4215 = vand.u32 %v3355, 4294901760
  %v4216 = vsub.f32 %v3355, %v4215
  %v4217 = vand.u32 %v4216, 4294901760
  %v4218 = vsub.f32 %v4216, %v4217
  %v4219 = vand.u32 %v4218, 4294901760
  %4220 = vmatprep.subr.mxu0 %v4219
  %v4221 = vand.u32 %v3354, 4294901760
  %v4222 = vsub.f32 %v3354, %v4221
  %v4223 = vand.u32 %v4222, 4294901760
  %v4224 = vsub.f32 %v4222, %v4223
  %v4225 = vand.u32 %v4224, 4294901760
  %4226 = vmatpush1.msra.mxu0 %v4225
  %v4227 = vand.u32 %v3359, 4294901760
  %v4228 = vsub.f32 %v3359, %v4227
  %v4229 = vand.u32 %v4228, 4294901760
  %v4230 = vsub.f32 %v4228, %v4229
  %v4231 = vand.u32 %v4230, 4294901760
  %4232 = vmatprep.subr.mxu0 %v4231
  %v4233 = vand.u32 %v3358, 4294901760
  %v4234 = vsub.f32 %v3358, %v4233
  %v4235 = vand.u32 %v4234, 4294901760
  %v4236 = vsub.f32 %v4234, %v4235
  %v4237 = vand.u32 %v4236, 4294901760
  %4238 = vmatpush1.msra.mxu0 %v4237
  %v4239 = vand.u32 %v3363, 4294901760
  %v4240 = vsub.f32 %v3363, %v4239
  %v4241 = vand.u32 %v4240, 4294901760
  %v4242 = vsub.f32 %v4240, %v4241
  %v4243 = vand.u32 %v4242, 4294901760
  %4244 = vmatprep.subr.mxu0 %v4243
  %v4245 = vand.u32 %v3362, 4294901760
  %v4246 = vsub.f32 %v3362, %v4245
  %v4247 = vand.u32 %v4246, 4294901760
  %v4248 = vsub.f32 %v4246, %v4247
  %v4249 = vand.u32 %v4248, 4294901760
  %4250 = vmatpush1.msra.mxu0 %v4249
  %4251 = vmatprep.subr.mxu0 0.0
  %4252 = vmatpush1.msra.mxu0 0.0
  %4253 = vmatprep.subr.mxu0 0.0
  %4254 = vmatpush1.msra.mxu0 0.0
  %4255 = vmatprep.subr.mxu0 0.0
  %4256 = vmatpush1.msra.mxu0 0.0
  %4257 = vmatprep.subr.mxu0 0.0
  %4258 = vmatpush1.msra.mxu0 0.0
  %4259 = vmatprep.subr.mxu0 0.0
  %4260 = vmatpush1.msra.mxu0 0.0
  %4261 = vmatprep.subr.mxu0 0.0
  %4262 = vmatpush1.msra.mxu0 0.0
  %4263 = vmatprep.subr.mxu0 0.0
  %4264 = vmatpush1.msra.mxu0 0.0
  %4265 = vmatprep.subr.mxu0 0.0
  %4266 = vmatpush1.msra.mxu0 0.0
  %4267 = vmatprep.subr.mxu0 0.0
  %4268 = vmatpush1.msra.mxu0 0.0
  %4269 = vmatprep.subr.mxu0 0.0
  %4270 = vmatpush1.msra.mxu0 0.0
  %4271 = vmatprep.subr.mxu0 0.0
  %4272 = vmatpush1.msra.mxu0 0.0
  %4273 = vmatprep.subr.mxu0 0.0
  %4274 = vmatpush1.msra.mxu0 0.0
  %4275 = vmatprep.subr.mxu0 0.0
  %4276 = vmatpush1.msra.mxu0 0.0
  %4277 = vmatprep.subr.mxu0 0.0
  %4278 = vmatpush1.msra.mxu0 0.0
  %4279 = vmatprep.subr.mxu0 0.0
  %4280 = vmatpush1.msra.mxu0 0.0
  %4281 = vmatprep.subr.mxu0 0.0
  %4282 = vmatpush1.msra.mxu0 0.0
  %4283 = vmatprep.subr.mxu0 0.0
  %4284 = vmatpush1.msra.mxu0 0.0
  %4285 = vmatprep.subr.mxu0 0.0
  %4286 = vmatpush1.msra.mxu0 0.0
  %4287 = vmatprep.subr.mxu0 0.0
  %4288 = vmatpush1.msra.mxu0 0.0
  %4289 = vmatprep.subr.mxu0 0.0
  %4290 = vmatpush1.msra.mxu0 0.0
  %4291 = vmatprep.subr.mxu0 0.0
  %4292 = vmatpush1.msra.mxu0 0.0
  %4293 = vmatprep.subr.mxu0 0.0
  %4294 = vmatpush1.msra.mxu0 0.0
  %4295 = vmatprep.subr.mxu0 0.0
  %4296 = vmatpush1.msra.mxu0 0.0
  %4297 = vmatprep.subr.mxu0 0.0
  %4298 = vmatpush1.msra.mxu0 0.0
  %4299 = vmatprep.subr.mxu0 0.0
  %4300 = vmatpush1.msra.mxu0 0.0
  %4301 = vmatprep.subr.mxu0 0.0
  %4302 = vmatpush1.msra.mxu0 0.0
  %4303 = vmatprep.subr.mxu0 0.0
  %4304 = vmatpush1.msra.mxu0 0.0
  %4305 = vmatprep.subr.mxu0 0.0
  %4306 = vmatpush1.msra.mxu0 0.0
  %4307 = vmatprep.mubr.f32.mxu0 0.0
  %v4308 = vand.u32 %v3385, 4294901760
  %4309 = vmatmul.mubr.f32.gmra.mrb[0].mxu0 %v4308
  %v4310 = vpop.f32.mrb[0].mxu0
  %v4311 = vadd.f32 %v4166, %v4310
  %v4312 = vpop.f32.mrb[0].mxu0
  %v4313 = vadd.f32 %v4168, %v4312
  %4314 = vmatprep.mubr.f32.mxu0 0.0
  %v4315 = vand.u32 %v3388, 4294901760
  %4316 = vmatmul.mubr.f32.gmra.mrb[0].mxu0 %v4315
  %v4317 = vpop.f32.mrb[0].mxu0
  %v4318 = vadd.f32 %v4177, %v4317
  %v4319 = vpop.f32.mrb[0].mxu0
  %v4320 = vadd.f32 %v4179, %v4319
  %4321 = vmatprep.mubr.f32.mxu0 0.0
  %v4322 = vand.u32 %v3391, 4294901760
  %4323 = vmatmul.mubr.f32.gmra.mrb[0].mxu0 %v4322
  %v4324 = vpop.f32.mrb[0].mxu0
  %v4325 = vadd.f32 %v4188, %v4324
  %v4326 = vpop.f32.mrb[0].mxu0
  %v4327 = vadd.f32 %v4190, %v4326
  %4328 = vmatprep.mubr.f32.mxu0 0.0
  %v4329 = vand.u32 %v3394, 4294901760
  %4330 = vmatmul.mubr.f32.gmra.mrb[0].mxu0 %v4329
  %v4331 = vpop.f32.mrb[0].mxu0
  %v4332 = vadd.f32 %v4199, %v4331
  %v4333 = vpop.f32.mrb[0].mxu0
  %v4334 = vadd.f32 %v4201, %v4333
  %4335 = vdwg.mxu0
  %v4336 = vand.u32 %v3351, 4294901760
  %v4337 = vsub.f32 %v3351, %v4336
  %4338 = vmatprep.subr.mxu0 %v4337
  %v4339 = vand.u32 %v3350, 4294901760
  %v4340 = vsub.f32 %v3350, %v4339
  %4341 = vmatpush1.msra.mxu0 %v4340
  %v4342 = vand.u32 %v3355, 4294901760
  %v4343 = vsub.f32 %v3355, %v4342
  %4344 = vmatprep.subr.mxu0 %v4343
  %v4345 = vand.u32 %v3354, 4294901760
  %v4346 = vsub.f32 %v3354, %v4345
  %4347 = vmatpush1.msra.mxu0 %v4346
  %v4348 = vand.u32 %v3359, 4294901760
  %v4349 = vsub.f32 %v3359, %v4348
  %4350 = vmatprep.subr.mxu0 %v4349
  %v4351 = vand.u32 %v3358, 4294901760
  %v4352 = vsub.f32 %v3358, %v4351
  %4353 = vmatpush1.msra.mxu0 %v4352
  %v4354 = vand.u32 %v3363, 4294901760
  %v4355 = vsub.f32 %v3363, %v4354
  %4356 = vmatprep.subr.mxu0 %v4355
  %v4357 = vand.u32 %v3362, 4294901760
  %v4358 = vsub.f32 %v3362, %v4357
  %4359 = vmatpush1.msra.mxu0 %v4358
  %4360 = vmatprep.subr.mxu0 0.0
  %4361 = vmatpush1.msra.mxu0 0.0
  %4362 = vmatprep.subr.mxu0 0.0
  %4363 = vmatpush1.msra.mxu0 0.0
  %4364 = vmatprep.subr.mxu0 0.0
  %4365 = vmatpush1.msra.mxu0 0.0
  %4366 = vmatprep.subr.mxu0 0.0
  %4367 = vmatpush1.msra.mxu0 0.0
  %4368 = vmatprep.subr.mxu0 0.0
  %4369 = vmatpush1.msra.mxu0 0.0
  %4370 = vmatprep.subr.mxu0 0.0
  %4371 = vmatpush1.msra.mxu0 0.0
  %4372 = vmatprep.subr.mxu0 0.0
  %4373 = vmatpush1.msra.mxu0 0.0
  %4374 = vmatprep.subr.mxu0 0.0
  %4375 = vmatpush1.msra.mxu0 0.0
  %4376 = vmatprep.subr.mxu0 0.0
  %4377 = vmatpush1.msra.mxu0 0.0
  %4378 = vmatprep.subr.mxu0 0.0
  %4379 = vmatpush1.msra.mxu0 0.0
  %4380 = vmatprep.subr.mxu0 0.0
  %4381 = vmatpush1.msra.mxu0 0.0
  %4382 = vmatprep.subr.mxu0 0.0
  %4383 = vmatpush1.msra.mxu0 0.0
  %4384 = vmatprep.subr.mxu0 0.0
  %4385 = vmatpush1.msra.mxu0 0.0
  %4386 = vmatprep.subr.mxu0 0.0
  %4387 = vmatpush1.msra.mxu0 0.0
  %4388 = vmatprep.subr.mxu0 0.0
  %4389 = vmatpush1.msra.mxu0 0.0
  %4390 = vmatprep.subr.mxu0 0.0
  %4391 = vmatpush1.msra.mxu0 0.0
  %4392 = vmatprep.subr.mxu0 0.0
  %4393 = vmatpush1.msra.mxu0 0.0
  %4394 = vmatprep.subr.mxu0 0.0
  %4395 = vmatpush1.msra.mxu0 0.0
  %4396 = vmatprep.subr.mxu0 0.0
  %4397 = vmatpush1.msra.mxu0 0.0
  %4398 = vmatprep.subr.mxu0 0.0
  %4399 = vmatpush1.msra.mxu0 0.0
  %4400 = vmatprep.subr.mxu0 0.0
  %4401 = vmatpush1.msra.mxu0 0.0
  %4402 = vmatprep.subr.mxu0 0.0
  %4403 = vmatpush1.msra.mxu0 0.0
  %4404 = vmatprep.subr.mxu0 0.0
  %4405 = vmatpush1.msra.mxu0 0.0
  %4406 = vmatprep.subr.mxu0 0.0
  %4407 = vmatpush1.msra.mxu0 0.0
  %4408 = vmatprep.subr.mxu0 0.0
  %4409 = vmatpush1.msra.mxu0 0.0
  %4410 = vmatprep.subr.mxu0 0.0
  %4411 = vmatpush1.msra.mxu0 0.0
  %4412 = vmatprep.subr.mxu0 0.0
  %4413 = vmatpush1.msra.mxu0 0.0
  %4414 = vmatprep.subr.mxu0 0.0
  %4415 = vmatpush1.msra.mxu0 0.0
  %4416 = vmatprep.mubr.f32.mxu0 0.0
  %v4417 = vand.u32 %v3385, 4294901760
  %v4418 = vsub.f32 %v3385, %v4417
  %4419 = vmatmul.mubr.f32.gmra.mrb[0].mxu0 %v4418
  %v4420 = vpop.f32.mrb[0].mxu0
  %v4421 = vadd.f32 %v4311, %v4420
  %v4422 = vpop.f32.mrb[0].mxu0
  %v4423 = vadd.f32 %v4313, %v4422
  %4424 = vmatprep.mubr.f32.mxu0 0.0
  %v4425 = vand.u32 %v3388, 4294901760
  %v4426 = vsub.f32 %v3388, %v4425
  %4427 = vmatmul.mubr.f32.gmra.mrb[0].mxu0 %v4426
  %v4428 = vpop.f32.mrb[0].mxu0
  %v4429 = vadd.f32 %v4318, %v4428
  %v4430 = vpop.f32.mrb[0].mxu0
  %v4431 = vadd.f32 %v4320, %v4430
  %4432 = vmatprep.mubr.f32.mxu0 0.0
  %v4433 = vand.u32 %v3391, 4294901760
  %v4434 = vsub.f32 %v3391, %v4433
  %4435 = vmatmul.mubr.f32.gmra.mrb[0].mxu0 %v4434
  %v4436 = vpop.f32.mrb[0].mxu0
  %v4437 = vadd.f32 %v4325, %v4436
  %v4438 = vpop.f32.mrb[0].mxu0
  %v4439 = vadd.f32 %v4327, %v4438
  %4440 = vmatprep.mubr.f32.mxu0 0.0
  %v4441 = vand.u32 %v3394, 4294901760
  %v4442 = vsub.f32 %v3394, %v4441
  %4443 = vmatmul.mubr.f32.gmra.mrb[0].mxu0 %v4442
  %v4444 = vpop.f32.mrb[0].mxu0
  %v4445 = vadd.f32 %v4332, %v4444
  %v4446 = vpop.f32.mrb[0].mxu0
  %v4447 = vadd.f32 %v4334, %v4446
  %4448 = vdwg.mxu0
  %v4449 = vand.u32 %v3351, 4294901760
  %4450 = vmatprep.subr.mxu0 %v4449
  %v4451 = vand.u32 %v3350, 4294901760
  %4452 = vmatpush1.msra.mxu0 %v4451
  %v4453 = vand.u32 %v3355, 4294901760
  %4454 = vmatprep.subr.mxu0 %v4453
  %v4455 = vand.u32 %v3354, 4294901760
  %4456 = vmatpush1.msra.mxu0 %v4455
  %v4457 = vand.u32 %v3359, 4294901760
  %4458 = vmatprep.subr.mxu0 %v4457
  %v4459 = vand.u32 %v3358, 4294901760
  %4460 = vmatpush1.msra.mxu0 %v4459
  %v4461 = vand.u32 %v3363, 4294901760
  %4462 = vmatprep.subr.mxu0 %v4461
  %v4463 = vand.u32 %v3362, 4294901760
  %4464 = vmatpush1.msra.mxu0 %v4463
  %4465 = vmatprep.subr.mxu0 0.0
  %4466 = vmatpush1.msra.mxu0 0.0
  %4467 = vmatprep.subr.mxu0 0.0
  %4468 = vmatpush1.msra.mxu0 0.0
  %4469 = vmatprep.subr.mxu0 0.0
  %4470 = vmatpush1.msra.mxu0 0.0
  %4471 = vmatprep.subr.mxu0 0.0
  %4472 = vmatpush1.msra.mxu0 0.0
  %4473 = vmatprep.subr.mxu0 0.0
  %4474 = vmatpush1.msra.mxu0 0.0
  %4475 = vmatprep.subr.mxu0 0.0
  %4476 = vmatpush1.msra.mxu0 0.0
  %4477 = vmatprep.subr.mxu0 0.0
  %4478 = vmatpush1.msra.mxu0 0.0
  %4479 = vmatprep.subr.mxu0 0.0
  %4480 = vmatpush1.msra.mxu0 0.0
  %4481 = vmatprep.subr.mxu0 0.0
  %4482 = vmatpush1.msra.mxu0 0.0
  %4483 = vmatprep.subr.mxu0 0.0
  %4484 = vmatpush1.msra.mxu0 0.0
  %4485 = vmatprep.subr.mxu0 0.0
  %4486 = vmatpush1.msra.mxu0 0.0
  %4487 = vmatprep.subr.mxu0 0.0
  %4488 = vmatpush1.msra.mxu0 0.0
  %4489 = vmatprep.subr.mxu0 0.0
  %4490 = vmatpush1.msra.mxu0 0.0
  %4491 = vmatprep.subr.mxu0 0.0
  %4492 = vmatpush1.msra.mxu0 0.0
  %4493 = vmatprep.subr.mxu0 0.0
  %4494 = vmatpush1.msra.mxu0 0.0
  %4495 = vmatprep.subr.mxu0 0.0
  %4496 = vmatpush1.msra.mxu0 0.0
  %4497 = vmatprep.subr.mxu0 0.0
  %4498 = vmatpush1.msra.mxu0 0.0
  %4499 = vmatprep.subr.mxu0 0.0
  %4500 = vmatpush1.msra.mxu0 0.0
  %4501 = vmatprep.subr.mxu0 0.0
  %4502 = vmatpush1.msra.mxu0 0.0
  %4503 = vmatprep.subr.mxu0 0.0
  %4504 = vmatpush1.msra.mxu0 0.0
  %4505 = vmatprep.subr.mxu0 0.0
  %4506 = vmatpush1.msra.mxu0 0.0
  %4507 = vmatprep.subr.mxu0 0.0
  %4508 = vmatpush1.msra.mxu0 0.0
  %4509 = vmatprep.subr.mxu0 0.0
  %4510 = vmatpush1.msra.mxu0 0.0
  %4511 = vmatprep.subr.mxu0 0.0
  %4512 = vmatpush1.msra.mxu0 0.0
  %4513 = vmatprep.subr.mxu0 0.0
  %4514 = vmatpush1.msra.mxu0 0.0
  %4515 = vmatprep.subr.mxu0 0.0
  %4516 = vmatpush1.msra.mxu0 0.0
  %4517 = vmatprep.subr.mxu0 0.0
  %4518 = vmatpush1.msra.mxu0 0.0
  %4519 = vmatprep.subr.mxu0 0.0
  %4520 = vmatpush1.msra.mxu0 0.0
  %4521 = vmatprep.mubr.f32.mxu0 0.0
  %v4522 = vand.u32 %v3385, 4294901760
  %v4523 = vsub.f32 %v3385, %v4522
  %v4524 = vand.u32 %v4523, 4294901760
  %4525 = vmatmul.mubr.f32.gmra.mrb[0].mxu0 %v4524
  %v4526 = vpop.f32.mrb[0].mxu0
  %v4527 = vadd.f32 %v4421, %v4526
  %v4528 = vpop.f32.mrb[0].mxu0
  %v4529 = vadd.f32 %v4423, %v4528
  %4530 = vmatprep.mubr.f32.mxu0 0.0
  %v4531 = vand.u32 %v3388, 4294901760
  %v4532 = vsub.f32 %v3388, %v4531
  %v4533 = vand.u32 %v4532, 4294901760
  %4534 = vmatmul.mubr.f32.gmra.mrb[0].mxu0 %v4533
  %v4535 = vpop.f32.mrb[0].mxu0
  %v4536 = vadd.f32 %v4429, %v4535
  %v4537 = vpop.f32.mrb[0].mxu0
  %v4538 = vadd.f32 %v4431, %v4537
  %4539 = vmatprep.mubr.f32.mxu0 0.0
  %v4540 = vand.u32 %v3391, 4294901760
  %v4541 = vsub.f32 %v3391, %v4540
  %v4542 = vand.u32 %v4541, 4294901760
  %4543 = vmatmul.mubr.f32.gmra.mrb[0].mxu0 %v4542
  %v4544 = vpop.f32.mrb[0].mxu0
  %v4545 = vadd.f32 %v4437, %v4544
  %v4546 = vpop.f32.mrb[0].mxu0
  %v4547 = vadd.f32 %v4439, %v4546
  %4548 = vmatprep.mubr.f32.mxu0 0.0
  %v4549 = vand.u32 %v3394, 4294901760
  %v4550 = vsub.f32 %v3394, %v4549
  %v4551 = vand.u32 %v4550, 4294901760
  %4552 = vmatmul.mubr.f32.gmra.mrb[0].mxu0 %v4551
  %v4553 = vpop.f32.mrb[0].mxu0
  %v4554 = vadd.f32 %v4445, %v4553
  %v4555 = vpop.f32.mrb[0].mxu0
  %v4556 = vadd.f32 %v4447, %v4555
  %4557 = vdwg.mxu0
  %v4558 = vand.u32 %v3351, 4294901760
  %v4559 = vsub.f32 %v3351, %v4558
  %v4560 = vand.u32 %v4559, 4294901760
  %4561 = vmatprep.subr.mxu0 %v4560
  %v4562 = vand.u32 %v3350, 4294901760
  %v4563 = vsub.f32 %v3350, %v4562
  %v4564 = vand.u32 %v4563, 4294901760
  %4565 = vmatpush1.msra.mxu0 %v4564
  %v4566 = vand.u32 %v3355, 4294901760
  %v4567 = vsub.f32 %v3355, %v4566
  %v4568 = vand.u32 %v4567, 4294901760
  %4569 = vmatprep.subr.mxu0 %v4568
  %v4570 = vand.u32 %v3354, 4294901760
  %v4571 = vsub.f32 %v3354, %v4570
  %v4572 = vand.u32 %v4571, 4294901760
  %4573 = vmatpush1.msra.mxu0 %v4572
  %v4574 = vand.u32 %v3359, 4294901760
  %v4575 = vsub.f32 %v3359, %v4574
  %v4576 = vand.u32 %v4575, 4294901760
  %4577 = vmatprep.subr.mxu0 %v4576
  %v4578 = vand.u32 %v3358, 4294901760
  %v4579 = vsub.f32 %v3358, %v4578
  %v4580 = vand.u32 %v4579, 4294901760
  %4581 = vmatpush1.msra.mxu0 %v4580
  %v4582 = vand.u32 %v3363, 4294901760
  %v4583 = vsub.f32 %v3363, %v4582
  %v4584 = vand.u32 %v4583, 4294901760
  %4585 = vmatprep.subr.mxu0 %v4584
  %v4586 = vand.u32 %v3362, 4294901760
  %v4587 = vsub.f32 %v3362, %v4586
  %v4588 = vand.u32 %v4587, 4294901760
  %4589 = vmatpush1.msra.mxu0 %v4588
  %4590 = vmatprep.subr.mxu0 0.0
  %4591 = vmatpush1.msra.mxu0 0.0
  %4592 = vmatprep.subr.mxu0 0.0
  %4593 = vmatpush1.msra.mxu0 0.0
  %4594 = vmatprep.subr.mxu0 0.0
  %4595 = vmatpush1.msra.mxu0 0.0
  %4596 = vmatprep.subr.mxu0 0.0
  %4597 = vmatpush1.msra.mxu0 0.0
  %4598 = vmatprep.subr.mxu0 0.0
  %4599 = vmatpush1.msra.mxu0 0.0
  %4600 = vmatprep.subr.mxu0 0.0
  %4601 = vmatpush1.msra.mxu0 0.0
  %4602 = vmatprep.subr.mxu0 0.0
  %4603 = vmatpush1.msra.mxu0 0.0
  %4604 = vmatprep.subr.mxu0 0.0
  %4605 = vmatpush1.msra.mxu0 0.0
  %4606 = vmatprep.subr.mxu0 0.0
  %4607 = vmatpush1.msra.mxu0 0.0
  %4608 = vmatprep.subr.mxu0 0.0
  %4609 = vmatpush1.msra.mxu0 0.0
  %4610 = vmatprep.subr.mxu0 0.0
  %4611 = vmatpush1.msra.mxu0 0.0
  %4612 = vmatprep.subr.mxu0 0.0
  %4613 = vmatpush1.msra.mxu0 0.0
  %4614 = vmatprep.subr.mxu0 0.0
  %4615 = vmatpush1.msra.mxu0 0.0
  %4616 = vmatprep.subr.mxu0 0.0
  %4617 = vmatpush1.msra.mxu0 0.0
  %4618 = vmatprep.subr.mxu0 0.0
  %4619 = vmatpush1.msra.mxu0 0.0
  %4620 = vmatprep.subr.mxu0 0.0
  %4621 = vmatpush1.msra.mxu0 0.0
  %4622 = vmatprep.subr.mxu0 0.0
  %4623 = vmatpush1.msra.mxu0 0.0
  %4624 = vmatprep.subr.mxu0 0.0
  %4625 = vmatpush1.msra.mxu0 0.0
  %4626 = vmatprep.subr.mxu0 0.0
  %4627 = vmatpush1.msra.mxu0 0.0
  %4628 = vmatprep.subr.mxu0 0.0
  %4629 = vmatpush1.msra.mxu0 0.0
  %4630 = vmatprep.subr.mxu0 0.0
  %4631 = vmatpush1.msra.mxu0 0.0
  %4632 = vmatprep.subr.mxu0 0.0
  %4633 = vmatpush1.msra.mxu0 0.0
  %4634 = vmatprep.subr.mxu0 0.0
  %4635 = vmatpush1.msra.mxu0 0.0
  %4636 = vmatprep.subr.mxu0 0.0
  %4637 = vmatpush1.msra.mxu0 0.0
  %4638 = vmatprep.subr.mxu0 0.0
  %4639 = vmatpush1.msra.mxu0 0.0
  %4640 = vmatprep.subr.mxu0 0.0
  %4641 = vmatpush1.msra.mxu0 0.0
  %4642 = vmatprep.subr.mxu0 0.0
  %4643 = vmatpush1.msra.mxu0 0.0
  %4644 = vmatprep.subr.mxu0 0.0
  %4645 = vmatpush1.msra.mxu0 0.0
  %4646 = vmatprep.mubr.f32.mxu0 0.0
  %v4647 = vand.u32 %v3385, 4294901760
  %4648 = vmatmul.mubr.f32.gmra.mrb[0].mxu0 %v4647
  %v4649 = vpop.f32.mrb[0].mxu0
  %v4650 = vadd.f32 %v4527, %v4649
  %v4651 = vpop.f32.mrb[0].mxu0
  %v4652 = vadd.f32 %v4529, %v4651
  %4653 = vmatprep.mubr.f32.mxu0 0.0
  %v4654 = vand.u32 %v3388, 4294901760
  %4655 = vmatmul.mubr.f32.gmra.mrb[0].mxu0 %v4654
  %v4656 = vpop.f32.mrb[0].mxu0
  %v4657 = vadd.f32 %v4536, %v4656
  %v4658 = vpop.f32.mrb[0].mxu0
  %v4659 = vadd.f32 %v4538, %v4658
  %4660 = vmatprep.mubr.f32.mxu0 0.0
  %v4661 = vand.u32 %v3391, 4294901760
  %4662 = vmatmul.mubr.f32.gmra.mrb[0].mxu0 %v4661
  %v4663 = vpop.f32.mrb[0].mxu0
  %v4664 = vadd.f32 %v4545, %v4663
  %v4665 = vpop.f32.mrb[0].mxu0
  %v4666 = vadd.f32 %v4547, %v4665
  %4667 = vmatprep.mubr.f32.mxu0 0.0
  %v4668 = vand.u32 %v3394, 4294901760
  %4669 = vmatmul.mubr.f32.gmra.mrb[0].mxu0 %v4668
  %v4670 = vpop.f32.mrb[0].mxu0
  %v4671 = vadd.f32 %v4554, %v4670
  %v4672 = vpop.f32.mrb[0].mxu0
  %v4673 = vadd.f32 %v4556, %v4672
  %4674 = vdwg.mxu0
  %v4675 = vand.u32 %v3351, 4294901760
  %4676 = vmatprep.subr.mxu0 %v4675
  %v4677 = vand.u32 %v3350, 4294901760
  %4678 = vmatpush1.msra.mxu0 %v4677
  %v4679 = vand.u32 %v3355, 4294901760
  %4680 = vmatprep.subr.mxu0 %v4679
  %v4681 = vand.u32 %v3354, 4294901760
  %4682 = vmatpush1.msra.mxu0 %v4681
  %v4683 = vand.u32 %v3359, 4294901760
  %4684 = vmatprep.subr.mxu0 %v4683
  %v4685 = vand.u32 %v3358, 4294901760
  %4686 = vmatpush1.msra.mxu0 %v4685
  %v4687 = vand.u32 %v3363, 4294901760
  %4688 = vmatprep.subr.mxu0 %v4687
  %v4689 = vand.u32 %v3362, 4294901760
  %4690 = vmatpush1.msra.mxu0 %v4689
  %4691 = vmatprep.subr.mxu0 0.0
  %4692 = vmatpush1.msra.mxu0 0.0
  %4693 = vmatprep.subr.mxu0 0.0
  %4694 = vmatpush1.msra.mxu0 0.0
  %4695 = vmatprep.subr.mxu0 0.0
  %4696 = vmatpush1.msra.mxu0 0.0
  %4697 = vmatprep.subr.mxu0 0.0
  %4698 = vmatpush1.msra.mxu0 0.0
  %4699 = vmatprep.subr.mxu0 0.0
  %4700 = vmatpush1.msra.mxu0 0.0
  %4701 = vmatprep.subr.mxu0 0.0
  %4702 = vmatpush1.msra.mxu0 0.0
  %4703 = vmatprep.subr.mxu0 0.0
  %4704 = vmatpush1.msra.mxu0 0.0
  %4705 = vmatprep.subr.mxu0 0.0
  %4706 = vmatpush1.msra.mxu0 0.0
  %4707 = vmatprep.subr.mxu0 0.0
  %4708 = vmatpush1.msra.mxu0 0.0
  %4709 = vmatprep.subr.mxu0 0.0
  %4710 = vmatpush1.msra.mxu0 0.0
  %4711 = vmatprep.subr.mxu0 0.0
  %4712 = vmatpush1.msra.mxu0 0.0
  %4713 = vmatprep.subr.mxu0 0.0
  %4714 = vmatpush1.msra.mxu0 0.0
  %4715 = vmatprep.subr.mxu0 0.0
  %4716 = vmatpush1.msra.mxu0 0.0
  %4717 = vmatprep.subr.mxu0 0.0
  %4718 = vmatpush1.msra.mxu0 0.0
  %4719 = vmatprep.subr.mxu0 0.0
  %4720 = vmatpush1.msra.mxu0 0.0
  %4721 = vmatprep.subr.mxu0 0.0
  %4722 = vmatpush1.msra.mxu0 0.0
  %4723 = vmatprep.subr.mxu0 0.0
  %4724 = vmatpush1.msra.mxu0 0.0
  %4725 = vmatprep.subr.mxu0 0.0
  %4726 = vmatpush1.msra.mxu0 0.0
  %4727 = vmatprep.subr.mxu0 0.0
  %4728 = vmatpush1.msra.mxu0 0.0
  %4729 = vmatprep.subr.mxu0 0.0
  %4730 = vmatpush1.msra.mxu0 0.0
  %4731 = vmatprep.subr.mxu0 0.0
  %4732 = vmatpush1.msra.mxu0 0.0
  %4733 = vmatprep.subr.mxu0 0.0
  %4734 = vmatpush1.msra.mxu0 0.0
  %4735 = vmatprep.subr.mxu0 0.0
  %4736 = vmatpush1.msra.mxu0 0.0
  %4737 = vmatprep.subr.mxu0 0.0
  %4738 = vmatpush1.msra.mxu0 0.0
  %4739 = vmatprep.subr.mxu0 0.0
  %4740 = vmatpush1.msra.mxu0 0.0
  %4741 = vmatprep.subr.mxu0 0.0
  %4742 = vmatpush1.msra.mxu0 0.0
  %4743 = vmatprep.subr.mxu0 0.0
  %4744 = vmatpush1.msra.mxu0 0.0
  %4745 = vmatprep.subr.mxu0 0.0
  %4746 = vmatpush1.msra.mxu0 0.0
  %4747 = vmatprep.mubr.f32.mxu0 0.0
  %v4748 = vand.u32 %v3385, 4294901760
  %4749 = vmatmul.mubr.f32.gmra.mrb[0].mxu0 %v4748
  %v4750 = vpop.f32.mrb[0].mxu0
  %v4751 = vadd.f32 %v4650, %v4750
  %v4752 = vpop.f32.mrb[0].mxu0
  %v4753 = vadd.f32 %v4652, %v4752
  %4754 = vmatprep.mubr.f32.mxu0 0.0
  %v4755 = vand.u32 %v3388, 4294901760
  %4756 = vmatmul.mubr.f32.gmra.mrb[0].mxu0 %v4755
  %v4757 = vpop.f32.mrb[0].mxu0
  %v4758 = vadd.f32 %v4657, %v4757
  %v4759 = vpop.f32.mrb[0].mxu0
  %v4760 = vadd.f32 %v4659, %v4759
  %4761 = vmatprep.mubr.f32.mxu0 0.0
  %v4762 = vand.u32 %v3391, 4294901760
  %4763 = vmatmul.mubr.f32.gmra.mrb[0].mxu0 %v4762
  %v4764 = vpop.f32.mrb[0].mxu0
  %v4765 = vadd.f32 %v4664, %v4764
  %v4766 = vpop.f32.mrb[0].mxu0
  %v4767 = vadd.f32 %v4666, %v4766
  %4768 = vmatprep.mubr.f32.mxu0 0.0
  %v4769 = vand.u32 %v3394, 4294901760
  %4770 = vmatmul.mubr.f32.gmra.mrb[0].mxu0 %v4769
  %v4771 = vpop.f32.mrb[0].mxu0
  %v4772 = vadd.f32 %v4671, %v4771
  %v4773 = vpop.f32.mrb[0].mxu0
  %v4774 = vadd.f32 %v4673, %v4773
  %4775 = vdwg.mxu0
  %v4776 = vmul.f32 %v4061, 0.31830987
  %v4777 = vmul.f32 %v4063, 0.31830987
  %v4778 = vmul.f32 %v4751, 0.31830987
  %v4779 = vmul.f32 %v4753, 0.31830987
  %v4780 = vmul.f32 %v4068, 0.31830987
  %v4781 = vmul.f32 %v4070, 0.31830987
  %v4782 = vmul.f32 %v4758, 0.31830987
  %v4783 = vmul.f32 %v4760, 0.31830987
  %v4784 = vmul.f32 %v4075, 0.31830987
  %v4785 = vmul.f32 %v4077, 0.31830987
  %v4786 = vmul.f32 %v4765, 0.31830987
  %v4787 = vmul.f32 %v4767, 0.31830987
  %v4788 = vmul.f32 %v4082, 0.31830987
  %v4789 = vmul.f32 %v4084, 0.31830987
  %v4790 = vmul.f32 %v4772, 0.31830987
  %v4791 = vmul.f32 %v4774, 0.31830987
  %v4792 = vround.ne.pseudo %v4776
  %v4793 = vround.ne.pseudo %v4777
  %v4794 = vround.ne.pseudo %v4778
  %v4795 = vround.ne.pseudo %v4779
  %v4796 = vround.ne.pseudo %v4780
  %v4797 = vround.ne.pseudo %v4781
  %v4798 = vround.ne.pseudo %v4782
  %v4799 = vround.ne.pseudo %v4783
  %v4800 = vround.ne.pseudo %v4784
  %v4801 = vround.ne.pseudo %v4785
  %v4802 = vround.ne.pseudo %v4786
  %v4803 = vround.ne.pseudo %v4787
  %v4804 = vround.ne.pseudo %v4788
  %v4805 = vround.ne.pseudo %v4789
  %v4806 = vround.ne.pseudo %v4790
  %v4807 = vround.ne.pseudo %v4791
  %v4808 = vmul.f32 %v4792, 3.140625
  %v4809 = vmul.f32 %v4793, 3.140625
  %v4810 = vmul.f32 %v4794, 3.140625
  %v4811 = vmul.f32 %v4795, 3.140625
  %v4812 = vmul.f32 %v4796, 3.140625
  %v4813 = vmul.f32 %v4797, 3.140625
  %v4814 = vmul.f32 %v4798, 3.140625
  %v4815 = vmul.f32 %v4799, 3.140625
  %v4816 = vmul.f32 %v4800, 3.140625
  %v4817 = vmul.f32 %v4801, 3.140625
  %v4818 = vmul.f32 %v4802, 3.140625
  %v4819 = vmul.f32 %v4803, 3.140625
  %v4820 = vmul.f32 %v4804, 3.140625
  %v4821 = vmul.f32 %v4805, 3.140625
  %v4822 = vmul.f32 %v4806, 3.140625
  %v4823 = vmul.f32 %v4807, 3.140625
  %v4824 = vsub.f32 %v4061, %v4808
  %v4825 = vsub.f32 %v4063, %v4809
  %v4826 = vsub.f32 %v4751, %v4810
  %v4827 = vsub.f32 %v4753, %v4811
  %v4828 = vsub.f32 %v4068, %v4812
  %v4829 = vsub.f32 %v4070, %v4813
  %v4830 = vsub.f32 %v4758, %v4814
  %v4831 = vsub.f32 %v4760, %v4815
  %v4832 = vsub.f32 %v4075, %v4816
  %v4833 = vsub.f32 %v4077, %v4817
  %v4834 = vsub.f32 %v4765, %v4818
  %v4835 = vsub.f32 %v4767, %v4819
  %v4836 = vsub.f32 %v4082, %v4820
  %v4837 = vsub.f32 %v4084, %v4821
  %v4838 = vsub.f32 %v4772, %v4822
  %v4839 = vsub.f32 %v4774, %v4823
  %v4840 = vmul.f32 %v4792, 0.0009676536
  %v4841 = vmul.f32 %v4793, 0.0009676536
  %v4842 = vmul.f32 %v4794, 0.0009676536
  %v4843 = vmul.f32 %v4795, 0.0009676536
  %v4844 = vmul.f32 %v4796, 0.0009676536
  %v4845 = vmul.f32 %v4797, 0.0009676536
  %v4846 = vmul.f32 %v4798, 0.0009676536
  %v4847 = vmul.f32 %v4799, 0.0009676536
  %v4848 = vmul.f32 %v4800, 0.0009676536
  %v4849 = vmul.f32 %v4801, 0.0009676536
  %v4850 = vmul.f32 %v4802, 0.0009676536
  %v4851 = vmul.f32 %v4803, 0.0009676536
  %v4852 = vmul.f32 %v4804, 0.0009676536
  %v4853 = vmul.f32 %v4805, 0.0009676536
  %v4854 = vmul.f32 %v4806, 0.0009676536
  %v4855 = vmul.f32 %v4807, 0.0009676536
  %v4856 = vsub.f32 %v4824, %v4840
  %v4857 = vsub.f32 %v4825, %v4841
  %v4858 = vsub.f32 %v4826, %v4842
  %v4859 = vsub.f32 %v4827, %v4843
  %v4860 = vsub.f32 %v4828, %v4844
  %v4861 = vsub.f32 %v4829, %v4845
  %v4862 = vsub.f32 %v4830, %v4846
  %v4863 = vsub.f32 %v4831, %v4847
  %v4864 = vsub.f32 %v4832, %v4848
  %v4865 = vsub.f32 %v4833, %v4849
  %v4866 = vsub.f32 %v4834, %v4850
  %v4867 = vsub.f32 %v4835, %v4851
  %v4868 = vsub.f32 %v4836, %v4852
  %v4869 = vsub.f32 %v4837, %v4853
  %v4870 = vsub.f32 %v4838, %v4854
  %v4871 = vsub.f32 %v4839, %v4855
  %v4872 = vmul.f32 %v4856, %v4856
  %v4873 = vmul.f32 %v4857, %v4857
  %v4874 = vmul.f32 %v4858, %v4858
  %v4875 = vmul.f32 %v4859, %v4859
  %v4876 = vmul.f32 %v4860, %v4860
  %v4877 = vmul.f32 %v4861, %v4861
  %v4878 = vmul.f32 %v4862, %v4862
  %v4879 = vmul.f32 %v4863, %v4863
  %v4880 = vmul.f32 %v4864, %v4864
  %v4881 = vmul.f32 %v4865, %v4865
  %v4882 = vmul.f32 %v4866, %v4866
  %v4883 = vmul.f32 %v4867, %v4867
  %v4884 = vmul.f32 %v4868, %v4868
  %v4885 = vmul.f32 %v4869, %v4869
  %v4886 = vmul.f32 %v4870, %v4870
  %v4887 = vmul.f32 %v4871, %v4871
  %v4888 = vmul.f32 %v4856, %v4872
  %v4889 = vmul.f32 %v4857, %v4873
  %v4890 = vmul.f32 %v4858, %v4874
  %v4891 = vmul.f32 %v4859, %v4875
  %v4892 = vmul.f32 %v4860, %v4876
  %v4893 = vmul.f32 %v4861, %v4877
  %v4894 = vmul.f32 %v4862, %v4878
  %v4895 = vmul.f32 %v4863, %v4879
  %v4896 = vmul.f32 %v4864, %v4880
  %v4897 = vmul.f32 %v4865, %v4881
  %v4898 = vmul.f32 %v4866, %v4882
  %v4899 = vmul.f32 %v4867, %v4883
  %v4900 = vmul.f32 %v4868, %v4884
  %v4901 = vmul.f32 %v4869, %v4885
  %v4902 = vmul.f32 %v4870, %v4886
  %v4903 = vmul.f32 %v4871, %v4887
  %v4904 = vmul.f32 %v4872, -0.00019515296
  %v4905 = vmul.f32 %v4873, -0.00019515296
  %v4906 = vmul.f32 %v4874, -0.00019515296
  %v4907 = vmul.f32 %v4875, -0.00019515296
  %v4908 = vmul.f32 %v4876, -0.00019515296
  %v4909 = vmul.f32 %v4877, -0.00019515296
  %v4910 = vmul.f32 %v4878, -0.00019515296
  %v4911 = vmul.f32 %v4879, -0.00019515296
  %v4912 = vmul.f32 %v4880, -0.00019515296
  %v4913 = vmul.f32 %v4881, -0.00019515296
  %v4914 = vmul.f32 %v4882, -0.00019515296
  %v4915 = vmul.f32 %v4883, -0.00019515296
  %v4916 = vmul.f32 %v4884, -0.00019515296
  %v4917 = vmul.f32 %v4885, -0.00019515296
  %v4918 = vmul.f32 %v4886, -0.00019515296
  %v4919 = vmul.f32 %v4887, -0.00019515296
  %v4920 = vadd.f32 %v4904, 0.008332161
  %v4921 = vadd.f32 %v4905, 0.008332161
  %v4922 = vadd.f32 %v4906, 0.008332161
  %v4923 = vadd.f32 %v4907, 0.008332161
  %v4924 = vadd.f32 %v4908, 0.008332161
  %v4925 = vadd.f32 %v4909, 0.008332161
  %v4926 = vadd.f32 %v4910, 0.008332161
  %v4927 = vadd.f32 %v4911, 0.008332161
  %v4928 = vadd.f32 %v4912, 0.008332161
  %v4929 = vadd.f32 %v4913, 0.008332161
  %v4930 = vadd.f32 %v4914, 0.008332161
  %v4931 = vadd.f32 %v4915, 0.008332161
  %v4932 = vadd.f32 %v4916, 0.008332161
  %v4933 = vadd.f32 %v4917, 0.008332161
  %v4934 = vadd.f32 %v4918, 0.008332161
  %v4935 = vadd.f32 %v4919, 0.008332161
  %v4936 = vmul.f32 %v4872, %v4920
  %v4937 = vmul.f32 %v4873, %v4921
  %v4938 = vmul.f32 %v4874, %v4922
  %v4939 = vmul.f32 %v4875, %v4923
  %v4940 = vmul.f32 %v4876, %v4924
  %v4941 = vmul.f32 %v4877, %v4925
  %v4942 = vmul.f32 %v4878, %v4926
  %v4943 = vmul.f32 %v4879, %v4927
  %v4944 = vmul.f32 %v4880, %v4928
  %v4945 = vmul.f32 %v4881, %v4929
  %v4946 = vmul.f32 %v4882, %v4930
  %v4947 = vmul.f32 %v4883, %v4931
  %v4948 = vmul.f32 %v4884, %v4932
  %v4949 = vmul.f32 %v4885, %v4933
  %v4950 = vmul.f32 %v4886, %v4934
  %v4951 = vmul.f32 %v4887, %v4935
  %v4952 = vadd.f32 %v4936, -0.16666655
  %v4953 = vadd.f32 %v4937, -0.16666655
  %v4954 = vadd.f32 %v4938, -0.16666655
  %v4955 = vadd.f32 %v4939, -0.16666655
  %v4956 = vadd.f32 %v4940, -0.16666655
  %v4957 = vadd.f32 %v4941, -0.16666655
  %v4958 = vadd.f32 %v4942, -0.16666655
  %v4959 = vadd.f32 %v4943, -0.16666655
  %v4960 = vadd.f32 %v4944, -0.16666655
  %v4961 = vadd.f32 %v4945, -0.16666655
  %v4962 = vadd.f32 %v4946, -0.16666655
  %v4963 = vadd.f32 %v4947, -0.16666655
  %v4964 = vadd.f32 %v4948, -0.16666655
  %v4965 = vadd.f32 %v4949, -0.16666655
  %v4966 = vadd.f32 %v4950, -0.16666655
  %v4967 = vadd.f32 %v4951, -0.16666655
  %v4968 = vmul.f32 %v4888, %v4952
  %v4969 = vmul.f32 %v4889, %v4953
  %v4970 = vmul.f32 %v4890, %v4954
  %v4971 = vmul.f32 %v4891, %v4955
  %v4972 = vmul.f32 %v4892, %v4956
  %v4973 = vmul.f32 %v4893, %v4957
  %v4974 = vmul.f32 %v4894, %v4958
  %v4975 = vmul.f32 %v4895, %v4959
  %v4976 = vmul.f32 %v4896, %v4960
  %v4977 = vmul.f32 %v4897, %v4961
  %v4978 = vmul.f32 %v4898, %v4962
  %v4979 = vmul.f32 %v4899, %v4963
  %v4980 = vmul.f32 %v4900, %v4964
  %v4981 = vmul.f32 %v4901, %v4965
  %v4982 = vmul.f32 %v4902, %v4966
  %v4983 = vmul.f32 %v4903, %v4967
  %v4984 = vadd.f32 %v4856, %v4968
  %v4985 = vadd.f32 %v4857, %v4969
  %v4986 = vadd.f32 %v4858, %v4970
  %v4987 = vadd.f32 %v4859, %v4971
  %v4988 = vadd.f32 %v4860, %v4972
  %v4989 = vadd.f32 %v4861, %v4973
  %v4990 = vadd.f32 %v4862, %v4974
  %v4991 = vadd.f32 %v4863, %v4975
  %v4992 = vadd.f32 %v4864, %v4976
  %v4993 = vadd.f32 %v4865, %v4977
  %v4994 = vadd.f32 %v4866, %v4978
  %v4995 = vadd.f32 %v4867, %v4979
  %v4996 = vadd.f32 %v4868, %v4980
  %v4997 = vadd.f32 %v4869, %v4981
  %v4998 = vadd.f32 %v4870, %v4982
  %v4999 = vadd.f32 %v4871, %v4983
  %v5000 = vcvt.f32.s32.ties.to.even %v4776
  %v5001 = vcvt.f32.s32.ties.to.even %v4777
  %v5002 = vcvt.f32.s32.ties.to.even %v4778
  %v5003 = vcvt.f32.s32.ties.to.even %v4779
  %v5004 = vcvt.f32.s32.ties.to.even %v4780
  %v5005 = vcvt.f32.s32.ties.to.even %v4781
  %v5006 = vcvt.f32.s32.ties.to.even %v4782
  %v5007 = vcvt.f32.s32.ties.to.even %v4783
  %v5008 = vcvt.f32.s32.ties.to.even %v4784
  %v5009 = vcvt.f32.s32.ties.to.even %v4785
  %v5010 = vcvt.f32.s32.ties.to.even %v4786
  %v5011 = vcvt.f32.s32.ties.to.even %v4787
  %v5012 = vcvt.f32.s32.ties.to.even %v4788
  %v5013 = vcvt.f32.s32.ties.to.even %v4789
  %v5014 = vcvt.f32.s32.ties.to.even %v4790
  %v5015 = vcvt.f32.s32.ties.to.even %v4791
  %v5016 = vand.u32 %v5000, 1
  %v5017 = vand.u32 %v5001, 1
  %v5018 = vand.u32 %v5002, 1
  %v5019 = vand.u32 %v5003, 1
  %v5020 = vand.u32 %v5004, 1
  %v5021 = vand.u32 %v5005, 1
  %v5022 = vand.u32 %v5006, 1
  %v5023 = vand.u32 %v5007, 1
  %v5024 = vand.u32 %v5008, 1
  %v5025 = vand.u32 %v5009, 1
  %v5026 = vand.u32 %v5010, 1
  %v5027 = vand.u32 %v5011, 1
  %v5028 = vand.u32 %v5012, 1
  %v5029 = vand.u32 %v5013, 1
  %v5030 = vand.u32 %v5014, 1
  %v5031 = vand.u32 %v5015, 1
  %vm5032 = vcmp.eq.s32.totalorder %v5016, 1
  %vm5033 = vcmp.eq.s32.totalorder %v5017, 1
  %vm5034 = vcmp.eq.s32.totalorder %v5018, 1
  %vm5035 = vcmp.eq.s32.totalorder %v5019, 1
  %vm5036 = vcmp.eq.s32.totalorder %v5020, 1
  %vm5037 = vcmp.eq.s32.totalorder %v5021, 1
  %vm5038 = vcmp.eq.s32.totalorder %v5022, 1
  %vm5039 = vcmp.eq.s32.totalorder %v5023, 1
  %vm5040 = vcmp.eq.s32.totalorder %v5024, 1
  %vm5041 = vcmp.eq.s32.totalorder %v5025, 1
  %vm5042 = vcmp.eq.s32.totalorder %v5026, 1
  %vm5043 = vcmp.eq.s32.totalorder %v5027, 1
  %vm5044 = vcmp.eq.s32.totalorder %v5028, 1
  %vm5045 = vcmp.eq.s32.totalorder %v5029, 1
  %vm5046 = vcmp.eq.s32.totalorder %v5030, 1
  %vm5047 = vcmp.eq.s32.totalorder %v5031, 1
  %v5048 = vsub.f32 0.0, %v4984
  %v5049 = vsub.f32 0.0, %v4985
  %v5050 = vsub.f32 0.0, %v4986
  %v5051 = vsub.f32 0.0, %v4987
  %v5052 = vsub.f32 0.0, %v4988
  %v5053 = vsub.f32 0.0, %v4989
  %v5054 = vsub.f32 0.0, %v4990
  %v5055 = vsub.f32 0.0, %v4991
  %v5056 = vsub.f32 0.0, %v4992
  %v5057 = vsub.f32 0.0, %v4993
  %v5058 = vsub.f32 0.0, %v4994
  %v5059 = vsub.f32 0.0, %v4995
  %v5060 = vsub.f32 0.0, %v4996
  %v5061 = vsub.f32 0.0, %v4997
  %v5062 = vsub.f32 0.0, %v4998
  %v5063 = vsub.f32 0.0, %v4999
  %v5064 = vsel %vm5032, %v5048, %v4984
  %v5065 = vsel %vm5033, %v5049, %v4985
  %v5066 = vsel %vm5034, %v5050, %v4986
  %v5067 = vsel %vm5035, %v5051, %v4987
  %v5068 = vsel %vm5036, %v5052, %v4988
  %v5069 = vsel %vm5037, %v5053, %v4989
  %v5070 = vsel %vm5038, %v5054, %v4990
  %v5071 = vsel %vm5039, %v5055, %v4991
  %v5072 = vsel %vm5040, %v5056, %v4992
  %v5073 = vsel %vm5041, %v5057, %v4993
  %v5074 = vsel %vm5042, %v5058, %v4994
  %v5075 = vsel %vm5043, %v5059, %v4995
  %v5076 = vsel %vm5044, %v5060, %v4996
  %v5077 = vsel %vm5045, %v5061, %v4997
  %v5078 = vsel %vm5046, %v5062, %v4998
  %v5079 = vsel %vm5047, %v5063, %v4999
  %5081 = vset.pattern.permute.xlu0 0
  %5082 = vperm.xlu0 %5081, %v57
  %v5083 = vpop.permute.xlu0 %5082
  %v5086 = vsel %vm1667, %v56, 0
  %v5088 = vand.u32 %v5065, 4294901760
  %5089 = vmatprep.subr.mxu0 %v5088
  %v5090 = vand.u32 %v5064, 4294901760
  %5091 = vmatpush1.msra.mxu0 %v5090
  %v5092 = vand.u32 %v5069, 4294901760
  %5093 = vmatprep.subr.mxu0 %v5092
  %v5094 = vand.u32 %v5068, 4294901760
  %5095 = vmatpush1.msra.mxu0 %v5094
  %v5096 = vand.u32 %v5073, 4294901760
  %5097 = vmatprep.subr.mxu0 %v5096
  %v5098 = vand.u32 %v5072, 4294901760
  %5099 = vmatpush1.msra.mxu0 %v5098
  %v5100 = vand.u32 %v5077, 4294901760
  %5101 = vmatprep.subr.mxu0 %v5100
  %v5102 = vand.u32 %v5076, 4294901760
  %5103 = vmatpush1.msra.mxu0 %v5102
  %5104 = vmatprep.subr.mxu0 0.0
  %5105 = vmatpush1.msra.mxu0 0.0
  %5106 = vmatprep.subr.mxu0 0.0
  %5107 = vmatpush1.msra.mxu0 0.0
  %5108 = vmatprep.subr.mxu0 0.0
  %5109 = vmatpush1.msra.mxu0 0.0
  %5110 = vmatprep.subr.mxu0 0.0
  %5111 = vmatpush1.msra.mxu0 0.0
  %5112 = vmatprep.subr.mxu0 0.0
  %5113 = vmatpush1.msra.mxu0 0.0
  %5114 = vmatprep.subr.mxu0 0.0
  %5115 = vmatpush1.msra.mxu0 0.0
  %5116 = vmatprep.subr.mxu0 0.0
  %5117 = vmatpush1.msra.mxu0 0.0
  %5118 = vmatprep.subr.mxu0 0.0
  %5119 = vmatpush1.msra.mxu0 0.0
  %5120 = vmatprep.subr.mxu0 0.0
  %5121 = vmatpush1.msra.mxu0 0.0
  %5122 = vmatprep.subr.mxu0 0.0
  %5123 = vmatpush1.msra.mxu0 0.0
  %5124 = vmatprep.subr.mxu0 0.0
  %5125 = vmatpush1.msra.mxu0 0.0
  %5126 = vmatprep.subr.mxu0 0.0
  %5127 = vmatpush1.msra.mxu0 0.0
  %5128 = vmatprep.subr.mxu0 0.0
  %5129 = vmatpush1.msra.mxu0 0.0
  %5130 = vmatprep.subr.mxu0 0.0
  %5131 = vmatpush1.msra.mxu0 0.0
  %5132 = vmatprep.subr.mxu0 0.0
  %5133 = vmatpush1.msra.mxu0 0.0
  %5134 = vmatprep.subr.mxu0 0.0
  %5135 = vmatpush1.msra.mxu0 0.0
  %5136 = vmatprep.subr.mxu0 0.0
  %5137 = vmatpush1.msra.mxu0 0.0
  %5138 = vmatprep.subr.mxu0 0.0
  %5139 = vmatpush1.msra.mxu0 0.0
  %5140 = vmatprep.subr.mxu0 0.0
  %5141 = vmatpush1.msra.mxu0 0.0
  %5142 = vmatprep.subr.mxu0 0.0
  %5143 = vmatpush1.msra.mxu0 0.0
  %5144 = vmatprep.subr.mxu0 0.0
  %5145 = vmatpush1.msra.mxu0 0.0
  %5146 = vmatprep.subr.mxu0 0.0
  %5147 = vmatpush1.msra.mxu0 0.0
  %5148 = vmatprep.subr.mxu0 0.0
  %5149 = vmatpush1.msra.mxu0 0.0
  %5150 = vmatprep.subr.mxu0 0.0
  %5151 = vmatpush1.msra.mxu0 0.0
  %5152 = vmatprep.subr.mxu0 0.0
  %5153 = vmatpush1.msra.mxu0 0.0
  %5154 = vmatprep.subr.mxu0 0.0
  %5155 = vmatpush1.msra.mxu0 0.0
  %5156 = vmatprep.subr.mxu0 0.0
  %5157 = vmatpush1.msra.mxu0 0.0
  %5158 = vmatprep.subr.mxu0 0.0
  %5159 = vmatpush1.msra.mxu0 0.0
  %5160 = vmatprep.mubr.f32.mxu0 0.0
  %v5161 = vand.u32 %v5086, 4294901760
  %v5162 = vsub.f32 %v5086, %v5161
  %v5163 = vand.u32 %v5162, 4294901760
  %v5164 = vsub.f32 %v5162, %v5163
  %v5165 = vand.u32 %v5164, 4294901760
  %5166 = vmatmul.mubr.f32.gmra.mrb[0].mxu0 %v5165
  %v5167 = vpop.f32.mrb[0].mxu0
  %v5168 = vadd.f32 %v5083, %v5167
  %v5169 = vpop.f32.mrb[0].mxu0
  %v5170 = vadd.f32 %v5083, %v5169
  %5171 = vdwg.mxu0
  %v5172 = vand.u32 %v5065, 4294901760
  %v5173 = vsub.f32 %v5065, %v5172
  %v5174 = vand.u32 %v5173, 4294901760
  %v5175 = vsub.f32 %v5173, %v5174
  %v5176 = vand.u32 %v5175, 4294901760
  %5177 = vmatprep.subr.mxu0 %v5176
  %v5178 = vand.u32 %v5064, 4294901760
  %v5179 = vsub.f32 %v5064, %v5178
  %v5180 = vand.u32 %v5179, 4294901760
  %v5181 = vsub.f32 %v5179, %v5180
  %v5182 = vand.u32 %v5181, 4294901760
  %5183 = vmatpush1.msra.mxu0 %v5182
  %v5184 = vand.u32 %v5069, 4294901760
  %v5185 = vsub.f32 %v5069, %v5184
  %v5186 = vand.u32 %v5185, 4294901760
  %v5187 = vsub.f32 %v5185, %v5186
  %v5188 = vand.u32 %v5187, 4294901760
  %5189 = vmatprep.subr.mxu0 %v5188
  %v5190 = vand.u32 %v5068, 4294901760
  %v5191 = vsub.f32 %v5068, %v5190
  %v5192 = vand.u32 %v5191, 4294901760
  %v5193 = vsub.f32 %v5191, %v5192
  %v5194 = vand.u32 %v5193, 4294901760
  %5195 = vmatpush1.msra.mxu0 %v5194
  %v5196 = vand.u32 %v5073, 4294901760
  %v5197 = vsub.f32 %v5073, %v5196
  %v5198 = vand.u32 %v5197, 4294901760
  %v5199 = vsub.f32 %v5197, %v5198
  %v5200 = vand.u32 %v5199, 4294901760
  %5201 = vmatprep.subr.mxu0 %v5200
  %v5202 = vand.u32 %v5072, 4294901760
  %v5203 = vsub.f32 %v5072, %v5202
  %v5204 = vand.u32 %v5203, 4294901760
  %v5205 = vsub.f32 %v5203, %v5204
  %v5206 = vand.u32 %v5205, 4294901760
  %5207 = vmatpush1.msra.mxu0 %v5206
  %v5208 = vand.u32 %v5077, 4294901760
  %v5209 = vsub.f32 %v5077, %v5208
  %v5210 = vand.u32 %v5209, 4294901760
  %v5211 = vsub.f32 %v5209, %v5210
  %v5212 = vand.u32 %v5211, 4294901760
  %5213 = vmatprep.subr.mxu0 %v5212
  %v5214 = vand.u32 %v5076, 4294901760
  %v5215 = vsub.f32 %v5076, %v5214
  %v5216 = vand.u32 %v5215, 4294901760
  %v5217 = vsub.f32 %v5215, %v5216
  %v5218 = vand.u32 %v5217, 4294901760
  %5219 = vmatpush1.msra.mxu0 %v5218
  %5220 = vmatprep.subr.mxu0 0.0
  %5221 = vmatpush1.msra.mxu0 0.0
  %5222 = vmatprep.subr.mxu0 0.0
  %5223 = vmatpush1.msra.mxu0 0.0
  %5224 = vmatprep.subr.mxu0 0.0
  %5225 = vmatpush1.msra.mxu0 0.0
  %5226 = vmatprep.subr.mxu0 0.0
  %5227 = vmatpush1.msra.mxu0 0.0
  %5228 = vmatprep.subr.mxu0 0.0
  %5229 = vmatpush1.msra.mxu0 0.0
  %5230 = vmatprep.subr.mxu0 0.0
  %5231 = vmatpush1.msra.mxu0 0.0
  %5232 = vmatprep.subr.mxu0 0.0
  %5233 = vmatpush1.msra.mxu0 0.0
  %5234 = vmatprep.subr.mxu0 0.0
  %5235 = vmatpush1.msra.mxu0 0.0
  %5236 = vmatprep.subr.mxu0 0.0
  %5237 = vmatpush1.msra.mxu0 0.0
  %5238 = vmatprep.subr.mxu0 0.0
  %5239 = vmatpush1.msra.mxu0 0.0
  %5240 = vmatprep.subr.mxu0 0.0
  %5241 = vmatpush1.msra.mxu0 0.0
  %5242 = vmatprep.subr.mxu0 0.0
  %5243 = vmatpush1.msra.mxu0 0.0
  %5244 = vmatprep.subr.mxu0 0.0
  %5245 = vmatpush1.msra.mxu0 0.0
  %5246 = vmatprep.subr.mxu0 0.0
  %5247 = vmatpush1.msra.mxu0 0.0
  %5248 = vmatprep.subr.mxu0 0.0
  %5249 = vmatpush1.msra.mxu0 0.0
  %5250 = vmatprep.subr.mxu0 0.0
  %5251 = vmatpush1.msra.mxu0 0.0
  %5252 = vmatprep.subr.mxu0 0.0
  %5253 = vmatpush1.msra.mxu0 0.0
  %5254 = vmatprep.subr.mxu0 0.0
  %5255 = vmatpush1.msra.mxu0 0.0
  %5256 = vmatprep.subr.mxu0 0.0
  %5257 = vmatpush1.msra.mxu0 0.0
  %5258 = vmatprep.subr.mxu0 0.0
  %5259 = vmatpush1.msra.mxu0 0.0
  %5260 = vmatprep.subr.mxu0 0.0
  %5261 = vmatpush1.msra.mxu0 0.0
  %5262 = vmatprep.subr.mxu0 0.0
  %5263 = vmatpush1.msra.mxu0 0.0
  %5264 = vmatprep.subr.mxu0 0.0
  %5265 = vmatpush1.msra.mxu0 0.0
  %5266 = vmatprep.subr.mxu0 0.0
  %5267 = vmatpush1.msra.mxu0 0.0
  %5268 = vmatprep.subr.mxu0 0.0
  %5269 = vmatpush1.msra.mxu0 0.0
  %5270 = vmatprep.subr.mxu0 0.0
  %5271 = vmatpush1.msra.mxu0 0.0
  %5272 = vmatprep.subr.mxu0 0.0
  %5273 = vmatpush1.msra.mxu0 0.0
  %5274 = vmatprep.subr.mxu0 0.0
  %5275 = vmatpush1.msra.mxu0 0.0
  %5276 = vmatprep.mubr.f32.mxu0 0.0
  %v5277 = vand.u32 %v5086, 4294901760
  %5278 = vmatmul.mubr.f32.gmra.mrb[0].mxu0 %v5277
  %v5279 = vpop.f32.mrb[0].mxu0
  %v5280 = vadd.f32 %v5168, %v5279
  %v5281 = vpop.f32.mrb[0].mxu0
  %v5282 = vadd.f32 %v5170, %v5281
  %5283 = vdwg.mxu0
  %v5284 = vand.u32 %v5065, 4294901760
  %v5285 = vsub.f32 %v5065, %v5284
  %5286 = vmatprep.subr.mxu0 %v5285
  %v5287 = vand.u32 %v5064, 4294901760
  %v5288 = vsub.f32 %v5064, %v5287
  %5289 = vmatpush1.msra.mxu0 %v5288
  %v5290 = vand.u32 %v5069, 4294901760
  %v5291 = vsub.f32 %v5069, %v5290
  %5292 = vmatprep.subr.mxu0 %v5291
  %v5293 = vand.u32 %v5068, 4294901760
  %v5294 = vsub.f32 %v5068, %v5293
  %5295 = vmatpush1.msra.mxu0 %v5294
  %v5296 = vand.u32 %v5073, 4294901760
  %v5297 = vsub.f32 %v5073, %v5296
  %5298 = vmatprep.subr.mxu0 %v5297
  %v5299 = vand.u32 %v5072, 4294901760
  %v5300 = vsub.f32 %v5072, %v5299
  %5301 = vmatpush1.msra.mxu0 %v5300
  %v5302 = vand.u32 %v5077, 4294901760
  %v5303 = vsub.f32 %v5077, %v5302
  %5304 = vmatprep.subr.mxu0 %v5303
  %v5305 = vand.u32 %v5076, 4294901760
  %v5306 = vsub.f32 %v5076, %v5305
  %5307 = vmatpush1.msra.mxu0 %v5306
  %5308 = vmatprep.subr.mxu0 0.0
  %5309 = vmatpush1.msra.mxu0 0.0
  %5310 = vmatprep.subr.mxu0 0.0
  %5311 = vmatpush1.msra.mxu0 0.0
  %5312 = vmatprep.subr.mxu0 0.0
  %5313 = vmatpush1.msra.mxu0 0.0
  %5314 = vmatprep.subr.mxu0 0.0
  %5315 = vmatpush1.msra.mxu0 0.0
  %5316 = vmatprep.subr.mxu0 0.0
  %5317 = vmatpush1.msra.mxu0 0.0
  %5318 = vmatprep.subr.mxu0 0.0
  %5319 = vmatpush1.msra.mxu0 0.0
  %5320 = vmatprep.subr.mxu0 0.0
  %5321 = vmatpush1.msra.mxu0 0.0
  %5322 = vmatprep.subr.mxu0 0.0
  %5323 = vmatpush1.msra.mxu0 0.0
  %5324 = vmatprep.subr.mxu0 0.0
  %5325 = vmatpush1.msra.mxu0 0.0
  %5326 = vmatprep.subr.mxu0 0.0
  %5327 = vmatpush1.msra.mxu0 0.0
  %5328 = vmatprep.subr.mxu0 0.0
  %5329 = vmatpush1.msra.mxu0 0.0
  %5330 = vmatprep.subr.mxu0 0.0
  %5331 = vmatpush1.msra.mxu0 0.0
  %5332 = vmatprep.subr.mxu0 0.0
  %5333 = vmatpush1.msra.mxu0 0.0
  %5334 = vmatprep.subr.mxu0 0.0
  %5335 = vmatpush1.msra.mxu0 0.0
  %5336 = vmatprep.subr.mxu0 0.0
  %5337 = vmatpush1.msra.mxu0 0.0
  %5338 = vmatprep.subr.mxu0 0.0
  %5339 = vmatpush1.msra.mxu0 0.0
  %5340 = vmatprep.subr.mxu0 0.0
  %5341 = vmatpush1.msra.mxu0 0.0
  %5342 = vmatprep.subr.mxu0 0.0
  %5343 = vmatpush1.msra.mxu0 0.0
  %5344 = vmatprep.subr.mxu0 0.0
  %5345 = vmatpush1.msra.mxu0 0.0
  %5346 = vmatprep.subr.mxu0 0.0
  %5347 = vmatpush1.msra.mxu0 0.0
  %5348 = vmatprep.subr.mxu0 0.0
  %5349 = vmatpush1.msra.mxu0 0.0
  %5350 = vmatprep.subr.mxu0 0.0
  %5351 = vmatpush1.msra.mxu0 0.0
  %5352 = vmatprep.subr.mxu0 0.0
  %5353 = vmatpush1.msra.mxu0 0.0
  %5354 = vmatprep.subr.mxu0 0.0
  %5355 = vmatpush1.msra.mxu0 0.0
  %5356 = vmatprep.subr.mxu0 0.0
  %5357 = vmatpush1.msra.mxu0 0.0
  %5358 = vmatprep.subr.mxu0 0.0
  %5359 = vmatpush1.msra.mxu0 0.0
  %5360 = vmatprep.subr.mxu0 0.0
  %5361 = vmatpush1.msra.mxu0 0.0
  %5362 = vmatprep.subr.mxu0 0.0
  %5363 = vmatpush1.msra.mxu0 0.0
  %5364 = vmatprep.mubr.f32.mxu0 0.0
  %v5365 = vand.u32 %v5086, 4294901760
  %v5366 = vsub.f32 %v5086, %v5365
  %5367 = vmatmul.mubr.f32.gmra.mrb[0].mxu0 %v5366
  %v5368 = vpop.f32.mrb[0].mxu0
  %v5369 = vadd.f32 %v5280, %v5368
  %v5370 = vpop.f32.mrb[0].mxu0
  %v5371 = vadd.f32 %v5282, %v5370
  %5372 = vdwg.mxu0
  %v5373 = vand.u32 %v5065, 4294901760
  %5374 = vmatprep.subr.mxu0 %v5373
  %v5375 = vand.u32 %v5064, 4294901760
  %5376 = vmatpush1.msra.mxu0 %v5375
  %v5377 = vand.u32 %v5069, 4294901760
  %5378 = vmatprep.subr.mxu0 %v5377
  %v5379 = vand.u32 %v5068, 4294901760
  %5380 = vmatpush1.msra.mxu0 %v5379
  %v5381 = vand.u32 %v5073, 4294901760
  %5382 = vmatprep.subr.mxu0 %v5381
  %v5383 = vand.u32 %v5072, 4294901760
  %5384 = vmatpush1.msra.mxu0 %v5383
  %v5385 = vand.u32 %v5077, 4294901760
  %5386 = vmatprep.subr.mxu0 %v5385
  %v5387 = vand.u32 %v5076, 4294901760
  %5388 = vmatpush1.msra.mxu0 %v5387
  %5389 = vmatprep.subr.mxu0 0.0
  %5390 = vmatpush1.msra.mxu0 0.0
  %5391 = vmatprep.subr.mxu0 0.0
  %5392 = vmatpush1.msra.mxu0 0.0
  %5393 = vmatprep.subr.mxu0 0.0
  %5394 = vmatpush1.msra.mxu0 0.0
  %5395 = vmatprep.subr.mxu0 0.0
  %5396 = vmatpush1.msra.mxu0 0.0
  %5397 = vmatprep.subr.mxu0 0.0
  %5398 = vmatpush1.msra.mxu0 0.0
  %5399 = vmatprep.subr.mxu0 0.0
  %5400 = vmatpush1.msra.mxu0 0.0
  %5401 = vmatprep.subr.mxu0 0.0
  %5402 = vmatpush1.msra.mxu0 0.0
  %5403 = vmatprep.subr.mxu0 0.0
  %5404 = vmatpush1.msra.mxu0 0.0
  %5405 = vmatprep.subr.mxu0 0.0
  %5406 = vmatpush1.msra.mxu0 0.0
  %5407 = vmatprep.subr.mxu0 0.0
  %5408 = vmatpush1.msra.mxu0 0.0
  %5409 = vmatprep.subr.mxu0 0.0
  %5410 = vmatpush1.msra.mxu0 0.0
  %5411 = vmatprep.subr.mxu0 0.0
  %5412 = vmatpush1.msra.mxu0 0.0
  %5413 = vmatprep.subr.mxu0 0.0
  %5414 = vmatpush1.msra.mxu0 0.0
  %5415 = vmatprep.subr.mxu0 0.0
  %5416 = vmatpush1.msra.mxu0 0.0
  %5417 = vmatprep.subr.mxu0 0.0
  %5418 = vmatpush1.msra.mxu0 0.0
  %5419 = vmatprep.subr.mxu0 0.0
  %5420 = vmatpush1.msra.mxu0 0.0
  %5421 = vmatprep.subr.mxu0 0.0
  %5422 = vmatpush1.msra.mxu0 0.0
  %5423 = vmatprep.subr.mxu0 0.0
  %5424 = vmatpush1.msra.mxu0 0.0
  %5425 = vmatprep.subr.mxu0 0.0
  %5426 = vmatpush1.msra.mxu0 0.0
  %5427 = vmatprep.subr.mxu0 0.0
  %5428 = vmatpush1.msra.mxu0 0.0
  %5429 = vmatprep.subr.mxu0 0.0
  %5430 = vmatpush1.msra.mxu0 0.0
  %5431 = vmatprep.subr.mxu0 0.0
  %5432 = vmatpush1.msra.mxu0 0.0
  %5433 = vmatprep.subr.mxu0 0.0
  %5434 = vmatpush1.msra.mxu0 0.0
  %5435 = vmatprep.subr.mxu0 0.0
  %5436 = vmatpush1.msra.mxu0 0.0
  %5437 = vmatprep.subr.mxu0 0.0
  %5438 = vmatpush1.msra.mxu0 0.0
  %5439 = vmatprep.subr.mxu0 0.0
  %5440 = vmatpush1.msra.mxu0 0.0
  %5441 = vmatprep.subr.mxu0 0.0
  %5442 = vmatpush1.msra.mxu0 0.0
  %5443 = vmatprep.subr.mxu0 0.0
  %5444 = vmatpush1.msra.mxu0 0.0
  %5445 = vmatprep.mubr.f32.mxu0 0.0
  %v5446 = vand.u32 %v5086, 4294901760
  %v5447 = vsub.f32 %v5086, %v5446
  %v5448 = vand.u32 %v5447, 4294901760
  %5449 = vmatmul.mubr.f32.gmra.mrb[0].mxu0 %v5448
  %v5450 = vpop.f32.mrb[0].mxu0
  %v5451 = vadd.f32 %v5369, %v5450
  %v5452 = vpop.f32.mrb[0].mxu0
  %v5453 = vadd.f32 %v5371, %v5452
  %5454 = vdwg.mxu0
  %v5455 = vand.u32 %v5065, 4294901760
  %v5456 = vsub.f32 %v5065, %v5455
  %v5457 = vand.u32 %v5456, 4294901760
  %5458 = vmatprep.subr.mxu0 %v5457
  %v5459 = vand.u32 %v5064, 4294901760
  %v5460 = vsub.f32 %v5064, %v5459
  %v5461 = vand.u32 %v5460, 4294901760
  %5462 = vmatpush1.msra.mxu0 %v5461
  %v5463 = vand.u32 %v5069, 4294901760
  %v5464 = vsub.f32 %v5069, %v5463
  %v5465 = vand.u32 %v5464, 4294901760
  %5466 = vmatprep.subr.mxu0 %v5465
  %v5467 = vand.u32 %v5068, 4294901760
  %v5468 = vsub.f32 %v5068, %v5467
  %v5469 = vand.u32 %v5468, 4294901760
  %5470 = vmatpush1.msra.mxu0 %v5469
  %v5471 = vand.u32 %v5073, 4294901760
  %v5472 = vsub.f32 %v5073, %v5471
  %v5473 = vand.u32 %v5472, 4294901760
  %5474 = vmatprep.subr.mxu0 %v5473
  %v5475 = vand.u32 %v5072, 4294901760
  %v5476 = vsub.f32 %v5072, %v5475
  %v5477 = vand.u32 %v5476, 4294901760
  %5478 = vmatpush1.msra.mxu0 %v5477
  %v5479 = vand.u32 %v5077, 4294901760
  %v5480 = vsub.f32 %v5077, %v5479
  %v5481 = vand.u32 %v5480, 4294901760
  %5482 = vmatprep.subr.mxu0 %v5481
  %v5483 = vand.u32 %v5076, 4294901760
  %v5484 = vsub.f32 %v5076, %v5483
  %v5485 = vand.u32 %v5484, 4294901760
  %5486 = vmatpush1.msra.mxu0 %v5485
  %5487 = vmatprep.subr.mxu0 0.0
  %5488 = vmatpush1.msra.mxu0 0.0
  %5489 = vmatprep.subr.mxu0 0.0
  %5490 = vmatpush1.msra.mxu0 0.0
  %5491 = vmatprep.subr.mxu0 0.0
  %5492 = vmatpush1.msra.mxu0 0.0
  %5493 = vmatprep.subr.mxu0 0.0
  %5494 = vmatpush1.msra.mxu0 0.0
  %5495 = vmatprep.subr.mxu0 0.0
  %5496 = vmatpush1.msra.mxu0 0.0
  %5497 = vmatprep.subr.mxu0 0.0
  %5498 = vmatpush1.msra.mxu0 0.0
  %5499 = vmatprep.subr.mxu0 0.0
  %5500 = vmatpush1.msra.mxu0 0.0
  %5501 = vmatprep.subr.mxu0 0.0
  %5502 = vmatpush1.msra.mxu0 0.0
  %5503 = vmatprep.subr.mxu0 0.0
  %5504 = vmatpush1.msra.mxu0 0.0
  %5505 = vmatprep.subr.mxu0 0.0
  %5506 = vmatpush1.msra.mxu0 0.0
  %5507 = vmatprep.subr.mxu0 0.0
  %5508 = vmatpush1.msra.mxu0 0.0
  %5509 = vmatprep.subr.mxu0 0.0
  %5510 = vmatpush1.msra.mxu0 0.0
  %5511 = vmatprep.subr.mxu0 0.0
  %5512 = vmatpush1.msra.mxu0 0.0
  %5513 = vmatprep.subr.mxu0 0.0
  %5514 = vmatpush1.msra.mxu0 0.0
  %5515 = vmatprep.subr.mxu0 0.0
  %5516 = vmatpush1.msra.mxu0 0.0
  %5517 = vmatprep.subr.mxu0 0.0
  %5518 = vmatpush1.msra.mxu0 0.0
  %5519 = vmatprep.subr.mxu0 0.0
  %5520 = vmatpush1.msra.mxu0 0.0
  %5521 = vmatprep.subr.mxu0 0.0
  %5522 = vmatpush1.msra.mxu0 0.0
  %5523 = vmatprep.subr.mxu0 0.0
  %5524 = vmatpush1.msra.mxu0 0.0
  %5525 = vmatprep.subr.mxu0 0.0
  %5526 = vmatpush1.msra.mxu0 0.0
  %5527 = vmatprep.subr.mxu0 0.0
  %5528 = vmatpush1.msra.mxu0 0.0
  %5529 = vmatprep.subr.mxu0 0.0
  %5530 = vmatpush1.msra.mxu0 0.0
  %5531 = vmatprep.subr.mxu0 0.0
  %5532 = vmatpush1.msra.mxu0 0.0
  %5533 = vmatprep.subr.mxu0 0.0
  %5534 = vmatpush1.msra.mxu0 0.0
  %5535 = vmatprep.subr.mxu0 0.0
  %5536 = vmatpush1.msra.mxu0 0.0
  %5537 = vmatprep.subr.mxu0 0.0
  %5538 = vmatpush1.msra.mxu0 0.0
  %5539 = vmatprep.subr.mxu0 0.0
  %5540 = vmatpush1.msra.mxu0 0.0
  %5541 = vmatprep.subr.mxu0 0.0
  %5542 = vmatpush1.msra.mxu0 0.0
  %5543 = vmatprep.mubr.f32.mxu0 0.0
  %v5544 = vand.u32 %v5086, 4294901760
  %5545 = vmatmul.mubr.f32.gmra.mrb[0].mxu0 %v5544
  %v5546 = vpop.f32.mrb[0].mxu0
  %v5547 = vadd.f32 %v5451, %v5546
  %v5548 = vpop.f32.mrb[0].mxu0
  %v5549 = vadd.f32 %v5453, %v5548
  %5550 = vdwg.mxu0
  %v5551 = vand.u32 %v5065, 4294901760
  %5552 = vmatprep.subr.mxu0 %v5551
  %v5553 = vand.u32 %v5064, 4294901760
  %5554 = vmatpush1.msra.mxu0 %v5553
  %v5555 = vand.u32 %v5069, 4294901760
  %5556 = vmatprep.subr.mxu0 %v5555
  %v5557 = vand.u32 %v5068, 4294901760
  %5558 = vmatpush1.msra.mxu0 %v5557
  %v5559 = vand.u32 %v5073, 4294901760
  %5560 = vmatprep.subr.mxu0 %v5559
  %v5561 = vand.u32 %v5072, 4294901760
  %5562 = vmatpush1.msra.mxu0 %v5561
  %v5563 = vand.u32 %v5077, 4294901760
  %5564 = vmatprep.subr.mxu0 %v5563
  %v5565 = vand.u32 %v5076, 4294901760
  %5566 = vmatpush1.msra.mxu0 %v5565
  %5567 = vmatprep.subr.mxu0 0.0
  %5568 = vmatpush1.msra.mxu0 0.0
  %5569 = vmatprep.subr.mxu0 0.0
  %5570 = vmatpush1.msra.mxu0 0.0
  %5571 = vmatprep.subr.mxu0 0.0
  %5572 = vmatpush1.msra.mxu0 0.0
  %5573 = vmatprep.subr.mxu0 0.0
  %5574 = vmatpush1.msra.mxu0 0.0
  %5575 = vmatprep.subr.mxu0 0.0
  %5576 = vmatpush1.msra.mxu0 0.0
  %5577 = vmatprep.subr.mxu0 0.0
  %5578 = vmatpush1.msra.mxu0 0.0
  %5579 = vmatprep.subr.mxu0 0.0
  %5580 = vmatpush1.msra.mxu0 0.0
  %5581 = vmatprep.subr.mxu0 0.0
  %5582 = vmatpush1.msra.mxu0 0.0
  %5583 = vmatprep.subr.mxu0 0.0
  %5584 = vmatpush1.msra.mxu0 0.0
  %5585 = vmatprep.subr.mxu0 0.0
  %5586 = vmatpush1.msra.mxu0 0.0
  %5587 = vmatprep.subr.mxu0 0.0
  %5588 = vmatpush1.msra.mxu0 0.0
  %5589 = vmatprep.subr.mxu0 0.0
  %5590 = vmatpush1.msra.mxu0 0.0
  %5591 = vmatprep.subr.mxu0 0.0
  %5592 = vmatpush1.msra.mxu0 0.0
  %5593 = vmatprep.subr.mxu0 0.0
  %5594 = vmatpush1.msra.mxu0 0.0
  %5595 = vmatprep.subr.mxu0 0.0
  %5596 = vmatpush1.msra.mxu0 0.0
  %5597 = vmatprep.subr.mxu0 0.0
  %5598 = vmatpush1.msra.mxu0 0.0
  %5599 = vmatprep.subr.mxu0 0.0
  %5600 = vmatpush1.msra.mxu0 0.0
  %5601 = vmatprep.subr.mxu0 0.0
  %5602 = vmatpush1.msra.mxu0 0.0
  %5603 = vmatprep.subr.mxu0 0.0
  %5604 = vmatpush1.msra.mxu0 0.0
  %5605 = vmatprep.subr.mxu0 0.0
  %5606 = vmatpush1.msra.mxu0 0.0
  %5607 = vmatprep.subr.mxu0 0.0
  %5608 = vmatpush1.msra.mxu0 0.0
  %5609 = vmatprep.subr.mxu0 0.0
  %5610 = vmatpush1.msra.mxu0 0.0
  %5611 = vmatprep.subr.mxu0 0.0
  %5612 = vmatpush1.msra.mxu0 0.0
  %5613 = vmatprep.subr.mxu0 0.0
  %5614 = vmatpush1.msra.mxu0 0.0
  %5615 = vmatprep.subr.mxu0 0.0
  %5616 = vmatpush1.msra.mxu0 0.0
  %5617 = vmatprep.subr.mxu0 0.0
  %5618 = vmatpush1.msra.mxu0 0.0
  %5619 = vmatprep.subr.mxu0 0.0
  %5620 = vmatpush1.msra.mxu0 0.0
  %5621 = vmatprep.subr.mxu0 0.0
  %5622 = vmatpush1.msra.mxu0 0.0
  %5623 = vmatprep.mubr.f32.mxu0 0.0
  %v5624 = vand.u32 %v5086, 4294901760
  %5625 = vmatmul.mubr.f32.gmra.mrb[0].mxu0 %v5624
  %v5626 = vpop.f32.mrb[0].mxu0
  %v5627 = vadd.f32 %v5547, %v5626
  %v5628 = vpop.f32.mrb[0].mxu0
  %v5629 = vadd.f32 %v5549, %v5628
  %5630 = vdwg.mxu0
  %v5631 = vand.u32 %v5067, 4294901760
  %5632 = vmatprep.subr.mxu0 %v5631
  %v5633 = vand.u32 %v5066, 4294901760
  %5634 = vmatpush1.msra.mxu0 %v5633
  %v5635 = vand.u32 %v5071, 4294901760
  %5636 = vmatprep.subr.mxu0 %v5635
  %v5637 = vand.u32 %v5070, 4294901760
  %5638 = vmatpush1.msra.mxu0 %v5637
  %v5639 = vand.u32 %v5075, 4294901760
  %5640 = vmatprep.subr.mxu0 %v5639
  %v5641 = vand.u32 %v5074, 4294901760
  %5642 = vmatpush1.msra.mxu0 %v5641
  %v5643 = vand.u32 %v5079, 4294901760
  %5644 = vmatprep.subr.mxu0 %v5643
  %v5645 = vand.u32 %v5078, 4294901760
  %5646 = vmatpush1.msra.mxu0 %v5645
  %5647 = vmatprep.subr.mxu0 0.0
  %5648 = vmatpush1.msra.mxu0 0.0
  %5649 = vmatprep.subr.mxu0 0.0
  %5650 = vmatpush1.msra.mxu0 0.0
  %5651 = vmatprep.subr.mxu0 0.0
  %5652 = vmatpush1.msra.mxu0 0.0
  %5653 = vmatprep.subr.mxu0 0.0
  %5654 = vmatpush1.msra.mxu0 0.0
  %5655 = vmatprep.subr.mxu0 0.0
  %5656 = vmatpush1.msra.mxu0 0.0
  %5657 = vmatprep.subr.mxu0 0.0
  %5658 = vmatpush1.msra.mxu0 0.0
  %5659 = vmatprep.subr.mxu0 0.0
  %5660 = vmatpush1.msra.mxu0 0.0
  %5661 = vmatprep.subr.mxu0 0.0
  %5662 = vmatpush1.msra.mxu0 0.0
  %5663 = vmatprep.subr.mxu0 0.0
  %5664 = vmatpush1.msra.mxu0 0.0
  %5665 = vmatprep.subr.mxu0 0.0
  %5666 = vmatpush1.msra.mxu0 0.0
  %5667 = vmatprep.subr.mxu0 0.0
  %5668 = vmatpush1.msra.mxu0 0.0
  %5669 = vmatprep.subr.mxu0 0.0
  %5670 = vmatpush1.msra.mxu0 0.0
  %5671 = vmatprep.subr.mxu0 0.0
  %5672 = vmatpush1.msra.mxu0 0.0
  %5673 = vmatprep.subr.mxu0 0.0
  %5674 = vmatpush1.msra.mxu0 0.0
  %5675 = vmatprep.subr.mxu0 0.0
  %5676 = vmatpush1.msra.mxu0 0.0
  %5677 = vmatprep.subr.mxu0 0.0
  %5678 = vmatpush1.msra.mxu0 0.0
  %5679 = vmatprep.subr.mxu0 0.0
  %5680 = vmatpush1.msra.mxu0 0.0
  %5681 = vmatprep.subr.mxu0 0.0
  %5682 = vmatpush1.msra.mxu0 0.0
  %5683 = vmatprep.subr.mxu0 0.0
  %5684 = vmatpush1.msra.mxu0 0.0
  %5685 = vmatprep.subr.mxu0 0.0
  %5686 = vmatpush1.msra.mxu0 0.0
  %5687 = vmatprep.subr.mxu0 0.0
  %5688 = vmatpush1.msra.mxu0 0.0
  %5689 = vmatprep.subr.mxu0 0.0
  %5690 = vmatpush1.msra.mxu0 0.0
  %5691 = vmatprep.subr.mxu0 0.0
  %5692 = vmatpush1.msra.mxu0 0.0
  %5693 = vmatprep.subr.mxu0 0.0
  %5694 = vmatpush1.msra.mxu0 0.0
  %5695 = vmatprep.subr.mxu0 0.0
  %5696 = vmatpush1.msra.mxu0 0.0
  %5697 = vmatprep.subr.mxu0 0.0
  %5698 = vmatpush1.msra.mxu0 0.0
  %5699 = vmatprep.subr.mxu0 0.0
  %5700 = vmatpush1.msra.mxu0 0.0
  %5701 = vmatprep.subr.mxu0 0.0
  %5702 = vmatpush1.msra.mxu0 0.0
  %5703 = vmatprep.mubr.f32.mxu0 0.0
  %v5704 = vand.u32 %v5086, 4294901760
  %v5705 = vsub.f32 %v5086, %v5704
  %v5706 = vand.u32 %v5705, 4294901760
  %v5707 = vsub.f32 %v5705, %v5706
  %v5708 = vand.u32 %v5707, 4294901760
  %5709 = vmatmul.mubr.f32.gmra.mrb[0].mxu0 %v5708
  %v5710 = vpop.f32.mrb[0].mxu0
  %v5711 = vadd.f32 %v5083, %v5710
  %v5712 = vpop.f32.mrb[0].mxu0
  %v5713 = vadd.f32 %v5083, %v5712
  %5714 = vdwg.mxu0
  %v5715 = vand.u32 %v5067, 4294901760
  %v5716 = vsub.f32 %v5067, %v5715
  %v5717 = vand.u32 %v5716, 4294901760
  %v5718 = vsub.f32 %v5716, %v5717
  %v5719 = vand.u32 %v5718, 4294901760
  %5720 = vmatprep.subr.mxu0 %v5719
  %v5721 = vand.u32 %v5066, 4294901760
  %v5722 = vsub.f32 %v5066, %v5721
  %v5723 = vand.u32 %v5722, 4294901760
  %v5724 = vsub.f32 %v5722, %v5723
  %v5725 = vand.u32 %v5724, 4294901760
  %5726 = vmatpush1.msra.mxu0 %v5725
  %v5727 = vand.u32 %v5071, 4294901760
  %v5728 = vsub.f32 %v5071, %v5727
  %v5729 = vand.u32 %v5728, 4294901760
  %v5730 = vsub.f32 %v5728, %v5729
  %v5731 = vand.u32 %v5730, 4294901760
  %5732 = vmatprep.subr.mxu0 %v5731
  %v5733 = vand.u32 %v5070, 4294901760
  %v5734 = vsub.f32 %v5070, %v5733
  %v5735 = vand.u32 %v5734, 4294901760
  %v5736 = vsub.f32 %v5734, %v5735
  %v5737 = vand.u32 %v5736, 4294901760
  %5738 = vmatpush1.msra.mxu0 %v5737
  %v5739 = vand.u32 %v5075, 4294901760
  %v5740 = vsub.f32 %v5075, %v5739
  %v5741 = vand.u32 %v5740, 4294901760
  %v5742 = vsub.f32 %v5740, %v5741
  %v5743 = vand.u32 %v5742, 4294901760
  %5744 = vmatprep.subr.mxu0 %v5743
  %v5745 = vand.u32 %v5074, 4294901760
  %v5746 = vsub.f32 %v5074, %v5745
  %v5747 = vand.u32 %v5746, 4294901760
  %v5748 = vsub.f32 %v5746, %v5747
  %v5749 = vand.u32 %v5748, 4294901760
  %5750 = vmatpush1.msra.mxu0 %v5749
  %v5751 = vand.u32 %v5079, 4294901760
  %v5752 = vsub.f32 %v5079, %v5751
  %v5753 = vand.u32 %v5752, 4294901760
  %v5754 = vsub.f32 %v5752, %v5753
  %v5755 = vand.u32 %v5754, 4294901760
  %5756 = vmatprep.subr.mxu0 %v5755
  %v5757 = vand.u32 %v5078, 4294901760
  %v5758 = vsub.f32 %v5078, %v5757
  %v5759 = vand.u32 %v5758, 4294901760
  %v5760 = vsub.f32 %v5758, %v5759
  %v5761 = vand.u32 %v5760, 4294901760
  %5762 = vmatpush1.msra.mxu0 %v5761
  %5763 = vmatprep.subr.mxu0 0.0
  %5764 = vmatpush1.msra.mxu0 0.0
  %5765 = vmatprep.subr.mxu0 0.0
  %5766 = vmatpush1.msra.mxu0 0.0
  %5767 = vmatprep.subr.mxu0 0.0
  %5768 = vmatpush1.msra.mxu0 0.0
  %5769 = vmatprep.subr.mxu0 0.0
  %5770 = vmatpush1.msra.mxu0 0.0
  %5771 = vmatprep.subr.mxu0 0.0
  %5772 = vmatpush1.msra.mxu0 0.0
  %5773 = vmatprep.subr.mxu0 0.0
  %5774 = vmatpush1.msra.mxu0 0.0
  %5775 = vmatprep.subr.mxu0 0.0
  %5776 = vmatpush1.msra.mxu0 0.0
  %5777 = vmatprep.subr.mxu0 0.0
  %5778 = vmatpush1.msra.mxu0 0.0
  %5779 = vmatprep.subr.mxu0 0.0
  %5780 = vmatpush1.msra.mxu0 0.0
  %5781 = vmatprep.subr.mxu0 0.0
  %5782 = vmatpush1.msra.mxu0 0.0
  %5783 = vmatprep.subr.mxu0 0.0
  %5784 = vmatpush1.msra.mxu0 0.0
  %5785 = vmatprep.subr.mxu0 0.0
  %5786 = vmatpush1.msra.mxu0 0.0
  %5787 = vmatprep.subr.mxu0 0.0
  %5788 = vmatpush1.msra.mxu0 0.0
  %5789 = vmatprep.subr.mxu0 0.0
  %5790 = vmatpush1.msra.mxu0 0.0
  %5791 = vmatprep.subr.mxu0 0.0
  %5792 = vmatpush1.msra.mxu0 0.0
  %5793 = vmatprep.subr.mxu0 0.0
  %5794 = vmatpush1.msra.mxu0 0.0
  %5795 = vmatprep.subr.mxu0 0.0
  %5796 = vmatpush1.msra.mxu0 0.0
  %5797 = vmatprep.subr.mxu0 0.0
  %5798 = vmatpush1.msra.mxu0 0.0
  %5799 = vmatprep.subr.mxu0 0.0
  %5800 = vmatpush1.msra.mxu0 0.0
  %5801 = vmatprep.subr.mxu0 0.0
  %5802 = vmatpush1.msra.mxu0 0.0
  %5803 = vmatprep.subr.mxu0 0.0
  %5804 = vmatpush1.msra.mxu0 0.0
  %5805 = vmatprep.subr.mxu0 0.0
  %5806 = vmatpush1.msra.mxu0 0.0
  %5807 = vmatprep.subr.mxu0 0.0
  %5808 = vmatpush1.msra.mxu0 0.0
  %5809 = vmatprep.subr.mxu0 0.0
  %5810 = vmatpush1.msra.mxu0 0.0
  %5811 = vmatprep.subr.mxu0 0.0
  %5812 = vmatpush1.msra.mxu0 0.0
  %5813 = vmatprep.subr.mxu0 0.0
  %5814 = vmatpush1.msra.mxu0 0.0
  %5815 = vmatprep.subr.mxu0 0.0
  %5816 = vmatpush1.msra.mxu0 0.0
  %5817 = vmatprep.subr.mxu0 0.0
  %5818 = vmatpush1.msra.mxu0 0.0
  %5819 = vmatprep.mubr.f32.mxu0 0.0
  %v5820 = vand.u32 %v5086, 4294901760
  %5821 = vmatmul.mubr.f32.gmra.mrb[0].mxu0 %v5820
  %v5822 = vpop.f32.mrb[0].mxu0
  %v5823 = vadd.f32 %v5711, %v5822
  %v5824 = vpop.f32.mrb[0].mxu0
  %v5825 = vadd.f32 %v5713, %v5824
  %5826 = vdwg.mxu0
  %v5827 = vand.u32 %v5067, 4294901760
  %v5828 = vsub.f32 %v5067, %v5827
  %5829 = vmatprep.subr.mxu0 %v5828
  %v5830 = vand.u32 %v5066, 4294901760
  %v5831 = vsub.f32 %v5066, %v5830
  %5832 = vmatpush1.msra.mxu0 %v5831
  %v5833 = vand.u32 %v5071, 4294901760
  %v5834 = vsub.f32 %v5071, %v5833
  %5835 = vmatprep.subr.mxu0 %v5834
  %v5836 = vand.u32 %v5070, 4294901760
  %v5837 = vsub.f32 %v5070, %v5836
  %5838 = vmatpush1.msra.mxu0 %v5837
  %v5839 = vand.u32 %v5075, 4294901760
  %v5840 = vsub.f32 %v5075, %v5839
  %5841 = vmatprep.subr.mxu0 %v5840
  %v5842 = vand.u32 %v5074, 4294901760
  %v5843 = vsub.f32 %v5074, %v5842
  %5844 = vmatpush1.msra.mxu0 %v5843
  %v5845 = vand.u32 %v5079, 4294901760
  %v5846 = vsub.f32 %v5079, %v5845
  %5847 = vmatprep.subr.mxu0 %v5846
  %v5848 = vand.u32 %v5078, 4294901760
  %v5849 = vsub.f32 %v5078, %v5848
  %5850 = vmatpush1.msra.mxu0 %v5849
  %5851 = vmatprep.subr.mxu0 0.0
  %5852 = vmatpush1.msra.mxu0 0.0
  %5853 = vmatprep.subr.mxu0 0.0
  %5854 = vmatpush1.msra.mxu0 0.0
  %5855 = vmatprep.subr.mxu0 0.0
  %5856 = vmatpush1.msra.mxu0 0.0
  %5857 = vmatprep.subr.mxu0 0.0
  %5858 = vmatpush1.msra.mxu0 0.0
  %5859 = vmatprep.subr.mxu0 0.0
  %5860 = vmatpush1.msra.mxu0 0.0
  %5861 = vmatprep.subr.mxu0 0.0
  %5862 = vmatpush1.msra.mxu0 0.0
  %5863 = vmatprep.subr.mxu0 0.0
  %5864 = vmatpush1.msra.mxu0 0.0
  %5865 = vmatprep.subr.mxu0 0.0
  %5866 = vmatpush1.msra.mxu0 0.0
  %5867 = vmatprep.subr.mxu0 0.0
  %5868 = vmatpush1.msra.mxu0 0.0
  %5869 = vmatprep.subr.mxu0 0.0
  %5870 = vmatpush1.msra.mxu0 0.0
  %5871 = vmatprep.subr.mxu0 0.0
  %5872 = vmatpush1.msra.mxu0 0.0
  %5873 = vmatprep.subr.mxu0 0.0
  %5874 = vmatpush1.msra.mxu0 0.0
  %5875 = vmatprep.subr.mxu0 0.0
  %5876 = vmatpush1.msra.mxu0 0.0
  %5877 = vmatprep.subr.mxu0 0.0
  %5878 = vmatpush1.msra.mxu0 0.0
  %5879 = vmatprep.subr.mxu0 0.0
  %5880 = vmatpush1.msra.mxu0 0.0
  %5881 = vmatprep.subr.mxu0 0.0
  %5882 = vmatpush1.msra.mxu0 0.0
  %5883 = vmatprep.subr.mxu0 0.0
  %5884 = vmatpush1.msra.mxu0 0.0
  %5885 = vmatprep.subr.mxu0 0.0
  %5886 = vmatpush1.msra.mxu0 0.0
  %5887 = vmatprep.subr.mxu0 0.0
  %5888 = vmatpush1.msra.mxu0 0.0
  %5889 = vmatprep.subr.mxu0 0.0
  %5890 = vmatpush1.msra.mxu0 0.0
  %5891 = vmatprep.subr.mxu0 0.0
  %5892 = vmatpush1.msra.mxu0 0.0
  %5893 = vmatprep.subr.mxu0 0.0
  %5894 = vmatpush1.msra.mxu0 0.0
  %5895 = vmatprep.subr.mxu0 0.0
  %5896 = vmatpush1.msra.mxu0 0.0
  %5897 = vmatprep.subr.mxu0 0.0
  %5898 = vmatpush1.msra.mxu0 0.0
  %5899 = vmatprep.subr.mxu0 0.0
  %5900 = vmatpush1.msra.mxu0 0.0
  %5901 = vmatprep.subr.mxu0 0.0
  %5902 = vmatpush1.msra.mxu0 0.0
  %5903 = vmatprep.subr.mxu0 0.0
  %5904 = vmatpush1.msra.mxu0 0.0
  %5905 = vmatprep.subr.mxu0 0.0
  %5906 = vmatpush1.msra.mxu0 0.0
  %5907 = vmatprep.mubr.f32.mxu0 0.0
  %v5908 = vand.u32 %v5086, 4294901760
  %v5909 = vsub.f32 %v5086, %v5908
  %5910 = vmatmul.mubr.f32.gmra.mrb[0].mxu0 %v5909
  %v5911 = vpop.f32.mrb[0].mxu0
  %v5912 = vadd.f32 %v5823, %v5911
  %v5913 = vpop.f32.mrb[0].mxu0
  %v5914 = vadd.f32 %v5825, %v5913
  %5915 = vdwg.mxu0
  %v5916 = vand.u32 %v5067, 4294901760
  %5917 = vmatprep.subr.mxu0 %v5916
  %v5918 = vand.u32 %v5066, 4294901760
  %5919 = vmatpush1.msra.mxu0 %v5918
  %v5920 = vand.u32 %v5071, 4294901760
  %5921 = vmatprep.subr.mxu0 %v5920
  %v5922 = vand.u32 %v5070, 4294901760
  %5923 = vmatpush1.msra.mxu0 %v5922
  %v5924 = vand.u32 %v5075, 4294901760
  %5925 = vmatprep.subr.mxu0 %v5924
  %v5926 = vand.u32 %v5074, 4294901760
  %5927 = vmatpush1.msra.mxu0 %v5926
  %v5928 = vand.u32 %v5079, 4294901760
  %5929 = vmatprep.subr.mxu0 %v5928
  %v5930 = vand.u32 %v5078, 4294901760
  %5931 = vmatpush1.msra.mxu0 %v5930
  %5932 = vmatprep.subr.mxu0 0.0
  %5933 = vmatpush1.msra.mxu0 0.0
  %5934 = vmatprep.subr.mxu0 0.0
  %5935 = vmatpush1.msra.mxu0 0.0
  %5936 = vmatprep.subr.mxu0 0.0
  %5937 = vmatpush1.msra.mxu0 0.0
  %5938 = vmatprep.subr.mxu0 0.0
  %5939 = vmatpush1.msra.mxu0 0.0
  %5940 = vmatprep.subr.mxu0 0.0
  %5941 = vmatpush1.msra.mxu0 0.0
  %5942 = vmatprep.subr.mxu0 0.0
  %5943 = vmatpush1.msra.mxu0 0.0
  %5944 = vmatprep.subr.mxu0 0.0
  %5945 = vmatpush1.msra.mxu0 0.0
  %5946 = vmatprep.subr.mxu0 0.0
  %5947 = vmatpush1.msra.mxu0 0.0
  %5948 = vmatprep.subr.mxu0 0.0
  %5949 = vmatpush1.msra.mxu0 0.0
  %5950 = vmatprep.subr.mxu0 0.0
  %5951 = vmatpush1.msra.mxu0 0.0
  %5952 = vmatprep.subr.mxu0 0.0
  %5953 = vmatpush1.msra.mxu0 0.0
  %5954 = vmatprep.subr.mxu0 0.0
  %5955 = vmatpush1.msra.mxu0 0.0
  %5956 = vmatprep.subr.mxu0 0.0
  %5957 = vmatpush1.msra.mxu0 0.0
  %5958 = vmatprep.subr.mxu0 0.0
  %5959 = vmatpush1.msra.mxu0 0.0
  %5960 = vmatprep.subr.mxu0 0.0
  %5961 = vmatpush1.msra.mxu0 0.0
  %5962 = vmatprep.subr.mxu0 0.0
  %5963 = vmatpush1.msra.mxu0 0.0
  %5964 = vmatprep.subr.mxu0 0.0
  %5965 = vmatpush1.msra.mxu0 0.0
  %5966 = vmatprep.subr.mxu0 0.0
  %5967 = vmatpush1.msra.mxu0 0.0
  %5968 = vmatprep.subr.mxu0 0.0
  %5969 = vmatpush1.msra.mxu0 0.0
  %5970 = vmatprep.subr.mxu0 0.0
  %5971 = vmatpush1.msra.mxu0 0.0
  %5972 = vmatprep.subr.mxu0 0.0
  %5973 = vmatpush1.msra.mxu0 0.0
  %5974 = vmatprep.subr.mxu0 0.0
  %5975 = vmatpush1.msra.mxu0 0.0
  %5976 = vmatprep.subr.mxu0 0.0
  %5977 = vmatpush1.msra.mxu0 0.0
  %5978 = vmatprep.subr.mxu0 0.0
  %5979 = vmatpush1.msra.mxu0 0.0
  %5980 = vmatprep.subr.mxu0 0.0
  %5981 = vmatpush1.msra.mxu0 0.0
  %5982 = vmatprep.subr.mxu0 0.0
  %5983 = vmatpush1.msra.mxu0 0.0
  %5984 = vmatprep.subr.mxu0 0.0
  %5985 = vmatpush1.msra.mxu0 0.0
  %5986 = vmatprep.subr.mxu0 0.0
  %5987 = vmatpush1.msra.mxu0 0.0
  %5988 = vmatprep.mubr.f32.mxu0 0.0
  %v5989 = vand.u32 %v5086, 4294901760
  %v5990 = vsub.f32 %v5086, %v5989
  %v5991 = vand.u32 %v5990, 4294901760
  %5992 = vmatmul.mubr.f32.gmra.mrb[0].mxu0 %v5991
  %v5993 = vpop.f32.mrb[0].mxu0
  %v5994 = vadd.f32 %v5912, %v5993
  %v5995 = vpop.f32.mrb[0].mxu0
  %v5996 = vadd.f32 %v5914, %v5995
  %5997 = vdwg.mxu0
  %v5998 = vand.u32 %v5067, 4294901760
  %v5999 = vsub.f32 %v5067, %v5998
  %v6000 = vand.u32 %v5999, 4294901760
  %6001 = vmatprep.subr.mxu0 %v6000
  %v6002 = vand.u32 %v5066, 4294901760
  %v6003 = vsub.f32 %v5066, %v6002
  %v6004 = vand.u32 %v6003, 4294901760
  %6005 = vmatpush1.msra.mxu0 %v6004
  %v6006 = vand.u32 %v5071, 4294901760
  %v6007 = vsub.f32 %v5071, %v6006
  %v6008 = vand.u32 %v6007, 4294901760
  %6009 = vmatprep.subr.mxu0 %v6008
  %v6010 = vand.u32 %v5070, 4294901760
  %v6011 = vsub.f32 %v5070, %v6010
  %v6012 = vand.u32 %v6011, 4294901760
  %6013 = vmatpush1.msra.mxu0 %v6012
  %v6014 = vand.u32 %v5075, 4294901760
  %v6015 = vsub.f32 %v5075, %v6014
  %v6016 = vand.u32 %v6015, 4294901760
  %6017 = vmatprep.subr.mxu0 %v6016
  %v6018 = vand.u32 %v5074, 4294901760
  %v6019 = vsub.f32 %v5074, %v6018
  %v6020 = vand.u32 %v6019, 4294901760
  %6021 = vmatpush1.msra.mxu0 %v6020
  %v6022 = vand.u32 %v5079, 4294901760
  %v6023 = vsub.f32 %v5079, %v6022
  %v6024 = vand.u32 %v6023, 4294901760
  %6025 = vmatprep.subr.mxu0 %v6024
  %v6026 = vand.u32 %v5078, 4294901760
  %v6027 = vsub.f32 %v5078, %v6026
  %v6028 = vand.u32 %v6027, 4294901760
  %6029 = vmatpush1.msra.mxu0 %v6028
  %6030 = vmatprep.subr.mxu0 0.0
  %6031 = vmatpush1.msra.mxu0 0.0
  %6032 = vmatprep.subr.mxu0 0.0
  %6033 = vmatpush1.msra.mxu0 0.0
  %6034 = vmatprep.subr.mxu0 0.0
  %6035 = vmatpush1.msra.mxu0 0.0
  %6036 = vmatprep.subr.mxu0 0.0
  %6037 = vmatpush1.msra.mxu0 0.0
  %6038 = vmatprep.subr.mxu0 0.0
  %6039 = vmatpush1.msra.mxu0 0.0
  %6040 = vmatprep.subr.mxu0 0.0
  %6041 = vmatpush1.msra.mxu0 0.0
  %6042 = vmatprep.subr.mxu0 0.0
  %6043 = vmatpush1.msra.mxu0 0.0
  %6044 = vmatprep.subr.mxu0 0.0
  %6045 = vmatpush1.msra.mxu0 0.0
  %6046 = vmatprep.subr.mxu0 0.0
  %6047 = vmatpush1.msra.mxu0 0.0
  %6048 = vmatprep.subr.mxu0 0.0
  %6049 = vmatpush1.msra.mxu0 0.0
  %6050 = vmatprep.subr.mxu0 0.0
  %6051 = vmatpush1.msra.mxu0 0.0
  %6052 = vmatprep.subr.mxu0 0.0
  %6053 = vmatpush1.msra.mxu0 0.0
  %6054 = vmatprep.subr.mxu0 0.0
  %6055 = vmatpush1.msra.mxu0 0.0
  %6056 = vmatprep.subr.mxu0 0.0
  %6057 = vmatpush1.msra.mxu0 0.0
  %6058 = vmatprep.subr.mxu0 0.0
  %6059 = vmatpush1.msra.mxu0 0.0
  %6060 = vmatprep.subr.mxu0 0.0
  %6061 = vmatpush1.msra.mxu0 0.0
  %6062 = vmatprep.subr.mxu0 0.0
  %6063 = vmatpush1.msra.mxu0 0.0
  %6064 = vmatprep.subr.mxu0 0.0
  %6065 = vmatpush1.msra.mxu0 0.0
  %6066 = vmatprep.subr.mxu0 0.0
  %6067 = vmatpush1.msra.mxu0 0.0
  %6068 = vmatprep.subr.mxu0 0.0
  %6069 = vmatpush1.msra.mxu0 0.0
  %6070 = vmatprep.subr.mxu0 0.0
  %6071 = vmatpush1.msra.mxu0 0.0
  %6072 = vmatprep.subr.mxu0 0.0
  %6073 = vmatpush1.msra.mxu0 0.0
  %6074 = vmatprep.subr.mxu0 0.0
  %6075 = vmatpush1.msra.mxu0 0.0
  %6076 = vmatprep.subr.mxu0 0.0
  %6077 = vmatpush1.msra.mxu0 0.0
  %6078 = vmatprep.subr.mxu0 0.0
  %6079 = vmatpush1.msra.mxu0 0.0
  %6080 = vmatprep.subr.mxu0 0.0
  %6081 = vmatpush1.msra.mxu0 0.0
  %6082 = vmatprep.subr.mxu0 0.0
  %6083 = vmatpush1.msra.mxu0 0.0
  %6084 = vmatprep.subr.mxu0 0.0
  %6085 = vmatpush1.msra.mxu0 0.0
  %6086 = vmatprep.mubr.f32.mxu0 0.0
  %v6087 = vand.u32 %v5086, 4294901760
  %6088 = vmatmul.mubr.f32.gmra.mrb[0].mxu0 %v6087
  %v6089 = vpop.f32.mrb[0].mxu0
  %v6090 = vadd.f32 %v5994, %v6089
  %v6091 = vpop.f32.mrb[0].mxu0
  %v6092 = vadd.f32 %v5996, %v6091
  %6093 = vdwg.mxu0
  %v6094 = vand.u32 %v5067, 4294901760
  %6095 = vmatprep.subr.mxu0 %v6094
  %v6096 = vand.u32 %v5066, 4294901760
  %6097 = vmatpush1.msra.mxu0 %v6096
  %v6098 = vand.u32 %v5071, 4294901760
  %6099 = vmatprep.subr.mxu0 %v6098
  %v6100 = vand.u32 %v5070, 4294901760
  %6101 = vmatpush1.msra.mxu0 %v6100
  %v6102 = vand.u32 %v5075, 4294901760
  %6103 = vmatprep.subr.mxu0 %v6102
  %v6104 = vand.u32 %v5074, 4294901760
  %6105 = vmatpush1.msra.mxu0 %v6104
  %v6106 = vand.u32 %v5079, 4294901760
  %6107 = vmatprep.subr.mxu0 %v6106
  %v6108 = vand.u32 %v5078, 4294901760
  %6109 = vmatpush1.msra.mxu0 %v6108
  %6110 = vmatprep.subr.mxu0 0.0
  %6111 = vmatpush1.msra.mxu0 0.0
  %6112 = vmatprep.subr.mxu0 0.0
  %6113 = vmatpush1.msra.mxu0 0.0
  %6114 = vmatprep.subr.mxu0 0.0
  %6115 = vmatpush1.msra.mxu0 0.0
  %6116 = vmatprep.subr.mxu0 0.0
  %6117 = vmatpush1.msra.mxu0 0.0
  %6118 = vmatprep.subr.mxu0 0.0
  %6119 = vmatpush1.msra.mxu0 0.0
  %6120 = vmatprep.subr.mxu0 0.0
  %6121 = vmatpush1.msra.mxu0 0.0
  %6122 = vmatprep.subr.mxu0 0.0
  %6123 = vmatpush1.msra.mxu0 0.0
  %6124 = vmatprep.subr.mxu0 0.0
  %6125 = vmatpush1.msra.mxu0 0.0
  %6126 = vmatprep.subr.mxu0 0.0
  %6127 = vmatpush1.msra.mxu0 0.0
  %6128 = vmatprep.subr.mxu0 0.0
  %6129 = vmatpush1.msra.mxu0 0.0
  %6130 = vmatprep.subr.mxu0 0.0
  %6131 = vmatpush1.msra.mxu0 0.0
  %6132 = vmatprep.subr.mxu0 0.0
  %6133 = vmatpush1.msra.mxu0 0.0
  %6134 = vmatprep.subr.mxu0 0.0
  %6135 = vmatpush1.msra.mxu0 0.0
  %6136 = vmatprep.subr.mxu0 0.0
  %6137 = vmatpush1.msra.mxu0 0.0
  %6138 = vmatprep.subr.mxu0 0.0
  %6139 = vmatpush1.msra.mxu0 0.0
  %6140 = vmatprep.subr.mxu0 0.0
  %6141 = vmatpush1.msra.mxu0 0.0
  %6142 = vmatprep.subr.mxu0 0.0
  %6143 = vmatpush1.msra.mxu0 0.0
  %6144 = vmatprep.subr.mxu0 0.0
  %6145 = vmatpush1.msra.mxu0 0.0
  %6146 = vmatprep.subr.mxu0 0.0
  %6147 = vmatpush1.msra.mxu0 0.0
  %6148 = vmatprep.subr.mxu0 0.0
  %6149 = vmatpush1.msra.mxu0 0.0
  %6150 = vmatprep.subr.mxu0 0.0
  %6151 = vmatpush1.msra.mxu0 0.0
  %6152 = vmatprep.subr.mxu0 0.0
  %6153 = vmatpush1.msra.mxu0 0.0
  %6154 = vmatprep.subr.mxu0 0.0
  %6155 = vmatpush1.msra.mxu0 0.0
  %6156 = vmatprep.subr.mxu0 0.0
  %6157 = vmatpush1.msra.mxu0 0.0
  %6158 = vmatprep.subr.mxu0 0.0
  %6159 = vmatpush1.msra.mxu0 0.0
  %6160 = vmatprep.subr.mxu0 0.0
  %6161 = vmatpush1.msra.mxu0 0.0
  %6162 = vmatprep.subr.mxu0 0.0
  %6163 = vmatpush1.msra.mxu0 0.0
  %6164 = vmatprep.subr.mxu0 0.0
  %6165 = vmatpush1.msra.mxu0 0.0
  %6166 = vmatprep.mubr.f32.mxu0 0.0
  %v6167 = vand.u32 %v5086, 4294901760
  %6168 = vmatmul.mubr.f32.gmra.mrb[0].mxu0 %v6167
  %v6169 = vpop.f32.mrb[0].mxu0
  %v6170 = vadd.f32 %v6090, %v6169
  %v6171 = vpop.f32.mrb[0].mxu0
  %v6172 = vadd.f32 %v6092, %v6171
  %6173 = vdwg.mxu0
  %v6178 = vcombine.low %v5627, %v5629
  %v6179 = vcombine.low %v6170, %v6172
  %6182 = vst [vmem:[%s9] sm:$0x77] %v6178
  %6183 = vst [vmem:[%s9 + $0x8] sm:$0x77] %v6179
  %s6184 = scalar_lea.vmem %s0, 8
  %v6185 = vld [vmem:[%s6184] sm:$0xff]
  %v6187 = vcombine.high %v6185, %v6185
  %v6189 = vunpack.c.l.s4 1983009808
  %v6190 = vunpack.c.0.s8 %v6189
  %v6191 = vlaneseq
  %v6192 = vshrl.u32 %v6191, 7
  %v6193 = vsub.s32 %v6190, %v6192
  %v6194 = vrot.slane %v6185, %v6193
  %v6196 = vunpack.c.l.s4 1983009808
  %v6197 = vunpack.c.0.s8 %v6196
  %v6198 = vlaneseq
  %v6199 = vshrl.u32 %v6198, 7
  %v6200 = vsub.s32 %v6197, %v6199
  %v6201 = vrot.slane %v6187, %v6200
  %v6202 = vcombine.high %v6194, %v6194
  %v6203 = vcombine.high %v6201, %v6201
  %v6204 = vsel %vm110, %v6194, 0
  %v6206 = vsel %vm110, %v6202, 0
  %v6208 = vsel %vm110, %v6201, 0
  %v6210 = vsel %vm110, %v6203, 0
  %v6212 = vand.u32 %v6206, 4294901760
  %6213 = vmatprep.subr.mxu0 %v6212
  %v6214 = vand.u32 %v6204, 4294901760
  %6215 = vmatpush1.msra.mxu0 %v6214
  %6216 = vmatprep.subr.mxu0 0.0
  %6217 = vmatpush1.msra.mxu0 0.0
  %6218 = vmatprep.subr.mxu0 0.0
  %6219 = vmatpush1.msra.mxu0 0.0
  %6220 = vmatprep.subr.mxu0 0.0
  %6221 = vmatpush1.msra.mxu0 0.0
  %6222 = vmatprep.subr.mxu0 0.0
  %6223 = vmatpush1.msra.mxu0 0.0
  %6224 = vmatprep.subr.mxu0 0.0
  %6225 = vmatpush1.msra.mxu0 0.0
  %6226 = vmatprep.subr.mxu0 0.0
  %6227 = vmatpush1.msra.mxu0 0.0
  %6228 = vmatprep.subr.mxu0 0.0
  %6229 = vmatpush1.msra.mxu0 0.0
  %6230 = vmatprep.subr.mxu0 0.0
  %6231 = vmatpush1.msra.mxu0 0.0
  %6232 = vmatprep.subr.mxu0 0.0
  %6233 = vmatpush1.msra.mxu0 0.0
  %6234 = vmatprep.subr.mxu0 0.0
  %6235 = vmatpush1.msra.mxu0 0.0
  %6236 = vmatprep.subr.mxu0 0.0
  %6237 = vmatpush1.msra.mxu0 0.0
  %6238 = vmatprep.subr.mxu0 0.0
  %6239 = vmatpush1.msra.mxu0 0.0
  %6240 = vmatprep.subr.mxu0 0.0
  %6241 = vmatpush1.msra.mxu0 0.0
  %6242 = vmatprep.subr.mxu0 0.0
  %6243 = vmatpush1.msra.mxu0 0.0
  %6244 = vmatprep.subr.mxu0 0.0
  %6245 = vmatpush1.msra.mxu0 0.0
  %6246 = vmatprep.subr.mxu0 0.0
  %6247 = vmatpush1.msra.mxu0 0.0
  %6248 = vmatprep.subr.mxu0 0.0
  %6249 = vmatpush1.msra.mxu0 0.0
  %6250 = vmatprep.subr.mxu0 0.0
  %6251 = vmatpush1.msra.mxu0 0.0
  %6252 = vmatprep.subr.mxu0 0.0
  %6253 = vmatpush1.msra.mxu0 0.0
  %6254 = vmatprep.subr.mxu0 0.0
  %6255 = vmatpush1.msra.mxu0 0.0
  %6256 = vmatprep.subr.mxu0 0.0
  %6257 = vmatpush1.msra.mxu0 0.0
  %6258 = vmatprep.subr.mxu0 0.0
  %6259 = vmatpush1.msra.mxu0 0.0
  %6260 = vmatprep.subr.mxu0 0.0
  %6261 = vmatpush1.msra.mxu0 0.0
  %6262 = vmatprep.subr.mxu0 0.0
  %6263 = vmatpush1.msra.mxu0 0.0
  %6264 = vmatprep.subr.mxu0 0.0
  %6265 = vmatpush1.msra.mxu0 0.0
  %6266 = vmatprep.subr.mxu0 0.0
  %6267 = vmatpush1.msra.mxu0 0.0
  %6268 = vmatprep.subr.mxu0 0.0
  %6269 = vmatpush1.msra.mxu0 0.0
  %6270 = vmatprep.subr.mxu0 0.0
  %6271 = vmatpush1.msra.mxu0 0.0
  %6272 = vmatprep.subr.mxu0 0.0
  %6273 = vmatpush1.msra.mxu0 0.0
  %6274 = vmatprep.subr.mxu0 0.0
  %6275 = vmatpush1.msra.mxu0 0.0
  %6276 = vmatprep.subr.mxu0 0.0
  %6277 = vmatpush1.msra.mxu0 0.0
  %6278 = vmatprep.mubr.f32.mxu0 0.0
  %v6279 = vand.u32 %v99, 4294901760
  %v6280 = vsub.f32 %v99, %v6279
  %v6281 = vand.u32 %v6280, 4294901760
  %v6282 = vsub.f32 %v6280, %v6281
  %v6283 = vand.u32 %v6282, 4294901760
  %6284 = vmatmul.mubr.f32.gmra.mrb[0].mxu0 %v6283
  %v6285 = vpop.f32.mrb[0].mxu0
  %v6286 = vadd.f32 %v62, %v6285
  %v6287 = vpop.f32.mrb[0].mxu0
  %v6288 = vadd.f32 %v62, %v6287
  %6289 = vmatprep.mubr.f32.mxu0 0.0
  %v6290 = vand.u32 %v102, 4294901760
  %v6291 = vsub.f32 %v102, %v6290
  %v6292 = vand.u32 %v6291, 4294901760
  %v6293 = vsub.f32 %v6291, %v6292
  %v6294 = vand.u32 %v6293, 4294901760
  %6295 = vmatmul.mubr.f32.gmra.mrb[0].mxu0 %v6294
  %v6296 = vpop.f32.mrb[0].mxu0
  %v6297 = vadd.f32 %v67, %v6296
  %v6298 = vpop.f32.mrb[0].mxu0
  %v6299 = vadd.f32 %v67, %v6298
  %6300 = vmatprep.mubr.f32.mxu0 0.0
  %v6301 = vand.u32 %v105, 4294901760
  %v6302 = vsub.f32 %v105, %v6301
  %v6303 = vand.u32 %v6302, 4294901760
  %v6304 = vsub.f32 %v6302, %v6303
  %v6305 = vand.u32 %v6304, 4294901760
  %6306 = vmatmul.mubr.f32.gmra.mrb[0].mxu0 %v6305
  %v6307 = vpop.f32.mrb[0].mxu0
  %v6308 = vadd.f32 %v72, %v6307
  %v6309 = vpop.f32.mrb[0].mxu0
  %v6310 = vadd.f32 %v72, %v6309
  %6311 = vmatprep.mubr.f32.mxu0 0.0
  %v6312 = vand.u32 %v108, 4294901760
  %v6313 = vsub.f32 %v108, %v6312
  %v6314 = vand.u32 %v6313, 4294901760
  %v6315 = vsub.f32 %v6313, %v6314
  %v6316 = vand.u32 %v6315, 4294901760
  %6317 = vmatmul.mubr.f32.gmra.mrb[0].mxu0 %v6316
  %v6318 = vpop.f32.mrb[0].mxu0
  %v6319 = vadd.f32 %v77, %v6318
  %v6320 = vpop.f32.mrb[0].mxu0
  %v6321 = vadd.f32 %v77, %v6320
  %6322 = vdwg.mxu0
  %v6323 = vand.u32 %v6206, 4294901760
  %v6324 = vsub.f32 %v6206, %v6323
  %v6325 = vand.u32 %v6324, 4294901760
  %v6326 = vsub.f32 %v6324, %v6325
  %v6327 = vand.u32 %v6326, 4294901760
  %6328 = vmatprep.subr.mxu0 %v6327
  %v6329 = vand.u32 %v6204, 4294901760
  %v6330 = vsub.f32 %v6204, %v6329
  %v6331 = vand.u32 %v6330, 4294901760
  %v6332 = vsub.f32 %v6330, %v6331
  %v6333 = vand.u32 %v6332, 4294901760
  %6334 = vmatpush1.msra.mxu0 %v6333
  %6335 = vmatprep.subr.mxu0 0.0
  %6336 = vmatpush1.msra.mxu0 0.0
  %6337 = vmatprep.subr.mxu0 0.0
  %6338 = vmatpush1.msra.mxu0 0.0
  %6339 = vmatprep.subr.mxu0 0.0
  %6340 = vmatpush1.msra.mxu0 0.0
  %6341 = vmatprep.subr.mxu0 0.0
  %6342 = vmatpush1.msra.mxu0 0.0
  %6343 = vmatprep.subr.mxu0 0.0
  %6344 = vmatpush1.msra.mxu0 0.0
  %6345 = vmatprep.subr.mxu0 0.0
  %6346 = vmatpush1.msra.mxu0 0.0
  %6347 = vmatprep.subr.mxu0 0.0
  %6348 = vmatpush1.msra.mxu0 0.0
  %6349 = vmatprep.subr.mxu0 0.0
  %6350 = vmatpush1.msra.mxu0 0.0
  %6351 = vmatprep.subr.mxu0 0.0
  %6352 = vmatpush1.msra.mxu0 0.0
  %6353 = vmatprep.subr.mxu0 0.0
  %6354 = vmatpush1.msra.mxu0 0.0
  %6355 = vmatprep.subr.mxu0 0.0
  %6356 = vmatpush1.msra.mxu0 0.0
  %6357 = vmatprep.subr.mxu0 0.0
  %6358 = vmatpush1.msra.mxu0 0.0
  %6359 = vmatprep.subr.mxu0 0.0
  %6360 = vmatpush1.msra.mxu0 0.0
  %6361 = vmatprep.subr.mxu0 0.0
  %6362 = vmatpush1.msra.mxu0 0.0
  %6363 = vmatprep.subr.mxu0 0.0
  %6364 = vmatpush1.msra.mxu0 0.0
  %6365 = vmatprep.subr.mxu0 0.0
  %6366 = vmatpush1.msra.mxu0 0.0
  %6367 = vmatprep.subr.mxu0 0.0
  %6368 = vmatpush1.msra.mxu0 0.0
  %6369 = vmatprep.subr.mxu0 0.0
  %6370 = vmatpush1.msra.mxu0 0.0
  %6371 = vmatprep.subr.mxu0 0.0
  %6372 = vmatpush1.msra.mxu0 0.0
  %6373 = vmatprep.subr.mxu0 0.0
  %6374 = vmatpush1.msra.mxu0 0.0
  %6375 = vmatprep.subr.mxu0 0.0
  %6376 = vmatpush1.msra.mxu0 0.0
  %6377 = vmatprep.subr.mxu0 0.0
  %6378 = vmatpush1.msra.mxu0 0.0
  %6379 = vmatprep.subr.mxu0 0.0
  %6380 = vmatpush1.msra.mxu0 0.0
  %6381 = vmatprep.subr.mxu0 0.0
  %6382 = vmatpush1.msra.mxu0 0.0
  %6383 = vmatprep.subr.mxu0 0.0
  %6384 = vmatpush1.msra.mxu0 0.0
  %6385 = vmatprep.subr.mxu0 0.0
  %6386 = vmatpush1.msra.mxu0 0.0
  %6387 = vmatprep.subr.mxu0 0.0
  %6388 = vmatpush1.msra.mxu0 0.0
  %6389 = vmatprep.subr.mxu0 0.0
  %6390 = vmatpush1.msra.mxu0 0.0
  %6391 = vmatprep.subr.mxu0 0.0
  %6392 = vmatpush1.msra.mxu0 0.0
  %6393 = vmatprep.subr.mxu0 0.0
  %6394 = vmatpush1.msra.mxu0 0.0
  %6395 = vmatprep.subr.mxu0 0.0
  %6396 = vmatpush1.msra.mxu0 0.0
  %6397 = vmatprep.mubr.f32.mxu0 0.0
  %v6398 = vand.u32 %v99, 4294901760
  %6399 = vmatmul.mubr.f32.gmra.mrb[0].mxu0 %v6398
  %v6400 = vpop.f32.mrb[0].mxu0
  %v6401 = vadd.f32 %v6286, %v6400
  %v6402 = vpop.f32.mrb[0].mxu0
  %v6403 = vadd.f32 %v6288, %v6402
  %6404 = vmatprep.mubr.f32.mxu0 0.0
  %v6405 = vand.u32 %v102, 4294901760
  %6406 = vmatmul.mubr.f32.gmra.mrb[0].mxu0 %v6405
  %v6407 = vpop.f32.mrb[0].mxu0
  %v6408 = vadd.f32 %v6297, %v6407
  %v6409 = vpop.f32.mrb[0].mxu0
  %v6410 = vadd.f32 %v6299, %v6409
  %6411 = vmatprep.mubr.f32.mxu0 0.0
  %v6412 = vand.u32 %v105, 4294901760
  %6413 = vmatmul.mubr.f32.gmra.mrb[0].mxu0 %v6412
  %v6414 = vpop.f32.mrb[0].mxu0
  %v6415 = vadd.f32 %v6308, %v6414
  %v6416 = vpop.f32.mrb[0].mxu0
  %v6417 = vadd.f32 %v6310, %v6416
  %6418 = vmatprep.mubr.f32.mxu0 0.0
  %v6419 = vand.u32 %v108, 4294901760
  %6420 = vmatmul.mubr.f32.gmra.mrb[0].mxu0 %v6419
  %v6421 = vpop.f32.mrb[0].mxu0
  %v6422 = vadd.f32 %v6319, %v6421
  %v6423 = vpop.f32.mrb[0].mxu0
  %v6424 = vadd.f32 %v6321, %v6423
  %6425 = vdwg.mxu0
  %v6426 = vand.u32 %v6206, 4294901760
  %v6427 = vsub.f32 %v6206, %v6426
  %6428 = vmatprep.subr.mxu0 %v6427
  %v6429 = vand.u32 %v6204, 4294901760
  %v6430 = vsub.f32 %v6204, %v6429
  %6431 = vmatpush1.msra.mxu0 %v6430
  %6432 = vmatprep.subr.mxu0 0.0
  %6433 = vmatpush1.msra.mxu0 0.0
  %6434 = vmatprep.subr.mxu0 0.0
  %6435 = vmatpush1.msra.mxu0 0.0
  %6436 = vmatprep.subr.mxu0 0.0
  %6437 = vmatpush1.msra.mxu0 0.0
  %6438 = vmatprep.subr.mxu0 0.0
  %6439 = vmatpush1.msra.mxu0 0.0
  %6440 = vmatprep.subr.mxu0 0.0
  %6441 = vmatpush1.msra.mxu0 0.0
  %6442 = vmatprep.subr.mxu0 0.0
  %6443 = vmatpush1.msra.mxu0 0.0
  %6444 = vmatprep.subr.mxu0 0.0
  %6445 = vmatpush1.msra.mxu0 0.0
  %6446 = vmatprep.subr.mxu0 0.0
  %6447 = vmatpush1.msra.mxu0 0.0
  %6448 = vmatprep.subr.mxu0 0.0
  %6449 = vmatpush1.msra.mxu0 0.0
  %6450 = vmatprep.subr.mxu0 0.0
  %6451 = vmatpush1.msra.mxu0 0.0
  %6452 = vmatprep.subr.mxu0 0.0
  %6453 = vmatpush1.msra.mxu0 0.0
  %6454 = vmatprep.subr.mxu0 0.0
  %6455 = vmatpush1.msra.mxu0 0.0
  %6456 = vmatprep.subr.mxu0 0.0
  %6457 = vmatpush1.msra.mxu0 0.0
  %6458 = vmatprep.subr.mxu0 0.0
  %6459 = vmatpush1.msra.mxu0 0.0
  %6460 = vmatprep.subr.mxu0 0.0
  %6461 = vmatpush1.msra.mxu0 0.0
  %6462 = vmatprep.subr.mxu0 0.0
  %6463 = vmatpush1.msra.mxu0 0.0
  %6464 = vmatprep.subr.mxu0 0.0
  %6465 = vmatpush1.msra.mxu0 0.0
  %6466 = vmatprep.subr.mxu0 0.0
  %6467 = vmatpush1.msra.mxu0 0.0
  %6468 = vmatprep.subr.mxu0 0.0
  %6469 = vmatpush1.msra.mxu0 0.0
  %6470 = vmatprep.subr.mxu0 0.0
  %6471 = vmatpush1.msra.mxu0 0.0
  %6472 = vmatprep.subr.mxu0 0.0
  %6473 = vmatpush1.msra.mxu0 0.0
  %6474 = vmatprep.subr.mxu0 0.0
  %6475 = vmatpush1.msra.mxu0 0.0
  %6476 = vmatprep.subr.mxu0 0.0
  %6477 = vmatpush1.msra.mxu0 0.0
  %6478 = vmatprep.subr.mxu0 0.0
  %6479 = vmatpush1.msra.mxu0 0.0
  %6480 = vmatprep.subr.mxu0 0.0
  %6481 = vmatpush1.msra.mxu0 0.0
  %6482 = vmatprep.subr.mxu0 0.0
  %6483 = vmatpush1.msra.mxu0 0.0
  %6484 = vmatprep.subr.mxu0 0.0
  %6485 = vmatpush1.msra.mxu0 0.0
  %6486 = vmatprep.subr.mxu0 0.0
  %6487 = vmatpush1.msra.mxu0 0.0
  %6488 = vmatprep.subr.mxu0 0.0
  %6489 = vmatpush1.msra.mxu0 0.0
  %6490 = vmatprep.subr.mxu0 0.0
  %6491 = vmatpush1.msra.mxu0 0.0
  %6492 = vmatprep.subr.mxu0 0.0
  %6493 = vmatpush1.msra.mxu0 0.0
  %6494 = vmatprep.mubr.f32.mxu0 0.0
  %v6495 = vand.u32 %v99, 4294901760
  %v6496 = vsub.f32 %v99, %v6495
  %6497 = vmatmul.mubr.f32.gmra.mrb[0].mxu0 %v6496
  %v6498 = vpop.f32.mrb[0].mxu0
  %v6499 = vadd.f32 %v6401, %v6498
  %v6500 = vpop.f32.mrb[0].mxu0
  %v6501 = vadd.f32 %v6403, %v6500
  %6502 = vmatprep.mubr.f32.mxu0 0.0
  %v6503 = vand.u32 %v102, 4294901760
  %v6504 = vsub.f32 %v102, %v6503
  %6505 = vmatmul.mubr.f32.gmra.mrb[0].mxu0 %v6504
  %v6506 = vpop.f32.mrb[0].mxu0
  %v6507 = vadd.f32 %v6408, %v6506
  %v6508 = vpop.f32.mrb[0].mxu0
  %v6509 = vadd.f32 %v6410, %v6508
  %6510 = vmatprep.mubr.f32.mxu0 0.0
  %v6511 = vand.u32 %v105, 4294901760
  %v6512 = vsub.f32 %v105, %v6511
  %6513 = vmatmul.mubr.f32.gmra.mrb[0].mxu0 %v6512
  %v6514 = vpop.f32.mrb[0].mxu0
  %v6515 = vadd.f32 %v6415, %v6514
  %v6516 = vpop.f32.mrb[0].mxu0
  %v6517 = vadd.f32 %v6417, %v6516
  %6518 = vmatprep.mubr.f32.mxu0 0.0
  %v6519 = vand.u32 %v108, 4294901760
  %v6520 = vsub.f32 %v108, %v6519
  %6521 = vmatmul.mubr.f32.gmra.mrb[0].mxu0 %v6520
  %v6522 = vpop.f32.mrb[0].mxu0
  %v6523 = vadd.f32 %v6422, %v6522
  %v6524 = vpop.f32.mrb[0].mxu0
  %v6525 = vadd.f32 %v6424, %v6524
  %6526 = vdwg.mxu0
  %v6527 = vand.u32 %v6206, 4294901760
  %6528 = vmatprep.subr.mxu0 %v6527
  %v6529 = vand.u32 %v6204, 4294901760
  %6530 = vmatpush1.msra.mxu0 %v6529
  %6531 = vmatprep.subr.mxu0 0.0
  %6532 = vmatpush1.msra.mxu0 0.0
  %6533 = vmatprep.subr.mxu0 0.0
  %6534 = vmatpush1.msra.mxu0 0.0
  %6535 = vmatprep.subr.mxu0 0.0
  %6536 = vmatpush1.msra.mxu0 0.0
  %6537 = vmatprep.subr.mxu0 0.0
  %6538 = vmatpush1.msra.mxu0 0.0
  %6539 = vmatprep.subr.mxu0 0.0
  %6540 = vmatpush1.msra.mxu0 0.0
  %6541 = vmatprep.subr.mxu0 0.0
  %6542 = vmatpush1.msra.mxu0 0.0
  %6543 = vmatprep.subr.mxu0 0.0
  %6544 = vmatpush1.msra.mxu0 0.0
  %6545 = vmatprep.subr.mxu0 0.0
  %6546 = vmatpush1.msra.mxu0 0.0
  %6547 = vmatprep.subr.mxu0 0.0
  %6548 = vmatpush1.msra.mxu0 0.0
  %6549 = vmatprep.subr.mxu0 0.0
  %6550 = vmatpush1.msra.mxu0 0.0
  %6551 = vmatprep.subr.mxu0 0.0
  %6552 = vmatpush1.msra.mxu0 0.0
  %6553 = vmatprep.subr.mxu0 0.0
  %6554 = vmatpush1.msra.mxu0 0.0
  %6555 = vmatprep.subr.mxu0 0.0
  %6556 = vmatpush1.msra.mxu0 0.0
  %6557 = vmatprep.subr.mxu0 0.0
  %6558 = vmatpush1.msra.mxu0 0.0
  %6559 = vmatprep.subr.mxu0 0.0
  %6560 = vmatpush1.msra.mxu0 0.0
  %6561 = vmatprep.subr.mxu0 0.0
  %6562 = vmatpush1.msra.mxu0 0.0
  %6563 = vmatprep.subr.mxu0 0.0
  %6564 = vmatpush1.msra.mxu0 0.0
  %6565 = vmatprep.subr.mxu0 0.0
  %6566 = vmatpush1.msra.mxu0 0.0
  %6567 = vmatprep.subr.mxu0 0.0
  %6568 = vmatpush1.msra.mxu0 0.0
  %6569 = vmatprep.subr.mxu0 0.0
  %6570 = vmatpush1.msra.mxu0 0.0
  %6571 = vmatprep.subr.mxu0 0.0
  %6572 = vmatpush1.msra.mxu0 0.0
  %6573 = vmatprep.subr.mxu0 0.0
  %6574 = vmatpush1.msra.mxu0 0.0
  %6575 = vmatprep.subr.mxu0 0.0
  %6576 = vmatpush1.msra.mxu0 0.0
  %6577 = vmatprep.subr.mxu0 0.0
  %6578 = vmatpush1.msra.mxu0 0.0
  %6579 = vmatprep.subr.mxu0 0.0
  %6580 = vmatpush1.msra.mxu0 0.0
  %6581 = vmatprep.subr.mxu0 0.0
  %6582 = vmatpush1.msra.mxu0 0.0
  %6583 = vmatprep.subr.mxu0 0.0
  %6584 = vmatpush1.msra.mxu0 0.0
  %6585 = vmatprep.subr.mxu0 0.0
  %6586 = vmatpush1.msra.mxu0 0.0
  %6587 = vmatprep.subr.mxu0 0.0
  %6588 = vmatpush1.msra.mxu0 0.0
  %6589 = vmatprep.subr.mxu0 0.0
  %6590 = vmatpush1.msra.mxu0 0.0
  %6591 = vmatprep.subr.mxu0 0.0
  %6592 = vmatpush1.msra.mxu0 0.0
  %6593 = vmatprep.mubr.f32.mxu0 0.0
  %v6594 = vand.u32 %v99, 4294901760
  %v6595 = vsub.f32 %v99, %v6594
  %v6596 = vand.u32 %v6595, 4294901760
  %6597 = vmatmul.mubr.f32.gmra.mrb[0].mxu0 %v6596
  %v6598 = vpop.f32.mrb[0].mxu0
  %v6599 = vadd.f32 %v6499, %v6598
  %v6600 = vpop.f32.mrb[0].mxu0
  %v6601 = vadd.f32 %v6501, %v6600
  %6602 = vmatprep.mubr.f32.mxu0 0.0
  %v6603 = vand.u32 %v102, 4294901760
  %v6604 = vsub.f32 %v102, %v6603
  %v6605 = vand.u32 %v6604, 4294901760
  %6606 = vmatmul.mubr.f32.gmra.mrb[0].mxu0 %v6605
  %v6607 = vpop.f32.mrb[0].mxu0
  %v6608 = vadd.f32 %v6507, %v6607
  %v6609 = vpop.f32.mrb[0].mxu0
  %v6610 = vadd.f32 %v6509, %v6609
  %6611 = vmatprep.mubr.f32.mxu0 0.0
  %v6612 = vand.u32 %v105, 4294901760
  %v6613 = vsub.f32 %v105, %v6612
  %v6614 = vand.u32 %v6613, 4294901760
  %6615 = vmatmul.mubr.f32.gmra.mrb[0].mxu0 %v6614
  %v6616 = vpop.f32.mrb[0].mxu0
  %v6617 = vadd.f32 %v6515, %v6616
  %v6618 = vpop.f32.mrb[0].mxu0
  %v6619 = vadd.f32 %v6517, %v6618
  %6620 = vmatprep.mubr.f32.mxu0 0.0
  %v6621 = vand.u32 %v108, 4294901760
  %v6622 = vsub.f32 %v108, %v6621
  %v6623 = vand.u32 %v6622, 4294901760
  %6624 = vmatmul.mubr.f32.gmra.mrb[0].mxu0 %v6623
  %v6625 = vpop.f32.mrb[0].mxu0
  %v6626 = vadd.f32 %v6523, %v6625
  %v6627 = vpop.f32.mrb[0].mxu0
  %v6628 = vadd.f32 %v6525, %v6627
  %6629 = vdwg.mxu0
  %v6630 = vand.u32 %v6206, 4294901760
  %v6631 = vsub.f32 %v6206, %v6630
  %v6632 = vand.u32 %v6631, 4294901760
  %6633 = vmatprep.subr.mxu0 %v6632
  %v6634 = vand.u32 %v6204, 4294901760
  %v6635 = vsub.f32 %v6204, %v6634
  %v6636 = vand.u32 %v6635, 4294901760
  %6637 = vmatpush1.msra.mxu0 %v6636
  %6638 = vmatprep.subr.mxu0 0.0
  %6639 = vmatpush1.msra.mxu0 0.0
  %6640 = vmatprep.subr.mxu0 0.0
  %6641 = vmatpush1.msra.mxu0 0.0
  %6642 = vmatprep.subr.mxu0 0.0
  %6643 = vmatpush1.msra.mxu0 0.0
  %6644 = vmatprep.subr.mxu0 0.0
  %6645 = vmatpush1.msra.mxu0 0.0
  %6646 = vmatprep.subr.mxu0 0.0
  %6647 = vmatpush1.msra.mxu0 0.0
  %6648 = vmatprep.subr.mxu0 0.0
  %6649 = vmatpush1.msra.mxu0 0.0
  %6650 = vmatprep.subr.mxu0 0.0
  %6651 = vmatpush1.msra.mxu0 0.0
  %6652 = vmatprep.subr.mxu0 0.0
  %6653 = vmatpush1.msra.mxu0 0.0
  %6654 = vmatprep.subr.mxu0 0.0
  %6655 = vmatpush1.msra.mxu0 0.0
  %6656 = vmatprep.subr.mxu0 0.0
  %6657 = vmatpush1.msra.mxu0 0.0
  %6658 = vmatprep.subr.mxu0 0.0
  %6659 = vmatpush1.msra.mxu0 0.0
  %6660 = vmatprep.subr.mxu0 0.0
  %6661 = vmatpush1.msra.mxu0 0.0
  %6662 = vmatprep.subr.mxu0 0.0
  %6663 = vmatpush1.msra.mxu0 0.0
  %6664 = vmatprep.subr.mxu0 0.0
  %6665 = vmatpush1.msra.mxu0 0.0
  %6666 = vmatprep.subr.mxu0 0.0
  %6667 = vmatpush1.msra.mxu0 0.0
  %6668 = vmatprep.subr.mxu0 0.0
  %6669 = vmatpush1.msra.mxu0 0.0
  %6670 = vmatprep.subr.mxu0 0.0
  %6671 = vmatpush1.msra.mxu0 0.0
  %6672 = vmatprep.subr.mxu0 0.0
  %6673 = vmatpush1.msra.mxu0 0.0
  %6674 = vmatprep.subr.mxu0 0.0
  %6675 = vmatpush1.msra.mxu0 0.0
  %6676 = vmatprep.subr.mxu0 0.0
  %6677 = vmatpush1.msra.mxu0 0.0
  %6678 = vmatprep.subr.mxu0 0.0
  %6679 = vmatpush1.msra.mxu0 0.0
  %6680 = vmatprep.subr.mxu0 0.0
  %6681 = vmatpush1.msra.mxu0 0.0
  %6682 = vmatprep.subr.mxu0 0.0
  %6683 = vmatpush1.msra.mxu0 0.0
  %6684 = vmatprep.subr.mxu0 0.0
  %6685 = vmatpush1.msra.mxu0 0.0
  %6686 = vmatprep.subr.mxu0 0.0
  %6687 = vmatpush1.msra.mxu0 0.0
  %6688 = vmatprep.subr.mxu0 0.0
  %6689 = vmatpush1.msra.mxu0 0.0
  %6690 = vmatprep.subr.mxu0 0.0
  %6691 = vmatpush1.msra.mxu0 0.0
  %6692 = vmatprep.subr.mxu0 0.0
  %6693 = vmatpush1.msra.mxu0 0.0
  %6694 = vmatprep.subr.mxu0 0.0
  %6695 = vmatpush1.msra.mxu0 0.0
  %6696 = vmatprep.subr.mxu0 0.0
  %6697 = vmatpush1.msra.mxu0 0.0
  %6698 = vmatprep.subr.mxu0 0.0
  %6699 = vmatpush1.msra.mxu0 0.0
  %6700 = vmatprep.mubr.f32.mxu0 0.0
  %v6701 = vand.u32 %v99, 4294901760
  %6702 = vmatmul.mubr.f32.gmra.mrb[0].mxu0 %v6701
  %v6703 = vpop.f32.mrb[0].mxu0
  %v6704 = vadd.f32 %v6599, %v6703
  %v6705 = vpop.f32.mrb[0].mxu0
  %v6706 = vadd.f32 %v6601, %v6705
  %6707 = vmatprep.mubr.f32.mxu0 0.0
  %v6708 = vand.u32 %v102, 4294901760
  %6709 = vmatmul.mubr.f32.gmra.mrb[0].mxu0 %v6708
  %v6710 = vpop.f32.mrb[0].mxu0
  %v6711 = vadd.f32 %v6608, %v6710
  %v6712 = vpop.f32.mrb[0].mxu0
  %v6713 = vadd.f32 %v6610, %v6712
  %6714 = vmatprep.mubr.f32.mxu0 0.0
  %v6715 = vand.u32 %v105, 4294901760
  %6716 = vmatmul.mubr.f32.gmra.mrb[0].mxu0 %v6715
  %v6717 = vpop.f32.mrb[0].mxu0
  %v6718 = vadd.f32 %v6617, %v6717
  %v6719 = vpop.f32.mrb[0].mxu0
  %v6720 = vadd.f32 %v6619, %v6719
  %6721 = vmatprep.mubr.f32.mxu0 0.0
  %v6722 = vand.u32 %v108, 4294901760
  %6723 = vmatmul.mubr.f32.gmra.mrb[0].mxu0 %v6722
  %v6724 = vpop.f32.mrb[0].mxu0
  %v6725 = vadd.f32 %v6626, %v6724
  %v6726 = vpop.f32.mrb[0].mxu0
  %v6727 = vadd.f32 %v6628, %v6726
  %6728 = vdwg.mxu0
  %v6729 = vand.u32 %v6206, 4294901760
  %6730 = vmatprep.subr.mxu0 %v6729
  %v6731 = vand.u32 %v6204, 4294901760
  %6732 = vmatpush1.msra.mxu0 %v6731
  %6733 = vmatprep.subr.mxu0 0.0
  %6734 = vmatpush1.msra.mxu0 0.0
  %6735 = vmatprep.subr.mxu0 0.0
  %6736 = vmatpush1.msra.mxu0 0.0
  %6737 = vmatprep.subr.mxu0 0.0
  %6738 = vmatpush1.msra.mxu0 0.0
  %6739 = vmatprep.subr.mxu0 0.0
  %6740 = vmatpush1.msra.mxu0 0.0
  %6741 = vmatprep.subr.mxu0 0.0
  %6742 = vmatpush1.msra.mxu0 0.0
  %6743 = vmatprep.subr.mxu0 0.0
  %6744 = vmatpush1.msra.mxu0 0.0
  %6745 = vmatprep.subr.mxu0 0.0
  %6746 = vmatpush1.msra.mxu0 0.0
  %6747 = vmatprep.subr.mxu0 0.0
  %6748 = vmatpush1.msra.mxu0 0.0
  %6749 = vmatprep.subr.mxu0 0.0
  %6750 = vmatpush1.msra.mxu0 0.0
  %6751 = vmatprep.subr.mxu0 0.0
  %6752 = vmatpush1.msra.mxu0 0.0
  %6753 = vmatprep.subr.mxu0 0.0
  %6754 = vmatpush1.msra.mxu0 0.0
  %6755 = vmatprep.subr.mxu0 0.0
  %6756 = vmatpush1.msra.mxu0 0.0
  %6757 = vmatprep.subr.mxu0 0.0
  %6758 = vmatpush1.msra.mxu0 0.0
  %6759 = vmatprep.subr.mxu0 0.0
  %6760 = vmatpush1.msra.mxu0 0.0
  %6761 = vmatprep.subr.mxu0 0.0
  %6762 = vmatpush1.msra.mxu0 0.0
  %6763 = vmatprep.subr.mxu0 0.0
  %6764 = vmatpush1.msra.mxu0 0.0
  %6765 = vmatprep.subr.mxu0 0.0
  %6766 = vmatpush1.msra.mxu0 0.0
  %6767 = vmatprep.subr.mxu0 0.0
  %6768 = vmatpush1.msra.mxu0 0.0
  %6769 = vmatprep.subr.mxu0 0.0
  %6770 = vmatpush1.msra.mxu0 0.0
  %6771 = vmatprep.subr.mxu0 0.0
  %6772 = vmatpush1.msra.mxu0 0.0
  %6773 = vmatprep.subr.mxu0 0.0
  %6774 = vmatpush1.msra.mxu0 0.0
  %6775 = vmatprep.subr.mxu0 0.0
  %6776 = vmatpush1.msra.mxu0 0.0
  %6777 = vmatprep.subr.mxu0 0.0
  %6778 = vmatpush1.msra.mxu0 0.0
  %6779 = vmatprep.subr.mxu0 0.0
  %6780 = vmatpush1.msra.mxu0 0.0
  %6781 = vmatprep.subr.mxu0 0.0
  %6782 = vmatpush1.msra.mxu0 0.0
  %6783 = vmatprep.subr.mxu0 0.0
  %6784 = vmatpush1.msra.mxu0 0.0
  %6785 = vmatprep.subr.mxu0 0.0
  %6786 = vmatpush1.msra.mxu0 0.0
  %6787 = vmatprep.subr.mxu0 0.0
  %6788 = vmatpush1.msra.mxu0 0.0
  %6789 = vmatprep.subr.mxu0 0.0
  %6790 = vmatpush1.msra.mxu0 0.0
  %6791 = vmatprep.subr.mxu0 0.0
  %6792 = vmatpush1.msra.mxu0 0.0
  %6793 = vmatprep.subr.mxu0 0.0
  %6794 = vmatpush1.msra.mxu0 0.0
  %6795 = vmatprep.mubr.f32.mxu0 0.0
  %v6796 = vand.u32 %v99, 4294901760
  %6797 = vmatmul.mubr.f32.gmra.mrb[0].mxu0 %v6796
  %v6798 = vpop.f32.mrb[0].mxu0
  %v6799 = vadd.f32 %v6704, %v6798
  %v6800 = vpop.f32.mrb[0].mxu0
  %v6801 = vadd.f32 %v6706, %v6800
  %6802 = vmatprep.mubr.f32.mxu0 0.0
  %v6803 = vand.u32 %v102, 4294901760
  %6804 = vmatmul.mubr.f32.gmra.mrb[0].mxu0 %v6803
  %v6805 = vpop.f32.mrb[0].mxu0
  %v6806 = vadd.f32 %v6711, %v6805
  %v6807 = vpop.f32.mrb[0].mxu0
  %v6808 = vadd.f32 %v6713, %v6807
  %6809 = vmatprep.mubr.f32.mxu0 0.0
  %v6810 = vand.u32 %v105, 4294901760
  %6811 = vmatmul.mubr.f32.gmra.mrb[0].mxu0 %v6810
  %v6812 = vpop.f32.mrb[0].mxu0
  %v6813 = vadd.f32 %v6718, %v6812
  %v6814 = vpop.f32.mrb[0].mxu0
  %v6815 = vadd.f32 %v6720, %v6814
  %6816 = vmatprep.mubr.f32.mxu0 0.0
  %v6817 = vand.u32 %v108, 4294901760
  %6818 = vmatmul.mubr.f32.gmra.mrb[0].mxu0 %v6817
  %v6819 = vpop.f32.mrb[0].mxu0
  %v6820 = vadd.f32 %v6725, %v6819
  %v6821 = vpop.f32.mrb[0].mxu0
  %v6822 = vadd.f32 %v6727, %v6821
  %6823 = vdwg.mxu0
  %v6824 = vand.u32 %v6210, 4294901760
  %6825 = vmatprep.subr.mxu0 %v6824
  %v6826 = vand.u32 %v6208, 4294901760
  %6827 = vmatpush1.msra.mxu0 %v6826
  %6828 = vmatprep.subr.mxu0 0.0
  %6829 = vmatpush1.msra.mxu0 0.0
  %6830 = vmatprep.subr.mxu0 0.0
  %6831 = vmatpush1.msra.mxu0 0.0
  %6832 = vmatprep.subr.mxu0 0.0
  %6833 = vmatpush1.msra.mxu0 0.0
  %6834 = vmatprep.subr.mxu0 0.0
  %6835 = vmatpush1.msra.mxu0 0.0
  %6836 = vmatprep.subr.mxu0 0.0
  %6837 = vmatpush1.msra.mxu0 0.0
  %6838 = vmatprep.subr.mxu0 0.0
  %6839 = vmatpush1.msra.mxu0 0.0
  %6840 = vmatprep.subr.mxu0 0.0
  %6841 = vmatpush1.msra.mxu0 0.0
  %6842 = vmatprep.subr.mxu0 0.0
  %6843 = vmatpush1.msra.mxu0 0.0
  %6844 = vmatprep.subr.mxu0 0.0
  %6845 = vmatpush1.msra.mxu0 0.0
  %6846 = vmatprep.subr.mxu0 0.0
  %6847 = vmatpush1.msra.mxu0 0.0
  %6848 = vmatprep.subr.mxu0 0.0
  %6849 = vmatpush1.msra.mxu0 0.0
  %6850 = vmatprep.subr.mxu0 0.0
  %6851 = vmatpush1.msra.mxu0 0.0
  %6852 = vmatprep.subr.mxu0 0.0
  %6853 = vmatpush1.msra.mxu0 0.0
  %6854 = vmatprep.subr.mxu0 0.0
  %6855 = vmatpush1.msra.mxu0 0.0
  %6856 = vmatprep.subr.mxu0 0.0
  %6857 = vmatpush1.msra.mxu0 0.0
  %6858 = vmatprep.subr.mxu0 0.0
  %6859 = vmatpush1.msra.mxu0 0.0
  %6860 = vmatprep.subr.mxu0 0.0
  %6861 = vmatpush1.msra.mxu0 0.0
  %6862 = vmatprep.subr.mxu0 0.0
  %6863 = vmatpush1.msra.mxu0 0.0
  %6864 = vmatprep.subr.mxu0 0.0
  %6865 = vmatpush1.msra.mxu0 0.0
  %6866 = vmatprep.subr.mxu0 0.0
  %6867 = vmatpush1.msra.mxu0 0.0
  %6868 = vmatprep.subr.mxu0 0.0
  %6869 = vmatpush1.msra.mxu0 0.0
  %6870 = vmatprep.subr.mxu0 0.0
  %6871 = vmatpush1.msra.mxu0 0.0
  %6872 = vmatprep.subr.mxu0 0.0
  %6873 = vmatpush1.msra.mxu0 0.0
  %6874 = vmatprep.subr.mxu0 0.0
  %6875 = vmatpush1.msra.mxu0 0.0
  %6876 = vmatprep.subr.mxu0 0.0
  %6877 = vmatpush1.msra.mxu0 0.0
  %6878 = vmatprep.subr.mxu0 0.0
  %6879 = vmatpush1.msra.mxu0 0.0
  %6880 = vmatprep.subr.mxu0 0.0
  %6881 = vmatpush1.msra.mxu0 0.0
  %6882 = vmatprep.subr.mxu0 0.0
  %6883 = vmatpush1.msra.mxu0 0.0
  %6884 = vmatprep.subr.mxu0 0.0
  %6885 = vmatpush1.msra.mxu0 0.0
  %6886 = vmatprep.subr.mxu0 0.0
  %6887 = vmatpush1.msra.mxu0 0.0
  %6888 = vmatprep.subr.mxu0 0.0
  %6889 = vmatpush1.msra.mxu0 0.0
  %6890 = vmatprep.mubr.f32.mxu0 0.0
  %v6891 = vand.u32 %v99, 4294901760
  %v6892 = vsub.f32 %v99, %v6891
  %v6893 = vand.u32 %v6892, 4294901760
  %v6894 = vsub.f32 %v6892, %v6893
  %v6895 = vand.u32 %v6894, 4294901760
  %6896 = vmatmul.mubr.f32.gmra.mrb[0].mxu0 %v6895
  %v6897 = vpop.f32.mrb[0].mxu0
  %v6898 = vadd.f32 %v62, %v6897
  %v6899 = vpop.f32.mrb[0].mxu0
  %v6900 = vadd.f32 %v62, %v6899
  %6901 = vmatprep.mubr.f32.mxu0 0.0
  %v6902 = vand.u32 %v102, 4294901760
  %v6903 = vsub.f32 %v102, %v6902
  %v6904 = vand.u32 %v6903, 4294901760
  %v6905 = vsub.f32 %v6903, %v6904
  %v6906 = vand.u32 %v6905, 4294901760
  %6907 = vmatmul.mubr.f32.gmra.mrb[0].mxu0 %v6906
  %v6908 = vpop.f32.mrb[0].mxu0
  %v6909 = vadd.f32 %v67, %v6908
  %v6910 = vpop.f32.mrb[0].mxu0
  %v6911 = vadd.f32 %v67, %v6910
  %6912 = vmatprep.mubr.f32.mxu0 0.0
  %v6913 = vand.u32 %v105, 4294901760
  %v6914 = vsub.f32 %v105, %v6913
  %v6915 = vand.u32 %v6914, 4294901760
  %v6916 = vsub.f32 %v6914, %v6915
  %v6917 = vand.u32 %v6916, 4294901760
  %6918 = vmatmul.mubr.f32.gmra.mrb[0].mxu0 %v6917
  %v6919 = vpop.f32.mrb[0].mxu0
  %v6920 = vadd.f32 %v72, %v6919
  %v6921 = vpop.f32.mrb[0].mxu0
  %v6922 = vadd.f32 %v72, %v6921
  %6923 = vmatprep.mubr.f32.mxu0 0.0
  %v6924 = vand.u32 %v108, 4294901760
  %v6925 = vsub.f32 %v108, %v6924
  %v6926 = vand.u32 %v6925, 4294901760
  %v6927 = vsub.f32 %v6925, %v6926
  %v6928 = vand.u32 %v6927, 4294901760
  %6929 = vmatmul.mubr.f32.gmra.mrb[0].mxu0 %v6928
  %v6930 = vpop.f32.mrb[0].mxu0
  %v6931 = vadd.f32 %v77, %v6930
  %v6932 = vpop.f32.mrb[0].mxu0
  %v6933 = vadd.f32 %v77, %v6932
  %6934 = vdwg.mxu0
  %v6935 = vand.u32 %v6210, 4294901760
  %v6936 = vsub.f32 %v6210, %v6935
  %v6937 = vand.u32 %v6936, 4294901760
  %v6938 = vsub.f32 %v6936, %v6937
  %v6939 = vand.u32 %v6938, 4294901760
  %6940 = vmatprep.subr.mxu0 %v6939
  %v6941 = vand.u32 %v6208, 4294901760
  %v6942 = vsub.f32 %v6208, %v6941
  %v6943 = vand.u32 %v6942, 4294901760
  %v6944 = vsub.f32 %v6942, %v6943
  %v6945 = vand.u32 %v6944, 4294901760
  %6946 = vmatpush1.msra.mxu0 %v6945
  %6947 = vmatprep.subr.mxu0 0.0
  %6948 = vmatpush1.msra.mxu0 0.0
  %6949 = vmatprep.subr.mxu0 0.0
  %6950 = vmatpush1.msra.mxu0 0.0
  %6951 = vmatprep.subr.mxu0 0.0
  %6952 = vmatpush1.msra.mxu0 0.0
  %6953 = vmatprep.subr.mxu0 0.0
  %6954 = vmatpush1.msra.mxu0 0.0
  %6955 = vmatprep.subr.mxu0 0.0
  %6956 = vmatpush1.msra.mxu0 0.0
  %6957 = vmatprep.subr.mxu0 0.0
  %6958 = vmatpush1.msra.mxu0 0.0
  %6959 = vmatprep.subr.mxu0 0.0
  %6960 = vmatpush1.msra.mxu0 0.0
  %6961 = vmatprep.subr.mxu0 0.0
  %6962 = vmatpush1.msra.mxu0 0.0
  %6963 = vmatprep.subr.mxu0 0.0
  %6964 = vmatpush1.msra.mxu0 0.0
  %6965 = vmatprep.subr.mxu0 0.0
  %6966 = vmatpush1.msra.mxu0 0.0
  %6967 = vmatprep.subr.mxu0 0.0
  %6968 = vmatpush1.msra.mxu0 0.0
  %6969 = vmatprep.subr.mxu0 0.0
  %6970 = vmatpush1.msra.mxu0 0.0
  %6971 = vmatprep.subr.mxu0 0.0
  %6972 = vmatpush1.msra.mxu0 0.0
  %6973 = vmatprep.subr.mxu0 0.0
  %6974 = vmatpush1.msra.mxu0 0.0
  %6975 = vmatprep.subr.mxu0 0.0
  %6976 = vmatpush1.msra.mxu0 0.0
  %6977 = vmatprep.subr.mxu0 0.0
  %6978 = vmatpush1.msra.mxu0 0.0
  %6979 = vmatprep.subr.mxu0 0.0
  %6980 = vmatpush1.msra.mxu0 0.0
  %6981 = vmatprep.subr.mxu0 0.0
  %6982 = vmatpush1.msra.mxu0 0.0
  %6983 = vmatprep.subr.mxu0 0.0
  %6984 = vmatpush1.msra.mxu0 0.0
  %6985 = vmatprep.subr.mxu0 0.0
  %6986 = vmatpush1.msra.mxu0 0.0
  %6987 = vmatprep.subr.mxu0 0.0
  %6988 = vmatpush1.msra.mxu0 0.0
  %6989 = vmatprep.subr.mxu0 0.0
  %6990 = vmatpush1.msra.mxu0 0.0
  %6991 = vmatprep.subr.mxu0 0.0
  %6992 = vmatpush1.msra.mxu0 0.0
  %6993 = vmatprep.subr.mxu0 0.0
  %6994 = vmatpush1.msra.mxu0 0.0
  %6995 = vmatprep.subr.mxu0 0.0
  %6996 = vmatpush1.msra.mxu0 0.0
  %6997 = vmatprep.subr.mxu0 0.0
  %6998 = vmatpush1.msra.mxu0 0.0
  %6999 = vmatprep.subr.mxu0 0.0
  %7000 = vmatpush1.msra.mxu0 0.0
  %7001 = vmatprep.subr.mxu0 0.0
  %7002 = vmatpush1.msra.mxu0 0.0
  %7003 = vmatprep.subr.mxu0 0.0
  %7004 = vmatpush1.msra.mxu0 0.0
  %7005 = vmatprep.subr.mxu0 0.0
  %7006 = vmatpush1.msra.mxu0 0.0
  %7007 = vmatprep.subr.mxu0 0.0
  %7008 = vmatpush1.msra.mxu0 0.0
  %7009 = vmatprep.mubr.f32.mxu0 0.0
  %v7010 = vand.u32 %v99, 4294901760
  %7011 = vmatmul.mubr.f32.gmra.mrb[0].mxu0 %v7010
  %v7012 = vpop.f32.mrb[0].mxu0
  %v7013 = vadd.f32 %v6898, %v7012
  %v7014 = vpop.f32.mrb[0].mxu0
  %v7015 = vadd.f32 %v6900, %v7014
  %7016 = vmatprep.mubr.f32.mxu0 0.0
  %v7017 = vand.u32 %v102, 4294901760
  %7018 = vmatmul.mubr.f32.gmra.mrb[0].mxu0 %v7017
  %v7019 = vpop.f32.mrb[0].mxu0
  %v7020 = vadd.f32 %v6909, %v7019
  %v7021 = vpop.f32.mrb[0].mxu0
  %v7022 = vadd.f32 %v6911, %v7021
  %7023 = vmatprep.mubr.f32.mxu0 0.0
  %v7024 = vand.u32 %v105, 4294901760
  %7025 = vmatmul.mubr.f32.gmra.mrb[0].mxu0 %v7024
  %v7026 = vpop.f32.mrb[0].mxu0
  %v7027 = vadd.f32 %v6920, %v7026
  %v7028 = vpop.f32.mrb[0].mxu0
  %v7029 = vadd.f32 %v6922, %v7028
  %7030 = vmatprep.mubr.f32.mxu0 0.0
  %v7031 = vand.u32 %v108, 4294901760
  %7032 = vmatmul.mubr.f32.gmra.mrb[0].mxu0 %v7031
  %v7033 = vpop.f32.mrb[0].mxu0
  %v7034 = vadd.f32 %v6931, %v7033
  %v7035 = vpop.f32.mrb[0].mxu0
  %v7036 = vadd.f32 %v6933, %v7035
  %7037 = vdwg.mxu0
  %v7038 = vand.u32 %v6210, 4294901760
  %v7039 = vsub.f32 %v6210, %v7038
  %7040 = vmatprep.subr.mxu0 %v7039
  %v7041 = vand.u32 %v6208, 4294901760
  %v7042 = vsub.f32 %v6208, %v7041
  %7043 = vmatpush1.msra.mxu0 %v7042
  %7044 = vmatprep.subr.mxu0 0.0
  %7045 = vmatpush1.msra.mxu0 0.0
  %7046 = vmatprep.subr.mxu0 0.0
  %7047 = vmatpush1.msra.mxu0 0.0
  %7048 = vmatprep.subr.mxu0 0.0
  %7049 = vmatpush1.msra.mxu0 0.0
  %7050 = vmatprep.subr.mxu0 0.0
  %7051 = vmatpush1.msra.mxu0 0.0
  %7052 = vmatprep.subr.mxu0 0.0
  %7053 = vmatpush1.msra.mxu0 0.0
  %7054 = vmatprep.subr.mxu0 0.0
  %7055 = vmatpush1.msra.mxu0 0.0
  %7056 = vmatprep.subr.mxu0 0.0
  %7057 = vmatpush1.msra.mxu0 0.0
  %7058 = vmatprep.subr.mxu0 0.0
  %7059 = vmatpush1.msra.mxu0 0.0
  %7060 = vmatprep.subr.mxu0 0.0
  %7061 = vmatpush1.msra.mxu0 0.0
  %7062 = vmatprep.subr.mxu0 0.0
  %7063 = vmatpush1.msra.mxu0 0.0
  %7064 = vmatprep.subr.mxu0 0.0
  %7065 = vmatpush1.msra.mxu0 0.0
  %7066 = vmatprep.subr.mxu0 0.0
  %7067 = vmatpush1.msra.mxu0 0.0
  %7068 = vmatprep.subr.mxu0 0.0
  %7069 = vmatpush1.msra.mxu0 0.0
  %7070 = vmatprep.subr.mxu0 0.0
  %7071 = vmatpush1.msra.mxu0 0.0
  %7072 = vmatprep.subr.mxu0 0.0
  %7073 = vmatpush1.msra.mxu0 0.0
  %7074 = vmatprep.subr.mxu0 0.0
  %7075 = vmatpush1.msra.mxu0 0.0
  %7076 = vmatprep.subr.mxu0 0.0
  %7077 = vmatpush1.msra.mxu0 0.0
  %7078 = vmatprep.subr.mxu0 0.0
  %7079 = vmatpush1.msra.mxu0 0.0
  %7080 = vmatprep.subr.mxu0 0.0
  %7081 = vmatpush1.msra.mxu0 0.0
  %7082 = vmatprep.subr.mxu0 0.0
  %7083 = vmatpush1.msra.mxu0 0.0
  %7084 = vmatprep.subr.mxu0 0.0
  %7085 = vmatpush1.msra.mxu0 0.0
  %7086 = vmatprep.subr.mxu0 0.0
  %7087 = vmatpush1.msra.mxu0 0.0
  %7088 = vmatprep.subr.mxu0 0.0
  %7089 = vmatpush1.msra.mxu0 0.0
  %7090 = vmatprep.subr.mxu0 0.0
  %7091 = vmatpush1.msra.mxu0 0.0
  %7092 = vmatprep.subr.mxu0 0.0
  %7093 = vmatpush1.msra.mxu0 0.0
  %7094 = vmatprep.subr.mxu0 0.0
  %7095 = vmatpush1.msra.mxu0 0.0
  %7096 = vmatprep.subr.mxu0 0.0
  %7097 = vmatpush1.msra.mxu0 0.0
  %7098 = vmatprep.subr.mxu0 0.0
  %7099 = vmatpush1.msra.mxu0 0.0
  %7100 = vmatprep.subr.mxu0 0.0
  %7101 = vmatpush1.msra.mxu0 0.0
  %7102 = vmatprep.subr.mxu0 0.0
  %7103 = vmatpush1.msra.mxu0 0.0
  %7104 = vmatprep.subr.mxu0 0.0
  %7105 = vmatpush1.msra.mxu0 0.0
  %7106 = vmatprep.mubr.f32.mxu0 0.0
  %v7107 = vand.u32 %v99, 4294901760
  %v7108 = vsub.f32 %v99, %v7107
  %7109 = vmatmul.mubr.f32.gmra.mrb[0].mxu0 %v7108
  %v7110 = vpop.f32.mrb[0].mxu0
  %v7111 = vadd.f32 %v7013, %v7110
  %v7112 = vpop.f32.mrb[0].mxu0
  %v7113 = vadd.f32 %v7015, %v7112
  %7114 = vmatprep.mubr.f32.mxu0 0.0
  %v7115 = vand.u32 %v102, 4294901760
  %v7116 = vsub.f32 %v102, %v7115
  %7117 = vmatmul.mubr.f32.gmra.mrb[0].mxu0 %v7116
  %v7118 = vpop.f32.mrb[0].mxu0
  %v7119 = vadd.f32 %v7020, %v7118
  %v7120 = vpop.f32.mrb[0].mxu0
  %v7121 = vadd.f32 %v7022, %v7120
  %7122 = vmatprep.mubr.f32.mxu0 0.0
  %v7123 = vand.u32 %v105, 4294901760
  %v7124 = vsub.f32 %v105, %v7123
  %7125 = vmatmul.mubr.f32.gmra.mrb[0].mxu0 %v7124
  %v7126 = vpop.f32.mrb[0].mxu0
  %v7127 = vadd.f32 %v7027, %v7126
  %v7128 = vpop.f32.mrb[0].mxu0
  %v7129 = vadd.f32 %v7029, %v7128
  %7130 = vmatprep.mubr.f32.mxu0 0.0
  %v7131 = vand.u32 %v108, 4294901760
  %v7132 = vsub.f32 %v108, %v7131
  %7133 = vmatmul.mubr.f32.gmra.mrb[0].mxu0 %v7132
  %v7134 = vpop.f32.mrb[0].mxu0
  %v7135 = vadd.f32 %v7034, %v7134
  %v7136 = vpop.f32.mrb[0].mxu0
  %v7137 = vadd.f32 %v7036, %v7136
  %7138 = vdwg.mxu0
  %v7139 = vand.u32 %v6210, 4294901760
  %7140 = vmatprep.subr.mxu0 %v7139
  %v7141 = vand.u32 %v6208, 4294901760
  %7142 = vmatpush1.msra.mxu0 %v7141
  %7143 = vmatprep.subr.mxu0 0.0
  %7144 = vmatpush1.msra.mxu0 0.0
  %7145 = vmatprep.subr.mxu0 0.0
  %7146 = vmatpush1.msra.mxu0 0.0
  %7147 = vmatprep.subr.mxu0 0.0
  %7148 = vmatpush1.msra.mxu0 0.0
  %7149 = vmatprep.subr.mxu0 0.0
  %7150 = vmatpush1.msra.mxu0 0.0
  %7151 = vmatprep.subr.mxu0 0.0
  %7152 = vmatpush1.msra.mxu0 0.0
  %7153 = vmatprep.subr.mxu0 0.0
  %7154 = vmatpush1.msra.mxu0 0.0
  %7155 = vmatprep.subr.mxu0 0.0
  %7156 = vmatpush1.msra.mxu0 0.0
  %7157 = vmatprep.subr.mxu0 0.0
  %7158 = vmatpush1.msra.mxu0 0.0
  %7159 = vmatprep.subr.mxu0 0.0
  %7160 = vmatpush1.msra.mxu0 0.0
  %7161 = vmatprep.subr.mxu0 0.0
  %7162 = vmatpush1.msra.mxu0 0.0
  %7163 = vmatprep.subr.mxu0 0.0
  %7164 = vmatpush1.msra.mxu0 0.0
  %7165 = vmatprep.subr.mxu0 0.0
  %7166 = vmatpush1.msra.mxu0 0.0
  %7167 = vmatprep.subr.mxu0 0.0
  %7168 = vmatpush1.msra.mxu0 0.0
  %7169 = vmatprep.subr.mxu0 0.0
  %7170 = vmatpush1.msra.mxu0 0.0
  %7171 = vmatprep.subr.mxu0 0.0
  %7172 = vmatpush1.msra.mxu0 0.0
  %7173 = vmatprep.subr.mxu0 0.0
  %7174 = vmatpush1.msra.mxu0 0.0
  %7175 = vmatprep.subr.mxu0 0.0
  %7176 = vmatpush1.msra.mxu0 0.0
  %7177 = vmatprep.subr.mxu0 0.0
  %7178 = vmatpush1.msra.mxu0 0.0
  %7179 = vmatprep.subr.mxu0 0.0
  %7180 = vmatpush1.msra.mxu0 0.0
  %7181 = vmatprep.subr.mxu0 0.0
  %7182 = vmatpush1.msra.mxu0 0.0
  %7183 = vmatprep.subr.mxu0 0.0
  %7184 = vmatpush1.msra.mxu0 0.0
  %7185 = vmatprep.subr.mxu0 0.0
  %7186 = vmatpush1.msra.mxu0 0.0
  %7187 = vmatprep.subr.mxu0 0.0
  %7188 = vmatpush1.msra.mxu0 0.0
  %7189 = vmatprep.subr.mxu0 0.0
  %7190 = vmatpush1.msra.mxu0 0.0
  %7191 = vmatprep.subr.mxu0 0.0
  %7192 = vmatpush1.msra.mxu0 0.0
  %7193 = vmatprep.subr.mxu0 0.0
  %7194 = vmatpush1.msra.mxu0 0.0
  %7195 = vmatprep.subr.mxu0 0.0
  %7196 = vmatpush1.msra.mxu0 0.0
  %7197 = vmatprep.subr.mxu0 0.0
  %7198 = vmatpush1.msra.mxu0 0.0
  %7199 = vmatprep.subr.mxu0 0.0
  %7200 = vmatpush1.msra.mxu0 0.0
  %7201 = vmatprep.subr.mxu0 0.0
  %7202 = vmatpush1.msra.mxu0 0.0
  %7203 = vmatprep.subr.mxu0 0.0
  %7204 = vmatpush1.msra.mxu0 0.0
  %7205 = vmatprep.mubr.f32.mxu0 0.0
  %v7206 = vand.u32 %v99, 4294901760
  %v7207 = vsub.f32 %v99, %v7206
  %v7208 = vand.u32 %v7207, 4294901760
  %7209 = vmatmul.mubr.f32.gmra.mrb[0].mxu0 %v7208
  %v7210 = vpop.f32.mrb[0].mxu0
  %v7211 = vadd.f32 %v7111, %v7210
  %v7212 = vpop.f32.mrb[0].mxu0
  %v7213 = vadd.f32 %v7113, %v7212
  %7214 = vmatprep.mubr.f32.mxu0 0.0
  %v7215 = vand.u32 %v102, 4294901760
  %v7216 = vsub.f32 %v102, %v7215
  %v7217 = vand.u32 %v7216, 4294901760
  %7218 = vmatmul.mubr.f32.gmra.mrb[0].mxu0 %v7217
  %v7219 = vpop.f32.mrb[0].mxu0
  %v7220 = vadd.f32 %v7119, %v7219
  %v7221 = vpop.f32.mrb[0].mxu0
  %v7222 = vadd.f32 %v7121, %v7221
  %7223 = vmatprep.mubr.f32.mxu0 0.0
  %v7224 = vand.u32 %v105, 4294901760
  %v7225 = vsub.f32 %v105, %v7224
  %v7226 = vand.u32 %v7225, 4294901760
  %7227 = vmatmul.mubr.f32.gmra.mrb[0].mxu0 %v7226
  %v7228 = vpop.f32.mrb[0].mxu0
  %v7229 = vadd.f32 %v7127, %v7228
  %v7230 = vpop.f32.mrb[0].mxu0
  %v7231 = vadd.f32 %v7129, %v7230
  %7232 = vmatprep.mubr.f32.mxu0 0.0
  %v7233 = vand.u32 %v108, 4294901760
  %v7234 = vsub.f32 %v108, %v7233
  %v7235 = vand.u32 %v7234, 4294901760
  %7236 = vmatmul.mubr.f32.gmra.mrb[0].mxu0 %v7235
  %v7237 = vpop.f32.mrb[0].mxu0
  %v7238 = vadd.f32 %v7135, %v7237
  %v7239 = vpop.f32.mrb[0].mxu0
  %v7240 = vadd.f32 %v7137, %v7239
  %7241 = vdwg.mxu0
  %v7242 = vand.u32 %v6210, 4294901760
  %v7243 = vsub.f32 %v6210, %v7242
  %v7244 = vand.u32 %v7243, 4294901760
  %7245 = vmatprep.subr.mxu0 %v7244
  %v7246 = vand.u32 %v6208, 4294901760
  %v7247 = vsub.f32 %v6208, %v7246
  %v7248 = vand.u32 %v7247, 4294901760
  %7249 = vmatpush1.msra.mxu0 %v7248
  %7250 = vmatprep.subr.mxu0 0.0
  %7251 = vmatpush1.msra.mxu0 0.0
  %7252 = vmatprep.subr.mxu0 0.0
  %7253 = vmatpush1.msra.mxu0 0.0
  %7254 = vmatprep.subr.mxu0 0.0
  %7255 = vmatpush1.msra.mxu0 0.0
  %7256 = vmatprep.subr.mxu0 0.0
  %7257 = vmatpush1.msra.mxu0 0.0
  %7258 = vmatprep.subr.mxu0 0.0
  %7259 = vmatpush1.msra.mxu0 0.0
  %7260 = vmatprep.subr.mxu0 0.0
  %7261 = vmatpush1.msra.mxu0 0.0
  %7262 = vmatprep.subr.mxu0 0.0
  %7263 = vmatpush1.msra.mxu0 0.0
  %7264 = vmatprep.subr.mxu0 0.0
  %7265 = vmatpush1.msra.mxu0 0.0
  %7266 = vmatprep.subr.mxu0 0.0
  %7267 = vmatpush1.msra.mxu0 0.0
  %7268 = vmatprep.subr.mxu0 0.0
  %7269 = vmatpush1.msra.mxu0 0.0
  %7270 = vmatprep.subr.mxu0 0.0
  %7271 = vmatpush1.msra.mxu0 0.0
  %7272 = vmatprep.subr.mxu0 0.0
  %7273 = vmatpush1.msra.mxu0 0.0
  %7274 = vmatprep.subr.mxu0 0.0
  %7275 = vmatpush1.msra.mxu0 0.0
  %7276 = vmatprep.subr.mxu0 0.0
  %7277 = vmatpush1.msra.mxu0 0.0
  %7278 = vmatprep.subr.mxu0 0.0
  %7279 = vmatpush1.msra.mxu0 0.0
  %7280 = vmatprep.subr.mxu0 0.0
  %7281 = vmatpush1.msra.mxu0 0.0
  %7282 = vmatprep.subr.mxu0 0.0
  %7283 = vmatpush1.msra.mxu0 0.0
  %7284 = vmatprep.subr.mxu0 0.0
  %7285 = vmatpush1.msra.mxu0 0.0
  %7286 = vmatprep.subr.mxu0 0.0
  %7287 = vmatpush1.msra.mxu0 0.0
  %7288 = vmatprep.subr.mxu0 0.0
  %7289 = vmatpush1.msra.mxu0 0.0
  %7290 = vmatprep.subr.mxu0 0.0
  %7291 = vmatpush1.msra.mxu0 0.0
  %7292 = vmatprep.subr.mxu0 0.0
  %7293 = vmatpush1.msra.mxu0 0.0
  %7294 = vmatprep.subr.mxu0 0.0
  %7295 = vmatpush1.msra.mxu0 0.0
  %7296 = vmatprep.subr.mxu0 0.0
  %7297 = vmatpush1.msra.mxu0 0.0
  %7298 = vmatprep.subr.mxu0 0.0
  %7299 = vmatpush1.msra.mxu0 0.0
  %7300 = vmatprep.subr.mxu0 0.0
  %7301 = vmatpush1.msra.mxu0 0.0
  %7302 = vmatprep.subr.mxu0 0.0
  %7303 = vmatpush1.msra.mxu0 0.0
  %7304 = vmatprep.subr.mxu0 0.0
  %7305 = vmatpush1.msra.mxu0 0.0
  %7306 = vmatprep.subr.mxu0 0.0
  %7307 = vmatpush1.msra.mxu0 0.0
  %7308 = vmatprep.subr.mxu0 0.0
  %7309 = vmatpush1.msra.mxu0 0.0
  %7310 = vmatprep.subr.mxu0 0.0
  %7311 = vmatpush1.msra.mxu0 0.0
  %7312 = vmatprep.mubr.f32.mxu0 0.0
  %v7313 = vand.u32 %v99, 4294901760
  %7314 = vmatmul.mubr.f32.gmra.mrb[0].mxu0 %v7313
  %v7315 = vpop.f32.mrb[0].mxu0
  %v7316 = vadd.f32 %v7211, %v7315
  %v7317 = vpop.f32.mrb[0].mxu0
  %v7318 = vadd.f32 %v7213, %v7317
  %7319 = vmatprep.mubr.f32.mxu0 0.0
  %v7320 = vand.u32 %v102, 4294901760
  %7321 = vmatmul.mubr.f32.gmra.mrb[0].mxu0 %v7320
  %v7322 = vpop.f32.mrb[0].mxu0
  %v7323 = vadd.f32 %v7220, %v7322
  %v7324 = vpop.f32.mrb[0].mxu0
  %v7325 = vadd.f32 %v7222, %v7324
  %7326 = vmatprep.mubr.f32.mxu0 0.0
  %v7327 = vand.u32 %v105, 4294901760
  %7328 = vmatmul.mubr.f32.gmra.mrb[0].mxu0 %v7327
  %v7329 = vpop.f32.mrb[0].mxu0
  %v7330 = vadd.f32 %v7229, %v7329
  %v7331 = vpop.f32.mrb[0].mxu0
  %v7332 = vadd.f32 %v7231, %v7331
  %7333 = vmatprep.mubr.f32.mxu0 0.0
  %v7334 = vand.u32 %v108, 4294901760
  %7335 = vmatmul.mubr.f32.gmra.mrb[0].mxu0 %v7334
  %v7336 = vpop.f32.mrb[0].mxu0
  %v7337 = vadd.f32 %v7238, %v7336
  %v7338 = vpop.f32.mrb[0].mxu0
  %v7339 = vadd.f32 %v7240, %v7338
  %7340 = vdwg.mxu0
  %v7341 = vand.u32 %v6210, 4294901760
  %7342 = vmatprep.subr.mxu0 %v7341
  %v7343 = vand.u32 %v6208, 4294901760
  %7344 = vmatpush1.msra.mxu0 %v7343
  %7345 = vmatprep.subr.mxu0 0.0
  %7346 = vmatpush1.msra.mxu0 0.0
  %7347 = vmatprep.subr.mxu0 0.0
  %7348 = vmatpush1.msra.mxu0 0.0
  %7349 = vmatprep.subr.mxu0 0.0
  %7350 = vmatpush1.msra.mxu0 0.0
  %7351 = vmatprep.subr.mxu0 0.0
  %7352 = vmatpush1.msra.mxu0 0.0
  %7353 = vmatprep.subr.mxu0 0.0
  %7354 = vmatpush1.msra.mxu0 0.0
  %7355 = vmatprep.subr.mxu0 0.0
  %7356 = vmatpush1.msra.mxu0 0.0
  %7357 = vmatprep.subr.mxu0 0.0
  %7358 = vmatpush1.msra.mxu0 0.0
  %7359 = vmatprep.subr.mxu0 0.0
  %7360 = vmatpush1.msra.mxu0 0.0
  %7361 = vmatprep.subr.mxu0 0.0
  %7362 = vmatpush1.msra.mxu0 0.0
  %7363 = vmatprep.subr.mxu0 0.0
  %7364 = vmatpush1.msra.mxu0 0.0
  %7365 = vmatprep.subr.mxu0 0.0
  %7366 = vmatpush1.msra.mxu0 0.0
  %7367 = vmatprep.subr.mxu0 0.0
  %7368 = vmatpush1.msra.mxu0 0.0
  %7369 = vmatprep.subr.mxu0 0.0
  %7370 = vmatpush1.msra.mxu0 0.0
  %7371 = vmatprep.subr.mxu0 0.0
  %7372 = vmatpush1.msra.mxu0 0.0
  %7373 = vmatprep.subr.mxu0 0.0
  %7374 = vmatpush1.msra.mxu0 0.0
  %7375 = vmatprep.subr.mxu0 0.0
  %7376 = vmatpush1.msra.mxu0 0.0
  %7377 = vmatprep.subr.mxu0 0.0
  %7378 = vmatpush1.msra.mxu0 0.0
  %7379 = vmatprep.subr.mxu0 0.0
  %7380 = vmatpush1.msra.mxu0 0.0
  %7381 = vmatprep.subr.mxu0 0.0
  %7382 = vmatpush1.msra.mxu0 0.0
  %7383 = vmatprep.subr.mxu0 0.0
  %7384 = vmatpush1.msra.mxu0 0.0
  %7385 = vmatprep.subr.mxu0 0.0
  %7386 = vmatpush1.msra.mxu0 0.0
  %7387 = vmatprep.subr.mxu0 0.0
  %7388 = vmatpush1.msra.mxu0 0.0
  %7389 = vmatprep.subr.mxu0 0.0
  %7390 = vmatpush1.msra.mxu0 0.0
  %7391 = vmatprep.subr.mxu0 0.0
  %7392 = vmatpush1.msra.mxu0 0.0
  %7393 = vmatprep.subr.mxu0 0.0
  %7394 = vmatpush1.msra.mxu0 0.0
  %7395 = vmatprep.subr.mxu0 0.0
  %7396 = vmatpush1.msra.mxu0 0.0
  %7397 = vmatprep.subr.mxu0 0.0
  %7398 = vmatpush1.msra.mxu0 0.0
  %7399 = vmatprep.subr.mxu0 0.0
  %7400 = vmatpush1.msra.mxu0 0.0
  %7401 = vmatprep.subr.mxu0 0.0
  %7402 = vmatpush1.msra.mxu0 0.0
  %7403 = vmatprep.subr.mxu0 0.0
  %7404 = vmatpush1.msra.mxu0 0.0
  %7405 = vmatprep.subr.mxu0 0.0
  %7406 = vmatpush1.msra.mxu0 0.0
  %7407 = vmatprep.mubr.f32.mxu0 0.0
  %v7408 = vand.u32 %v99, 4294901760
  %7409 = vmatmul.mubr.f32.gmra.mrb[0].mxu0 %v7408
  %v7410 = vpop.f32.mrb[0].mxu0
  %v7411 = vadd.f32 %v7316, %v7410
  %v7412 = vpop.f32.mrb[0].mxu0
  %v7413 = vadd.f32 %v7318, %v7412
  %7414 = vmatprep.mubr.f32.mxu0 0.0
  %v7415 = vand.u32 %v102, 4294901760
  %7416 = vmatmul.mubr.f32.gmra.mrb[0].mxu0 %v7415
  %v7417 = vpop.f32.mrb[0].mxu0
  %v7418 = vadd.f32 %v7323, %v7417
  %v7419 = vpop.f32.mrb[0].mxu0
  %v7420 = vadd.f32 %v7325, %v7419
  %7421 = vmatprep.mubr.f32.mxu0 0.0
  %v7422 = vand.u32 %v105, 4294901760
  %7423 = vmatmul.mubr.f32.gmra.mrb[0].mxu0 %v7422
  %v7424 = vpop.f32.mrb[0].mxu0
  %v7425 = vadd.f32 %v7330, %v7424
  %v7426 = vpop.f32.mrb[0].mxu0
  %v7427 = vadd.f32 %v7332, %v7426
  %7428 = vmatprep.mubr.f32.mxu0 0.0
  %v7429 = vand.u32 %v108, 4294901760
  %7430 = vmatmul.mubr.f32.gmra.mrb[0].mxu0 %v7429
  %v7431 = vpop.f32.mrb[0].mxu0
  %v7432 = vadd.f32 %v7337, %v7431
  %v7433 = vpop.f32.mrb[0].mxu0
  %v7434 = vadd.f32 %v7339, %v7433
  %7435 = vdwg.mxu0
  %v7436 = vmul.f32 %v6799, 0.31830987
  %v7437 = vmul.f32 %v6801, 0.31830987
  %v7438 = vmul.f32 %v7411, 0.31830987
  %v7439 = vmul.f32 %v7413, 0.31830987
  %v7440 = vmul.f32 %v6806, 0.31830987
  %v7441 = vmul.f32 %v6808, 0.31830987
  %v7442 = vmul.f32 %v7418, 0.31830987
  %v7443 = vmul.f32 %v7420, 0.31830987
  %v7444 = vmul.f32 %v6813, 0.31830987
  %v7445 = vmul.f32 %v6815, 0.31830987
  %v7446 = vmul.f32 %v7425, 0.31830987
  %v7447 = vmul.f32 %v7427, 0.31830987
  %v7448 = vmul.f32 %v6820, 0.31830987
  %v7449 = vmul.f32 %v6822, 0.31830987
  %v7450 = vmul.f32 %v7432, 0.31830987
  %v7451 = vmul.f32 %v7434, 0.31830987
  %v7452 = vround.ne.pseudo %v7436
  %v7453 = vround.ne.pseudo %v7437
  %v7454 = vround.ne.pseudo %v7438
  %v7455 = vround.ne.pseudo %v7439
  %v7456 = vround.ne.pseudo %v7440
  %v7457 = vround.ne.pseudo %v7441
  %v7458 = vround.ne.pseudo %v7442
  %v7459 = vround.ne.pseudo %v7443
  %v7460 = vround.ne.pseudo %v7444
  %v7461 = vround.ne.pseudo %v7445
  %v7462 = vround.ne.pseudo %v7446
  %v7463 = vround.ne.pseudo %v7447
  %v7464 = vround.ne.pseudo %v7448
  %v7465 = vround.ne.pseudo %v7449
  %v7466 = vround.ne.pseudo %v7450
  %v7467 = vround.ne.pseudo %v7451
  %v7468 = vmul.f32 %v7452, 3.140625
  %v7469 = vmul.f32 %v7453, 3.140625
  %v7470 = vmul.f32 %v7454, 3.140625
  %v7471 = vmul.f32 %v7455, 3.140625
  %v7472 = vmul.f32 %v7456, 3.140625
  %v7473 = vmul.f32 %v7457, 3.140625
  %v7474 = vmul.f32 %v7458, 3.140625
  %v7475 = vmul.f32 %v7459, 3.140625
  %v7476 = vmul.f32 %v7460, 3.140625
  %v7477 = vmul.f32 %v7461, 3.140625
  %v7478 = vmul.f32 %v7462, 3.140625
  %v7479 = vmul.f32 %v7463, 3.140625
  %v7480 = vmul.f32 %v7464, 3.140625
  %v7481 = vmul.f32 %v7465, 3.140625
  %v7482 = vmul.f32 %v7466, 3.140625
  %v7483 = vmul.f32 %v7467, 3.140625
  %v7484 = vsub.f32 %v6799, %v7468
  %v7485 = vsub.f32 %v6801, %v7469
  %v7486 = vsub.f32 %v7411, %v7470
  %v7487 = vsub.f32 %v7413, %v7471
  %v7488 = vsub.f32 %v6806, %v7472
  %v7489 = vsub.f32 %v6808, %v7473
  %v7490 = vsub.f32 %v7418, %v7474
  %v7491 = vsub.f32 %v7420, %v7475
  %v7492 = vsub.f32 %v6813, %v7476
  %v7493 = vsub.f32 %v6815, %v7477
  %v7494 = vsub.f32 %v7425, %v7478
  %v7495 = vsub.f32 %v7427, %v7479
  %v7496 = vsub.f32 %v6820, %v7480
  %v7497 = vsub.f32 %v6822, %v7481
  %v7498 = vsub.f32 %v7432, %v7482
  %v7499 = vsub.f32 %v7434, %v7483
  %v7500 = vmul.f32 %v7452, 0.0009676536
  %v7501 = vmul.f32 %v7453, 0.0009676536
  %v7502 = vmul.f32 %v7454, 0.0009676536
  %v7503 = vmul.f32 %v7455, 0.0009676536
  %v7504 = vmul.f32 %v7456, 0.0009676536
  %v7505 = vmul.f32 %v7457, 0.0009676536
  %v7506 = vmul.f32 %v7458, 0.0009676536
  %v7507 = vmul.f32 %v7459, 0.0009676536
  %v7508 = vmul.f32 %v7460, 0.0009676536
  %v7509 = vmul.f32 %v7461, 0.0009676536
  %v7510 = vmul.f32 %v7462, 0.0009676536
  %v7511 = vmul.f32 %v7463, 0.0009676536
  %v7512 = vmul.f32 %v7464, 0.0009676536
  %v7513 = vmul.f32 %v7465, 0.0009676536
  %v7514 = vmul.f32 %v7466, 0.0009676536
  %v7515 = vmul.f32 %v7467, 0.0009676536
  %v7516 = vsub.f32 %v7484, %v7500
  %v7517 = vsub.f32 %v7485, %v7501
  %v7518 = vsub.f32 %v7486, %v7502
  %v7519 = vsub.f32 %v7487, %v7503
  %v7520 = vsub.f32 %v7488, %v7504
  %v7521 = vsub.f32 %v7489, %v7505
  %v7522 = vsub.f32 %v7490, %v7506
  %v7523 = vsub.f32 %v7491, %v7507
  %v7524 = vsub.f32 %v7492, %v7508
  %v7525 = vsub.f32 %v7493, %v7509
  %v7526 = vsub.f32 %v7494, %v7510
  %v7527 = vsub.f32 %v7495, %v7511
  %v7528 = vsub.f32 %v7496, %v7512
  %v7529 = vsub.f32 %v7497, %v7513
  %v7530 = vsub.f32 %v7498, %v7514
  %v7531 = vsub.f32 %v7499, %v7515
  %v7532 = vmul.f32 %v7516, %v7516
  %v7533 = vmul.f32 %v7517, %v7517
  %v7534 = vmul.f32 %v7518, %v7518
  %v7535 = vmul.f32 %v7519, %v7519
  %v7536 = vmul.f32 %v7520, %v7520
  %v7537 = vmul.f32 %v7521, %v7521
  %v7538 = vmul.f32 %v7522, %v7522
  %v7539 = vmul.f32 %v7523, %v7523
  %v7540 = vmul.f32 %v7524, %v7524
  %v7541 = vmul.f32 %v7525, %v7525
  %v7542 = vmul.f32 %v7526, %v7526
  %v7543 = vmul.f32 %v7527, %v7527
  %v7544 = vmul.f32 %v7528, %v7528
  %v7545 = vmul.f32 %v7529, %v7529
  %v7546 = vmul.f32 %v7530, %v7530
  %v7547 = vmul.f32 %v7531, %v7531
  %v7548 = vmul.f32 %v7516, %v7532
  %v7549 = vmul.f32 %v7517, %v7533
  %v7550 = vmul.f32 %v7518, %v7534
  %v7551 = vmul.f32 %v7519, %v7535
  %v7552 = vmul.f32 %v7520, %v7536
  %v7553 = vmul.f32 %v7521, %v7537
  %v7554 = vmul.f32 %v7522, %v7538
  %v7555 = vmul.f32 %v7523, %v7539
  %v7556 = vmul.f32 %v7524, %v7540
  %v7557 = vmul.f32 %v7525, %v7541
  %v7558 = vmul.f32 %v7526, %v7542
  %v7559 = vmul.f32 %v7527, %v7543
  %v7560 = vmul.f32 %v7528, %v7544
  %v7561 = vmul.f32 %v7529, %v7545
  %v7562 = vmul.f32 %v7530, %v7546
  %v7563 = vmul.f32 %v7531, %v7547
  %v7564 = vmul.f32 %v7532, -0.00019515296
  %v7565 = vmul.f32 %v7533, -0.00019515296
  %v7566 = vmul.f32 %v7534, -0.00019515296
  %v7567 = vmul.f32 %v7535, -0.00019515296
  %v7568 = vmul.f32 %v7536, -0.00019515296
  %v7569 = vmul.f32 %v7537, -0.00019515296
  %v7570 = vmul.f32 %v7538, -0.00019515296
  %v7571 = vmul.f32 %v7539, -0.00019515296
  %v7572 = vmul.f32 %v7540, -0.00019515296
  %v7573 = vmul.f32 %v7541, -0.00019515296
  %v7574 = vmul.f32 %v7542, -0.00019515296
  %v7575 = vmul.f32 %v7543, -0.00019515296
  %v7576 = vmul.f32 %v7544, -0.00019515296
  %v7577 = vmul.f32 %v7545, -0.00019515296
  %v7578 = vmul.f32 %v7546, -0.00019515296
  %v7579 = vmul.f32 %v7547, -0.00019515296
  %v7580 = vadd.f32 %v7564, 0.008332161
  %v7581 = vadd.f32 %v7565, 0.008332161
  %v7582 = vadd.f32 %v7566, 0.008332161
  %v7583 = vadd.f32 %v7567, 0.008332161
  %v7584 = vadd.f32 %v7568, 0.008332161
  %v7585 = vadd.f32 %v7569, 0.008332161
  %v7586 = vadd.f32 %v7570, 0.008332161
  %v7587 = vadd.f32 %v7571, 0.008332161
  %v7588 = vadd.f32 %v7572, 0.008332161
  %v7589 = vadd.f32 %v7573, 0.008332161
  %v7590 = vadd.f32 %v7574, 0.008332161
  %v7591 = vadd.f32 %v7575, 0.008332161
  %v7592 = vadd.f32 %v7576, 0.008332161
  %v7593 = vadd.f32 %v7577, 0.008332161
  %v7594 = vadd.f32 %v7578, 0.008332161
  %v7595 = vadd.f32 %v7579, 0.008332161
  %v7596 = vmul.f32 %v7532, %v7580
  %v7597 = vmul.f32 %v7533, %v7581
  %v7598 = vmul.f32 %v7534, %v7582
  %v7599 = vmul.f32 %v7535, %v7583
  %v7600 = vmul.f32 %v7536, %v7584
  %v7601 = vmul.f32 %v7537, %v7585
  %v7602 = vmul.f32 %v7538, %v7586
  %v7603 = vmul.f32 %v7539, %v7587
  %v7604 = vmul.f32 %v7540, %v7588
  %v7605 = vmul.f32 %v7541, %v7589
  %v7606 = vmul.f32 %v7542, %v7590
  %v7607 = vmul.f32 %v7543, %v7591
  %v7608 = vmul.f32 %v7544, %v7592
  %v7609 = vmul.f32 %v7545, %v7593
  %v7610 = vmul.f32 %v7546, %v7594
  %v7611 = vmul.f32 %v7547, %v7595
  %v7612 = vadd.f32 %v7596, -0.16666655
  %v7613 = vadd.f32 %v7597, -0.16666655
  %v7614 = vadd.f32 %v7598, -0.16666655
  %v7615 = vadd.f32 %v7599, -0.16666655
  %v7616 = vadd.f32 %v7600, -0.16666655
  %v7617 = vadd.f32 %v7601, -0.16666655
  %v7618 = vadd.f32 %v7602, -0.16666655
  %v7619 = vadd.f32 %v7603, -0.16666655
  %v7620 = vadd.f32 %v7604, -0.16666655
  %v7621 = vadd.f32 %v7605, -0.16666655
  %v7622 = vadd.f32 %v7606, -0.16666655
  %v7623 = vadd.f32 %v7607, -0.16666655
  %v7624 = vadd.f32 %v7608, -0.16666655
  %v7625 = vadd.f32 %v7609, -0.16666655
  %v7626 = vadd.f32 %v7610, -0.16666655
  %v7627 = vadd.f32 %v7611, -0.16666655
  %v7628 = vmul.f32 %v7548, %v7612
  %v7629 = vmul.f32 %v7549, %v7613
  %v7630 = vmul.f32 %v7550, %v7614
  %v7631 = vmul.f32 %v7551, %v7615
  %v7632 = vmul.f32 %v7552, %v7616
  %v7633 = vmul.f32 %v7553, %v7617
  %v7634 = vmul.f32 %v7554, %v7618
  %v7635 = vmul.f32 %v7555, %v7619
  %v7636 = vmul.f32 %v7556, %v7620
  %v7637 = vmul.f32 %v7557, %v7621
  %v7638 = vmul.f32 %v7558, %v7622
  %v7639 = vmul.f32 %v7559, %v7623
  %v7640 = vmul.f32 %v7560, %v7624
  %v7641 = vmul.f32 %v7561, %v7625
  %v7642 = vmul.f32 %v7562, %v7626
  %v7643 = vmul.f32 %v7563, %v7627
  %v7644 = vadd.f32 %v7516, %v7628
  %v7645 = vadd.f32 %v7517, %v7629
  %v7646 = vadd.f32 %v7518, %v7630
  %v7647 = vadd.f32 %v7519, %v7631
  %v7648 = vadd.f32 %v7520, %v7632
  %v7649 = vadd.f32 %v7521, %v7633
  %v7650 = vadd.f32 %v7522, %v7634
  %v7651 = vadd.f32 %v7523, %v7635
  %v7652 = vadd.f32 %v7524, %v7636
  %v7653 = vadd.f32 %v7525, %v7637
  %v7654 = vadd.f32 %v7526, %v7638
  %v7655 = vadd.f32 %v7527, %v7639
  %v7656 = vadd.f32 %v7528, %v7640
  %v7657 = vadd.f32 %v7529, %v7641
  %v7658 = vadd.f32 %v7530, %v7642
  %v7659 = vadd.f32 %v7531, %v7643
  %v7660 = vcvt.f32.s32.ties.to.even %v7436
  %v7661 = vcvt.f32.s32.ties.to.even %v7437
  %v7662 = vcvt.f32.s32.ties.to.even %v7438
  %v7663 = vcvt.f32.s32.ties.to.even %v7439
  %v7664 = vcvt.f32.s32.ties.to.even %v7440
  %v7665 = vcvt.f32.s32.ties.to.even %v7441
  %v7666 = vcvt.f32.s32.ties.to.even %v7442
  %v7667 = vcvt.f32.s32.ties.to.even %v7443
  %v7668 = vcvt.f32.s32.ties.to.even %v7444
  %v7669 = vcvt.f32.s32.ties.to.even %v7445
  %v7670 = vcvt.f32.s32.ties.to.even %v7446
  %v7671 = vcvt.f32.s32.ties.to.even %v7447
  %v7672 = vcvt.f32.s32.ties.to.even %v7448
  %v7673 = vcvt.f32.s32.ties.to.even %v7449
  %v7674 = vcvt.f32.s32.ties.to.even %v7450
  %v7675 = vcvt.f32.s32.ties.to.even %v7451
  %v7676 = vand.u32 %v7660, 1
  %v7677 = vand.u32 %v7661, 1
  %v7678 = vand.u32 %v7662, 1
  %v7679 = vand.u32 %v7663, 1
  %v7680 = vand.u32 %v7664, 1
  %v7681 = vand.u32 %v7665, 1
  %v7682 = vand.u32 %v7666, 1
  %v7683 = vand.u32 %v7667, 1
  %v7684 = vand.u32 %v7668, 1
  %v7685 = vand.u32 %v7669, 1
  %v7686 = vand.u32 %v7670, 1
  %v7687 = vand.u32 %v7671, 1
  %v7688 = vand.u32 %v7672, 1
  %v7689 = vand.u32 %v7673, 1
  %v7690 = vand.u32 %v7674, 1
  %v7691 = vand.u32 %v7675, 1
  %vm7692 = vcmp.eq.s32.totalorder %v7676, 1
  %vm7693 = vcmp.eq.s32.totalorder %v7677, 1
  %vm7694 = vcmp.eq.s32.totalorder %v7678, 1
  %vm7695 = vcmp.eq.s32.totalorder %v7679, 1
  %vm7696 = vcmp.eq.s32.totalorder %v7680, 1
  %vm7697 = vcmp.eq.s32.totalorder %v7681, 1
  %vm7698 = vcmp.eq.s32.totalorder %v7682, 1
  %vm7699 = vcmp.eq.s32.totalorder %v7683, 1
  %vm7700 = vcmp.eq.s32.totalorder %v7684, 1
  %vm7701 = vcmp.eq.s32.totalorder %v7685, 1
  %vm7702 = vcmp.eq.s32.totalorder %v7686, 1
  %vm7703 = vcmp.eq.s32.totalorder %v7687, 1
  %vm7704 = vcmp.eq.s32.totalorder %v7688, 1
  %vm7705 = vcmp.eq.s32.totalorder %v7689, 1
  %vm7706 = vcmp.eq.s32.totalorder %v7690, 1
  %vm7707 = vcmp.eq.s32.totalorder %v7691, 1
  %v7708 = vsub.f32 0.0, %v7644
  %v7709 = vsub.f32 0.0, %v7645
  %v7710 = vsub.f32 0.0, %v7646
  %v7711 = vsub.f32 0.0, %v7647
  %v7712 = vsub.f32 0.0, %v7648
  %v7713 = vsub.f32 0.0, %v7649
  %v7714 = vsub.f32 0.0, %v7650
  %v7715 = vsub.f32 0.0, %v7651
  %v7716 = vsub.f32 0.0, %v7652
  %v7717 = vsub.f32 0.0, %v7653
  %v7718 = vsub.f32 0.0, %v7654
  %v7719 = vsub.f32 0.0, %v7655
  %v7720 = vsub.f32 0.0, %v7656
  %v7721 = vsub.f32 0.0, %v7657
  %v7722 = vsub.f32 0.0, %v7658
  %v7723 = vsub.f32 0.0, %v7659
  %v7724 = vsel %vm7692, %v7708, %v7644
  %v7725 = vsel %vm7693, %v7709, %v7645
  %v7726 = vsel %vm7694, %v7710, %v7646
  %v7727 = vsel %vm7695, %v7711, %v7647
  %v7728 = vsel %vm7696, %v7712, %v7648
  %v7729 = vsel %vm7697, %v7713, %v7649
  %v7730 = vsel %vm7698, %v7714, %v7650
  %v7731 = vsel %vm7699, %v7715, %v7651
  %v7732 = vsel %vm7700, %v7716, %v7652
  %v7733 = vsel %vm7701, %v7717, %v7653
  %v7734 = vsel %vm7702, %v7718, %v7654
  %v7735 = vsel %vm7703, %v7719, %v7655
  %v7736 = vsel %vm7704, %v7720, %v7656
  %v7737 = vsel %vm7705, %v7721, %v7657
  %v7738 = vsel %vm7706, %v7722, %v7658
  %v7739 = vsel %vm7707, %v7723, %v7659
  %v7740 = vand.u32 %v7725, 4294901760
  %7741 = vmatprep.subr.mxu0 %v7740
  %v7742 = vand.u32 %v7724, 4294901760
  %7743 = vmatpush1.msra.mxu0 %v7742
  %v7744 = vand.u32 %v7729, 4294901760
  %7745 = vmatprep.subr.mxu0 %v7744
  %v7746 = vand.u32 %v7728, 4294901760
  %7747 = vmatpush1.msra.mxu0 %v7746
  %v7748 = vand.u32 %v7733, 4294901760
  %7749 = vmatprep.subr.mxu0 %v7748
  %v7750 = vand.u32 %v7732, 4294901760
  %7751 = vmatpush1.msra.mxu0 %v7750
  %v7752 = vand.u32 %v7737, 4294901760
  %7753 = vmatprep.subr.mxu0 %v7752
  %v7754 = vand.u32 %v7736, 4294901760
  %7755 = vmatpush1.msra.mxu0 %v7754
  %7756 = vmatprep.subr.mxu0 0.0
  %7757 = vmatpush1.msra.mxu0 0.0
  %7758 = vmatprep.subr.mxu0 0.0
  %7759 = vmatpush1.msra.mxu0 0.0
  %7760 = vmatprep.subr.mxu0 0.0
  %7761 = vmatpush1.msra.mxu0 0.0
  %7762 = vmatprep.subr.mxu0 0.0
  %7763 = vmatpush1.msra.mxu0 0.0
  %7764 = vmatprep.subr.mxu0 0.0
  %7765 = vmatpush1.msra.mxu0 0.0
  %7766 = vmatprep.subr.mxu0 0.0
  %7767 = vmatpush1.msra.mxu0 0.0
  %7768 = vmatprep.subr.mxu0 0.0
  %7769 = vmatpush1.msra.mxu0 0.0
  %7770 = vmatprep.subr.mxu0 0.0
  %7771 = vmatpush1.msra.mxu0 0.0
  %7772 = vmatprep.subr.mxu0 0.0
  %7773 = vmatpush1.msra.mxu0 0.0
  %7774 = vmatprep.subr.mxu0 0.0
  %7775 = vmatpush1.msra.mxu0 0.0
  %7776 = vmatprep.subr.mxu0 0.0
  %7777 = vmatpush1.msra.mxu0 0.0
  %7778 = vmatprep.subr.mxu0 0.0
  %7779 = vmatpush1.msra.mxu0 0.0
  %7780 = vmatprep.subr.mxu0 0.0
  %7781 = vmatpush1.msra.mxu0 0.0
  %7782 = vmatprep.subr.mxu0 0.0
  %7783 = vmatpush1.msra.mxu0 0.0
  %7784 = vmatprep.subr.mxu0 0.0
  %7785 = vmatpush1.msra.mxu0 0.0
  %7786 = vmatprep.subr.mxu0 0.0
  %7787 = vmatpush1.msra.mxu0 0.0
  %7788 = vmatprep.subr.mxu0 0.0
  %7789 = vmatpush1.msra.mxu0 0.0
  %7790 = vmatprep.subr.mxu0 0.0
  %7791 = vmatpush1.msra.mxu0 0.0
  %7792 = vmatprep.subr.mxu0 0.0
  %7793 = vmatpush1.msra.mxu0 0.0
  %7794 = vmatprep.subr.mxu0 0.0
  %7795 = vmatpush1.msra.mxu0 0.0
  %7796 = vmatprep.subr.mxu0 0.0
  %7797 = vmatpush1.msra.mxu0 0.0
  %7798 = vmatprep.subr.mxu0 0.0
  %7799 = vmatpush1.msra.mxu0 0.0
  %7800 = vmatprep.subr.mxu0 0.0
  %7801 = vmatpush1.msra.mxu0 0.0
  %7802 = vmatprep.subr.mxu0 0.0
  %7803 = vmatpush1.msra.mxu0 0.0
  %7804 = vmatprep.subr.mxu0 0.0
  %7805 = vmatpush1.msra.mxu0 0.0
  %7806 = vmatprep.subr.mxu0 0.0
  %7807 = vmatpush1.msra.mxu0 0.0
  %7808 = vmatprep.subr.mxu0 0.0
  %7809 = vmatpush1.msra.mxu0 0.0
  %7810 = vmatprep.subr.mxu0 0.0
  %7811 = vmatpush1.msra.mxu0 0.0
  %7812 = vmatprep.mubr.f32.mxu0 0.0
  %v7813 = vand.u32 %v1669, 4294901760
  %v7814 = vsub.f32 %v1669, %v7813
  %v7815 = vand.u32 %v7814, 4294901760
  %v7816 = vsub.f32 %v7814, %v7815
  %v7817 = vand.u32 %v7816, 4294901760
  %7818 = vmatmul.mubr.f32.gmra.mrb[0].mxu0 %v7817
  %v7819 = vpop.f32.mrb[0].mxu0
  %v7820 = vadd.f32 %v1650, %v7819
  %v7821 = vpop.f32.mrb[0].mxu0
  %v7822 = vadd.f32 %v1650, %v7821
  %7823 = vmatprep.mubr.f32.mxu0 0.0
  %v7824 = vand.u32 %v1672, 4294901760
  %v7825 = vsub.f32 %v1672, %v7824
  %v7826 = vand.u32 %v7825, 4294901760
  %v7827 = vsub.f32 %v7825, %v7826
  %v7828 = vand.u32 %v7827, 4294901760
  %7829 = vmatmul.mubr.f32.gmra.mrb[0].mxu0 %v7828
  %v7830 = vpop.f32.mrb[0].mxu0
  %v7831 = vadd.f32 %v1655, %v7830
  %v7832 = vpop.f32.mrb[0].mxu0
  %v7833 = vadd.f32 %v1655, %v7832
  %7834 = vmatprep.mubr.f32.mxu0 0.0
  %v7835 = vand.u32 %v1675, 4294901760
  %v7836 = vsub.f32 %v1675, %v7835
  %v7837 = vand.u32 %v7836, 4294901760
  %v7838 = vsub.f32 %v7836, %v7837
  %v7839 = vand.u32 %v7838, 4294901760
  %7840 = vmatmul.mubr.f32.gmra.mrb[0].mxu0 %v7839
  %v7841 = vpop.f32.mrb[0].mxu0
  %v7842 = vadd.f32 %v1660, %v7841
  %v7843 = vpop.f32.mrb[0].mxu0
  %v7844 = vadd.f32 %v1660, %v7843
  %7845 = vmatprep.mubr.f32.mxu0 0.0
  %v7846 = vand.u32 %v1678, 4294901760
  %v7847 = vsub.f32 %v1678, %v7846
  %v7848 = vand.u32 %v7847, 4294901760
  %v7849 = vsub.f32 %v7847, %v7848
  %v7850 = vand.u32 %v7849, 4294901760
  %7851 = vmatmul.mubr.f32.gmra.mrb[0].mxu0 %v7850
  %v7852 = vpop.f32.mrb[0].mxu0
  %v7853 = vadd.f32 %v1665, %v7852
  %v7854 = vpop.f32.mrb[0].mxu0
  %v7855 = vadd.f32 %v1665, %v7854
  %7856 = vdwg.mxu0
  %v7857 = vand.u32 %v7725, 4294901760
  %v7858 = vsub.f32 %v7725, %v7857
  %v7859 = vand.u32 %v7858, 4294901760
  %v7860 = vsub.f32 %v7858, %v7859
  %v7861 = vand.u32 %v7860, 4294901760
  %7862 = vmatprep.subr.mxu0 %v7861
  %v7863 = vand.u32 %v7724, 4294901760
  %v7864 = vsub.f32 %v7724, %v7863
  %v7865 = vand.u32 %v7864, 4294901760
  %v7866 = vsub.f32 %v7864, %v7865
  %v7867 = vand.u32 %v7866, 4294901760
  %7868 = vmatpush1.msra.mxu0 %v7867
  %v7869 = vand.u32 %v7729, 4294901760
  %v7870 = vsub.f32 %v7729, %v7869
  %v7871 = vand.u32 %v7870, 4294901760
  %v7872 = vsub.f32 %v7870, %v7871
  %v7873 = vand.u32 %v7872, 4294901760
  %7874 = vmatprep.subr.mxu0 %v7873
  %v7875 = vand.u32 %v7728, 4294901760
  %v7876 = vsub.f32 %v7728, %v7875
  %v7877 = vand.u32 %v7876, 4294901760
  %v7878 = vsub.f32 %v7876, %v7877
  %v7879 = vand.u32 %v7878, 4294901760
  %7880 = vmatpush1.msra.mxu0 %v7879
  %v7881 = vand.u32 %v7733, 4294901760
  %v7882 = vsub.f32 %v7733, %v7881
  %v7883 = vand.u32 %v7882, 4294901760
  %v7884 = vsub.f32 %v7882, %v7883
  %v7885 = vand.u32 %v7884, 4294901760
  %7886 = vmatprep.subr.mxu0 %v7885
  %v7887 = vand.u32 %v7732, 4294901760
  %v7888 = vsub.f32 %v7732, %v7887
  %v7889 = vand.u32 %v7888, 4294901760
  %v7890 = vsub.f32 %v7888, %v7889
  %v7891 = vand.u32 %v7890, 4294901760
  %7892 = vmatpush1.msra.mxu0 %v7891
  %v7893 = vand.u32 %v7737, 4294901760
  %v7894 = vsub.f32 %v7737, %v7893
  %v7895 = vand.u32 %v7894, 4294901760
  %v7896 = vsub.f32 %v7894, %v7895
  %v7897 = vand.u32 %v7896, 4294901760
  %7898 = vmatprep.subr.mxu0 %v7897
  %v7899 = vand.u32 %v7736, 4294901760
  %v7900 = vsub.f32 %v7736, %v7899
  %v7901 = vand.u32 %v7900, 4294901760
  %v7902 = vsub.f32 %v7900, %v7901
  %v7903 = vand.u32 %v7902, 4294901760
  %7904 = vmatpush1.msra.mxu0 %v7903
  %7905 = vmatprep.subr.mxu0 0.0
  %7906 = vmatpush1.msra.mxu0 0.0
  %7907 = vmatprep.subr.mxu0 0.0
  %7908 = vmatpush1.msra.mxu0 0.0
  %7909 = vmatprep.subr.mxu0 0.0
  %7910 = vmatpush1.msra.mxu0 0.0
  %7911 = vmatprep.subr.mxu0 0.0
  %7912 = vmatpush1.msra.mxu0 0.0
  %7913 = vmatprep.subr.mxu0 0.0
  %7914 = vmatpush1.msra.mxu0 0.0
  %7915 = vmatprep.subr.mxu0 0.0
  %7916 = vmatpush1.msra.mxu0 0.0
  %7917 = vmatprep.subr.mxu0 0.0
  %7918 = vmatpush1.msra.mxu0 0.0
  %7919 = vmatprep.subr.mxu0 0.0
  %7920 = vmatpush1.msra.mxu0 0.0
  %7921 = vmatprep.subr.mxu0 0.0
  %7922 = vmatpush1.msra.mxu0 0.0
  %7923 = vmatprep.subr.mxu0 0.0
  %7924 = vmatpush1.msra.mxu0 0.0
  %7925 = vmatprep.subr.mxu0 0.0
  %7926 = vmatpush1.msra.mxu0 0.0
  %7927 = vmatprep.subr.mxu0 0.0
  %7928 = vmatpush1.msra.mxu0 0.0
  %7929 = vmatprep.subr.mxu0 0.0
  %7930 = vmatpush1.msra.mxu0 0.0
  %7931 = vmatprep.subr.mxu0 0.0
  %7932 = vmatpush1.msra.mxu0 0.0
  %7933 = vmatprep.subr.mxu0 0.0
  %7934 = vmatpush1.msra.mxu0 0.0
  %7935 = vmatprep.subr.mxu0 0.0
  %7936 = vmatpush1.msra.mxu0 0.0
  %7937 = vmatprep.subr.mxu0 0.0
  %7938 = vmatpush1.msra.mxu0 0.0
  %7939 = vmatprep.subr.mxu0 0.0
  %7940 = vmatpush1.msra.mxu0 0.0
  %7941 = vmatprep.subr.mxu0 0.0
  %7942 = vmatpush1.msra.mxu0 0.0
  %7943 = vmatprep.subr.mxu0 0.0
  %7944 = vmatpush1.msra.mxu0 0.0
  %7945 = vmatprep.subr.mxu0 0.0
  %7946 = vmatpush1.msra.mxu0 0.0
  %7947 = vmatprep.subr.mxu0 0.0
  %7948 = vmatpush1.msra.mxu0 0.0
  %7949 = vmatprep.subr.mxu0 0.0
  %7950 = vmatpush1.msra.mxu0 0.0
  %7951 = vmatprep.subr.mxu0 0.0
  %7952 = vmatpush1.msra.mxu0 0.0
  %7953 = vmatprep.subr.mxu0 0.0
  %7954 = vmatpush1.msra.mxu0 0.0
  %7955 = vmatprep.subr.mxu0 0.0
  %7956 = vmatpush1.msra.mxu0 0.0
  %7957 = vmatprep.subr.mxu0 0.0
  %7958 = vmatpush1.msra.mxu0 0.0
  %7959 = vmatprep.subr.mxu0 0.0
  %7960 = vmatpush1.msra.mxu0 0.0
  %7961 = vmatprep.mubr.f32.mxu0 0.0
  %v7962 = vand.u32 %v1669, 4294901760
  %7963 = vmatmul.mubr.f32.gmra.mrb[0].mxu0 %v7962
  %v7964 = vpop.f32.mrb[0].mxu0
  %v7965 = vadd.f32 %v7820, %v7964
  %v7966 = vpop.f32.mrb[0].mxu0
  %v7967 = vadd.f32 %v7822, %v7966
  %7968 = vmatprep.mubr.f32.mxu0 0.0
  %v7969 = vand.u32 %v1672, 4294901760
  %7970 = vmatmul.mubr.f32.gmra.mrb[0].mxu0 %v7969
  %v7971 = vpop.f32.mrb[0].mxu0
  %v7972 = vadd.f32 %v7831, %v7971
  %v7973 = vpop.f32.mrb[0].mxu0
  %v7974 = vadd.f32 %v7833, %v7973
  %7975 = vmatprep.mubr.f32.mxu0 0.0
  %v7976 = vand.u32 %v1675, 4294901760
  %7977 = vmatmul.mubr.f32.gmra.mrb[0].mxu0 %v7976
  %v7978 = vpop.f32.mrb[0].mxu0
  %v7979 = vadd.f32 %v7842, %v7978
  %v7980 = vpop.f32.mrb[0].mxu0
  %v7981 = vadd.f32 %v7844, %v7980
  %7982 = vmatprep.mubr.f32.mxu0 0.0
  %v7983 = vand.u32 %v1678, 4294901760
  %7984 = vmatmul.mubr.f32.gmra.mrb[0].mxu0 %v7983
  %v7985 = vpop.f32.mrb[0].mxu0
  %v7986 = vadd.f32 %v7853, %v7985
  %v7987 = vpop.f32.mrb[0].mxu0
  %v7988 = vadd.f32 %v7855, %v7987
  %7989 = vdwg.mxu0
  %v7990 = vand.u32 %v7725, 4294901760
  %v7991 = vsub.f32 %v7725, %v7990
  %7992 = vmatprep.subr.mxu0 %v7991
  %v7993 = vand.u32 %v7724, 4294901760
  %v7994 = vsub.f32 %v7724, %v7993
  %7995 = vmatpush1.msra.mxu0 %v7994
  %v7996 = vand.u32 %v7729, 4294901760
  %v7997 = vsub.f32 %v7729, %v7996
  %7998 = vmatprep.subr.mxu0 %v7997
  %v7999 = vand.u32 %v7728, 4294901760
  %v8000 = vsub.f32 %v7728, %v7999
  %8001 = vmatpush1.msra.mxu0 %v8000
  %v8002 = vand.u32 %v7733, 4294901760
  %v8003 = vsub.f32 %v7733, %v8002
  %8004 = vmatprep.subr.mxu0 %v8003
  %v8005 = vand.u32 %v7732, 4294901760
  %v8006 = vsub.f32 %v7732, %v8005
  %8007 = vmatpush1.msra.mxu0 %v8006
  %v8008 = vand.u32 %v7737, 4294901760
  %v8009 = vsub.f32 %v7737, %v8008
  %8010 = vmatprep.subr.mxu0 %v8009
  %v8011 = vand.u32 %v7736, 4294901760
  %v8012 = vsub.f32 %v7736, %v8011
  %8013 = vmatpush1.msra.mxu0 %v8012
  %8014 = vmatprep.subr.mxu0 0.0
  %8015 = vmatpush1.msra.mxu0 0.0
  %8016 = vmatprep.subr.mxu0 0.0
  %8017 = vmatpush1.msra.mxu0 0.0
  %8018 = vmatprep.subr.mxu0 0.0
  %8019 = vmatpush1.msra.mxu0 0.0
  %8020 = vmatprep.subr.mxu0 0.0
  %8021 = vmatpush1.msra.mxu0 0.0
  %8022 = vmatprep.subr.mxu0 0.0
  %8023 = vmatpush1.msra.mxu0 0.0
  %8024 = vmatprep.subr.mxu0 0.0
  %8025 = vmatpush1.msra.mxu0 0.0
  %8026 = vmatprep.subr.mxu0 0.0
  %8027 = vmatpush1.msra.mxu0 0.0
  %8028 = vmatprep.subr.mxu0 0.0
  %8029 = vmatpush1.msra.mxu0 0.0
  %8030 = vmatprep.subr.mxu0 0.0
  %8031 = vmatpush1.msra.mxu0 0.0
  %8032 = vmatprep.subr.mxu0 0.0
  %8033 = vmatpush1.msra.mxu0 0.0
  %8034 = vmatprep.subr.mxu0 0.0
  %8035 = vmatpush1.msra.mxu0 0.0
  %8036 = vmatprep.subr.mxu0 0.0
  %8037 = vmatpush1.msra.mxu0 0.0
  %8038 = vmatprep.subr.mxu0 0.0
  %8039 = vmatpush1.msra.mxu0 0.0
  %8040 = vmatprep.subr.mxu0 0.0
  %8041 = vmatpush1.msra.mxu0 0.0
  %8042 = vmatprep.subr.mxu0 0.0
  %8043 = vmatpush1.msra.mxu0 0.0
  %8044 = vmatprep.subr.mxu0 0.0
  %8045 = vmatpush1.msra.mxu0 0.0
  %8046 = vmatprep.subr.mxu0 0.0
  %8047 = vmatpush1.msra.mxu0 0.0
  %8048 = vmatprep.subr.mxu0 0.0
  %8049 = vmatpush1.msra.mxu0 0.0
  %8050 = vmatprep.subr.mxu0 0.0
  %8051 = vmatpush1.msra.mxu0 0.0
  %8052 = vmatprep.subr.mxu0 0.0
  %8053 = vmatpush1.msra.mxu0 0.0
  %8054 = vmatprep.subr.mxu0 0.0
  %8055 = vmatpush1.msra.mxu0 0.0
  %8056 = vmatprep.subr.mxu0 0.0
  %8057 = vmatpush1.msra.mxu0 0.0
  %8058 = vmatprep.subr.mxu0 0.0
  %8059 = vmatpush1.msra.mxu0 0.0
  %8060 = vmatprep.subr.mxu0 0.0
  %8061 = vmatpush1.msra.mxu0 0.0
  %8062 = vmatprep.subr.mxu0 0.0
  %8063 = vmatpush1.msra.mxu0 0.0
  %8064 = vmatprep.subr.mxu0 0.0
  %8065 = vmatpush1.msra.mxu0 0.0
  %8066 = vmatprep.subr.mxu0 0.0
  %8067 = vmatpush1.msra.mxu0 0.0
  %8068 = vmatprep.subr.mxu0 0.0
  %8069 = vmatpush1.msra.mxu0 0.0
  %8070 = vmatprep.mubr.f32.mxu0 0.0
  %v8071 = vand.u32 %v1669, 4294901760
  %v8072 = vsub.f32 %v1669, %v8071
  %8073 = vmatmul.mubr.f32.gmra.mrb[0].mxu0 %v8072
  %v8074 = vpop.f32.mrb[0].mxu0
  %v8075 = vadd.f32 %v7965, %v8074
  %v8076 = vpop.f32.mrb[0].mxu0
  %v8077 = vadd.f32 %v7967, %v8076
  %8078 = vmatprep.mubr.f32.mxu0 0.0
  %v8079 = vand.u32 %v1672, 4294901760
  %v8080 = vsub.f32 %v1672, %v8079
  %8081 = vmatmul.mubr.f32.gmra.mrb[0].mxu0 %v8080
  %v8082 = vpop.f32.mrb[0].mxu0
  %v8083 = vadd.f32 %v7972, %v8082
  %v8084 = vpop.f32.mrb[0].mxu0
  %v8085 = vadd.f32 %v7974, %v8084
  %8086 = vmatprep.mubr.f32.mxu0 0.0
  %v8087 = vand.u32 %v1675, 4294901760
  %v8088 = vsub.f32 %v1675, %v8087
  %8089 = vmatmul.mubr.f32.gmra.mrb[0].mxu0 %v8088
  %v8090 = vpop.f32.mrb[0].mxu0
  %v8091 = vadd.f32 %v7979, %v8090
  %v8092 = vpop.f32.mrb[0].mxu0
  %v8093 = vadd.f32 %v7981, %v8092
  %8094 = vmatprep.mubr.f32.mxu0 0.0
  %v8095 = vand.u32 %v1678, 4294901760
  %v8096 = vsub.f32 %v1678, %v8095
  %8097 = vmatmul.mubr.f32.gmra.mrb[0].mxu0 %v8096
  %v8098 = vpop.f32.mrb[0].mxu0
  %v8099 = vadd.f32 %v7986, %v8098
  %v8100 = vpop.f32.mrb[0].mxu0
  %v8101 = vadd.f32 %v7988, %v8100
  %8102 = vdwg.mxu0
  %v8103 = vand.u32 %v7725, 4294901760
  %8104 = vmatprep.subr.mxu0 %v8103
  %v8105 = vand.u32 %v7724, 4294901760
  %8106 = vmatpush1.msra.mxu0 %v8105
  %v8107 = vand.u32 %v7729, 4294901760
  %8108 = vmatprep.subr.mxu0 %v8107
  %v8109 = vand.u32 %v7728, 4294901760
  %8110 = vmatpush1.msra.mxu0 %v8109
  %v8111 = vand.u32 %v7733, 4294901760
  %8112 = vmatprep.subr.mxu0 %v8111
  %v8113 = vand.u32 %v7732, 4294901760
  %8114 = vmatpush1.msra.mxu0 %v8113
  %v8115 = vand.u32 %v7737, 4294901760
  %8116 = vmatprep.subr.mxu0 %v8115
  %v8117 = vand.u32 %v7736, 4294901760
  %8118 = vmatpush1.msra.mxu0 %v8117
  %8119 = vmatprep.subr.mxu0 0.0
  %8120 = vmatpush1.msra.mxu0 0.0
  %8121 = vmatprep.subr.mxu0 0.0
  %8122 = vmatpush1.msra.mxu0 0.0
  %8123 = vmatprep.subr.mxu0 0.0
  %8124 = vmatpush1.msra.mxu0 0.0
  %8125 = vmatprep.subr.mxu0 0.0
  %8126 = vmatpush1.msra.mxu0 0.0
  %8127 = vmatprep.subr.mxu0 0.0
  %8128 = vmatpush1.msra.mxu0 0.0
  %8129 = vmatprep.subr.mxu0 0.0
  %8130 = vmatpush1.msra.mxu0 0.0
  %8131 = vmatprep.subr.mxu0 0.0
  %8132 = vmatpush1.msra.mxu0 0.0
  %8133 = vmatprep.subr.mxu0 0.0
  %8134 = vmatpush1.msra.mxu0 0.0
  %8135 = vmatprep.subr.mxu0 0.0
  %8136 = vmatpush1.msra.mxu0 0.0
  %8137 = vmatprep.subr.mxu0 0.0
  %8138 = vmatpush1.msra.mxu0 0.0
  %8139 = vmatprep.subr.mxu0 0.0
  %8140 = vmatpush1.msra.mxu0 0.0
  %8141 = vmatprep.subr.mxu0 0.0
  %8142 = vmatpush1.msra.mxu0 0.0
  %8143 = vmatprep.subr.mxu0 0.0
  %8144 = vmatpush1.msra.mxu0 0.0
  %8145 = vmatprep.subr.mxu0 0.0
  %8146 = vmatpush1.msra.mxu0 0.0
  %8147 = vmatprep.subr.mxu0 0.0
  %8148 = vmatpush1.msra.mxu0 0.0
  %8149 = vmatprep.subr.mxu0 0.0
  %8150 = vmatpush1.msra.mxu0 0.0
  %8151 = vmatprep.subr.mxu0 0.0
  %8152 = vmatpush1.msra.mxu0 0.0
  %8153 = vmatprep.subr.mxu0 0.0
  %8154 = vmatpush1.msra.mxu0 0.0
  %8155 = vmatprep.subr.mxu0 0.0
  %8156 = vmatpush1.msra.mxu0 0.0
  %8157 = vmatprep.subr.mxu0 0.0
  %8158 = vmatpush1.msra.mxu0 0.0
  %8159 = vmatprep.subr.mxu0 0.0
  %8160 = vmatpush1.msra.mxu0 0.0
  %8161 = vmatprep.subr.mxu0 0.0
  %8162 = vmatpush1.msra.mxu0 0.0
  %8163 = vmatprep.subr.mxu0 0.0
  %8164 = vmatpush1.msra.mxu0 0.0
  %8165 = vmatprep.subr.mxu0 0.0
  %8166 = vmatpush1.msra.mxu0 0.0
  %8167 = vmatprep.subr.mxu0 0.0
  %8168 = vmatpush1.msra.mxu0 0.0
  %8169 = vmatprep.subr.mxu0 0.0
  %8170 = vmatpush1.msra.mxu0 0.0
  %8171 = vmatprep.subr.mxu0 0.0
  %8172 = vmatpush1.msra.mxu0 0.0
  %8173 = vmatprep.subr.mxu0 0.0
  %8174 = vmatpush1.msra.mxu0 0.0
  %8175 = vmatprep.mubr.f32.mxu0 0.0
  %v8176 = vand.u32 %v1669, 4294901760
  %v8177 = vsub.f32 %v1669, %v8176
  %v8178 = vand.u32 %v8177, 4294901760
  %8179 = vmatmul.mubr.f32.gmra.mrb[0].mxu0 %v8178
  %v8180 = vpop.f32.mrb[0].mxu0
  %v8181 = vadd.f32 %v8075, %v8180
  %v8182 = vpop.f32.mrb[0].mxu0
  %v8183 = vadd.f32 %v8077, %v8182
  %8184 = vmatprep.mubr.f32.mxu0 0.0
  %v8185 = vand.u32 %v1672, 4294901760
  %v8186 = vsub.f32 %v1672, %v8185
  %v8187 = vand.u32 %v8186, 4294901760
  %8188 = vmatmul.mubr.f32.gmra.mrb[0].mxu0 %v8187
  %v8189 = vpop.f32.mrb[0].mxu0
  %v8190 = vadd.f32 %v8083, %v8189
  %v8191 = vpop.f32.mrb[0].mxu0
  %v8192 = vadd.f32 %v8085, %v8191
  %8193 = vmatprep.mubr.f32.mxu0 0.0
  %v8194 = vand.u32 %v1675, 4294901760
  %v8195 = vsub.f32 %v1675, %v8194
  %v8196 = vand.u32 %v8195, 4294901760
  %8197 = vmatmul.mubr.f32.gmra.mrb[0].mxu0 %v8196
  %v8198 = vpop.f32.mrb[0].mxu0
  %v8199 = vadd.f32 %v8091, %v8198
  %v8200 = vpop.f32.mrb[0].mxu0
  %v8201 = vadd.f32 %v8093, %v8200
  %8202 = vmatprep.mubr.f32.mxu0 0.0
  %v8203 = vand.u32 %v1678, 4294901760
  %v8204 = vsub.f32 %v1678, %v8203
  %v8205 = vand.u32 %v8204, 4294901760
  %8206 = vmatmul.mubr.f32.gmra.mrb[0].mxu0 %v8205
  %v8207 = vpop.f32.mrb[0].mxu0
  %v8208 = vadd.f32 %v8099, %v8207
  %v8209 = vpop.f32.mrb[0].mxu0
  %v8210 = vadd.f32 %v8101, %v8209
  %8211 = vdwg.mxu0
  %v8212 = vand.u32 %v7725, 4294901760
  %v8213 = vsub.f32 %v7725, %v8212
  %v8214 = vand.u32 %v8213, 4294901760
  %8215 = vmatprep.subr.mxu0 %v8214
  %v8216 = vand.u32 %v7724, 4294901760
  %v8217 = vsub.f32 %v7724, %v8216
  %v8218 = vand.u32 %v8217, 4294901760
  %8219 = vmatpush1.msra.mxu0 %v8218
  %v8220 = vand.u32 %v7729, 4294901760
  %v8221 = vsub.f32 %v7729, %v8220
  %v8222 = vand.u32 %v8221, 4294901760
  %8223 = vmatprep.subr.mxu0 %v8222
  %v8224 = vand.u32 %v7728, 4294901760
  %v8225 = vsub.f32 %v7728, %v8224
  %v8226 = vand.u32 %v8225, 4294901760
  %8227 = vmatpush1.msra.mxu0 %v8226
  %v8228 = vand.u32 %v7733, 4294901760
  %v8229 = vsub.f32 %v7733, %v8228
  %v8230 = vand.u32 %v8229, 4294901760
  %8231 = vmatprep.subr.mxu0 %v8230
  %v8232 = vand.u32 %v7732, 4294901760
  %v8233 = vsub.f32 %v7732, %v8232
  %v8234 = vand.u32 %v8233, 4294901760
  %8235 = vmatpush1.msra.mxu0 %v8234
  %v8236 = vand.u32 %v7737, 4294901760
  %v8237 = vsub.f32 %v7737, %v8236
  %v8238 = vand.u32 %v8237, 4294901760
  %8239 = vmatprep.subr.mxu0 %v8238
  %v8240 = vand.u32 %v7736, 4294901760
  %v8241 = vsub.f32 %v7736, %v8240
  %v8242 = vand.u32 %v8241, 4294901760
  %8243 = vmatpush1.msra.mxu0 %v8242
  %8244 = vmatprep.subr.mxu0 0.0
  %8245 = vmatpush1.msra.mxu0 0.0
  %8246 = vmatprep.subr.mxu0 0.0
  %8247 = vmatpush1.msra.mxu0 0.0
  %8248 = vmatprep.subr.mxu0 0.0
  %8249 = vmatpush1.msra.mxu0 0.0
  %8250 = vmatprep.subr.mxu0 0.0
  %8251 = vmatpush1.msra.mxu0 0.0
  %8252 = vmatprep.subr.mxu0 0.0
  %8253 = vmatpush1.msra.mxu0 0.0
  %8254 = vmatprep.subr.mxu0 0.0
  %8255 = vmatpush1.msra.mxu0 0.0
  %8256 = vmatprep.subr.mxu0 0.0
  %8257 = vmatpush1.msra.mxu0 0.0
  %8258 = vmatprep.subr.mxu0 0.0
  %8259 = vmatpush1.msra.mxu0 0.0
  %8260 = vmatprep.subr.mxu0 0.0
  %8261 = vmatpush1.msra.mxu0 0.0
  %8262 = vmatprep.subr.mxu0 0.0
  %8263 = vmatpush1.msra.mxu0 0.0
  %8264 = vmatprep.subr.mxu0 0.0
  %8265 = vmatpush1.msra.mxu0 0.0
  %8266 = vmatprep.subr.mxu0 0.0
  %8267 = vmatpush1.msra.mxu0 0.0
  %8268 = vmatprep.subr.mxu0 0.0
  %8269 = vmatpush1.msra.mxu0 0.0
  %8270 = vmatprep.subr.mxu0 0.0
  %8271 = vmatpush1.msra.mxu0 0.0
  %8272 = vmatprep.subr.mxu0 0.0
  %8273 = vmatpush1.msra.mxu0 0.0
  %8274 = vmatprep.subr.mxu0 0.0
  %8275 = vmatpush1.msra.mxu0 0.0
  %8276 = vmatprep.subr.mxu0 0.0
  %8277 = vmatpush1.msra.mxu0 0.0
  %8278 = vmatprep.subr.mxu0 0.0
  %8279 = vmatpush1.msra.mxu0 0.0
  %8280 = vmatprep.subr.mxu0 0.0
  %8281 = vmatpush1.msra.mxu0 0.0
  %8282 = vmatprep.subr.mxu0 0.0
  %8283 = vmatpush1.msra.mxu0 0.0
  %8284 = vmatprep.subr.mxu0 0.0
  %8285 = vmatpush1.msra.mxu0 0.0
  %8286 = vmatprep.subr.mxu0 0.0
  %8287 = vmatpush1.msra.mxu0 0.0
  %8288 = vmatprep.subr.mxu0 0.0
  %8289 = vmatpush1.msra.mxu0 0.0
  %8290 = vmatprep.subr.mxu0 0.0
  %8291 = vmatpush1.msra.mxu0 0.0
  %8292 = vmatprep.subr.mxu0 0.0
  %8293 = vmatpush1.msra.mxu0 0.0
  %8294 = vmatprep.subr.mxu0 0.0
  %8295 = vmatpush1.msra.mxu0 0.0
  %8296 = vmatprep.subr.mxu0 0.0
  %8297 = vmatpush1.msra.mxu0 0.0
  %8298 = vmatprep.subr.mxu0 0.0
  %8299 = vmatpush1.msra.mxu0 0.0
  %8300 = vmatprep.mubr.f32.mxu0 0.0
  %v8301 = vand.u32 %v1669, 4294901760
  %8302 = vmatmul.mubr.f32.gmra.mrb[0].mxu0 %v8301
  %v8303 = vpop.f32.mrb[0].mxu0
  %v8304 = vadd.f32 %v8181, %v8303
  %v8305 = vpop.f32.mrb[0].mxu0
  %v8306 = vadd.f32 %v8183, %v8305
  %8307 = vmatprep.mubr.f32.mxu0 0.0
  %v8308 = vand.u32 %v1672, 4294901760
  %8309 = vmatmul.mubr.f32.gmra.mrb[0].mxu0 %v8308
  %v8310 = vpop.f32.mrb[0].mxu0
  %v8311 = vadd.f32 %v8190, %v8310
  %v8312 = vpop.f32.mrb[0].mxu0
  %v8313 = vadd.f32 %v8192, %v8312
  %8314 = vmatprep.mubr.f32.mxu0 0.0
  %v8315 = vand.u32 %v1675, 4294901760
  %8316 = vmatmul.mubr.f32.gmra.mrb[0].mxu0 %v8315
  %v8317 = vpop.f32.mrb[0].mxu0
  %v8318 = vadd.f32 %v8199, %v8317
  %v8319 = vpop.f32.mrb[0].mxu0
  %v8320 = vadd.f32 %v8201, %v8319
  %8321 = vmatprep.mubr.f32.mxu0 0.0
  %v8322 = vand.u32 %v1678, 4294901760
  %8323 = vmatmul.mubr.f32.gmra.mrb[0].mxu0 %v8322
  %v8324 = vpop.f32.mrb[0].mxu0
  %v8325 = vadd.f32 %v8208, %v8324
  %v8326 = vpop.f32.mrb[0].mxu0
  %v8327 = vadd.f32 %v8210, %v8326
  %8328 = vdwg.mxu0
  %v8329 = vand.u32 %v7725, 4294901760
  %8330 = vmatprep.subr.mxu0 %v8329
  %v8331 = vand.u32 %v7724, 4294901760
  %8332 = vmatpush1.msra.mxu0 %v8331
  %v8333 = vand.u32 %v7729, 4294901760
  %8334 = vmatprep.subr.mxu0 %v8333
  %v8335 = vand.u32 %v7728, 4294901760
  %8336 = vmatpush1.msra.mxu0 %v8335
  %v8337 = vand.u32 %v7733, 4294901760
  %8338 = vmatprep.subr.mxu0 %v8337
  %v8339 = vand.u32 %v7732, 4294901760
  %8340 = vmatpush1.msra.mxu0 %v8339
  %v8341 = vand.u32 %v7737, 4294901760
  %8342 = vmatprep.subr.mxu0 %v8341
  %v8343 = vand.u32 %v7736, 4294901760
  %8344 = vmatpush1.msra.mxu0 %v8343
  %8345 = vmatprep.subr.mxu0 0.0
  %8346 = vmatpush1.msra.mxu0 0.0
  %8347 = vmatprep.subr.mxu0 0.0
  %8348 = vmatpush1.msra.mxu0 0.0
  %8349 = vmatprep.subr.mxu0 0.0
  %8350 = vmatpush1.msra.mxu0 0.0
  %8351 = vmatprep.subr.mxu0 0.0
  %8352 = vmatpush1.msra.mxu0 0.0
  %8353 = vmatprep.subr.mxu0 0.0
  %8354 = vmatpush1.msra.mxu0 0.0
  %8355 = vmatprep.subr.mxu0 0.0
  %8356 = vmatpush1.msra.mxu0 0.0
  %8357 = vmatprep.subr.mxu0 0.0
  %8358 = vmatpush1.msra.mxu0 0.0
  %8359 = vmatprep.subr.mxu0 0.0
  %8360 = vmatpush1.msra.mxu0 0.0
  %8361 = vmatprep.subr.mxu0 0.0
  %8362 = vmatpush1.msra.mxu0 0.0
  %8363 = vmatprep.subr.mxu0 0.0
  %8364 = vmatpush1.msra.mxu0 0.0
  %8365 = vmatprep.subr.mxu0 0.0
  %8366 = vmatpush1.msra.mxu0 0.0
  %8367 = vmatprep.subr.mxu0 0.0
  %8368 = vmatpush1.msra.mxu0 0.0
  %8369 = vmatprep.subr.mxu0 0.0
  %8370 = vmatpush1.msra.mxu0 0.0
  %8371 = vmatprep.subr.mxu0 0.0
  %8372 = vmatpush1.msra.mxu0 0.0
  %8373 = vmatprep.subr.mxu0 0.0
  %8374 = vmatpush1.msra.mxu0 0.0
  %8375 = vmatprep.subr.mxu0 0.0
  %8376 = vmatpush1.msra.mxu0 0.0
  %8377 = vmatprep.subr.mxu0 0.0
  %8378 = vmatpush1.msra.mxu0 0.0
  %8379 = vmatprep.subr.mxu0 0.0
  %8380 = vmatpush1.msra.mxu0 0.0
  %8381 = vmatprep.subr.mxu0 0.0
  %8382 = vmatpush1.msra.mxu0 0.0
  %8383 = vmatprep.subr.mxu0 0.0
  %8384 = vmatpush1.msra.mxu0 0.0
  %8385 = vmatprep.subr.mxu0 0.0
  %8386 = vmatpush1.msra.mxu0 0.0
  %8387 = vmatprep.subr.mxu0 0.0
  %8388 = vmatpush1.msra.mxu0 0.0
  %8389 = vmatprep.subr.mxu0 0.0
  %8390 = vmatpush1.msra.mxu0 0.0
  %8391 = vmatprep.subr.mxu0 0.0
  %8392 = vmatpush1.msra.mxu0 0.0
  %8393 = vmatprep.subr.mxu0 0.0
  %8394 = vmatpush1.msra.mxu0 0.0
  %8395 = vmatprep.subr.mxu0 0.0
  %8396 = vmatpush1.msra.mxu0 0.0
  %8397 = vmatprep.subr.mxu0 0.0
  %8398 = vmatpush1.msra.mxu0 0.0
  %8399 = vmatprep.subr.mxu0 0.0
  %8400 = vmatpush1.msra.mxu0 0.0
  %8401 = vmatprep.mubr.f32.mxu0 0.0
  %v8402 = vand.u32 %v1669, 4294901760
  %8403 = vmatmul.mubr.f32.gmra.mrb[0].mxu0 %v8402
  %v8404 = vpop.f32.mrb[0].mxu0
  %v8405 = vadd.f32 %v8304, %v8404
  %v8406 = vpop.f32.mrb[0].mxu0
  %v8407 = vadd.f32 %v8306, %v8406
  %8408 = vmatprep.mubr.f32.mxu0 0.0
  %v8409 = vand.u32 %v1672, 4294901760
  %8410 = vmatmul.mubr.f32.gmra.mrb[0].mxu0 %v8409
  %v8411 = vpop.f32.mrb[0].mxu0
  %v8412 = vadd.f32 %v8311, %v8411
  %v8413 = vpop.f32.mrb[0].mxu0
  %v8414 = vadd.f32 %v8313, %v8413
  %8415 = vmatprep.mubr.f32.mxu0 0.0
  %v8416 = vand.u32 %v1675, 4294901760
  %8417 = vmatmul.mubr.f32.gmra.mrb[0].mxu0 %v8416
  %v8418 = vpop.f32.mrb[0].mxu0
  %v8419 = vadd.f32 %v8318, %v8418
  %v8420 = vpop.f32.mrb[0].mxu0
  %v8421 = vadd.f32 %v8320, %v8420
  %8422 = vmatprep.mubr.f32.mxu0 0.0
  %v8423 = vand.u32 %v1678, 4294901760
  %8424 = vmatmul.mubr.f32.gmra.mrb[0].mxu0 %v8423
  %v8425 = vpop.f32.mrb[0].mxu0
  %v8426 = vadd.f32 %v8325, %v8425
  %v8427 = vpop.f32.mrb[0].mxu0
  %v8428 = vadd.f32 %v8327, %v8427
  %8429 = vdwg.mxu0
  %v8430 = vand.u32 %v7727, 4294901760
  %8431 = vmatprep.subr.mxu0 %v8430
  %v8432 = vand.u32 %v7726, 4294901760
  %8433 = vmatpush1.msra.mxu0 %v8432
  %v8434 = vand.u32 %v7731, 4294901760
  %8435 = vmatprep.subr.mxu0 %v8434
  %v8436 = vand.u32 %v7730, 4294901760
  %8437 = vmatpush1.msra.mxu0 %v8436
  %v8438 = vand.u32 %v7735, 4294901760
  %8439 = vmatprep.subr.mxu0 %v8438
  %v8440 = vand.u32 %v7734, 4294901760
  %8441 = vmatpush1.msra.mxu0 %v8440
  %v8442 = vand.u32 %v7739, 4294901760
  %8443 = vmatprep.subr.mxu0 %v8442
  %v8444 = vand.u32 %v7738, 4294901760
  %8445 = vmatpush1.msra.mxu0 %v8444
  %8446 = vmatprep.subr.mxu0 0.0
  %8447 = vmatpush1.msra.mxu0 0.0
  %8448 = vmatprep.subr.mxu0 0.0
  %8449 = vmatpush1.msra.mxu0 0.0
  %8450 = vmatprep.subr.mxu0 0.0
  %8451 = vmatpush1.msra.mxu0 0.0
  %8452 = vmatprep.subr.mxu0 0.0
  %8453 = vmatpush1.msra.mxu0 0.0
  %8454 = vmatprep.subr.mxu0 0.0
  %8455 = vmatpush1.msra.mxu0 0.0
  %8456 = vmatprep.subr.mxu0 0.0
  %8457 = vmatpush1.msra.mxu0 0.0
  %8458 = vmatprep.subr.mxu0 0.0
  %8459 = vmatpush1.msra.mxu0 0.0
  %8460 = vmatprep.subr.mxu0 0.0
  %8461 = vmatpush1.msra.mxu0 0.0
  %8462 = vmatprep.subr.mxu0 0.0
  %8463 = vmatpush1.msra.mxu0 0.0
  %8464 = vmatprep.subr.mxu0 0.0
  %8465 = vmatpush1.msra.mxu0 0.0
  %8466 = vmatprep.subr.mxu0 0.0
  %8467 = vmatpush1.msra.mxu0 0.0
  %8468 = vmatprep.subr.mxu0 0.0
  %8469 = vmatpush1.msra.mxu0 0.0
  %8470 = vmatprep.subr.mxu0 0.0
  %8471 = vmatpush1.msra.mxu0 0.0
  %8472 = vmatprep.subr.mxu0 0.0
  %8473 = vmatpush1.msra.mxu0 0.0
  %8474 = vmatprep.subr.mxu0 0.0
  %8475 = vmatpush1.msra.mxu0 0.0
  %8476 = vmatprep.subr.mxu0 0.0
  %8477 = vmatpush1.msra.mxu0 0.0
  %8478 = vmatprep.subr.mxu0 0.0
  %8479 = vmatpush1.msra.mxu0 0.0
  %8480 = vmatprep.subr.mxu0 0.0
  %8481 = vmatpush1.msra.mxu0 0.0
  %8482 = vmatprep.subr.mxu0 0.0
  %8483 = vmatpush1.msra.mxu0 0.0
  %8484 = vmatprep.subr.mxu0 0.0
  %8485 = vmatpush1.msra.mxu0 0.0
  %8486 = vmatprep.subr.mxu0 0.0
  %8487 = vmatpush1.msra.mxu0 0.0
  %8488 = vmatprep.subr.mxu0 0.0
  %8489 = vmatpush1.msra.mxu0 0.0
  %8490 = vmatprep.subr.mxu0 0.0
  %8491 = vmatpush1.msra.mxu0 0.0
  %8492 = vmatprep.subr.mxu0 0.0
  %8493 = vmatpush1.msra.mxu0 0.0
  %8494 = vmatprep.subr.mxu0 0.0
  %8495 = vmatpush1.msra.mxu0 0.0
  %8496 = vmatprep.subr.mxu0 0.0
  %8497 = vmatpush1.msra.mxu0 0.0
  %8498 = vmatprep.subr.mxu0 0.0
  %8499 = vmatpush1.msra.mxu0 0.0
  %8500 = vmatprep.subr.mxu0 0.0
  %8501 = vmatpush1.msra.mxu0 0.0
  %8502 = vmatprep.mubr.f32.mxu0 0.0
  %v8503 = vand.u32 %v1669, 4294901760
  %v8504 = vsub.f32 %v1669, %v8503
  %v8505 = vand.u32 %v8504, 4294901760
  %v8506 = vsub.f32 %v8504, %v8505
  %v8507 = vand.u32 %v8506, 4294901760
  %8508 = vmatmul.mubr.f32.gmra.mrb[0].mxu0 %v8507
  %v8509 = vpop.f32.mrb[0].mxu0
  %v8510 = vadd.f32 %v1650, %v8509
  %v8511 = vpop.f32.mrb[0].mxu0
  %v8512 = vadd.f32 %v1650, %v8511
  %8513 = vmatprep.mubr.f32.mxu0 0.0
  %v8514 = vand.u32 %v1672, 4294901760
  %v8515 = vsub.f32 %v1672, %v8514
  %v8516 = vand.u32 %v8515, 4294901760
  %v8517 = vsub.f32 %v8515, %v8516
  %v8518 = vand.u32 %v8517, 4294901760
  %8519 = vmatmul.mubr.f32.gmra.mrb[0].mxu0 %v8518
  %v8520 = vpop.f32.mrb[0].mxu0
  %v8521 = vadd.f32 %v1655, %v8520
  %v8522 = vpop.f32.mrb[0].mxu0
  %v8523 = vadd.f32 %v1655, %v8522
  %8524 = vmatprep.mubr.f32.mxu0 0.0
  %v8525 = vand.u32 %v1675, 4294901760
  %v8526 = vsub.f32 %v1675, %v8525
  %v8527 = vand.u32 %v8526, 4294901760
  %v8528 = vsub.f32 %v8526, %v8527
  %v8529 = vand.u32 %v8528, 4294901760
  %8530 = vmatmul.mubr.f32.gmra.mrb[0].mxu0 %v8529
  %v8531 = vpop.f32.mrb[0].mxu0
  %v8532 = vadd.f32 %v1660, %v8531
  %v8533 = vpop.f32.mrb[0].mxu0
  %v8534 = vadd.f32 %v1660, %v8533
  %8535 = vmatprep.mubr.f32.mxu0 0.0
  %v8536 = vand.u32 %v1678, 4294901760
  %v8537 = vsub.f32 %v1678, %v8536
  %v8538 = vand.u32 %v8537, 4294901760
  %v8539 = vsub.f32 %v8537, %v8538
  %v8540 = vand.u32 %v8539, 4294901760
  %8541 = vmatmul.mubr.f32.gmra.mrb[0].mxu0 %v8540
  %v8542 = vpop.f32.mrb[0].mxu0
  %v8543 = vadd.f32 %v1665, %v8542
  %v8544 = vpop.f32.mrb[0].mxu0
  %v8545 = vadd.f32 %v1665, %v8544
  %8546 = vdwg.mxu0
  %v8547 = vand.u32 %v7727, 4294901760
  %v8548 = vsub.f32 %v7727, %v8547
  %v8549 = vand.u32 %v8548, 4294901760
  %v8550 = vsub.f32 %v8548, %v8549
  %v8551 = vand.u32 %v8550, 4294901760
  %8552 = vmatprep.subr.mxu0 %v8551
  %v8553 = vand.u32 %v7726, 4294901760
  %v8554 = vsub.f32 %v7726, %v8553
  %v8555 = vand.u32 %v8554, 4294901760
  %v8556 = vsub.f32 %v8554, %v8555
  %v8557 = vand.u32 %v8556, 4294901760
  %8558 = vmatpush1.msra.mxu0 %v8557
  %v8559 = vand.u32 %v7731, 4294901760
  %v8560 = vsub.f32 %v7731, %v8559
  %v8561 = vand.u32 %v8560, 4294901760
  %v8562 = vsub.f32 %v8560, %v8561
  %v8563 = vand.u32 %v8562, 4294901760
  %8564 = vmatprep.subr.mxu0 %v8563
  %v8565 = vand.u32 %v7730, 4294901760
  %v8566 = vsub.f32 %v7730, %v8565
  %v8567 = vand.u32 %v8566, 4294901760
  %v8568 = vsub.f32 %v8566, %v8567
  %v8569 = vand.u32 %v8568, 4294901760
  %8570 = vmatpush1.msra.mxu0 %v8569
  %v8571 = vand.u32 %v7735, 4294901760
  %v8572 = vsub.f32 %v7735, %v8571
  %v8573 = vand.u32 %v8572, 4294901760
  %v8574 = vsub.f32 %v8572, %v8573
  %v8575 = vand.u32 %v8574, 4294901760
  %8576 = vmatprep.subr.mxu0 %v8575
  %v8577 = vand.u32 %v7734, 4294901760
  %v8578 = vsub.f32 %v7734, %v8577
  %v8579 = vand.u32 %v8578, 4294901760
  %v8580 = vsub.f32 %v8578, %v8579
  %v8581 = vand.u32 %v8580, 4294901760
  %8582 = vmatpush1.msra.mxu0 %v8581
  %v8583 = vand.u32 %v7739, 4294901760
  %v8584 = vsub.f32 %v7739, %v8583
  %v8585 = vand.u32 %v8584, 4294901760
  %v8586 = vsub.f32 %v8584, %v8585
  %v8587 = vand.u32 %v8586, 4294901760
  %8588 = vmatprep.subr.mxu0 %v8587
  %v8589 = vand.u32 %v7738, 4294901760
  %v8590 = vsub.f32 %v7738, %v8589
  %v8591 = vand.u32 %v8590, 4294901760
  %v8592 = vsub.f32 %v8590, %v8591
  %v8593 = vand.u32 %v8592, 4294901760
  %8594 = vmatpush1.msra.mxu0 %v8593
  %8595 = vmatprep.subr.mxu0 0.0
  %8596 = vmatpush1.msra.mxu0 0.0
  %8597 = vmatprep.subr.mxu0 0.0
  %8598 = vmatpush1.msra.mxu0 0.0
  %8599 = vmatprep.subr.mxu0 0.0
  %8600 = vmatpush1.msra.mxu0 0.0
  %8601 = vmatprep.subr.mxu0 0.0
  %8602 = vmatpush1.msra.mxu0 0.0
  %8603 = vmatprep.subr.mxu0 0.0
  %8604 = vmatpush1.msra.mxu0 0.0
  %8605 = vmatprep.subr.mxu0 0.0
  %8606 = vmatpush1.msra.mxu0 0.0
  %8607 = vmatprep.subr.mxu0 0.0
  %8608 = vmatpush1.msra.mxu0 0.0
  %8609 = vmatprep.subr.mxu0 0.0
  %8610 = vmatpush1.msra.mxu0 0.0
  %8611 = vmatprep.subr.mxu0 0.0
  %8612 = vmatpush1.msra.mxu0 0.0
  %8613 = vmatprep.subr.mxu0 0.0
  %8614 = vmatpush1.msra.mxu0 0.0
  %8615 = vmatprep.subr.mxu0 0.0
  %8616 = vmatpush1.msra.mxu0 0.0
  %8617 = vmatprep.subr.mxu0 0.0
  %8618 = vmatpush1.msra.mxu0 0.0
  %8619 = vmatprep.subr.mxu0 0.0
  %8620 = vmatpush1.msra.mxu0 0.0
  %8621 = vmatprep.subr.mxu0 0.0
  %8622 = vmatpush1.msra.mxu0 0.0
  %8623 = vmatprep.subr.mxu0 0.0
  %8624 = vmatpush1.msra.mxu0 0.0
  %8625 = vmatprep.subr.mxu0 0.0
  %8626 = vmatpush1.msra.mxu0 0.0
  %8627 = vmatprep.subr.mxu0 0.0
  %8628 = vmatpush1.msra.mxu0 0.0
  %8629 = vmatprep.subr.mxu0 0.0
  %8630 = vmatpush1.msra.mxu0 0.0
  %8631 = vmatprep.subr.mxu0 0.0
  %8632 = vmatpush1.msra.mxu0 0.0
  %8633 = vmatprep.subr.mxu0 0.0
  %8634 = vmatpush1.msra.mxu0 0.0
  %8635 = vmatprep.subr.mxu0 0.0
  %8636 = vmatpush1.msra.mxu0 0.0
  %8637 = vmatprep.subr.mxu0 0.0
  %8638 = vmatpush1.msra.mxu0 0.0
  %8639 = vmatprep.subr.mxu0 0.0
  %8640 = vmatpush1.msra.mxu0 0.0
  %8641 = vmatprep.subr.mxu0 0.0
  %8642 = vmatpush1.msra.mxu0 0.0
  %8643 = vmatprep.subr.mxu0 0.0
  %8644 = vmatpush1.msra.mxu0 0.0
  %8645 = vmatprep.subr.mxu0 0.0
  %8646 = vmatpush1.msra.mxu0 0.0
  %8647 = vmatprep.subr.mxu0 0.0
  %8648 = vmatpush1.msra.mxu0 0.0
  %8649 = vmatprep.subr.mxu0 0.0
  %8650 = vmatpush1.msra.mxu0 0.0
  %8651 = vmatprep.mubr.f32.mxu0 0.0
  %v8652 = vand.u32 %v1669, 4294901760
  %8653 = vmatmul.mubr.f32.gmra.mrb[0].mxu0 %v8652
  %v8654 = vpop.f32.mrb[0].mxu0
  %v8655 = vadd.f32 %v8510, %v8654
  %v8656 = vpop.f32.mrb[0].mxu0
  %v8657 = vadd.f32 %v8512, %v8656
  %8658 = vmatprep.mubr.f32.mxu0 0.0
  %v8659 = vand.u32 %v1672, 4294901760
  %8660 = vmatmul.mubr.f32.gmra.mrb[0].mxu0 %v8659
  %v8661 = vpop.f32.mrb[0].mxu0
  %v8662 = vadd.f32 %v8521, %v8661
  %v8663 = vpop.f32.mrb[0].mxu0
  %v8664 = vadd.f32 %v8523, %v8663
  %8665 = vmatprep.mubr.f32.mxu0 0.0
  %v8666 = vand.u32 %v1675, 4294901760
  %8667 = vmatmul.mubr.f32.gmra.mrb[0].mxu0 %v8666
  %v8668 = vpop.f32.mrb[0].mxu0
  %v8669 = vadd.f32 %v8532, %v8668
  %v8670 = vpop.f32.mrb[0].mxu0
  %v8671 = vadd.f32 %v8534, %v8670
  %8672 = vmatprep.mubr.f32.mxu0 0.0
  %v8673 = vand.u32 %v1678, 4294901760
  %8674 = vmatmul.mubr.f32.gmra.mrb[0].mxu0 %v8673
  %v8675 = vpop.f32.mrb[0].mxu0
  %v8676 = vadd.f32 %v8543, %v8675
  %v8677 = vpop.f32.mrb[0].mxu0
  %v8678 = vadd.f32 %v8545, %v8677
  %8679 = vdwg.mxu0
  %v8680 = vand.u32 %v7727, 4294901760
  %v8681 = vsub.f32 %v7727, %v8680
  %8682 = vmatprep.subr.mxu0 %v8681
  %v8683 = vand.u32 %v7726, 4294901760
  %v8684 = vsub.f32 %v7726, %v8683
  %8685 = vmatpush1.msra.mxu0 %v8684
  %v8686 = vand.u32 %v7731, 4294901760
  %v8687 = vsub.f32 %v7731, %v8686
  %8688 = vmatprep.subr.mxu0 %v8687
  %v8689 = vand.u32 %v7730, 4294901760
  %v8690 = vsub.f32 %v7730, %v8689
  %8691 = vmatpush1.msra.mxu0 %v8690
  %v8692 = vand.u32 %v7735, 4294901760
  %v8693 = vsub.f32 %v7735, %v8692
  %8694 = vmatprep.subr.mxu0 %v8693
  %v8695 = vand.u32 %v7734, 4294901760
  %v8696 = vsub.f32 %v7734, %v8695
  %8697 = vmatpush1.msra.mxu0 %v8696
  %v8698 = vand.u32 %v7739, 4294901760
  %v8699 = vsub.f32 %v7739, %v8698
  %8700 = vmatprep.subr.mxu0 %v8699
  %v8701 = vand.u32 %v7738, 4294901760
  %v8702 = vsub.f32 %v7738, %v8701
  %8703 = vmatpush1.msra.mxu0 %v8702
  %8704 = vmatprep.subr.mxu0 0.0
  %8705 = vmatpush1.msra.mxu0 0.0
  %8706 = vmatprep.subr.mxu0 0.0
  %8707 = vmatpush1.msra.mxu0 0.0
  %8708 = vmatprep.subr.mxu0 0.0
  %8709 = vmatpush1.msra.mxu0 0.0
  %8710 = vmatprep.subr.mxu0 0.0
  %8711 = vmatpush1.msra.mxu0 0.0
  %8712 = vmatprep.subr.mxu0 0.0
  %8713 = vmatpush1.msra.mxu0 0.0
  %8714 = vmatprep.subr.mxu0 0.0
  %8715 = vmatpush1.msra.mxu0 0.0
  %8716 = vmatprep.subr.mxu0 0.0
  %8717 = vmatpush1.msra.mxu0 0.0
  %8718 = vmatprep.subr.mxu0 0.0
  %8719 = vmatpush1.msra.mxu0 0.0
  %8720 = vmatprep.subr.mxu0 0.0
  %8721 = vmatpush1.msra.mxu0 0.0
  %8722 = vmatprep.subr.mxu0 0.0
  %8723 = vmatpush1.msra.mxu0 0.0
  %8724 = vmatprep.subr.mxu0 0.0
  %8725 = vmatpush1.msra.mxu0 0.0
  %8726 = vmatprep.subr.mxu0 0.0
  %8727 = vmatpush1.msra.mxu0 0.0
  %8728 = vmatprep.subr.mxu0 0.0
  %8729 = vmatpush1.msra.mxu0 0.0
  %8730 = vmatprep.subr.mxu0 0.0
  %8731 = vmatpush1.msra.mxu0 0.0
  %8732 = vmatprep.subr.mxu0 0.0
  %8733 = vmatpush1.msra.mxu0 0.0
  %8734 = vmatprep.subr.mxu0 0.0
  %8735 = vmatpush1.msra.mxu0 0.0
  %8736 = vmatprep.subr.mxu0 0.0
  %8737 = vmatpush1.msra.mxu0 0.0
  %8738 = vmatprep.subr.mxu0 0.0
  %8739 = vmatpush1.msra.mxu0 0.0
  %8740 = vmatprep.subr.mxu0 0.0
  %8741 = vmatpush1.msra.mxu0 0.0
  %8742 = vmatprep.subr.mxu0 0.0
  %8743 = vmatpush1.msra.mxu0 0.0
  %8744 = vmatprep.subr.mxu0 0.0
  %8745 = vmatpush1.msra.mxu0 0.0
  %8746 = vmatprep.subr.mxu0 0.0
  %8747 = vmatpush1.msra.mxu0 0.0
  %8748 = vmatprep.subr.mxu0 0.0
  %8749 = vmatpush1.msra.mxu0 0.0
  %8750 = vmatprep.subr.mxu0 0.0
  %8751 = vmatpush1.msra.mxu0 0.0
  %8752 = vmatprep.subr.mxu0 0.0
  %8753 = vmatpush1.msra.mxu0 0.0
  %8754 = vmatprep.subr.mxu0 0.0
  %8755 = vmatpush1.msra.mxu0 0.0
  %8756 = vmatprep.subr.mxu0 0.0
  %8757 = vmatpush1.msra.mxu0 0.0
  %8758 = vmatprep.subr.mxu0 0.0
  %8759 = vmatpush1.msra.mxu0 0.0
  %8760 = vmatprep.mubr.f32.mxu0 0.0
  %v8761 = vand.u32 %v1669, 4294901760
  %v8762 = vsub.f32 %v1669, %v8761
  %8763 = vmatmul.mubr.f32.gmra.mrb[0].mxu0 %v8762
  %v8764 = vpop.f32.mrb[0].mxu0
  %v8765 = vadd.f32 %v8655, %v8764
  %v8766 = vpop.f32.mrb[0].mxu0
  %v8767 = vadd.f32 %v8657, %v8766
  %8768 = vmatprep.mubr.f32.mxu0 0.0
  %v8769 = vand.u32 %v1672, 4294901760
  %v8770 = vsub.f32 %v1672, %v8769
  %8771 = vmatmul.mubr.f32.gmra.mrb[0].mxu0 %v8770
  %v8772 = vpop.f32.mrb[0].mxu0
  %v8773 = vadd.f32 %v8662, %v8772
  %v8774 = vpop.f32.mrb[0].mxu0
  %v8775 = vadd.f32 %v8664, %v8774
  %8776 = vmatprep.mubr.f32.mxu0 0.0
  %v8777 = vand.u32 %v1675, 4294901760
  %v8778 = vsub.f32 %v1675, %v8777
  %8779 = vmatmul.mubr.f32.gmra.mrb[0].mxu0 %v8778
  %v8780 = vpop.f32.mrb[0].mxu0
  %v8781 = vadd.f32 %v8669, %v8780
  %v8782 = vpop.f32.mrb[0].mxu0
  %v8783 = vadd.f32 %v8671, %v8782
  %8784 = vmatprep.mubr.f32.mxu0 0.0
  %v8785 = vand.u32 %v1678, 4294901760
  %v8786 = vsub.f32 %v1678, %v8785
  %8787 = vmatmul.mubr.f32.gmra.mrb[0].mxu0 %v8786
  %v8788 = vpop.f32.mrb[0].mxu0
  %v8789 = vadd.f32 %v8676, %v8788
  %v8790 = vpop.f32.mrb[0].mxu0
  %v8791 = vadd.f32 %v8678, %v8790
  %8792 = vdwg.mxu0
  %v8793 = vand.u32 %v7727, 4294901760
  %8794 = vmatprep.subr.mxu0 %v8793
  %v8795 = vand.u32 %v7726, 4294901760
  %8796 = vmatpush1.msra.mxu0 %v8795
  %v8797 = vand.u32 %v7731, 4294901760
  %8798 = vmatprep.subr.mxu0 %v8797
  %v8799 = vand.u32 %v7730, 4294901760
  %8800 = vmatpush1.msra.mxu0 %v8799
  %v8801 = vand.u32 %v7735, 4294901760
  %8802 = vmatprep.subr.mxu0 %v8801
  %v8803 = vand.u32 %v7734, 4294901760
  %8804 = vmatpush1.msra.mxu0 %v8803
  %v8805 = vand.u32 %v7739, 4294901760
  %8806 = vmatprep.subr.mxu0 %v8805
  %v8807 = vand.u32 %v7738, 4294901760
  %8808 = vmatpush1.msra.mxu0 %v8807
  %8809 = vmatprep.subr.mxu0 0.0
  %8810 = vmatpush1.msra.mxu0 0.0
  %8811 = vmatprep.subr.mxu0 0.0
  %8812 = vmatpush1.msra.mxu0 0.0
  %8813 = vmatprep.subr.mxu0 0.0
  %8814 = vmatpush1.msra.mxu0 0.0
  %8815 = vmatprep.subr.mxu0 0.0
  %8816 = vmatpush1.msra.mxu0 0.0
  %8817 = vmatprep.subr.mxu0 0.0
  %8818 = vmatpush1.msra.mxu0 0.0
  %8819 = vmatprep.subr.mxu0 0.0
  %8820 = vmatpush1.msra.mxu0 0.0
  %8821 = vmatprep.subr.mxu0 0.0
  %8822 = vmatpush1.msra.mxu0 0.0
  %8823 = vmatprep.subr.mxu0 0.0
  %8824 = vmatpush1.msra.mxu0 0.0
  %8825 = vmatprep.subr.mxu0 0.0
  %8826 = vmatpush1.msra.mxu0 0.0
  %8827 = vmatprep.subr.mxu0 0.0
  %8828 = vmatpush1.msra.mxu0 0.0
  %8829 = vmatprep.subr.mxu0 0.0
  %8830 = vmatpush1.msra.mxu0 0.0
  %8831 = vmatprep.subr.mxu0 0.0
  %8832 = vmatpush1.msra.mxu0 0.0
  %8833 = vmatprep.subr.mxu0 0.0
  %8834 = vmatpush1.msra.mxu0 0.0
  %8835 = vmatprep.subr.mxu0 0.0
  %8836 = vmatpush1.msra.mxu0 0.0
  %8837 = vmatprep.subr.mxu0 0.0
  %8838 = vmatpush1.msra.mxu0 0.0
  %8839 = vmatprep.subr.mxu0 0.0
  %8840 = vmatpush1.msra.mxu0 0.0
  %8841 = vmatprep.subr.mxu0 0.0
  %8842 = vmatpush1.msra.mxu0 0.0
  %8843 = vmatprep.subr.mxu0 0.0
  %8844 = vmatpush1.msra.mxu0 0.0
  %8845 = vmatprep.subr.mxu0 0.0
  %8846 = vmatpush1.msra.mxu0 0.0
  %8847 = vmatprep.subr.mxu0 0.0
  %8848 = vmatpush1.msra.mxu0 0.0
  %8849 = vmatprep.subr.mxu0 0.0
  %8850 = vmatpush1.msra.mxu0 0.0
  %8851 = vmatprep.subr.mxu0 0.0
  %8852 = vmatpush1.msra.mxu0 0.0
  %8853 = vmatprep.subr.mxu0 0.0
  %8854 = vmatpush1.msra.mxu0 0.0
  %8855 = vmatprep.subr.mxu0 0.0
  %8856 = vmatpush1.msra.mxu0 0.0
  %8857 = vmatprep.subr.mxu0 0.0
  %8858 = vmatpush1.msra.mxu0 0.0
  %8859 = vmatprep.subr.mxu0 0.0
  %8860 = vmatpush1.msra.mxu0 0.0
  %8861 = vmatprep.subr.mxu0 0.0
  %8862 = vmatpush1.msra.mxu0 0.0
  %8863 = vmatprep.subr.mxu0 0.0
  %8864 = vmatpush1.msra.mxu0 0.0
  %8865 = vmatprep.mubr.f32.mxu0 0.0
  %v8866 = vand.u32 %v1669, 4294901760
  %v8867 = vsub.f32 %v1669, %v8866
  %v8868 = vand.u32 %v8867, 4294901760
  %8869 = vmatmul.mubr.f32.gmra.mrb[0].mxu0 %v8868
  %v8870 = vpop.f32.mrb[0].mxu0
  %v8871 = vadd.f32 %v8765, %v8870
  %v8872 = vpop.f32.mrb[0].mxu0
  %v8873 = vadd.f32 %v8767, %v8872
  %8874 = vmatprep.mubr.f32.mxu0 0.0
  %v8875 = vand.u32 %v1672, 4294901760
  %v8876 = vsub.f32 %v1672, %v8875
  %v8877 = vand.u32 %v8876, 4294901760
  %8878 = vmatmul.mubr.f32.gmra.mrb[0].mxu0 %v8877
  %v8879 = vpop.f32.mrb[0].mxu0
  %v8880 = vadd.f32 %v8773, %v8879
  %v8881 = vpop.f32.mrb[0].mxu0
  %v8882 = vadd.f32 %v8775, %v8881
  %8883 = vmatprep.mubr.f32.mxu0 0.0
  %v8884 = vand.u32 %v1675, 4294901760
  %v8885 = vsub.f32 %v1675, %v8884
  %v8886 = vand.u32 %v8885, 4294901760
  %8887 = vmatmul.mubr.f32.gmra.mrb[0].mxu0 %v8886
  %v8888 = vpop.f32.mrb[0].mxu0
  %v8889 = vadd.f32 %v8781, %v8888
  %v8890 = vpop.f32.mrb[0].mxu0
  %v8891 = vadd.f32 %v8783, %v8890
  %8892 = vmatprep.mubr.f32.mxu0 0.0
  %v8893 = vand.u32 %v1678, 4294901760
  %v8894 = vsub.f32 %v1678, %v8893
  %v8895 = vand.u32 %v8894, 4294901760
  %8896 = vmatmul.mubr.f32.gmra.mrb[0].mxu0 %v8895
  %v8897 = vpop.f32.mrb[0].mxu0
  %v8898 = vadd.f32 %v8789, %v8897
  %v8899 = vpop.f32.mrb[0].mxu0
  %v8900 = vadd.f32 %v8791, %v8899
  %8901 = vdwg.mxu0
  %v8902 = vand.u32 %v7727, 4294901760
  %v8903 = vsub.f32 %v7727, %v8902
  %v8904 = vand.u32 %v8903, 4294901760
  %8905 = vmatprep.subr.mxu0 %v8904
  %v8906 = vand.u32 %v7726, 4294901760
  %v8907 = vsub.f32 %v7726, %v8906
  %v8908 = vand.u32 %v8907, 4294901760
  %8909 = vmatpush1.msra.mxu0 %v8908
  %v8910 = vand.u32 %v7731, 4294901760
  %v8911 = vsub.f32 %v7731, %v8910
  %v8912 = vand.u32 %v8911, 4294901760
  %8913 = vmatprep.subr.mxu0 %v8912
  %v8914 = vand.u32 %v7730, 4294901760
  %v8915 = vsub.f32 %v7730, %v8914
  %v8916 = vand.u32 %v8915, 4294901760
  %8917 = vmatpush1.msra.mxu0 %v8916
  %v8918 = vand.u32 %v7735, 4294901760
  %v8919 = vsub.f32 %v7735, %v8918
  %v8920 = vand.u32 %v8919, 4294901760
  %8921 = vmatprep.subr.mxu0 %v8920
  %v8922 = vand.u32 %v7734, 4294901760
  %v8923 = vsub.f32 %v7734, %v8922
  %v8924 = vand.u32 %v8923, 4294901760
  %8925 = vmatpush1.msra.mxu0 %v8924
  %v8926 = vand.u32 %v7739, 4294901760
  %v8927 = vsub.f32 %v7739, %v8926
  %v8928 = vand.u32 %v8927, 4294901760
  %8929 = vmatprep.subr.mxu0 %v8928
  %v8930 = vand.u32 %v7738, 4294901760
  %v8931 = vsub.f32 %v7738, %v8930
  %v8932 = vand.u32 %v8931, 4294901760
  %8933 = vmatpush1.msra.mxu0 %v8932
  %8934 = vmatprep.subr.mxu0 0.0
  %8935 = vmatpush1.msra.mxu0 0.0
  %8936 = vmatprep.subr.mxu0 0.0
  %8937 = vmatpush1.msra.mxu0 0.0
  %8938 = vmatprep.subr.mxu0 0.0
  %8939 = vmatpush1.msra.mxu0 0.0
  %8940 = vmatprep.subr.mxu0 0.0
  %8941 = vmatpush1.msra.mxu0 0.0
  %8942 = vmatprep.subr.mxu0 0.0
  %8943 = vmatpush1.msra.mxu0 0.0
  %8944 = vmatprep.subr.mxu0 0.0
  %8945 = vmatpush1.msra.mxu0 0.0
  %8946 = vmatprep.subr.mxu0 0.0
  %8947 = vmatpush1.msra.mxu0 0.0
  %8948 = vmatprep.subr.mxu0 0.0
  %8949 = vmatpush1.msra.mxu0 0.0
  %8950 = vmatprep.subr.mxu0 0.0
  %8951 = vmatpush1.msra.mxu0 0.0
  %8952 = vmatprep.subr.mxu0 0.0
  %8953 = vmatpush1.msra.mxu0 0.0
  %8954 = vmatprep.subr.mxu0 0.0
  %8955 = vmatpush1.msra.mxu0 0.0
  %8956 = vmatprep.subr.mxu0 0.0
  %8957 = vmatpush1.msra.mxu0 0.0
  %8958 = vmatprep.subr.mxu0 0.0
  %8959 = vmatpush1.msra.mxu0 0.0
  %8960 = vmatprep.subr.mxu0 0.0
  %8961 = vmatpush1.msra.mxu0 0.0
  %8962 = vmatprep.subr.mxu0 0.0
  %8963 = vmatpush1.msra.mxu0 0.0
  %8964 = vmatprep.subr.mxu0 0.0
  %8965 = vmatpush1.msra.mxu0 0.0
  %8966 = vmatprep.subr.mxu0 0.0
  %8967 = vmatpush1.msra.mxu0 0.0
  %8968 = vmatprep.subr.mxu0 0.0
  %8969 = vmatpush1.msra.mxu0 0.0
  %8970 = vmatprep.subr.mxu0 0.0
  %8971 = vmatpush1.msra.mxu0 0.0
  %8972 = vmatprep.subr.mxu0 0.0
  %8973 = vmatpush1.msra.mxu0 0.0
  %8974 = vmatprep.subr.mxu0 0.0
  %8975 = vmatpush1.msra.mxu0 0.0
  %8976 = vmatprep.subr.mxu0 0.0
  %8977 = vmatpush1.msra.mxu0 0.0
  %8978 = vmatprep.subr.mxu0 0.0
  %8979 = vmatpush1.msra.mxu0 0.0
  %8980 = vmatprep.subr.mxu0 0.0
  %8981 = vmatpush1.msra.mxu0 0.0
  %8982 = vmatprep.subr.mxu0 0.0
  %8983 = vmatpush1.msra.mxu0 0.0
  %8984 = vmatprep.subr.mxu0 0.0
  %8985 = vmatpush1.msra.mxu0 0.0
  %8986 = vmatprep.subr.mxu0 0.0
  %8987 = vmatpush1.msra.mxu0 0.0
  %8988 = vmatprep.subr.mxu0 0.0
  %8989 = vmatpush1.msra.mxu0 0.0
  %8990 = vmatprep.mubr.f32.mxu0 0.0
  %v8991 = vand.u32 %v1669, 4294901760
  %8992 = vmatmul.mubr.f32.gmra.mrb[0].mxu0 %v8991
  %v8993 = vpop.f32.mrb[0].mxu0
  %v8994 = vadd.f32 %v8871, %v8993
  %v8995 = vpop.f32.mrb[0].mxu0
  %v8996 = vadd.f32 %v8873, %v8995
  %8997 = vmatprep.mubr.f32.mxu0 0.0
  %v8998 = vand.u32 %v1672, 4294901760
  %8999 = vmatmul.mubr.f32.gmra.mrb[0].mxu0 %v8998
  %v9000 = vpop.f32.mrb[0].mxu0
  %v9001 = vadd.f32 %v8880, %v9000
  %v9002 = vpop.f32.mrb[0].mxu0
  %v9003 = vadd.f32 %v8882, %v9002
  %9004 = vmatprep.mubr.f32.mxu0 0.0
  %v9005 = vand.u32 %v1675, 4294901760
  %9006 = vmatmul.mubr.f32.gmra.mrb[0].mxu0 %v9005
  %v9007 = vpop.f32.mrb[0].mxu0
  %v9008 = vadd.f32 %v8889, %v9007
  %v9009 = vpop.f32.mrb[0].mxu0
  %v9010 = vadd.f32 %v8891, %v9009
  %9011 = vmatprep.mubr.f32.mxu0 0.0
  %v9012 = vand.u32 %v1678, 4294901760
  %9013 = vmatmul.mubr.f32.gmra.mrb[0].mxu0 %v9012
  %v9014 = vpop.f32.mrb[0].mxu0
  %v9015 = vadd.f32 %v8898, %v9014
  %v9016 = vpop.f32.mrb[0].mxu0
  %v9017 = vadd.f32 %v8900, %v9016
  %9018 = vdwg.mxu0
  %v9019 = vand.u32 %v7727, 4294901760
  %9020 = vmatprep.subr.mxu0 %v9019
  %v9021 = vand.u32 %v7726, 4294901760
  %9022 = vmatpush1.msra.mxu0 %v9021
  %v9023 = vand.u32 %v7731, 4294901760
  %9024 = vmatprep.subr.mxu0 %v9023
  %v9025 = vand.u32 %v7730, 4294901760
  %9026 = vmatpush1.msra.mxu0 %v9025
  %v9027 = vand.u32 %v7735, 4294901760
  %9028 = vmatprep.subr.mxu0 %v9027
  %v9029 = vand.u32 %v7734, 4294901760
  %9030 = vmatpush1.msra.mxu0 %v9029
  %v9031 = vand.u32 %v7739, 4294901760
  %9032 = vmatprep.subr.mxu0 %v9031
  %v9033 = vand.u32 %v7738, 4294901760
  %9034 = vmatpush1.msra.mxu0 %v9033
  %9035 = vmatprep.subr.mxu0 0.0
  %9036 = vmatpush1.msra.mxu0 0.0
  %9037 = vmatprep.subr.mxu0 0.0
  %9038 = vmatpush1.msra.mxu0 0.0
  %9039 = vmatprep.subr.mxu0 0.0
  %9040 = vmatpush1.msra.mxu0 0.0
  %9041 = vmatprep.subr.mxu0 0.0
  %9042 = vmatpush1.msra.mxu0 0.0
  %9043 = vmatprep.subr.mxu0 0.0
  %9044 = vmatpush1.msra.mxu0 0.0
  %9045 = vmatprep.subr.mxu0 0.0
  %9046 = vmatpush1.msra.mxu0 0.0
  %9047 = vmatprep.subr.mxu0 0.0
  %9048 = vmatpush1.msra.mxu0 0.0
  %9049 = vmatprep.subr.mxu0 0.0
  %9050 = vmatpush1.msra.mxu0 0.0
  %9051 = vmatprep.subr.mxu0 0.0
  %9052 = vmatpush1.msra.mxu0 0.0
  %9053 = vmatprep.subr.mxu0 0.0
  %9054 = vmatpush1.msra.mxu0 0.0
  %9055 = vmatprep.subr.mxu0 0.0
  %9056 = vmatpush1.msra.mxu0 0.0
  %9057 = vmatprep.subr.mxu0 0.0
  %9058 = vmatpush1.msra.mxu0 0.0
  %9059 = vmatprep.subr.mxu0 0.0
  %9060 = vmatpush1.msra.mxu0 0.0
  %9061 = vmatprep.subr.mxu0 0.0
  %9062 = vmatpush1.msra.mxu0 0.0
  %9063 = vmatprep.subr.mxu0 0.0
  %9064 = vmatpush1.msra.mxu0 0.0
  %9065 = vmatprep.subr.mxu0 0.0
  %9066 = vmatpush1.msra.mxu0 0.0
  %9067 = vmatprep.subr.mxu0 0.0
  %9068 = vmatpush1.msra.mxu0 0.0
  %9069 = vmatprep.subr.mxu0 0.0
  %9070 = vmatpush1.msra.mxu0 0.0
  %9071 = vmatprep.subr.mxu0 0.0
  %9072 = vmatpush1.msra.mxu0 0.0
  %9073 = vmatprep.subr.mxu0 0.0
  %9074 = vmatpush1.msra.mxu0 0.0
  %9075 = vmatprep.subr.mxu0 0.0
  %9076 = vmatpush1.msra.mxu0 0.0
  %9077 = vmatprep.subr.mxu0 0.0
  %9078 = vmatpush1.msra.mxu0 0.0
  %9079 = vmatprep.subr.mxu0 0.0
  %9080 = vmatpush1.msra.mxu0 0.0
  %9081 = vmatprep.subr.mxu0 0.0
  %9082 = vmatpush1.msra.mxu0 0.0
  %9083 = vmatprep.subr.mxu0 0.0
  %9084 = vmatpush1.msra.mxu0 0.0
  %9085 = vmatprep.subr.mxu0 0.0
  %9086 = vmatpush1.msra.mxu0 0.0
  %9087 = vmatprep.subr.mxu0 0.0
  %9088 = vmatpush1.msra.mxu0 0.0
  %9089 = vmatprep.subr.mxu0 0.0
  %9090 = vmatpush1.msra.mxu0 0.0
  %9091 = vmatprep.mubr.f32.mxu0 0.0
  %v9092 = vand.u32 %v1669, 4294901760
  %9093 = vmatmul.mubr.f32.gmra.mrb[0].mxu0 %v9092
  %v9094 = vpop.f32.mrb[0].mxu0
  %v9095 = vadd.f32 %v8994, %v9094
  %v9096 = vpop.f32.mrb[0].mxu0
  %v9097 = vadd.f32 %v8996, %v9096
  %9098 = vmatprep.mubr.f32.mxu0 0.0
  %v9099 = vand.u32 %v1672, 4294901760
  %9100 = vmatmul.mubr.f32.gmra.mrb[0].mxu0 %v9099
  %v9101 = vpop.f32.mrb[0].mxu0
  %v9102 = vadd.f32 %v9001, %v9101
  %v9103 = vpop.f32.mrb[0].mxu0
  %v9104 = vadd.f32 %v9003, %v9103
  %9105 = vmatprep.mubr.f32.mxu0 0.0
  %v9106 = vand.u32 %v1675, 4294901760
  %9107 = vmatmul.mubr.f32.gmra.mrb[0].mxu0 %v9106
  %v9108 = vpop.f32.mrb[0].mxu0
  %v9109 = vadd.f32 %v9008, %v9108
  %v9110 = vpop.f32.mrb[0].mxu0
  %v9111 = vadd.f32 %v9010, %v9110
  %9112 = vmatprep.mubr.f32.mxu0 0.0
  %v9113 = vand.u32 %v1678, 4294901760
  %9114 = vmatmul.mubr.f32.gmra.mrb[0].mxu0 %v9113
  %v9115 = vpop.f32.mrb[0].mxu0
  %v9116 = vadd.f32 %v9015, %v9115
  %v9117 = vpop.f32.mrb[0].mxu0
  %v9118 = vadd.f32 %v9017, %v9117
  %9119 = vdwg.mxu0
  %v9120 = vmul.f32 %v8405, 0.31830987
  %v9121 = vmul.f32 %v8407, 0.31830987
  %v9122 = vmul.f32 %v9095, 0.31830987
  %v9123 = vmul.f32 %v9097, 0.31830987
  %v9124 = vmul.f32 %v8412, 0.31830987
  %v9125 = vmul.f32 %v8414, 0.31830987
  %v9126 = vmul.f32 %v9102, 0.31830987
  %v9127 = vmul.f32 %v9104, 0.31830987
  %v9128 = vmul.f32 %v8419, 0.31830987
  %v9129 = vmul.f32 %v8421, 0.31830987
  %v9130 = vmul.f32 %v9109, 0.31830987
  %v9131 = vmul.f32 %v9111, 0.31830987
  %v9132 = vmul.f32 %v8426, 0.31830987
  %v9133 = vmul.f32 %v8428, 0.31830987
  %v9134 = vmul.f32 %v9116, 0.31830987
  %v9135 = vmul.f32 %v9118, 0.31830987
  %v9136 = vround.ne.pseudo %v9120
  %v9137 = vround.ne.pseudo %v9121
  %v9138 = vround.ne.pseudo %v9122
  %v9139 = vround.ne.pseudo %v9123
  %v9140 = vround.ne.pseudo %v9124
  %v9141 = vround.ne.pseudo %v9125
  %v9142 = vround.ne.pseudo %v9126
  %v9143 = vround.ne.pseudo %v9127
  %v9144 = vround.ne.pseudo %v9128
  %v9145 = vround.ne.pseudo %v9129
  %v9146 = vround.ne.pseudo %v9130
  %v9147 = vround.ne.pseudo %v9131
  %v9148 = vround.ne.pseudo %v9132
  %v9149 = vround.ne.pseudo %v9133
  %v9150 = vround.ne.pseudo %v9134
  %v9151 = vround.ne.pseudo %v9135
  %v9152 = vmul.f32 %v9136, 3.140625
  %v9153 = vmul.f32 %v9137, 3.140625
  %v9154 = vmul.f32 %v9138, 3.140625
  %v9155 = vmul.f32 %v9139, 3.140625
  %v9156 = vmul.f32 %v9140, 3.140625
  %v9157 = vmul.f32 %v9141, 3.140625
  %v9158 = vmul.f32 %v9142, 3.140625
  %v9159 = vmul.f32 %v9143, 3.140625
  %v9160 = vmul.f32 %v9144, 3.140625
  %v9161 = vmul.f32 %v9145, 3.140625
  %v9162 = vmul.f32 %v9146, 3.140625
  %v9163 = vmul.f32 %v9147, 3.140625
  %v9164 = vmul.f32 %v9148, 3.140625
  %v9165 = vmul.f32 %v9149, 3.140625
  %v9166 = vmul.f32 %v9150, 3.140625
  %v9167 = vmul.f32 %v9151, 3.140625
  %v9168 = vsub.f32 %v8405, %v9152
  %v9169 = vsub.f32 %v8407, %v9153
  %v9170 = vsub.f32 %v9095, %v9154
  %v9171 = vsub.f32 %v9097, %v9155
  %v9172 = vsub.f32 %v8412, %v9156
  %v9173 = vsub.f32 %v8414, %v9157
  %v9174 = vsub.f32 %v9102, %v9158
  %v9175 = vsub.f32 %v9104, %v9159
  %v9176 = vsub.f32 %v8419, %v9160
  %v9177 = vsub.f32 %v8421, %v9161
  %v9178 = vsub.f32 %v9109, %v9162
  %v9179 = vsub.f32 %v9111, %v9163
  %v9180 = vsub.f32 %v8426, %v9164
  %v9181 = vsub.f32 %v8428, %v9165
  %v9182 = vsub.f32 %v9116, %v9166
  %v9183 = vsub.f32 %v9118, %v9167
  %v9184 = vmul.f32 %v9136, 0.0009676536
  %v9185 = vmul.f32 %v9137, 0.0009676536
  %v9186 = vmul.f32 %v9138, 0.0009676536
  %v9187 = vmul.f32 %v9139, 0.0009676536
  %v9188 = vmul.f32 %v9140, 0.0009676536
  %v9189 = vmul.f32 %v9141, 0.0009676536
  %v9190 = vmul.f32 %v9142, 0.0009676536
  %v9191 = vmul.f32 %v9143, 0.0009676536
  %v9192 = vmul.f32 %v9144, 0.0009676536
  %v9193 = vmul.f32 %v9145, 0.0009676536
  %v9194 = vmul.f32 %v9146, 0.0009676536
  %v9195 = vmul.f32 %v9147, 0.0009676536
  %v9196 = vmul.f32 %v9148, 0.0009676536
  %v9197 = vmul.f32 %v9149, 0.0009676536
  %v9198 = vmul.f32 %v9150, 0.0009676536
  %v9199 = vmul.f32 %v9151, 0.0009676536
  %v9200 = vsub.f32 %v9168, %v9184
  %v9201 = vsub.f32 %v9169, %v9185
  %v9202 = vsub.f32 %v9170, %v9186
  %v9203 = vsub.f32 %v9171, %v9187
  %v9204 = vsub.f32 %v9172, %v9188
  %v9205 = vsub.f32 %v9173, %v9189
  %v9206 = vsub.f32 %v9174, %v9190
  %v9207 = vsub.f32 %v9175, %v9191
  %v9208 = vsub.f32 %v9176, %v9192
  %v9209 = vsub.f32 %v9177, %v9193
  %v9210 = vsub.f32 %v9178, %v9194
  %v9211 = vsub.f32 %v9179, %v9195
  %v9212 = vsub.f32 %v9180, %v9196
  %v9213 = vsub.f32 %v9181, %v9197
  %v9214 = vsub.f32 %v9182, %v9198
  %v9215 = vsub.f32 %v9183, %v9199
  %v9216 = vmul.f32 %v9200, %v9200
  %v9217 = vmul.f32 %v9201, %v9201
  %v9218 = vmul.f32 %v9202, %v9202
  %v9219 = vmul.f32 %v9203, %v9203
  %v9220 = vmul.f32 %v9204, %v9204
  %v9221 = vmul.f32 %v9205, %v9205
  %v9222 = vmul.f32 %v9206, %v9206
  %v9223 = vmul.f32 %v9207, %v9207
  %v9224 = vmul.f32 %v9208, %v9208
  %v9225 = vmul.f32 %v9209, %v9209
  %v9226 = vmul.f32 %v9210, %v9210
  %v9227 = vmul.f32 %v9211, %v9211
  %v9228 = vmul.f32 %v9212, %v9212
  %v9229 = vmul.f32 %v9213, %v9213
  %v9230 = vmul.f32 %v9214, %v9214
  %v9231 = vmul.f32 %v9215, %v9215
  %v9232 = vmul.f32 %v9200, %v9216
  %v9233 = vmul.f32 %v9201, %v9217
  %v9234 = vmul.f32 %v9202, %v9218
  %v9235 = vmul.f32 %v9203, %v9219
  %v9236 = vmul.f32 %v9204, %v9220
  %v9237 = vmul.f32 %v9205, %v9221
  %v9238 = vmul.f32 %v9206, %v9222
  %v9239 = vmul.f32 %v9207, %v9223
  %v9240 = vmul.f32 %v9208, %v9224
  %v9241 = vmul.f32 %v9209, %v9225
  %v9242 = vmul.f32 %v9210, %v9226
  %v9243 = vmul.f32 %v9211, %v9227
  %v9244 = vmul.f32 %v9212, %v9228
  %v9245 = vmul.f32 %v9213, %v9229
  %v9246 = vmul.f32 %v9214, %v9230
  %v9247 = vmul.f32 %v9215, %v9231
  %v9248 = vmul.f32 %v9216, -0.00019515296
  %v9249 = vmul.f32 %v9217, -0.00019515296
  %v9250 = vmul.f32 %v9218, -0.00019515296
  %v9251 = vmul.f32 %v9219, -0.00019515296
  %v9252 = vmul.f32 %v9220, -0.00019515296
  %v9253 = vmul.f32 %v9221, -0.00019515296
  %v9254 = vmul.f32 %v9222, -0.00019515296
  %v9255 = vmul.f32 %v9223, -0.00019515296
  %v9256 = vmul.f32 %v9224, -0.00019515296
  %v9257 = vmul.f32 %v9225, -0.00019515296
  %v9258 = vmul.f32 %v9226, -0.00019515296
  %v9259 = vmul.f32 %v9227, -0.00019515296
  %v9260 = vmul.f32 %v9228, -0.00019515296
  %v9261 = vmul.f32 %v9229, -0.00019515296
  %v9262 = vmul.f32 %v9230, -0.00019515296
  %v9263 = vmul.f32 %v9231, -0.00019515296
  %v9264 = vadd.f32 %v9248, 0.008332161
  %v9265 = vadd.f32 %v9249, 0.008332161
  %v9266 = vadd.f32 %v9250, 0.008332161
  %v9267 = vadd.f32 %v9251, 0.008332161
  %v9268 = vadd.f32 %v9252, 0.008332161
  %v9269 = vadd.f32 %v9253, 0.008332161
  %v9270 = vadd.f32 %v9254, 0.008332161
  %v9271 = vadd.f32 %v9255, 0.008332161
  %v9272 = vadd.f32 %v9256, 0.008332161
  %v9273 = vadd.f32 %v9257, 0.008332161
  %v9274 = vadd.f32 %v9258, 0.008332161
  %v9275 = vadd.f32 %v9259, 0.008332161
  %v9276 = vadd.f32 %v9260, 0.008332161
  %v9277 = vadd.f32 %v9261, 0.008332161
  %v9278 = vadd.f32 %v9262, 0.008332161
  %v9279 = vadd.f32 %v9263, 0.008332161
  %v9280 = vmul.f32 %v9216, %v9264
  %v9281 = vmul.f32 %v9217, %v9265
  %v9282 = vmul.f32 %v9218, %v9266
  %v9283 = vmul.f32 %v9219, %v9267
  %v9284 = vmul.f32 %v9220, %v9268
  %v9285 = vmul.f32 %v9221, %v9269
  %v9286 = vmul.f32 %v9222, %v9270
  %v9287 = vmul.f32 %v9223, %v9271
  %v9288 = vmul.f32 %v9224, %v9272
  %v9289 = vmul.f32 %v9225, %v9273
  %v9290 = vmul.f32 %v9226, %v9274
  %v9291 = vmul.f32 %v9227, %v9275
  %v9292 = vmul.f32 %v9228, %v9276
  %v9293 = vmul.f32 %v9229, %v9277
  %v9294 = vmul.f32 %v9230, %v9278
  %v9295 = vmul.f32 %v9231, %v9279
  %v9296 = vadd.f32 %v9280, -0.16666655
  %v9297 = vadd.f32 %v9281, -0.16666655
  %v9298 = vadd.f32 %v9282, -0.16666655
  %v9299 = vadd.f32 %v9283, -0.16666655
  %v9300 = vadd.f32 %v9284, -0.16666655
  %v9301 = vadd.f32 %v9285, -0.16666655
  %v9302 = vadd.f32 %v9286, -0.16666655
  %v9303 = vadd.f32 %v9287, -0.16666655
  %v9304 = vadd.f32 %v9288, -0.16666655
  %v9305 = vadd.f32 %v9289, -0.16666655
  %v9306 = vadd.f32 %v9290, -0.16666655
  %v9307 = vadd.f32 %v9291, -0.16666655
  %v9308 = vadd.f32 %v9292, -0.16666655
  %v9309 = vadd.f32 %v9293, -0.16666655
  %v9310 = vadd.f32 %v9294, -0.16666655
  %v9311 = vadd.f32 %v9295, -0.16666655
  %v9312 = vmul.f32 %v9232, %v9296
  %v9313 = vmul.f32 %v9233, %v9297
  %v9314 = vmul.f32 %v9234, %v9298
  %v9315 = vmul.f32 %v9235, %v9299
  %v9316 = vmul.f32 %v9236, %v9300
  %v9317 = vmul.f32 %v9237, %v9301
  %v9318 = vmul.f32 %v9238, %v9302
  %v9319 = vmul.f32 %v9239, %v9303
  %v9320 = vmul.f32 %v9240, %v9304
  %v9321 = vmul.f32 %v9241, %v9305
  %v9322 = vmul.f32 %v9242, %v9306
  %v9323 = vmul.f32 %v9243, %v9307
  %v9324 = vmul.f32 %v9244, %v9308
  %v9325 = vmul.f32 %v9245, %v9309
  %v9326 = vmul.f32 %v9246, %v9310
  %v9327 = vmul.f32 %v9247, %v9311
  %v9328 = vadd.f32 %v9200, %v9312
  %v9329 = vadd.f32 %v9201, %v9313
  %v9330 = vadd.f32 %v9202, %v9314
  %v9331 = vadd.f32 %v9203, %v9315
  %v9332 = vadd.f32 %v9204, %v9316
  %v9333 = vadd.f32 %v9205, %v9317
  %v9334 = vadd.f32 %v9206, %v9318
  %v9335 = vadd.f32 %v9207, %v9319
  %v9336 = vadd.f32 %v9208, %v9320
  %v9337 = vadd.f32 %v9209, %v9321
  %v9338 = vadd.f32 %v9210, %v9322
  %v9339 = vadd.f32 %v9211, %v9323
  %v9340 = vadd.f32 %v9212, %v9324
  %v9341 = vadd.f32 %v9213, %v9325
  %v9342 = vadd.f32 %v9214, %v9326
  %v9343 = vadd.f32 %v9215, %v9327
  %v9344 = vcvt.f32.s32.ties.to.even %v9120
  %v9345 = vcvt.f32.s32.ties.to.even %v9121
  %v9346 = vcvt.f32.s32.ties.to.even %v9122
  %v9347 = vcvt.f32.s32.ties.to.even %v9123
  %v9348 = vcvt.f32.s32.ties.to.even %v9124
  %v9349 = vcvt.f32.s32.ties.to.even %v9125
  %v9350 = vcvt.f32.s32.ties.to.even %v9126
  %v9351 = vcvt.f32.s32.ties.to.even %v9127
  %v9352 = vcvt.f32.s32.ties.to.even %v9128
  %v9353 = vcvt.f32.s32.ties.to.even %v9129
  %v9354 = vcvt.f32.s32.ties.to.even %v9130
  %v9355 = vcvt.f32.s32.ties.to.even %v9131
  %v9356 = vcvt.f32.s32.ties.to.even %v9132
  %v9357 = vcvt.f32.s32.ties.to.even %v9133
  %v9358 = vcvt.f32.s32.ties.to.even %v9134
  %v9359 = vcvt.f32.s32.ties.to.even %v9135
  %v9360 = vand.u32 %v9344, 1
  %v9361 = vand.u32 %v9345, 1
  %v9362 = vand.u32 %v9346, 1
  %v9363 = vand.u32 %v9347, 1
  %v9364 = vand.u32 %v9348, 1
  %v9365 = vand.u32 %v9349, 1
  %v9366 = vand.u32 %v9350, 1
  %v9367 = vand.u32 %v9351, 1
  %v9368 = vand.u32 %v9352, 1
  %v9369 = vand.u32 %v9353, 1
  %v9370 = vand.u32 %v9354, 1
  %v9371 = vand.u32 %v9355, 1
  %v9372 = vand.u32 %v9356, 1
  %v9373 = vand.u32 %v9357, 1
  %v9374 = vand.u32 %v9358, 1
  %v9375 = vand.u32 %v9359, 1
  %vm9376 = vcmp.eq.s32.totalorder %v9360, 1
  %vm9377 = vcmp.eq.s32.totalorder %v9361, 1
  %vm9378 = vcmp.eq.s32.totalorder %v9362, 1
  %vm9379 = vcmp.eq.s32.totalorder %v9363, 1
  %vm9380 = vcmp.eq.s32.totalorder %v9364, 1
  %vm9381 = vcmp.eq.s32.totalorder %v9365, 1
  %vm9382 = vcmp.eq.s32.totalorder %v9366, 1
  %vm9383 = vcmp.eq.s32.totalorder %v9367, 1
  %vm9384 = vcmp.eq.s32.totalorder %v9368, 1
  %vm9385 = vcmp.eq.s32.totalorder %v9369, 1
  %vm9386 = vcmp.eq.s32.totalorder %v9370, 1
  %vm9387 = vcmp.eq.s32.totalorder %v9371, 1
  %vm9388 = vcmp.eq.s32.totalorder %v9372, 1
  %vm9389 = vcmp.eq.s32.totalorder %v9373, 1
  %vm9390 = vcmp.eq.s32.totalorder %v9374, 1
  %vm9391 = vcmp.eq.s32.totalorder %v9375, 1
  %v9392 = vsub.f32 0.0, %v9328
  %v9393 = vsub.f32 0.0, %v9329
  %v9394 = vsub.f32 0.0, %v9330
  %v9395 = vsub.f32 0.0, %v9331
  %v9396 = vsub.f32 0.0, %v9332
  %v9397 = vsub.f32 0.0, %v9333
  %v9398 = vsub.f32 0.0, %v9334
  %v9399 = vsub.f32 0.0, %v9335
  %v9400 = vsub.f32 0.0, %v9336
  %v9401 = vsub.f32 0.0, %v9337
  %v9402 = vsub.f32 0.0, %v9338
  %v9403 = vsub.f32 0.0, %v9339
  %v9404 = vsub.f32 0.0, %v9340
  %v9405 = vsub.f32 0.0, %v9341
  %v9406 = vsub.f32 0.0, %v9342
  %v9407 = vsub.f32 0.0, %v9343
  %v9408 = vsel %vm9376, %v9392, %v9328
  %v9409 = vsel %vm9377, %v9393, %v9329
  %v9410 = vsel %vm9378, %v9394, %v9330
  %v9411 = vsel %vm9379, %v9395, %v9331
  %v9412 = vsel %vm9380, %v9396, %v9332
  %v9413 = vsel %vm9381, %v9397, %v9333
  %v9414 = vsel %vm9382, %v9398, %v9334
  %v9415 = vsel %vm9383, %v9399, %v9335
  %v9416 = vsel %vm9384, %v9400, %v9336
  %v9417 = vsel %vm9385, %v9401, %v9337
  %v9418 = vsel %vm9386, %v9402, %v9338
  %v9419 = vsel %vm9387, %v9403, %v9339
  %v9420 = vsel %vm9388, %v9404, %v9340
  %v9421 = vsel %vm9389, %v9405, %v9341
  %v9422 = vsel %vm9390, %v9406, %v9342
  %v9423 = vsel %vm9391, %v9407, %v9343
  %v9424 = vand.u32 %v9409, 4294901760
  %9425 = vmatprep.subr.mxu0 %v9424
  %v9426 = vand.u32 %v9408, 4294901760
  %9427 = vmatpush1.msra.mxu0 %v9426
  %v9428 = vand.u32 %v9413, 4294901760
  %9429 = vmatprep.subr.mxu0 %v9428
  %v9430 = vand.u32 %v9412, 4294901760
  %9431 = vmatpush1.msra.mxu0 %v9430
  %v9432 = vand.u32 %v9417, 4294901760
  %9433 = vmatprep.subr.mxu0 %v9432
  %v9434 = vand.u32 %v9416, 4294901760
  %9435 = vmatpush1.msra.mxu0 %v9434
  %v9436 = vand.u32 %v9421, 4294901760
  %9437 = vmatprep.subr.mxu0 %v9436
  %v9438 = vand.u32 %v9420, 4294901760
  %9439 = vmatpush1.msra.mxu0 %v9438
  %9440 = vmatprep.subr.mxu0 0.0
  %9441 = vmatpush1.msra.mxu0 0.0
  %9442 = vmatprep.subr.mxu0 0.0
  %9443 = vmatpush1.msra.mxu0 0.0
  %9444 = vmatprep.subr.mxu0 0.0
  %9445 = vmatpush1.msra.mxu0 0.0
  %9446 = vmatprep.subr.mxu0 0.0
  %9447 = vmatpush1.msra.mxu0 0.0
  %9448 = vmatprep.subr.mxu0 0.0
  %9449 = vmatpush1.msra.mxu0 0.0
  %9450 = vmatprep.subr.mxu0 0.0
  %9451 = vmatpush1.msra.mxu0 0.0
  %9452 = vmatprep.subr.mxu0 0.0
  %9453 = vmatpush1.msra.mxu0 0.0
  %9454 = vmatprep.subr.mxu0 0.0
  %9455 = vmatpush1.msra.mxu0 0.0
  %9456 = vmatprep.subr.mxu0 0.0
  %9457 = vmatpush1.msra.mxu0 0.0
  %9458 = vmatprep.subr.mxu0 0.0
  %9459 = vmatpush1.msra.mxu0 0.0
  %9460 = vmatprep.subr.mxu0 0.0
  %9461 = vmatpush1.msra.mxu0 0.0
  %9462 = vmatprep.subr.mxu0 0.0
  %9463 = vmatpush1.msra.mxu0 0.0
  %9464 = vmatprep.subr.mxu0 0.0
  %9465 = vmatpush1.msra.mxu0 0.0
  %9466 = vmatprep.subr.mxu0 0.0
  %9467 = vmatpush1.msra.mxu0 0.0
  %9468 = vmatprep.subr.mxu0 0.0
  %9469 = vmatpush1.msra.mxu0 0.0
  %9470 = vmatprep.subr.mxu0 0.0
  %9471 = vmatpush1.msra.mxu0 0.0
  %9472 = vmatprep.subr.mxu0 0.0
  %9473 = vmatpush1.msra.mxu0 0.0
  %9474 = vmatprep.subr.mxu0 0.0
  %9475 = vmatpush1.msra.mxu0 0.0
  %9476 = vmatprep.subr.mxu0 0.0
  %9477 = vmatpush1.msra.mxu0 0.0
  %9478 = vmatprep.subr.mxu0 0.0
  %9479 = vmatpush1.msra.mxu0 0.0
  %9480 = vmatprep.subr.mxu0 0.0
  %9481 = vmatpush1.msra.mxu0 0.0
  %9482 = vmatprep.subr.mxu0 0.0
  %9483 = vmatpush1.msra.mxu0 0.0
  %9484 = vmatprep.subr.mxu0 0.0
  %9485 = vmatpush1.msra.mxu0 0.0
  %9486 = vmatprep.subr.mxu0 0.0
  %9487 = vmatpush1.msra.mxu0 0.0
  %9488 = vmatprep.subr.mxu0 0.0
  %9489 = vmatpush1.msra.mxu0 0.0
  %9490 = vmatprep.subr.mxu0 0.0
  %9491 = vmatpush1.msra.mxu0 0.0
  %9492 = vmatprep.subr.mxu0 0.0
  %9493 = vmatpush1.msra.mxu0 0.0
  %9494 = vmatprep.subr.mxu0 0.0
  %9495 = vmatpush1.msra.mxu0 0.0
  %9496 = vmatprep.mubr.f32.mxu0 0.0
  %v9497 = vand.u32 %v3385, 4294901760
  %v9498 = vsub.f32 %v3385, %v9497
  %v9499 = vand.u32 %v9498, 4294901760
  %v9500 = vsub.f32 %v9498, %v9499
  %v9501 = vand.u32 %v9500, 4294901760
  %9502 = vmatmul.mubr.f32.gmra.mrb[0].mxu0 %v9501
  %v9503 = vpop.f32.mrb[0].mxu0
  %v9504 = vadd.f32 %v3367, %v9503
  %v9505 = vpop.f32.mrb[0].mxu0
  %v9506 = vadd.f32 %v3367, %v9505
  %9507 = vmatprep.mubr.f32.mxu0 0.0
  %v9508 = vand.u32 %v3388, 4294901760
  %v9509 = vsub.f32 %v3388, %v9508
  %v9510 = vand.u32 %v9509, 4294901760
  %v9511 = vsub.f32 %v9509, %v9510
  %v9512 = vand.u32 %v9511, 4294901760
  %9513 = vmatmul.mubr.f32.gmra.mrb[0].mxu0 %v9512
  %v9514 = vpop.f32.mrb[0].mxu0
  %v9515 = vadd.f32 %v3372, %v9514
  %v9516 = vpop.f32.mrb[0].mxu0
  %v9517 = vadd.f32 %v3372, %v9516
  %9518 = vmatprep.mubr.f32.mxu0 0.0
  %v9519 = vand.u32 %v3391, 4294901760
  %v9520 = vsub.f32 %v3391, %v9519
  %v9521 = vand.u32 %v9520, 4294901760
  %v9522 = vsub.f32 %v9520, %v9521
  %v9523 = vand.u32 %v9522, 4294901760
  %9524 = vmatmul.mubr.f32.gmra.mrb[0].mxu0 %v9523
  %v9525 = vpop.f32.mrb[0].mxu0
  %v9526 = vadd.f32 %v3377, %v9525
  %v9527 = vpop.f32.mrb[0].mxu0
  %v9528 = vadd.f32 %v3377, %v9527
  %9529 = vmatprep.mubr.f32.mxu0 0.0
  %v9530 = vand.u32 %v3394, 4294901760
  %v9531 = vsub.f32 %v3394, %v9530
  %v9532 = vand.u32 %v9531, 4294901760
  %v9533 = vsub.f32 %v9531, %v9532
  %v9534 = vand.u32 %v9533, 4294901760
  %9535 = vmatmul.mubr.f32.gmra.mrb[0].mxu0 %v9534
  %v9536 = vpop.f32.mrb[0].mxu0
  %v9537 = vadd.f32 %v3382, %v9536
  %v9538 = vpop.f32.mrb[0].mxu0
  %v9539 = vadd.f32 %v3382, %v9538
  %9540 = vdwg.mxu0
  %v9541 = vand.u32 %v9409, 4294901760
  %v9542 = vsub.f32 %v9409, %v9541
  %v9543 = vand.u32 %v9542, 4294901760
  %v9544 = vsub.f32 %v9542, %v9543
  %v9545 = vand.u32 %v9544, 4294901760
  %9546 = vmatprep.subr.mxu0 %v9545
  %v9547 = vand.u32 %v9408, 4294901760
  %v9548 = vsub.f32 %v9408, %v9547
  %v9549 = vand.u32 %v9548, 4294901760
  %v9550 = vsub.f32 %v9548, %v9549
  %v9551 = vand.u32 %v9550, 4294901760
  %9552 = vmatpush1.msra.mxu0 %v9551
  %v9553 = vand.u32 %v9413, 4294901760
  %v9554 = vsub.f32 %v9413, %v9553
  %v9555 = vand.u32 %v9554, 4294901760
  %v9556 = vsub.f32 %v9554, %v9555
  %v9557 = vand.u32 %v9556, 4294901760
  %9558 = vmatprep.subr.mxu0 %v9557
  %v9559 = vand.u32 %v9412, 4294901760
  %v9560 = vsub.f32 %v9412, %v9559
  %v9561 = vand.u32 %v9560, 4294901760
  %v9562 = vsub.f32 %v9560, %v9561
  %v9563 = vand.u32 %v9562, 4294901760
  %9564 = vmatpush1.msra.mxu0 %v9563
  %v9565 = vand.u32 %v9417, 4294901760
  %v9566 = vsub.f32 %v9417, %v9565
  %v9567 = vand.u32 %v9566, 4294901760
  %v9568 = vsub.f32 %v9566, %v9567
  %v9569 = vand.u32 %v9568, 4294901760
  %9570 = vmatprep.subr.mxu0 %v9569
  %v9571 = vand.u32 %v9416, 4294901760
  %v9572 = vsub.f32 %v9416, %v9571
  %v9573 = vand.u32 %v9572, 4294901760
  %v9574 = vsub.f32 %v9572, %v9573
  %v9575 = vand.u32 %v9574, 4294901760
  %9576 = vmatpush1.msra.mxu0 %v9575
  %v9577 = vand.u32 %v9421, 4294901760
  %v9578 = vsub.f32 %v9421, %v9577
  %v9579 = vand.u32 %v9578, 4294901760
  %v9580 = vsub.f32 %v9578, %v9579
  %v9581 = vand.u32 %v9580, 4294901760
  %9582 = vmatprep.subr.mxu0 %v9581
  %v9583 = vand.u32 %v9420, 4294901760
  %v9584 = vsub.f32 %v9420, %v9583
  %v9585 = vand.u32 %v9584, 4294901760
  %v9586 = vsub.f32 %v9584, %v9585
  %v9587 = vand.u32 %v9586, 4294901760
  %9588 = vmatpush1.msra.mxu0 %v9587
  %9589 = vmatprep.subr.mxu0 0.0
  %9590 = vmatpush1.msra.mxu0 0.0
  %9591 = vmatprep.subr.mxu0 0.0
  %9592 = vmatpush1.msra.mxu0 0.0
  %9593 = vmatprep.subr.mxu0 0.0
  %9594 = vmatpush1.msra.mxu0 0.0
  %9595 = vmatprep.subr.mxu0 0.0
  %9596 = vmatpush1.msra.mxu0 0.0
  %9597 = vmatprep.subr.mxu0 0.0
  %9598 = vmatpush1.msra.mxu0 0.0
  %9599 = vmatprep.subr.mxu0 0.0
  %9600 = vmatpush1.msra.mxu0 0.0
  %9601 = vmatprep.subr.mxu0 0.0
  %9602 = vmatpush1.msra.mxu0 0.0
  %9603 = vmatprep.subr.mxu0 0.0
  %9604 = vmatpush1.msra.mxu0 0.0
  %9605 = vmatprep.subr.mxu0 0.0
  %9606 = vmatpush1.msra.mxu0 0.0
  %9607 = vmatprep.subr.mxu0 0.0
  %9608 = vmatpush1.msra.mxu0 0.0
  %9609 = vmatprep.subr.mxu0 0.0
  %9610 = vmatpush1.msra.mxu0 0.0
  %9611 = vmatprep.subr.mxu0 0.0
  %9612 = vmatpush1.msra.mxu0 0.0
  %9613 = vmatprep.subr.mxu0 0.0
  %9614 = vmatpush1.msra.mxu0 0.0
  %9615 = vmatprep.subr.mxu0 0.0
  %9616 = vmatpush1.msra.mxu0 0.0
  %9617 = vmatprep.subr.mxu0 0.0
  %9618 = vmatpush1.msra.mxu0 0.0
  %9619 = vmatprep.subr.mxu0 0.0
  %9620 = vmatpush1.msra.mxu0 0.0
  %9621 = vmatprep.subr.mxu0 0.0
  %9622 = vmatpush1.msra.mxu0 0.0
  %9623 = vmatprep.subr.mxu0 0.0
  %9624 = vmatpush1.msra.mxu0 0.0
  %9625 = vmatprep.subr.mxu0 0.0
  %9626 = vmatpush1.msra.mxu0 0.0
  %9627 = vmatprep.subr.mxu0 0.0
  %9628 = vmatpush1.msra.mxu0 0.0
  %9629 = vmatprep.subr.mxu0 0.0
  %9630 = vmatpush1.msra.mxu0 0.0
  %9631 = vmatprep.subr.mxu0 0.0
  %9632 = vmatpush1.msra.mxu0 0.0
  %9633 = vmatprep.subr.mxu0 0.0
  %9634 = vmatpush1.msra.mxu0 0.0
  %9635 = vmatprep.subr.mxu0 0.0
  %9636 = vmatpush1.msra.mxu0 0.0
  %9637 = vmatprep.subr.mxu0 0.0
  %9638 = vmatpush1.msra.mxu0 0.0
  %9639 = vmatprep.subr.mxu0 0.0
  %9640 = vmatpush1.msra.mxu0 0.0
  %9641 = vmatprep.subr.mxu0 0.0
  %9642 = vmatpush1.msra.mxu0 0.0
  %9643 = vmatprep.subr.mxu0 0.0
  %9644 = vmatpush1.msra.mxu0 0.0
  %9645 = vmatprep.mubr.f32.mxu0 0.0
  %v9646 = vand.u32 %v3385, 4294901760
  %9647 = vmatmul.mubr.f32.gmra.mrb[0].mxu0 %v9646
  %v9648 = vpop.f32.mrb[0].mxu0
  %v9649 = vadd.f32 %v9504, %v9648
  %v9650 = vpop.f32.mrb[0].mxu0
  %v9651 = vadd.f32 %v9506, %v9650
  %9652 = vmatprep.mubr.f32.mxu0 0.0
  %v9653 = vand.u32 %v3388, 4294901760
  %9654 = vmatmul.mubr.f32.gmra.mrb[0].mxu0 %v9653
  %v9655 = vpop.f32.mrb[0].mxu0
  %v9656 = vadd.f32 %v9515, %v9655
  %v9657 = vpop.f32.mrb[0].mxu0
  %v9658 = vadd.f32 %v9517, %v9657
  %9659 = vmatprep.mubr.f32.mxu0 0.0
  %v9660 = vand.u32 %v3391, 4294901760
  %9661 = vmatmul.mubr.f32.gmra.mrb[0].mxu0 %v9660
  %v9662 = vpop.f32.mrb[0].mxu0
  %v9663 = vadd.f32 %v9526, %v9662
  %v9664 = vpop.f32.mrb[0].mxu0
  %v9665 = vadd.f32 %v9528, %v9664
  %9666 = vmatprep.mubr.f32.mxu0 0.0
  %v9667 = vand.u32 %v3394, 4294901760
  %9668 = vmatmul.mubr.f32.gmra.mrb[0].mxu0 %v9667
  %v9669 = vpop.f32.mrb[0].mxu0
  %v9670 = vadd.f32 %v9537, %v9669
  %v9671 = vpop.f32.mrb[0].mxu0
  %v9672 = vadd.f32 %v9539, %v9671
  %9673 = vdwg.mxu0
  %v9674 = vand.u32 %v9409, 4294901760
  %v9675 = vsub.f32 %v9409, %v9674
  %9676 = vmatprep.subr.mxu0 %v9675
  %v9677 = vand.u32 %v9408, 4294901760
  %v9678 = vsub.f32 %v9408, %v9677
  %9679 = vmatpush1.msra.mxu0 %v9678
  %v9680 = vand.u32 %v9413, 4294901760
  %v9681 = vsub.f32 %v9413, %v9680
  %9682 = vmatprep.subr.mxu0 %v9681
  %v9683 = vand.u32 %v9412, 4294901760
  %v9684 = vsub.f32 %v9412, %v9683
  %9685 = vmatpush1.msra.mxu0 %v9684
  %v9686 = vand.u32 %v9417, 4294901760
  %v9687 = vsub.f32 %v9417, %v9686
  %9688 = vmatprep.subr.mxu0 %v9687
  %v9689 = vand.u32 %v9416, 4294901760
  %v9690 = vsub.f32 %v9416, %v9689
  %9691 = vmatpush1.msra.mxu0 %v9690
  %v9692 = vand.u32 %v9421, 4294901760
  %v9693 = vsub.f32 %v9421, %v9692
  %9694 = vmatprep.subr.mxu0 %v9693
  %v9695 = vand.u32 %v9420, 4294901760
  %v9696 = vsub.f32 %v9420, %v9695
  %9697 = vmatpush1.msra.mxu0 %v9696
  %9698 = vmatprep.subr.mxu0 0.0
  %9699 = vmatpush1.msra.mxu0 0.0
  %9700 = vmatprep.subr.mxu0 0.0
  %9701 = vmatpush1.msra.mxu0 0.0
  %9702 = vmatprep.subr.mxu0 0.0
  %9703 = vmatpush1.msra.mxu0 0.0
  %9704 = vmatprep.subr.mxu0 0.0
  %9705 = vmatpush1.msra.mxu0 0.0
  %9706 = vmatprep.subr.mxu0 0.0
  %9707 = vmatpush1.msra.mxu0 0.0
  %9708 = vmatprep.subr.mxu0 0.0
  %9709 = vmatpush1.msra.mxu0 0.0
  %9710 = vmatprep.subr.mxu0 0.0
  %9711 = vmatpush1.msra.mxu0 0.0
  %9712 = vmatprep.subr.mxu0 0.0
  %9713 = vmatpush1.msra.mxu0 0.0
  %9714 = vmatprep.subr.mxu0 0.0
  %9715 = vmatpush1.msra.mxu0 0.0
  %9716 = vmatprep.subr.mxu0 0.0
  %9717 = vmatpush1.msra.mxu0 0.0
  %9718 = vmatprep.subr.mxu0 0.0
  %9719 = vmatpush1.msra.mxu0 0.0
  %9720 = vmatprep.subr.mxu0 0.0
  %9721 = vmatpush1.msra.mxu0 0.0
  %9722 = vmatprep.subr.mxu0 0.0
  %9723 = vmatpush1.msra.mxu0 0.0
  %9724 = vmatprep.subr.mxu0 0.0
  %9725 = vmatpush1.msra.mxu0 0.0
  %9726 = vmatprep.subr.mxu0 0.0
  %9727 = vmatpush1.msra.mxu0 0.0
  %9728 = vmatprep.subr.mxu0 0.0
  %9729 = vmatpush1.msra.mxu0 0.0
  %9730 = vmatprep.subr.mxu0 0.0
  %9731 = vmatpush1.msra.mxu0 0.0
  %9732 = vmatprep.subr.mxu0 0.0
  %9733 = vmatpush1.msra.mxu0 0.0
  %9734 = vmatprep.subr.mxu0 0.0
  %9735 = vmatpush1.msra.mxu0 0.0
  %9736 = vmatprep.subr.mxu0 0.0
  %9737 = vmatpush1.msra.mxu0 0.0
  %9738 = vmatprep.subr.mxu0 0.0
  %9739 = vmatpush1.msra.mxu0 0.0
  %9740 = vmatprep.subr.mxu0 0.0
  %9741 = vmatpush1.msra.mxu0 0.0
  %9742 = vmatprep.subr.mxu0 0.0
  %9743 = vmatpush1.msra.mxu0 0.0
  %9744 = vmatprep.subr.mxu0 0.0
  %9745 = vmatpush1.msra.mxu0 0.0
  %9746 = vmatprep.subr.mxu0 0.0
  %9747 = vmatpush1.msra.mxu0 0.0
  %9748 = vmatprep.subr.mxu0 0.0
  %9749 = vmatpush1.msra.mxu0 0.0
  %9750 = vmatprep.subr.mxu0 0.0
  %9751 = vmatpush1.msra.mxu0 0.0
  %9752 = vmatprep.subr.mxu0 0.0
  %9753 = vmatpush1.msra.mxu0 0.0
  %9754 = vmatprep.mubr.f32.mxu0 0.0
  %v9755 = vand.u32 %v3385, 4294901760
  %v9756 = vsub.f32 %v3385, %v9755
  %9757 = vmatmul.mubr.f32.gmra.mrb[0].mxu0 %v9756
  %v9758 = vpop.f32.mrb[0].mxu0
  %v9759 = vadd.f32 %v9649, %v9758
  %v9760 = vpop.f32.mrb[0].mxu0
  %v9761 = vadd.f32 %v9651, %v9760
  %9762 = vmatprep.mubr.f32.mxu0 0.0
  %v9763 = vand.u32 %v3388, 4294901760
  %v9764 = vsub.f32 %v3388, %v9763
  %9765 = vmatmul.mubr.f32.gmra.mrb[0].mxu0 %v9764
  %v9766 = vpop.f32.mrb[0].mxu0
  %v9767 = vadd.f32 %v9656, %v9766
  %v9768 = vpop.f32.mrb[0].mxu0
  %v9769 = vadd.f32 %v9658, %v9768
  %9770 = vmatprep.mubr.f32.mxu0 0.0
  %v9771 = vand.u32 %v3391, 4294901760
  %v9772 = vsub.f32 %v3391, %v9771
  %9773 = vmatmul.mubr.f32.gmra.mrb[0].mxu0 %v9772
  %v9774 = vpop.f32.mrb[0].mxu0
  %v9775 = vadd.f32 %v9663, %v9774
  %v9776 = vpop.f32.mrb[0].mxu0
  %v9777 = vadd.f32 %v9665, %v9776
  %9778 = vmatprep.mubr.f32.mxu0 0.0
  %v9779 = vand.u32 %v3394, 4294901760
  %v9780 = vsub.f32 %v3394, %v9779
  %9781 = vmatmul.mubr.f32.gmra.mrb[0].mxu0 %v9780
  %v9782 = vpop.f32.mrb[0].mxu0
  %v9783 = vadd.f32 %v9670, %v9782
  %v9784 = vpop.f32.mrb[0].mxu0
  %v9785 = vadd.f32 %v9672, %v9784
  %9786 = vdwg.mxu0
  %v9787 = vand.u32 %v9409, 4294901760
  %9788 = vmatprep.subr.mxu0 %v9787
  %v9789 = vand.u32 %v9408, 4294901760
  %9790 = vmatpush1.msra.mxu0 %v9789
  %v9791 = vand.u32 %v9413, 4294901760
  %9792 = vmatprep.subr.mxu0 %v9791
  %v9793 = vand.u32 %v9412, 4294901760
  %9794 = vmatpush1.msra.mxu0 %v9793
  %v9795 = vand.u32 %v9417, 4294901760
  %9796 = vmatprep.subr.mxu0 %v9795
  %v9797 = vand.u32 %v9416, 4294901760
  %9798 = vmatpush1.msra.mxu0 %v9797
  %v9799 = vand.u32 %v9421, 4294901760
  %9800 = vmatprep.subr.mxu0 %v9799
  %v9801 = vand.u32 %v9420, 4294901760
  %9802 = vmatpush1.msra.mxu0 %v9801
  %9803 = vmatprep.subr.mxu0 0.0
  %9804 = vmatpush1.msra.mxu0 0.0
  %9805 = vmatprep.subr.mxu0 0.0
  %9806 = vmatpush1.msra.mxu0 0.0
  %9807 = vmatprep.subr.mxu0 0.0
  %9808 = vmatpush1.msra.mxu0 0.0
  %9809 = vmatprep.subr.mxu0 0.0
  %9810 = vmatpush1.msra.mxu0 0.0
  %9811 = vmatprep.subr.mxu0 0.0
  %9812 = vmatpush1.msra.mxu0 0.0
  %9813 = vmatprep.subr.mxu0 0.0
  %9814 = vmatpush1.msra.mxu0 0.0
  %9815 = vmatprep.subr.mxu0 0.0
  %9816 = vmatpush1.msra.mxu0 0.0
  %9817 = vmatprep.subr.mxu0 0.0
  %9818 = vmatpush1.msra.mxu0 0.0
  %9819 = vmatprep.subr.mxu0 0.0
  %9820 = vmatpush1.msra.mxu0 0.0
  %9821 = vmatprep.subr.mxu0 0.0
  %9822 = vmatpush1.msra.mxu0 0.0
  %9823 = vmatprep.subr.mxu0 0.0
  %9824 = vmatpush1.msra.mxu0 0.0
  %9825 = vmatprep.subr.mxu0 0.0
  %9826 = vmatpush1.msra.mxu0 0.0
  %9827 = vmatprep.subr.mxu0 0.0
  %9828 = vmatpush1.msra.mxu0 0.0
  %9829 = vmatprep.subr.mxu0 0.0
  %9830 = vmatpush1.msra.mxu0 0.0
  %9831 = vmatprep.subr.mxu0 0.0
  %9832 = vmatpush1.msra.mxu0 0.0
  %9833 = vmatprep.subr.mxu0 0.0
  %9834 = vmatpush1.msra.mxu0 0.0
  %9835 = vmatprep.subr.mxu0 0.0
  %9836 = vmatpush1.msra.mxu0 0.0
  %9837 = vmatprep.subr.mxu0 0.0
  %9838 = vmatpush1.msra.mxu0 0.0
  %9839 = vmatprep.subr.mxu0 0.0
  %9840 = vmatpush1.msra.mxu0 0.0
  %9841 = vmatprep.subr.mxu0 0.0
  %9842 = vmatpush1.msra.mxu0 0.0
  %9843 = vmatprep.subr.mxu0 0.0
  %9844 = vmatpush1.msra.mxu0 0.0
  %9845 = vmatprep.subr.mxu0 0.0
  %9846 = vmatpush1.msra.mxu0 0.0
  %9847 = vmatprep.subr.mxu0 0.0
  %9848 = vmatpush1.msra.mxu0 0.0
  %9849 = vmatprep.subr.mxu0 0.0
  %9850 = vmatpush1.msra.mxu0 0.0
  %9851 = vmatprep.subr.mxu0 0.0
  %9852 = vmatpush1.msra.mxu0 0.0
  %9853 = vmatprep.subr.mxu0 0.0
  %9854 = vmatpush1.msra.mxu0 0.0
  %9855 = vmatprep.subr.mxu0 0.0
  %9856 = vmatpush1.msra.mxu0 0.0
  %9857 = vmatprep.subr.mxu0 0.0
  %9858 = vmatpush1.msra.mxu0 0.0
  %9859 = vmatprep.mubr.f32.mxu0 0.0
  %v9860 = vand.u32 %v3385, 4294901760
  %v9861 = vsub.f32 %v3385, %v9860
  %v9862 = vand.u32 %v9861, 4294901760
  %9863 = vmatmul.mubr.f32.gmra.mrb[0].mxu0 %v9862
  %v9864 = vpop.f32.mrb[0].mxu0
  %v9865 = vadd.f32 %v9759, %v9864
  %v9866 = vpop.f32.mrb[0].mxu0
  %v9867 = vadd.f32 %v9761, %v9866
  %9868 = vmatprep.mubr.f32.mxu0 0.0
  %v9869 = vand.u32 %v3388, 4294901760
  %v9870 = vsub.f32 %v3388, %v9869
  %v9871 = vand.u32 %v9870, 4294901760
  %9872 = vmatmul.mubr.f32.gmra.mrb[0].mxu0 %v9871
  %v9873 = vpop.f32.mrb[0].mxu0
  %v9874 = vadd.f32 %v9767, %v9873
  %v9875 = vpop.f32.mrb[0].mxu0
  %v9876 = vadd.f32 %v9769, %v9875
  %9877 = vmatprep.mubr.f32.mxu0 0.0
  %v9878 = vand.u32 %v3391, 4294901760
  %v9879 = vsub.f32 %v3391, %v9878
  %v9880 = vand.u32 %v9879, 4294901760
  %9881 = vmatmul.mubr.f32.gmra.mrb[0].mxu0 %v9880
  %v9882 = vpop.f32.mrb[0].mxu0
  %v9883 = vadd.f32 %v9775, %v9882
  %v9884 = vpop.f32.mrb[0].mxu0
  %v9885 = vadd.f32 %v9777, %v9884
  %9886 = vmatprep.mubr.f32.mxu0 0.0
  %v9887 = vand.u32 %v3394, 4294901760
  %v9888 = vsub.f32 %v3394, %v9887
  %v9889 = vand.u32 %v9888, 4294901760
  %9890 = vmatmul.mubr.f32.gmra.mrb[0].mxu0 %v9889
  %v9891 = vpop.f32.mrb[0].mxu0
  %v9892 = vadd.f32 %v9783, %v9891
  %v9893 = vpop.f32.mrb[0].mxu0
  %v9894 = vadd.f32 %v9785, %v9893
  %9895 = vdwg.mxu0
  %v9896 = vand.u32 %v9409, 4294901760
  %v9897 = vsub.f32 %v9409, %v9896
  %v9898 = vand.u32 %v9897, 4294901760
  %9899 = vmatprep.subr.mxu0 %v9898
  %v9900 = vand.u32 %v9408, 4294901760
  %v9901 = vsub.f32 %v9408, %v9900
  %v9902 = vand.u32 %v9901, 4294901760
  %9903 = vmatpush1.msra.mxu0 %v9902
  %v9904 = vand.u32 %v9413, 4294901760
  %v9905 = vsub.f32 %v9413, %v9904
  %v9906 = vand.u32 %v9905, 4294901760
  %9907 = vmatprep.subr.mxu0 %v9906
  %v9908 = vand.u32 %v9412, 4294901760
  %v9909 = vsub.f32 %v9412, %v9908
  %v9910 = vand.u32 %v9909, 4294901760
  %9911 = vmatpush1.msra.mxu0 %v9910
  %v9912 = vand.u32 %v9417, 4294901760
  %v9913 = vsub.f32 %v9417, %v9912
  %v9914 = vand.u32 %v9913, 4294901760
  %9915 = vmatprep.subr.mxu0 %v9914
  %v9916 = vand.u32 %v9416, 4294901760
  %v9917 = vsub.f32 %v9416, %v9916
  %v9918 = vand.u32 %v9917, 4294901760
  %9919 = vmatpush1.msra.mxu0 %v9918
  %v9920 = vand.u32 %v9421, 4294901760
  %v9921 = vsub.f32 %v9421, %v9920
  %v9922 = vand.u32 %v9921, 4294901760
  %9923 = vmatprep.subr.mxu0 %v9922
  %v9924 = vand.u32 %v9420, 4294901760
  %v9925 = vsub.f32 %v9420, %v9924
  %v9926 = vand.u32 %v9925, 4294901760
  %9927 = vmatpush1.msra.mxu0 %v9926
  %9928 = vmatprep.subr.mxu0 0.0
  %9929 = vmatpush1.msra.mxu0 0.0
  %9930 = vmatprep.subr.mxu0 0.0
  %9931 = vmatpush1.msra.mxu0 0.0
  %9932 = vmatprep.subr.mxu0 0.0
  %9933 = vmatpush1.msra.mxu0 0.0
  %9934 = vmatprep.subr.mxu0 0.0
  %9935 = vmatpush1.msra.mxu0 0.0
  %9936 = vmatprep.subr.mxu0 0.0
  %9937 = vmatpush1.msra.mxu0 0.0
  %9938 = vmatprep.subr.mxu0 0.0
  %9939 = vmatpush1.msra.mxu0 0.0
  %9940 = vmatprep.subr.mxu0 0.0
  %9941 = vmatpush1.msra.mxu0 0.0
  %9942 = vmatprep.subr.mxu0 0.0
  %9943 = vmatpush1.msra.mxu0 0.0
  %9944 = vmatprep.subr.mxu0 0.0
  %9945 = vmatpush1.msra.mxu0 0.0
  %9946 = vmatprep.subr.mxu0 0.0
  %9947 = vmatpush1.msra.mxu0 0.0
  %9948 = vmatprep.subr.mxu0 0.0
  %9949 = vmatpush1.msra.mxu0 0.0
  %9950 = vmatprep.subr.mxu0 0.0
  %9951 = vmatpush1.msra.mxu0 0.0
  %9952 = vmatprep.subr.mxu0 0.0
  %9953 = vmatpush1.msra.mxu0 0.0
  %9954 = vmatprep.subr.mxu0 0.0
  %9955 = vmatpush1.msra.mxu0 0.0
  %9956 = vmatprep.subr.mxu0 0.0
  %9957 = vmatpush1.msra.mxu0 0.0
  %9958 = vmatprep.subr.mxu0 0.0
  %9959 = vmatpush1.msra.mxu0 0.0
  %9960 = vmatprep.subr.mxu0 0.0
  %9961 = vmatpush1.msra.mxu0 0.0
  %9962 = vmatprep.subr.mxu0 0.0
  %9963 = vmatpush1.msra.mxu0 0.0
  %9964 = vmatprep.subr.mxu0 0.0
  %9965 = vmatpush1.msra.mxu0 0.0
  %9966 = vmatprep.subr.mxu0 0.0
  %9967 = vmatpush1.msra.mxu0 0.0
  %9968 = vmatprep.subr.mxu0 0.0
  %9969 = vmatpush1.msra.mxu0 0.0
  %9970 = vmatprep.subr.mxu0 0.0
  %9971 = vmatpush1.msra.mxu0 0.0
  %9972 = vmatprep.subr.mxu0 0.0
  %9973 = vmatpush1.msra.mxu0 0.0
  %9974 = vmatprep.subr.mxu0 0.0
  %9975 = vmatpush1.msra.mxu0 0.0
  %9976 = vmatprep.subr.mxu0 0.0
  %9977 = vmatpush1.msra.mxu0 0.0
  %9978 = vmatprep.subr.mxu0 0.0
  %9979 = vmatpush1.msra.mxu0 0.0
  %9980 = vmatprep.subr.mxu0 0.0
  %9981 = vmatpush1.msra.mxu0 0.0
  %9982 = vmatprep.subr.mxu0 0.0
  %9983 = vmatpush1.msra.mxu0 0.0
  %9984 = vmatprep.mubr.f32.mxu0 0.0
  %v9985 = vand.u32 %v3385, 4294901760
  %9986 = vmatmul.mubr.f32.gmra.mrb[0].mxu0 %v9985
  %v9987 = vpop.f32.mrb[0].mxu0
  %v9988 = vadd.f32 %v9865, %v9987
  %v9989 = vpop.f32.mrb[0].mxu0
  %v9990 = vadd.f32 %v9867, %v9989
  %9991 = vmatprep.mubr.f32.mxu0 0.0
  %v9992 = vand.u32 %v3388, 4294901760
  %9993 = vmatmul.mubr.f32.gmra.mrb[0].mxu0 %v9992
  %v9994 = vpop.f32.mrb[0].mxu0
  %v9995 = vadd.f32 %v9874, %v9994
  %v9996 = vpop.f32.mrb[0].mxu0
  %v9997 = vadd.f32 %v9876, %v9996
  %9998 = vmatprep.mubr.f32.mxu0 0.0
  %v9999 = vand.u32 %v3391, 4294901760
  %10000 = vmatmul.mubr.f32.gmra.mrb[0].mxu0 %v9999
  %v10001 = vpop.f32.mrb[0].mxu0
  %v10002 = vadd.f32 %v9883, %v10001
  %v10003 = vpop.f32.mrb[0].mxu0
  %v10004 = vadd.f32 %v9885, %v10003
  %10005 = vmatprep.mubr.f32.mxu0 0.0
  %v10006 = vand.u32 %v3394, 4294901760
  %10007 = vmatmul.mubr.f32.gmra.mrb[0].mxu0 %v10006
  %v10008 = vpop.f32.mrb[0].mxu0
  %v10009 = vadd.f32 %v9892, %v10008
  %v10010 = vpop.f32.mrb[0].mxu0
  %v10011 = vadd.f32 %v9894, %v10010
  %10012 = vdwg.mxu0
  %v10013 = vand.u32 %v9409, 4294901760
  %10014 = vmatprep.subr.mxu0 %v10013
  %v10015 = vand.u32 %v9408, 4294901760
  %10016 = vmatpush1.msra.mxu0 %v10015
  %v10017 = vand.u32 %v9413, 4294901760
  %10018 = vmatprep.subr.mxu0 %v10017
  %v10019 = vand.u32 %v9412, 4294901760
  %10020 = vmatpush1.msra.mxu0 %v10019
  %v10021 = vand.u32 %v9417, 4294901760
  %10022 = vmatprep.subr.mxu0 %v10021
  %v10023 = vand.u32 %v9416, 4294901760
  %10024 = vmatpush1.msra.mxu0 %v10023
  %v10025 = vand.u32 %v9421, 4294901760
  %10026 = vmatprep.subr.mxu0 %v10025
  %v10027 = vand.u32 %v9420, 4294901760
  %10028 = vmatpush1.msra.mxu0 %v10027
  %10029 = vmatprep.subr.mxu0 0.0
  %10030 = vmatpush1.msra.mxu0 0.0
  %10031 = vmatprep.subr.mxu0 0.0
  %10032 = vmatpush1.msra.mxu0 0.0
  %10033 = vmatprep.subr.mxu0 0.0
  %10034 = vmatpush1.msra.mxu0 0.0
  %10035 = vmatprep.subr.mxu0 0.0
  %10036 = vmatpush1.msra.mxu0 0.0
  %10037 = vmatprep.subr.mxu0 0.0
  %10038 = vmatpush1.msra.mxu0 0.0
  %10039 = vmatprep.subr.mxu0 0.0
  %10040 = vmatpush1.msra.mxu0 0.0
  %10041 = vmatprep.subr.mxu0 0.0
  %10042 = vmatpush1.msra.mxu0 0.0
  %10043 = vmatprep.subr.mxu0 0.0
  %10044 = vmatpush1.msra.mxu0 0.0
  %10045 = vmatprep.subr.mxu0 0.0
  %10046 = vmatpush1.msra.mxu0 0.0
  %10047 = vmatprep.subr.mxu0 0.0
  %10048 = vmatpush1.msra.mxu0 0.0
  %10049 = vmatprep.subr.mxu0 0.0
  %10050 = vmatpush1.msra.mxu0 0.0
  %10051 = vmatprep.subr.mxu0 0.0
  %10052 = vmatpush1.msra.mxu0 0.0
  %10053 = vmatprep.subr.mxu0 0.0
  %10054 = vmatpush1.msra.mxu0 0.0
  %10055 = vmatprep.subr.mxu0 0.0
  %10056 = vmatpush1.msra.mxu0 0.0
  %10057 = vmatprep.subr.mxu0 0.0
  %10058 = vmatpush1.msra.mxu0 0.0
  %10059 = vmatprep.subr.mxu0 0.0
  %10060 = vmatpush1.msra.mxu0 0.0
  %10061 = vmatprep.subr.mxu0 0.0
  %10062 = vmatpush1.msra.mxu0 0.0
  %10063 = vmatprep.subr.mxu0 0.0
  %10064 = vmatpush1.msra.mxu0 0.0
  %10065 = vmatprep.subr.mxu0 0.0
  %10066 = vmatpush1.msra.mxu0 0.0
  %10067 = vmatprep.subr.mxu0 0.0
  %10068 = vmatpush1.msra.mxu0 0.0
  %10069 = vmatprep.subr.mxu0 0.0
  %10070 = vmatpush1.msra.mxu0 0.0
  %10071 = vmatprep.subr.mxu0 0.0
  %10072 = vmatpush1.msra.mxu0 0.0
  %10073 = vmatprep.subr.mxu0 0.0
  %10074 = vmatpush1.msra.mxu0 0.0
  %10075 = vmatprep.subr.mxu0 0.0
  %10076 = vmatpush1.msra.mxu0 0.0
  %10077 = vmatprep.subr.mxu0 0.0
  %10078 = vmatpush1.msra.mxu0 0.0
  %10079 = vmatprep.subr.mxu0 0.0
  %10080 = vmatpush1.msra.mxu0 0.0
  %10081 = vmatprep.subr.mxu0 0.0
  %10082 = vmatpush1.msra.mxu0 0.0
  %10083 = vmatprep.subr.mxu0 0.0
  %10084 = vmatpush1.msra.mxu0 0.0
  %10085 = vmatprep.mubr.f32.mxu0 0.0
  %v10086 = vand.u32 %v3385, 4294901760
  %10087 = vmatmul.mubr.f32.gmra.mrb[0].mxu0 %v10086
  %v10088 = vpop.f32.mrb[0].mxu0
  %v10089 = vadd.f32 %v9988, %v10088
  %v10090 = vpop.f32.mrb[0].mxu0
  %v10091 = vadd.f32 %v9990, %v10090
  %10092 = vmatprep.mubr.f32.mxu0 0.0
  %v10093 = vand.u32 %v3388, 4294901760
  %10094 = vmatmul.mubr.f32.gmra.mrb[0].mxu0 %v10093
  %v10095 = vpop.f32.mrb[0].mxu0
  %v10096 = vadd.f32 %v9995, %v10095
  %v10097 = vpop.f32.mrb[0].mxu0
  %v10098 = vadd.f32 %v9997, %v10097
  %10099 = vmatprep.mubr.f32.mxu0 0.0
  %v10100 = vand.u32 %v3391, 4294901760
  %10101 = vmatmul.mubr.f32.gmra.mrb[0].mxu0 %v10100
  %v10102 = vpop.f32.mrb[0].mxu0
  %v10103 = vadd.f32 %v10002, %v10102
  %v10104 = vpop.f32.mrb[0].mxu0
  %v10105 = vadd.f32 %v10004, %v10104
  %10106 = vmatprep.mubr.f32.mxu0 0.0
  %v10107 = vand.u32 %v3394, 4294901760
  %10108 = vmatmul.mubr.f32.gmra.mrb[0].mxu0 %v10107
  %v10109 = vpop.f32.mrb[0].mxu0
  %v10110 = vadd.f32 %v10009, %v10109
  %v10111 = vpop.f32.mrb[0].mxu0
  %v10112 = vadd.f32 %v10011, %v10111
  %10113 = vdwg.mxu0
  %v10114 = vand.u32 %v9411, 4294901760
  %10115 = vmatprep.subr.mxu0 %v10114
  %v10116 = vand.u32 %v9410, 4294901760
  %10117 = vmatpush1.msra.mxu0 %v10116
  %v10118 = vand.u32 %v9415, 4294901760
  %10119 = vmatprep.subr.mxu0 %v10118
  %v10120 = vand.u32 %v9414, 4294901760
  %10121 = vmatpush1.msra.mxu0 %v10120
  %v10122 = vand.u32 %v9419, 4294901760
  %10123 = vmatprep.subr.mxu0 %v10122
  %v10124 = vand.u32 %v9418, 4294901760
  %10125 = vmatpush1.msra.mxu0 %v10124
  %v10126 = vand.u32 %v9423, 4294901760
  %10127 = vmatprep.subr.mxu0 %v10126
  %v10128 = vand.u32 %v9422, 4294901760
  %10129 = vmatpush1.msra.mxu0 %v10128
  %10130 = vmatprep.subr.mxu0 0.0
  %10131 = vmatpush1.msra.mxu0 0.0
  %10132 = vmatprep.subr.mxu0 0.0
  %10133 = vmatpush1.msra.mxu0 0.0
  %10134 = vmatprep.subr.mxu0 0.0
  %10135 = vmatpush1.msra.mxu0 0.0
  %10136 = vmatprep.subr.mxu0 0.0
  %10137 = vmatpush1.msra.mxu0 0.0
  %10138 = vmatprep.subr.mxu0 0.0
  %10139 = vmatpush1.msra.mxu0 0.0
  %10140 = vmatprep.subr.mxu0 0.0
  %10141 = vmatpush1.msra.mxu0 0.0
  %10142 = vmatprep.subr.mxu0 0.0
  %10143 = vmatpush1.msra.mxu0 0.0
  %10144 = vmatprep.subr.mxu0 0.0
  %10145 = vmatpush1.msra.mxu0 0.0
  %10146 = vmatprep.subr.mxu0 0.0
  %10147 = vmatpush1.msra.mxu0 0.0
  %10148 = vmatprep.subr.mxu0 0.0
  %10149 = vmatpush1.msra.mxu0 0.0
  %10150 = vmatprep.subr.mxu0 0.0
  %10151 = vmatpush1.msra.mxu0 0.0
  %10152 = vmatprep.subr.mxu0 0.0
  %10153 = vmatpush1.msra.mxu0 0.0
  %10154 = vmatprep.subr.mxu0 0.0
  %10155 = vmatpush1.msra.mxu0 0.0
  %10156 = vmatprep.subr.mxu0 0.0
  %10157 = vmatpush1.msra.mxu0 0.0
  %10158 = vmatprep.subr.mxu0 0.0
  %10159 = vmatpush1.msra.mxu0 0.0
  %10160 = vmatprep.subr.mxu0 0.0
  %10161 = vmatpush1.msra.mxu0 0.0
  %10162 = vmatprep.subr.mxu0 0.0
  %10163 = vmatpush1.msra.mxu0 0.0
  %10164 = vmatprep.subr.mxu0 0.0
  %10165 = vmatpush1.msra.mxu0 0.0
  %10166 = vmatprep.subr.mxu0 0.0
  %10167 = vmatpush1.msra.mxu0 0.0
  %10168 = vmatprep.subr.mxu0 0.0
  %10169 = vmatpush1.msra.mxu0 0.0
  %10170 = vmatprep.subr.mxu0 0.0
  %10171 = vmatpush1.msra.mxu0 0.0
  %10172 = vmatprep.subr.mxu0 0.0
  %10173 = vmatpush1.msra.mxu0 0.0
  %10174 = vmatprep.subr.mxu0 0.0
  %10175 = vmatpush1.msra.mxu0 0.0
  %10176 = vmatprep.subr.mxu0 0.0
  %10177 = vmatpush1.msra.mxu0 0.0
  %10178 = vmatprep.subr.mxu0 0.0
  %10179 = vmatpush1.msra.mxu0 0.0
  %10180 = vmatprep.subr.mxu0 0.0
  %10181 = vmatpush1.msra.mxu0 0.0
  %10182 = vmatprep.subr.mxu0 0.0
  %10183 = vmatpush1.msra.mxu0 0.0
  %10184 = vmatprep.subr.mxu0 0.0
  %10185 = vmatpush1.msra.mxu0 0.0
  %10186 = vmatprep.mubr.f32.mxu0 0.0
  %v10187 = vand.u32 %v3385, 4294901760
  %v10188 = vsub.f32 %v3385, %v10187
  %v10189 = vand.u32 %v10188, 4294901760
  %v10190 = vsub.f32 %v10188, %v10189
  %v10191 = vand.u32 %v10190, 4294901760
  %10192 = vmatmul.mubr.f32.gmra.mrb[0].mxu0 %v10191
  %v10193 = vpop.f32.mrb[0].mxu0
  %v10194 = vadd.f32 %v3367, %v10193
  %v10195 = vpop.f32.mrb[0].mxu0
  %v10196 = vadd.f32 %v3367, %v10195
  %10197 = vmatprep.mubr.f32.mxu0 0.0
  %v10198 = vand.u32 %v3388, 4294901760
  %v10199 = vsub.f32 %v3388, %v10198
  %v10200 = vand.u32 %v10199, 4294901760
  %v10201 = vsub.f32 %v10199, %v10200
  %v10202 = vand.u32 %v10201, 4294901760
  %10203 = vmatmul.mubr.f32.gmra.mrb[0].mxu0 %v10202
  %v10204 = vpop.f32.mrb[0].mxu0
  %v10205 = vadd.f32 %v3372, %v10204
  %v10206 = vpop.f32.mrb[0].mxu0
  %v10207 = vadd.f32 %v3372, %v10206
  %10208 = vmatprep.mubr.f32.mxu0 0.0
  %v10209 = vand.u32 %v3391, 4294901760
  %v10210 = vsub.f32 %v3391, %v10209
  %v10211 = vand.u32 %v10210, 4294901760
  %v10212 = vsub.f32 %v10210, %v10211
  %v10213 = vand.u32 %v10212, 4294901760
  %10214 = vmatmul.mubr.f32.gmra.mrb[0].mxu0 %v10213
  %v10215 = vpop.f32.mrb[0].mxu0
  %v10216 = vadd.f32 %v3377, %v10215
  %v10217 = vpop.f32.mrb[0].mxu0
  %v10218 = vadd.f32 %v3377, %v10217
  %10219 = vmatprep.mubr.f32.mxu0 0.0
  %v10220 = vand.u32 %v3394, 4294901760
  %v10221 = vsub.f32 %v3394, %v10220
  %v10222 = vand.u32 %v10221, 4294901760
  %v10223 = vsub.f32 %v10221, %v10222
  %v10224 = vand.u32 %v10223, 4294901760
  %10225 = vmatmul.mubr.f32.gmra.mrb[0].mxu0 %v10224
  %v10226 = vpop.f32.mrb[0].mxu0
  %v10227 = vadd.f32 %v3382, %v10226
  %v10228 = vpop.f32.mrb[0].mxu0
  %v10229 = vadd.f32 %v3382, %v10228
  %10230 = vdwg.mxu0
  %v10231 = vand.u32 %v9411, 4294901760
  %v10232 = vsub.f32 %v9411, %v10231
  %v10233 = vand.u32 %v10232, 4294901760
  %v10234 = vsub.f32 %v10232, %v10233
  %v10235 = vand.u32 %v10234, 4294901760
  %10236 = vmatprep.subr.mxu0 %v10235
  %v10237 = vand.u32 %v9410, 4294901760
  %v10238 = vsub.f32 %v9410, %v10237
  %v10239 = vand.u32 %v10238, 4294901760
  %v10240 = vsub.f32 %v10238, %v10239
  %v10241 = vand.u32 %v10240, 4294901760
  %10242 = vmatpush1.msra.mxu0 %v10241
  %v10243 = vand.u32 %v9415, 4294901760
  %v10244 = vsub.f32 %v9415, %v10243
  %v10245 = vand.u32 %v10244, 4294901760
  %v10246 = vsub.f32 %v10244, %v10245
  %v10247 = vand.u32 %v10246, 4294901760
  %10248 = vmatprep.subr.mxu0 %v10247
  %v10249 = vand.u32 %v9414, 4294901760
  %v10250 = vsub.f32 %v9414, %v10249
  %v10251 = vand.u32 %v10250, 4294901760
  %v10252 = vsub.f32 %v10250, %v10251
  %v10253 = vand.u32 %v10252, 4294901760
  %10254 = vmatpush1.msra.mxu0 %v10253
  %v10255 = vand.u32 %v9419, 4294901760
  %v10256 = vsub.f32 %v9419, %v10255
  %v10257 = vand.u32 %v10256, 4294901760
  %v10258 = vsub.f32 %v10256, %v10257
  %v10259 = vand.u32 %v10258, 4294901760
  %10260 = vmatprep.subr.mxu0 %v10259
  %v10261 = vand.u32 %v9418, 4294901760
  %v10262 = vsub.f32 %v9418, %v10261
  %v10263 = vand.u32 %v10262, 4294901760
  %v10264 = vsub.f32 %v10262, %v10263
  %v10265 = vand.u32 %v10264, 4294901760
  %10266 = vmatpush1.msra.mxu0 %v10265
  %v10267 = vand.u32 %v9423, 4294901760
  %v10268 = vsub.f32 %v9423, %v10267
  %v10269 = vand.u32 %v10268, 4294901760
  %v10270 = vsub.f32 %v10268, %v10269
  %v10271 = vand.u32 %v10270, 4294901760
  %10272 = vmatprep.subr.mxu0 %v10271
  %v10273 = vand.u32 %v9422, 4294901760
  %v10274 = vsub.f32 %v9422, %v10273
  %v10275 = vand.u32 %v10274, 4294901760
  %v10276 = vsub.f32 %v10274, %v10275
  %v10277 = vand.u32 %v10276, 4294901760
  %10278 = vmatpush1.msra.mxu0 %v10277
  %10279 = vmatprep.subr.mxu0 0.0
  %10280 = vmatpush1.msra.mxu0 0.0
  %10281 = vmatprep.subr.mxu0 0.0
  %10282 = vmatpush1.msra.mxu0 0.0
  %10283 = vmatprep.subr.mxu0 0.0
  %10284 = vmatpush1.msra.mxu0 0.0
  %10285 = vmatprep.subr.mxu0 0.0
  %10286 = vmatpush1.msra.mxu0 0.0
  %10287 = vmatprep.subr.mxu0 0.0
  %10288 = vmatpush1.msra.mxu0 0.0
  %10289 = vmatprep.subr.mxu0 0.0
  %10290 = vmatpush1.msra.mxu0 0.0
  %10291 = vmatprep.subr.mxu0 0.0
  %10292 = vmatpush1.msra.mxu0 0.0
  %10293 = vmatprep.subr.mxu0 0.0
  %10294 = vmatpush1.msra.mxu0 0.0
  %10295 = vmatprep.subr.mxu0 0.0
  %10296 = vmatpush1.msra.mxu0 0.0
  %10297 = vmatprep.subr.mxu0 0.0
  %10298 = vmatpush1.msra.mxu0 0.0
  %10299 = vmatprep.subr.mxu0 0.0
  %10300 = vmatpush1.msra.mxu0 0.0
  %10301 = vmatprep.subr.mxu0 0.0
  %10302 = vmatpush1.msra.mxu0 0.0
  %10303 = vmatprep.subr.mxu0 0.0
  %10304 = vmatpush1.msra.mxu0 0.0
  %10305 = vmatprep.subr.mxu0 0.0
  %10306 = vmatpush1.msra.mxu0 0.0
  %10307 = vmatprep.subr.mxu0 0.0
  %10308 = vmatpush1.msra.mxu0 0.0
  %10309 = vmatprep.subr.mxu0 0.0
  %10310 = vmatpush1.msra.mxu0 0.0
  %10311 = vmatprep.subr.mxu0 0.0
  %10312 = vmatpush1.msra.mxu0 0.0
  %10313 = vmatprep.subr.mxu0 0.0
  %10314 = vmatpush1.msra.mxu0 0.0
  %10315 = vmatprep.subr.mxu0 0.0
  %10316 = vmatpush1.msra.mxu0 0.0
  %10317 = vmatprep.subr.mxu0 0.0
  %10318 = vmatpush1.msra.mxu0 0.0
  %10319 = vmatprep.subr.mxu0 0.0
  %10320 = vmatpush1.msra.mxu0 0.0
  %10321 = vmatprep.subr.mxu0 0.0
  %10322 = vmatpush1.msra.mxu0 0.0
  %10323 = vmatprep.subr.mxu0 0.0
  %10324 = vmatpush1.msra.mxu0 0.0
  %10325 = vmatprep.subr.mxu0 0.0
  %10326 = vmatpush1.msra.mxu0 0.0
  %10327 = vmatprep.subr.mxu0 0.0
  %10328 = vmatpush1.msra.mxu0 0.0
  %10329 = vmatprep.subr.mxu0 0.0
  %10330 = vmatpush1.msra.mxu0 0.0
  %10331 = vmatprep.subr.mxu0 0.0
  %10332 = vmatpush1.msra.mxu0 0.0
  %10333 = vmatprep.subr.mxu0 0.0
  %10334 = vmatpush1.msra.mxu0 0.0
  %10335 = vmatprep.mubr.f32.mxu0 0.0
  %v10336 = vand.u32 %v3385, 4294901760
  %10337 = vmatmul.mubr.f32.gmra.mrb[0].mxu0 %v10336
  %v10338 = vpop.f32.mrb[0].mxu0
  %v10339 = vadd.f32 %v10194, %v10338
  %v10340 = vpop.f32.mrb[0].mxu0
  %v10341 = vadd.f32 %v10196, %v10340
  %10342 = vmatprep.mubr.f32.mxu0 0.0
  %v10343 = vand.u32 %v3388, 4294901760
  %10344 = vmatmul.mubr.f32.gmra.mrb[0].mxu0 %v10343
  %v10345 = vpop.f32.mrb[0].mxu0
  %v10346 = vadd.f32 %v10205, %v10345
  %v10347 = vpop.f32.mrb[0].mxu0
  %v10348 = vadd.f32 %v10207, %v10347
  %10349 = vmatprep.mubr.f32.mxu0 0.0
  %v10350 = vand.u32 %v3391, 4294901760
  %10351 = vmatmul.mubr.f32.gmra.mrb[0].mxu0 %v10350
  %v10352 = vpop.f32.mrb[0].mxu0
  %v10353 = vadd.f32 %v10216, %v10352
  %v10354 = vpop.f32.mrb[0].mxu0
  %v10355 = vadd.f32 %v10218, %v10354
  %10356 = vmatprep.mubr.f32.mxu0 0.0
  %v10357 = vand.u32 %v3394, 4294901760
  %10358 = vmatmul.mubr.f32.gmra.mrb[0].mxu0 %v10357
  %v10359 = vpop.f32.mrb[0].mxu0
  %v10360 = vadd.f32 %v10227, %v10359
  %v10361 = vpop.f32.mrb[0].mxu0
  %v10362 = vadd.f32 %v10229, %v10361
  %10363 = vdwg.mxu0
  %v10364 = vand.u32 %v9411, 4294901760
  %v10365 = vsub.f32 %v9411, %v10364
  %10366 = vmatprep.subr.mxu0 %v10365
  %v10367 = vand.u32 %v9410, 4294901760
  %v10368 = vsub.f32 %v9410, %v10367
  %10369 = vmatpush1.msra.mxu0 %v10368
  %v10370 = vand.u32 %v9415, 4294901760
  %v10371 = vsub.f32 %v9415, %v10370
  %10372 = vmatprep.subr.mxu0 %v10371
  %v10373 = vand.u32 %v9414, 4294901760
  %v10374 = vsub.f32 %v9414, %v10373
  %10375 = vmatpush1.msra.mxu0 %v10374
  %v10376 = vand.u32 %v9419, 4294901760
  %v10377 = vsub.f32 %v9419, %v10376
  %10378 = vmatprep.subr.mxu0 %v10377
  %v10379 = vand.u32 %v9418, 4294901760
  %v10380 = vsub.f32 %v9418, %v10379
  %10381 = vmatpush1.msra.mxu0 %v10380
  %v10382 = vand.u32 %v9423, 4294901760
  %v10383 = vsub.f32 %v9423, %v10382
  %10384 = vmatprep.subr.mxu0 %v10383
  %v10385 = vand.u32 %v9422, 4294901760
  %v10386 = vsub.f32 %v9422, %v10385
  %10387 = vmatpush1.msra.mxu0 %v10386
  %10388 = vmatprep.subr.mxu0 0.0
  %10389 = vmatpush1.msra.mxu0 0.0
  %10390 = vmatprep.subr.mxu0 0.0
  %10391 = vmatpush1.msra.mxu0 0.0
  %10392 = vmatprep.subr.mxu0 0.0
  %10393 = vmatpush1.msra.mxu0 0.0
  %10394 = vmatprep.subr.mxu0 0.0
  %10395 = vmatpush1.msra.mxu0 0.0
  %10396 = vmatprep.subr.mxu0 0.0
  %10397 = vmatpush1.msra.mxu0 0.0
  %10398 = vmatprep.subr.mxu0 0.0
  %10399 = vmatpush1.msra.mxu0 0.0
  %10400 = vmatprep.subr.mxu0 0.0
  %10401 = vmatpush1.msra.mxu0 0.0
  %10402 = vmatprep.subr.mxu0 0.0
  %10403 = vmatpush1.msra.mxu0 0.0
  %10404 = vmatprep.subr.mxu0 0.0
  %10405 = vmatpush1.msra.mxu0 0.0
  %10406 = vmatprep.subr.mxu0 0.0
  %10407 = vmatpush1.msra.mxu0 0.0
  %10408 = vmatprep.subr.mxu0 0.0
  %10409 = vmatpush1.msra.mxu0 0.0
  %10410 = vmatprep.subr.mxu0 0.0
  %10411 = vmatpush1.msra.mxu0 0.0
  %10412 = vmatprep.subr.mxu0 0.0
  %10413 = vmatpush1.msra.mxu0 0.0
  %10414 = vmatprep.subr.mxu0 0.0
  %10415 = vmatpush1.msra.mxu0 0.0
  %10416 = vmatprep.subr.mxu0 0.0
  %10417 = vmatpush1.msra.mxu0 0.0
  %10418 = vmatprep.subr.mxu0 0.0
  %10419 = vmatpush1.msra.mxu0 0.0
  %10420 = vmatprep.subr.mxu0 0.0
  %10421 = vmatpush1.msra.mxu0 0.0
  %10422 = vmatprep.subr.mxu0 0.0
  %10423 = vmatpush1.msra.mxu0 0.0
  %10424 = vmatprep.subr.mxu0 0.0
  %10425 = vmatpush1.msra.mxu0 0.0
  %10426 = vmatprep.subr.mxu0 0.0
  %10427 = vmatpush1.msra.mxu0 0.0
  %10428 = vmatprep.subr.mxu0 0.0
  %10429 = vmatpush1.msra.mxu0 0.0
  %10430 = vmatprep.subr.mxu0 0.0
  %10431 = vmatpush1.msra.mxu0 0.0
  %10432 = vmatprep.subr.mxu0 0.0
  %10433 = vmatpush1.msra.mxu0 0.0
  %10434 = vmatprep.subr.mxu0 0.0
  %10435 = vmatpush1.msra.mxu0 0.0
  %10436 = vmatprep.subr.mxu0 0.0
  %10437 = vmatpush1.msra.mxu0 0.0
  %10438 = vmatprep.subr.mxu0 0.0
  %10439 = vmatpush1.msra.mxu0 0.0
  %10440 = vmatprep.subr.mxu0 0.0
  %10441 = vmatpush1.msra.mxu0 0.0
  %10442 = vmatprep.subr.mxu0 0.0
  %10443 = vmatpush1.msra.mxu0 0.0
  %10444 = vmatprep.mubr.f32.mxu0 0.0
  %v10445 = vand.u32 %v3385, 4294901760
  %v10446 = vsub.f32 %v3385, %v10445
  %10447 = vmatmul.mubr.f32.gmra.mrb[0].mxu0 %v10446
  %v10448 = vpop.f32.mrb[0].mxu0
  %v10449 = vadd.f32 %v10339, %v10448
  %v10450 = vpop.f32.mrb[0].mxu0
  %v10451 = vadd.f32 %v10341, %v10450
  %10452 = vmatprep.mubr.f32.mxu0 0.0
  %v10453 = vand.u32 %v3388, 4294901760
  %v10454 = vsub.f32 %v3388, %v10453
  %10455 = vmatmul.mubr.f32.gmra.mrb[0].mxu0 %v10454
  %v10456 = vpop.f32.mrb[0].mxu0
  %v10457 = vadd.f32 %v10346, %v10456
  %v10458 = vpop.f32.mrb[0].mxu0
  %v10459 = vadd.f32 %v10348, %v10458
  %10460 = vmatprep.mubr.f32.mxu0 0.0
  %v10461 = vand.u32 %v3391, 4294901760
  %v10462 = vsub.f32 %v3391, %v10461
  %10463 = vmatmul.mubr.f32.gmra.mrb[0].mxu0 %v10462
  %v10464 = vpop.f32.mrb[0].mxu0
  %v10465 = vadd.f32 %v10353, %v10464
  %v10466 = vpop.f32.mrb[0].mxu0
  %v10467 = vadd.f32 %v10355, %v10466
  %10468 = vmatprep.mubr.f32.mxu0 0.0
  %v10469 = vand.u32 %v3394, 4294901760
  %v10470 = vsub.f32 %v3394, %v10469
  %10471 = vmatmul.mubr.f32.gmra.mrb[0].mxu0 %v10470
  %v10472 = vpop.f32.mrb[0].mxu0
  %v10473 = vadd.f32 %v10360, %v10472
  %v10474 = vpop.f32.mrb[0].mxu0
  %v10475 = vadd.f32 %v10362, %v10474
  %10476 = vdwg.mxu0
  %v10477 = vand.u32 %v9411, 4294901760
  %10478 = vmatprep.subr.mxu0 %v10477
  %v10479 = vand.u32 %v9410, 4294901760
  %10480 = vmatpush1.msra.mxu0 %v10479
  %v10481 = vand.u32 %v9415, 4294901760
  %10482 = vmatprep.subr.mxu0 %v10481
  %v10483 = vand.u32 %v9414, 4294901760
  %10484 = vmatpush1.msra.mxu0 %v10483
  %v10485 = vand.u32 %v9419, 4294901760
  %10486 = vmatprep.subr.mxu0 %v10485
  %v10487 = vand.u32 %v9418, 4294901760
  %10488 = vmatpush1.msra.mxu0 %v10487
  %v10489 = vand.u32 %v9423, 4294901760
  %10490 = vmatprep.subr.mxu0 %v10489
  %v10491 = vand.u32 %v9422, 4294901760
  %10492 = vmatpush1.msra.mxu0 %v10491
  %10493 = vmatprep.subr.mxu0 0.0
  %10494 = vmatpush1.msra.mxu0 0.0
  %10495 = vmatprep.subr.mxu0 0.0
  %10496 = vmatpush1.msra.mxu0 0.0
  %10497 = vmatprep.subr.mxu0 0.0
  %10498 = vmatpush1.msra.mxu0 0.0
  %10499 = vmatprep.subr.mxu0 0.0
  %10500 = vmatpush1.msra.mxu0 0.0
  %10501 = vmatprep.subr.mxu0 0.0
  %10502 = vmatpush1.msra.mxu0 0.0
  %10503 = vmatprep.subr.mxu0 0.0
  %10504 = vmatpush1.msra.mxu0 0.0
  %10505 = vmatprep.subr.mxu0 0.0
  %10506 = vmatpush1.msra.mxu0 0.0
  %10507 = vmatprep.subr.mxu0 0.0
  %10508 = vmatpush1.msra.mxu0 0.0
  %10509 = vmatprep.subr.mxu0 0.0
  %10510 = vmatpush1.msra.mxu0 0.0
  %10511 = vmatprep.subr.mxu0 0.0
  %10512 = vmatpush1.msra.mxu0 0.0
  %10513 = vmatprep.subr.mxu0 0.0
  %10514 = vmatpush1.msra.mxu0 0.0
  %10515 = vmatprep.subr.mxu0 0.0
  %10516 = vmatpush1.msra.mxu0 0.0
  %10517 = vmatprep.subr.mxu0 0.0
  %10518 = vmatpush1.msra.mxu0 0.0
  %10519 = vmatprep.subr.mxu0 0.0
  %10520 = vmatpush1.msra.mxu0 0.0
  %10521 = vmatprep.subr.mxu0 0.0
  %10522 = vmatpush1.msra.mxu0 0.0
  %10523 = vmatprep.subr.mxu0 0.0
  %10524 = vmatpush1.msra.mxu0 0.0
  %10525 = vmatprep.subr.mxu0 0.0
  %10526 = vmatpush1.msra.mxu0 0.0
  %10527 = vmatprep.subr.mxu0 0.0
  %10528 = vmatpush1.msra.mxu0 0.0
  %10529 = vmatprep.subr.mxu0 0.0
  %10530 = vmatpush1.msra.mxu0 0.0
  %10531 = vmatprep.subr.mxu0 0.0
  %10532 = vmatpush1.msra.mxu0 0.0
  %10533 = vmatprep.subr.mxu0 0.0
  %10534 = vmatpush1.msra.mxu0 0.0
  %10535 = vmatprep.subr.mxu0 0.0
  %10536 = vmatpush1.msra.mxu0 0.0
  %10537 = vmatprep.subr.mxu0 0.0
  %10538 = vmatpush1.msra.mxu0 0.0
  %10539 = vmatprep.subr.mxu0 0.0
  %10540 = vmatpush1.msra.mxu0 0.0
  %10541 = vmatprep.subr.mxu0 0.0
  %10542 = vmatpush1.msra.mxu0 0.0
  %10543 = vmatprep.subr.mxu0 0.0
  %10544 = vmatpush1.msra.mxu0 0.0
  %10545 = vmatprep.subr.mxu0 0.0
  %10546 = vmatpush1.msra.mxu0 0.0
  %10547 = vmatprep.subr.mxu0 0.0
  %10548 = vmatpush1.msra.mxu0 0.0
  %10549 = vmatprep.mubr.f32.mxu0 0.0
  %v10550 = vand.u32 %v3385, 4294901760
  %v10551 = vsub.f32 %v3385, %v10550
  %v10552 = vand.u32 %v10551, 4294901760
  %10553 = vmatmul.mubr.f32.gmra.mrb[0].mxu0 %v10552
  %v10554 = vpop.f32.mrb[0].mxu0
  %v10555 = vadd.f32 %v10449, %v10554
  %v10556 = vpop.f32.mrb[0].mxu0
  %v10557 = vadd.f32 %v10451, %v10556
  %10558 = vmatprep.mubr.f32.mxu0 0.0
  %v10559 = vand.u32 %v3388, 4294901760
  %v10560 = vsub.f32 %v3388, %v10559
  %v10561 = vand.u32 %v10560, 4294901760
  %10562 = vmatmul.mubr.f32.gmra.mrb[0].mxu0 %v10561
  %v10563 = vpop.f32.mrb[0].mxu0
  %v10564 = vadd.f32 %v10457, %v10563
  %v10565 = vpop.f32.mrb[0].mxu0
  %v10566 = vadd.f32 %v10459, %v10565
  %10567 = vmatprep.mubr.f32.mxu0 0.0
  %v10568 = vand.u32 %v3391, 4294901760
  %v10569 = vsub.f32 %v3391, %v10568
  %v10570 = vand.u32 %v10569, 4294901760
  %10571 = vmatmul.mubr.f32.gmra.mrb[0].mxu0 %v10570
  %v10572 = vpop.f32.mrb[0].mxu0
  %v10573 = vadd.f32 %v10465, %v10572
  %v10574 = vpop.f32.mrb[0].mxu0
  %v10575 = vadd.f32 %v10467, %v10574
  %10576 = vmatprep.mubr.f32.mxu0 0.0
  %v10577 = vand.u32 %v3394, 4294901760
  %v10578 = vsub.f32 %v3394, %v10577
  %v10579 = vand.u32 %v10578, 4294901760
  %10580 = vmatmul.mubr.f32.gmra.mrb[0].mxu0 %v10579
  %v10581 = vpop.f32.mrb[0].mxu0
  %v10582 = vadd.f32 %v10473, %v10581
  %v10583 = vpop.f32.mrb[0].mxu0
  %v10584 = vadd.f32 %v10475, %v10583
  %10585 = vdwg.mxu0
  %v10586 = vand.u32 %v9411, 4294901760
  %v10587 = vsub.f32 %v9411, %v10586
  %v10588 = vand.u32 %v10587, 4294901760
  %10589 = vmatprep.subr.mxu0 %v10588
  %v10590 = vand.u32 %v9410, 4294901760
  %v10591 = vsub.f32 %v9410, %v10590
  %v10592 = vand.u32 %v10591, 4294901760
  %10593 = vmatpush1.msra.mxu0 %v10592
  %v10594 = vand.u32 %v9415, 4294901760
  %v10595 = vsub.f32 %v9415, %v10594
  %v10596 = vand.u32 %v10595, 4294901760
  %10597 = vmatprep.subr.mxu0 %v10596
  %v10598 = vand.u32 %v9414, 4294901760
  %v10599 = vsub.f32 %v9414, %v10598
  %v10600 = vand.u32 %v10599, 4294901760
  %10601 = vmatpush1.msra.mxu0 %v10600
  %v10602 = vand.u32 %v9419, 4294901760
  %v10603 = vsub.f32 %v9419, %v10602
  %v10604 = vand.u32 %v10603, 4294901760
  %10605 = vmatprep.subr.mxu0 %v10604
  %v10606 = vand.u32 %v9418, 4294901760
  %v10607 = vsub.f32 %v9418, %v10606
  %v10608 = vand.u32 %v10607, 4294901760
  %10609 = vmatpush1.msra.mxu0 %v10608
  %v10610 = vand.u32 %v9423, 4294901760
  %v10611 = vsub.f32 %v9423, %v10610
  %v10612 = vand.u32 %v10611, 4294901760
  %10613 = vmatprep.subr.mxu0 %v10612
  %v10614 = vand.u32 %v9422, 4294901760
  %v10615 = vsub.f32 %v9422, %v10614
  %v10616 = vand.u32 %v10615, 4294901760
  %10617 = vmatpush1.msra.mxu0 %v10616
  %10618 = vmatprep.subr.mxu0 0.0
  %10619 = vmatpush1.msra.mxu0 0.0
  %10620 = vmatprep.subr.mxu0 0.0
  %10621 = vmatpush1.msra.mxu0 0.0
  %10622 = vmatprep.subr.mxu0 0.0
  %10623 = vmatpush1.msra.mxu0 0.0
  %10624 = vmatprep.subr.mxu0 0.0
  %10625 = vmatpush1.msra.mxu0 0.0
  %10626 = vmatprep.subr.mxu0 0.0
  %10627 = vmatpush1.msra.mxu0 0.0
  %10628 = vmatprep.subr.mxu0 0.0
  %10629 = vmatpush1.msra.mxu0 0.0
  %10630 = vmatprep.subr.mxu0 0.0
  %10631 = vmatpush1.msra.mxu0 0.0
  %10632 = vmatprep.subr.mxu0 0.0
  %10633 = vmatpush1.msra.mxu0 0.0
  %10634 = vmatprep.subr.mxu0 0.0
  %10635 = vmatpush1.msra.mxu0 0.0
  %10636 = vmatprep.subr.mxu0 0.0
  %10637 = vmatpush1.msra.mxu0 0.0
  %10638 = vmatprep.subr.mxu0 0.0
  %10639 = vmatpush1.msra.mxu0 0.0
  %10640 = vmatprep.subr.mxu0 0.0
  %10641 = vmatpush1.msra.mxu0 0.0
  %10642 = vmatprep.subr.mxu0 0.0
  %10643 = vmatpush1.msra.mxu0 0.0
  %10644 = vmatprep.subr.mxu0 0.0
  %10645 = vmatpush1.msra.mxu0 0.0
  %10646 = vmatprep.subr.mxu0 0.0
  %10647 = vmatpush1.msra.mxu0 0.0
  %10648 = vmatprep.subr.mxu0 0.0
  %10649 = vmatpush1.msra.mxu0 0.0
  %10650 = vmatprep.subr.mxu0 0.0
  %10651 = vmatpush1.msra.mxu0 0.0
  %10652 = vmatprep.subr.mxu0 0.0
  %10653 = vmatpush1.msra.mxu0 0.0
  %10654 = vmatprep.subr.mxu0 0.0
  %10655 = vmatpush1.msra.mxu0 0.0
  %10656 = vmatprep.subr.mxu0 0.0
  %10657 = vmatpush1.msra.mxu0 0.0
  %10658 = vmatprep.subr.mxu0 0.0
  %10659 = vmatpush1.msra.mxu0 0.0
  %10660 = vmatprep.subr.mxu0 0.0
  %10661 = vmatpush1.msra.mxu0 0.0
  %10662 = vmatprep.subr.mxu0 0.0
  %10663 = vmatpush1.msra.mxu0 0.0
  %10664 = vmatprep.subr.mxu0 0.0
  %10665 = vmatpush1.msra.mxu0 0.0
  %10666 = vmatprep.subr.mxu0 0.0
  %10667 = vmatpush1.msra.mxu0 0.0
  %10668 = vmatprep.subr.mxu0 0.0
  %10669 = vmatpush1.msra.mxu0 0.0
  %10670 = vmatprep.subr.mxu0 0.0
  %10671 = vmatpush1.msra.mxu0 0.0
  %10672 = vmatprep.subr.mxu0 0.0
  %10673 = vmatpush1.msra.mxu0 0.0
  %10674 = vmatprep.mubr.f32.mxu0 0.0
  %v10675 = vand.u32 %v3385, 4294901760
  %10676 = vmatmul.mubr.f32.gmra.mrb[0].mxu0 %v10675
  %v10677 = vpop.f32.mrb[0].mxu0
  %v10678 = vadd.f32 %v10555, %v10677
  %v10679 = vpop.f32.mrb[0].mxu0
  %v10680 = vadd.f32 %v10557, %v10679
  %10681 = vmatprep.mubr.f32.mxu0 0.0
  %v10682 = vand.u32 %v3388, 4294901760
  %10683 = vmatmul.mubr.f32.gmra.mrb[0].mxu0 %v10682
  %v10684 = vpop.f32.mrb[0].mxu0
  %v10685 = vadd.f32 %v10564, %v10684
  %v10686 = vpop.f32.mrb[0].mxu0
  %v10687 = vadd.f32 %v10566, %v10686
  %10688 = vmatprep.mubr.f32.mxu0 0.0
  %v10689 = vand.u32 %v3391, 4294901760
  %10690 = vmatmul.mubr.f32.gmra.mrb[0].mxu0 %v10689
  %v10691 = vpop.f32.mrb[0].mxu0
  %v10692 = vadd.f32 %v10573, %v10691
  %v10693 = vpop.f32.mrb[0].mxu0
  %v10694 = vadd.f32 %v10575, %v10693
  %10695 = vmatprep.mubr.f32.mxu0 0.0
  %v10696 = vand.u32 %v3394, 4294901760
  %10697 = vmatmul.mubr.f32.gmra.mrb[0].mxu0 %v10696
  %v10698 = vpop.f32.mrb[0].mxu0
  %v10699 = vadd.f32 %v10582, %v10698
  %v10700 = vpop.f32.mrb[0].mxu0
  %v10701 = vadd.f32 %v10584, %v10700
  %10702 = vdwg.mxu0
  %v10703 = vand.u32 %v9411, 4294901760
  %10704 = vmatprep.subr.mxu0 %v10703
  %v10705 = vand.u32 %v9410, 4294901760
  %10706 = vmatpush1.msra.mxu0 %v10705
  %v10707 = vand.u32 %v9415, 4294901760
  %10708 = vmatprep.subr.mxu0 %v10707
  %v10709 = vand.u32 %v9414, 4294901760
  %10710 = vmatpush1.msra.mxu0 %v10709
  %v10711 = vand.u32 %v9419, 4294901760
  %10712 = vmatprep.subr.mxu0 %v10711
  %v10713 = vand.u32 %v9418, 4294901760
  %10714 = vmatpush1.msra.mxu0 %v10713
  %v10715 = vand.u32 %v9423, 4294901760
  %10716 = vmatprep.subr.mxu0 %v10715
  %v10717 = vand.u32 %v9422, 4294901760
  %10718 = vmatpush1.msra.mxu0 %v10717
  %10719 = vmatprep.subr.mxu0 0.0
  %10720 = vmatpush1.msra.mxu0 0.0
  %10721 = vmatprep.subr.mxu0 0.0
  %10722 = vmatpush1.msra.mxu0 0.0
  %10723 = vmatprep.subr.mxu0 0.0
  %10724 = vmatpush1.msra.mxu0 0.0
  %10725 = vmatprep.subr.mxu0 0.0
  %10726 = vmatpush1.msra.mxu0 0.0
  %10727 = vmatprep.subr.mxu0 0.0
  %10728 = vmatpush1.msra.mxu0 0.0
  %10729 = vmatprep.subr.mxu0 0.0
  %10730 = vmatpush1.msra.mxu0 0.0
  %10731 = vmatprep.subr.mxu0 0.0
  %10732 = vmatpush1.msra.mxu0 0.0
  %10733 = vmatprep.subr.mxu0 0.0
  %10734 = vmatpush1.msra.mxu0 0.0
  %10735 = vmatprep.subr.mxu0 0.0
  %10736 = vmatpush1.msra.mxu0 0.0
  %10737 = vmatprep.subr.mxu0 0.0
  %10738 = vmatpush1.msra.mxu0 0.0
  %10739 = vmatprep.subr.mxu0 0.0
  %10740 = vmatpush1.msra.mxu0 0.0
  %10741 = vmatprep.subr.mxu0 0.0
  %10742 = vmatpush1.msra.mxu0 0.0
  %10743 = vmatprep.subr.mxu0 0.0
  %10744 = vmatpush1.msra.mxu0 0.0
  %10745 = vmatprep.subr.mxu0 0.0
  %10746 = vmatpush1.msra.mxu0 0.0
  %10747 = vmatprep.subr.mxu0 0.0
  %10748 = vmatpush1.msra.mxu0 0.0
  %10749 = vmatprep.subr.mxu0 0.0
  %10750 = vmatpush1.msra.mxu0 0.0
  %10751 = vmatprep.subr.mxu0 0.0
  %10752 = vmatpush1.msra.mxu0 0.0
  %10753 = vmatprep.subr.mxu0 0.0
  %10754 = vmatpush1.msra.mxu0 0.0
  %10755 = vmatprep.subr.mxu0 0.0
  %10756 = vmatpush1.msra.mxu0 0.0
  %10757 = vmatprep.subr.mxu0 0.0
  %10758 = vmatpush1.msra.mxu0 0.0
  %10759 = vmatprep.subr.mxu0 0.0
  %10760 = vmatpush1.msra.mxu0 0.0
  %10761 = vmatprep.subr.mxu0 0.0
  %10762 = vmatpush1.msra.mxu0 0.0
  %10763 = vmatprep.subr.mxu0 0.0
  %10764 = vmatpush1.msra.mxu0 0.0
  %10765 = vmatprep.subr.mxu0 0.0
  %10766 = vmatpush1.msra.mxu0 0.0
  %10767 = vmatprep.subr.mxu0 0.0
  %10768 = vmatpush1.msra.mxu0 0.0
  %10769 = vmatprep.subr.mxu0 0.0
  %10770 = vmatpush1.msra.mxu0 0.0
  %10771 = vmatprep.subr.mxu0 0.0
  %10772 = vmatpush1.msra.mxu0 0.0
  %10773 = vmatprep.subr.mxu0 0.0
  %10774 = vmatpush1.msra.mxu0 0.0
  %10775 = vmatprep.mubr.f32.mxu0 0.0
  %v10776 = vand.u32 %v3385, 4294901760
  %10777 = vmatmul.mubr.f32.gmra.mrb[0].mxu0 %v10776
  %v10778 = vpop.f32.mrb[0].mxu0
  %v10779 = vadd.f32 %v10678, %v10778
  %v10780 = vpop.f32.mrb[0].mxu0
  %v10781 = vadd.f32 %v10680, %v10780
  %10782 = vmatprep.mubr.f32.mxu0 0.0
  %v10783 = vand.u32 %v3388, 4294901760
  %10784 = vmatmul.mubr.f32.gmra.mrb[0].mxu0 %v10783
  %v10785 = vpop.f32.mrb[0].mxu0
  %v10786 = vadd.f32 %v10685, %v10785
  %v10787 = vpop.f32.mrb[0].mxu0
  %v10788 = vadd.f32 %v10687, %v10787
  %10789 = vmatprep.mubr.f32.mxu0 0.0
  %v10790 = vand.u32 %v3391, 4294901760
  %10791 = vmatmul.mubr.f32.gmra.mrb[0].mxu0 %v10790
  %v10792 = vpop.f32.mrb[0].mxu0
  %v10793 = vadd.f32 %v10692, %v10792
  %v10794 = vpop.f32.mrb[0].mxu0
  %v10795 = vadd.f32 %v10694, %v10794
  %10796 = vmatprep.mubr.f32.mxu0 0.0
  %v10797 = vand.u32 %v3394, 4294901760
  %10798 = vmatmul.mubr.f32.gmra.mrb[0].mxu0 %v10797
  %v10799 = vpop.f32.mrb[0].mxu0
  %v10800 = vadd.f32 %v10699, %v10799
  %v10801 = vpop.f32.mrb[0].mxu0
  %v10802 = vadd.f32 %v10701, %v10801
  %10803 = vdwg.mxu0
  %v10804 = vmul.f32 %v10089, 0.31830987
  %v10805 = vmul.f32 %v10091, 0.31830987
  %v10806 = vmul.f32 %v10779, 0.31830987
  %v10807 = vmul.f32 %v10781, 0.31830987
  %v10808 = vmul.f32 %v10096, 0.31830987
  %v10809 = vmul.f32 %v10098, 0.31830987
  %v10810 = vmul.f32 %v10786, 0.31830987
  %v10811 = vmul.f32 %v10788, 0.31830987
  %v10812 = vmul.f32 %v10103, 0.31830987
  %v10813 = vmul.f32 %v10105, 0.31830987
  %v10814 = vmul.f32 %v10793, 0.31830987
  %v10815 = vmul.f32 %v10795, 0.31830987
  %v10816 = vmul.f32 %v10110, 0.31830987
  %v10817 = vmul.f32 %v10112, 0.31830987
  %v10818 = vmul.f32 %v10800, 0.31830987
  %v10819 = vmul.f32 %v10802, 0.31830987
  %v10820 = vround.ne.pseudo %v10804
  %v10821 = vround.ne.pseudo %v10805
  %v10822 = vround.ne.pseudo %v10806
  %v10823 = vround.ne.pseudo %v10807
  %v10824 = vround.ne.pseudo %v10808
  %v10825 = vround.ne.pseudo %v10809
  %v10826 = vround.ne.pseudo %v10810
  %v10827 = vround.ne.pseudo %v10811
  %v10828 = vround.ne.pseudo %v10812
  %v10829 = vround.ne.pseudo %v10813
  %v10830 = vround.ne.pseudo %v10814
  %v10831 = vround.ne.pseudo %v10815
  %v10832 = vround.ne.pseudo %v10816
  %v10833 = vround.ne.pseudo %v10817
  %v10834 = vround.ne.pseudo %v10818
  %v10835 = vround.ne.pseudo %v10819
  %v10836 = vmul.f32 %v10820, 3.140625
  %v10837 = vmul.f32 %v10821, 3.140625
  %v10838 = vmul.f32 %v10822, 3.140625
  %v10839 = vmul.f32 %v10823, 3.140625
  %v10840 = vmul.f32 %v10824, 3.140625
  %v10841 = vmul.f32 %v10825, 3.140625
  %v10842 = vmul.f32 %v10826, 3.140625
  %v10843 = vmul.f32 %v10827, 3.140625
  %v10844 = vmul.f32 %v10828, 3.140625
  %v10845 = vmul.f32 %v10829, 3.140625
  %v10846 = vmul.f32 %v10830, 3.140625
  %v10847 = vmul.f32 %v10831, 3.140625
  %v10848 = vmul.f32 %v10832, 3.140625
  %v10849 = vmul.f32 %v10833, 3.140625
  %v10850 = vmul.f32 %v10834, 3.140625
  %v10851 = vmul.f32 %v10835, 3.140625
  %v10852 = vsub.f32 %v10089, %v10836
  %v10853 = vsub.f32 %v10091, %v10837
  %v10854 = vsub.f32 %v10779, %v10838
  %v10855 = vsub.f32 %v10781, %v10839
  %v10856 = vsub.f32 %v10096, %v10840
  %v10857 = vsub.f32 %v10098, %v10841
  %v10858 = vsub.f32 %v10786, %v10842
  %v10859 = vsub.f32 %v10788, %v10843
  %v10860 = vsub.f32 %v10103, %v10844
  %v10861 = vsub.f32 %v10105, %v10845
  %v10862 = vsub.f32 %v10793, %v10846
  %v10863 = vsub.f32 %v10795, %v10847
  %v10864 = vsub.f32 %v10110, %v10848
  %v10865 = vsub.f32 %v10112, %v10849
  %v10866 = vsub.f32 %v10800, %v10850
  %v10867 = vsub.f32 %v10802, %v10851
  %v10868 = vmul.f32 %v10820, 0.0009676536
  %v10869 = vmul.f32 %v10821, 0.0009676536
  %v10870 = vmul.f32 %v10822, 0.0009676536
  %v10871 = vmul.f32 %v10823, 0.0009676536
  %v10872 = vmul.f32 %v10824, 0.0009676536
  %v10873 = vmul.f32 %v10825, 0.0009676536
  %v10874 = vmul.f32 %v10826, 0.0009676536
  %v10875 = vmul.f32 %v10827, 0.0009676536
  %v10876 = vmul.f32 %v10828, 0.0009676536
  %v10877 = vmul.f32 %v10829, 0.0009676536
  %v10878 = vmul.f32 %v10830, 0.0009676536
  %v10879 = vmul.f32 %v10831, 0.0009676536
  %v10880 = vmul.f32 %v10832, 0.0009676536
  %v10881 = vmul.f32 %v10833, 0.0009676536
  %v10882 = vmul.f32 %v10834, 0.0009676536
  %v10883 = vmul.f32 %v10835, 0.0009676536
  %v10884 = vsub.f32 %v10852, %v10868
  %v10885 = vsub.f32 %v10853, %v10869
  %v10886 = vsub.f32 %v10854, %v10870
  %v10887 = vsub.f32 %v10855, %v10871
  %v10888 = vsub.f32 %v10856, %v10872
  %v10889 = vsub.f32 %v10857, %v10873
  %v10890 = vsub.f32 %v10858, %v10874
  %v10891 = vsub.f32 %v10859, %v10875
  %v10892 = vsub.f32 %v10860, %v10876
  %v10893 = vsub.f32 %v10861, %v10877
  %v10894 = vsub.f32 %v10862, %v10878
  %v10895 = vsub.f32 %v10863, %v10879
  %v10896 = vsub.f32 %v10864, %v10880
  %v10897 = vsub.f32 %v10865, %v10881
  %v10898 = vsub.f32 %v10866, %v10882
  %v10899 = vsub.f32 %v10867, %v10883
  %v10900 = vmul.f32 %v10884, %v10884
  %v10901 = vmul.f32 %v10885, %v10885
  %v10902 = vmul.f32 %v10886, %v10886
  %v10903 = vmul.f32 %v10887, %v10887
  %v10904 = vmul.f32 %v10888, %v10888
  %v10905 = vmul.f32 %v10889, %v10889
  %v10906 = vmul.f32 %v10890, %v10890
  %v10907 = vmul.f32 %v10891, %v10891
  %v10908 = vmul.f32 %v10892, %v10892
  %v10909 = vmul.f32 %v10893, %v10893
  %v10910 = vmul.f32 %v10894, %v10894
  %v10911 = vmul.f32 %v10895, %v10895
  %v10912 = vmul.f32 %v10896, %v10896
  %v10913 = vmul.f32 %v10897, %v10897
  %v10914 = vmul.f32 %v10898, %v10898
  %v10915 = vmul.f32 %v10899, %v10899
  %v10916 = vmul.f32 %v10884, %v10900
  %v10917 = vmul.f32 %v10885, %v10901
  %v10918 = vmul.f32 %v10886, %v10902
  %v10919 = vmul.f32 %v10887, %v10903
  %v10920 = vmul.f32 %v10888, %v10904
  %v10921 = vmul.f32 %v10889, %v10905
  %v10922 = vmul.f32 %v10890, %v10906
  %v10923 = vmul.f32 %v10891, %v10907
  %v10924 = vmul.f32 %v10892, %v10908
  %v10925 = vmul.f32 %v10893, %v10909
  %v10926 = vmul.f32 %v10894, %v10910
  %v10927 = vmul.f32 %v10895, %v10911
  %v10928 = vmul.f32 %v10896, %v10912
  %v10929 = vmul.f32 %v10897, %v10913
  %v10930 = vmul.f32 %v10898, %v10914
  %v10931 = vmul.f32 %v10899, %v10915
  %v10932 = vmul.f32 %v10900, -0.00019515296
  %v10933 = vmul.f32 %v10901, -0.00019515296
  %v10934 = vmul.f32 %v10902, -0.00019515296
  %v10935 = vmul.f32 %v10903, -0.00019515296
  %v10936 = vmul.f32 %v10904, -0.00019515296
  %v10937 = vmul.f32 %v10905, -0.00019515296
  %v10938 = vmul.f32 %v10906, -0.00019515296
  %v10939 = vmul.f32 %v10907, -0.00019515296
  %v10940 = vmul.f32 %v10908, -0.00019515296
  %v10941 = vmul.f32 %v10909, -0.00019515296
  %v10942 = vmul.f32 %v10910, -0.00019515296
  %v10943 = vmul.f32 %v10911, -0.00019515296
  %v10944 = vmul.f32 %v10912, -0.00019515296
  %v10945 = vmul.f32 %v10913, -0.00019515296
  %v10946 = vmul.f32 %v10914, -0.00019515296
  %v10947 = vmul.f32 %v10915, -0.00019515296
  %v10948 = vadd.f32 %v10932, 0.008332161
  %v10949 = vadd.f32 %v10933, 0.008332161
  %v10950 = vadd.f32 %v10934, 0.008332161
  %v10951 = vadd.f32 %v10935, 0.008332161
  %v10952 = vadd.f32 %v10936, 0.008332161
  %v10953 = vadd.f32 %v10937, 0.008332161
  %v10954 = vadd.f32 %v10938, 0.008332161
  %v10955 = vadd.f32 %v10939, 0.008332161
  %v10956 = vadd.f32 %v10940, 0.008332161
  %v10957 = vadd.f32 %v10941, 0.008332161
  %v10958 = vadd.f32 %v10942, 0.008332161
  %v10959 = vadd.f32 %v10943, 0.008332161
  %v10960 = vadd.f32 %v10944, 0.008332161
  %v10961 = vadd.f32 %v10945, 0.008332161
  %v10962 = vadd.f32 %v10946, 0.008332161
  %v10963 = vadd.f32 %v10947, 0.008332161
  %v10964 = vmul.f32 %v10900, %v10948
  %v10965 = vmul.f32 %v10901, %v10949
  %v10966 = vmul.f32 %v10902, %v10950
  %v10967 = vmul.f32 %v10903, %v10951
  %v10968 = vmul.f32 %v10904, %v10952
  %v10969 = vmul.f32 %v10905, %v10953
  %v10970 = vmul.f32 %v10906, %v10954
  %v10971 = vmul.f32 %v10907, %v10955
  %v10972 = vmul.f32 %v10908, %v10956
  %v10973 = vmul.f32 %v10909, %v10957
  %v10974 = vmul.f32 %v10910, %v10958
  %v10975 = vmul.f32 %v10911, %v10959
  %v10976 = vmul.f32 %v10912, %v10960
  %v10977 = vmul.f32 %v10913, %v10961
  %v10978 = vmul.f32 %v10914, %v10962
  %v10979 = vmul.f32 %v10915, %v10963
  %v10980 = vadd.f32 %v10964, -0.16666655
  %v10981 = vadd.f32 %v10965, -0.16666655
  %v10982 = vadd.f32 %v10966, -0.16666655
  %v10983 = vadd.f32 %v10967, -0.16666655
  %v10984 = vadd.f32 %v10968, -0.16666655
  %v10985 = vadd.f32 %v10969, -0.16666655
  %v10986 = vadd.f32 %v10970, -0.16666655
  %v10987 = vadd.f32 %v10971, -0.16666655
  %v10988 = vadd.f32 %v10972, -0.16666655
  %v10989 = vadd.f32 %v10973, -0.16666655
  %v10990 = vadd.f32 %v10974, -0.16666655
  %v10991 = vadd.f32 %v10975, -0.16666655
  %v10992 = vadd.f32 %v10976, -0.16666655
  %v10993 = vadd.f32 %v10977, -0.16666655
  %v10994 = vadd.f32 %v10978, -0.16666655
  %v10995 = vadd.f32 %v10979, -0.16666655
  %v10996 = vmul.f32 %v10916, %v10980
  %v10997 = vmul.f32 %v10917, %v10981
  %v10998 = vmul.f32 %v10918, %v10982
  %v10999 = vmul.f32 %v10919, %v10983
  %v11000 = vmul.f32 %v10920, %v10984
  %v11001 = vmul.f32 %v10921, %v10985
  %v11002 = vmul.f32 %v10922, %v10986
  %v11003 = vmul.f32 %v10923, %v10987
  %v11004 = vmul.f32 %v10924, %v10988
  %v11005 = vmul.f32 %v10925, %v10989
  %v11006 = vmul.f32 %v10926, %v10990
  %v11007 = vmul.f32 %v10927, %v10991
  %v11008 = vmul.f32 %v10928, %v10992
  %v11009 = vmul.f32 %v10929, %v10993
  %v11010 = vmul.f32 %v10930, %v10994
  %v11011 = vmul.f32 %v10931, %v10995
  %v11012 = vadd.f32 %v10884, %v10996
  %v11013 = vadd.f32 %v10885, %v10997
  %v11014 = vadd.f32 %v10886, %v10998
  %v11015 = vadd.f32 %v10887, %v10999
  %v11016 = vadd.f32 %v10888, %v11000
  %v11017 = vadd.f32 %v10889, %v11001
  %v11018 = vadd.f32 %v10890, %v11002
  %v11019 = vadd.f32 %v10891, %v11003
  %v11020 = vadd.f32 %v10892, %v11004
  %v11021 = vadd.f32 %v10893, %v11005
  %v11022 = vadd.f32 %v10894, %v11006
  %v11023 = vadd.f32 %v10895, %v11007
  %v11024 = vadd.f32 %v10896, %v11008
  %v11025 = vadd.f32 %v10897, %v11009
  %v11026 = vadd.f32 %v10898, %v11010
  %v11027 = vadd.f32 %v10899, %v11011
  %v11028 = vcvt.f32.s32.ties.to.even %v10804
  %v11029 = vcvt.f32.s32.ties.to.even %v10805
  %v11030 = vcvt.f32.s32.ties.to.even %v10806
  %v11031 = vcvt.f32.s32.ties.to.even %v10807
  %v11032 = vcvt.f32.s32.ties.to.even %v10808
  %v11033 = vcvt.f32.s32.ties.to.even %v10809
  %v11034 = vcvt.f32.s32.ties.to.even %v10810
  %v11035 = vcvt.f32.s32.ties.to.even %v10811
  %v11036 = vcvt.f32.s32.ties.to.even %v10812
  %v11037 = vcvt.f32.s32.ties.to.even %v10813
  %v11038 = vcvt.f32.s32.ties.to.even %v10814
  %v11039 = vcvt.f32.s32.ties.to.even %v10815
  %v11040 = vcvt.f32.s32.ties.to.even %v10816
  %v11041 = vcvt.f32.s32.ties.to.even %v10817
  %v11042 = vcvt.f32.s32.ties.to.even %v10818
  %v11043 = vcvt.f32.s32.ties.to.even %v10819
  %v11044 = vand.u32 %v11028, 1
  %v11045 = vand.u32 %v11029, 1
  %v11046 = vand.u32 %v11030, 1
  %v11047 = vand.u32 %v11031, 1
  %v11048 = vand.u32 %v11032, 1
  %v11049 = vand.u32 %v11033, 1
  %v11050 = vand.u32 %v11034, 1
  %v11051 = vand.u32 %v11035, 1
  %v11052 = vand.u32 %v11036, 1
  %v11053 = vand.u32 %v11037, 1
  %v11054 = vand.u32 %v11038, 1
  %v11055 = vand.u32 %v11039, 1
  %v11056 = vand.u32 %v11040, 1
  %v11057 = vand.u32 %v11041, 1
  %v11058 = vand.u32 %v11042, 1
  %v11059 = vand.u32 %v11043, 1
  %vm11060 = vcmp.eq.s32.totalorder %v11044, 1
  %vm11061 = vcmp.eq.s32.totalorder %v11045, 1
  %vm11062 = vcmp.eq.s32.totalorder %v11046, 1
  %vm11063 = vcmp.eq.s32.totalorder %v11047, 1
  %vm11064 = vcmp.eq.s32.totalorder %v11048, 1
  %vm11065 = vcmp.eq.s32.totalorder %v11049, 1
  %vm11066 = vcmp.eq.s32.totalorder %v11050, 1
  %vm11067 = vcmp.eq.s32.totalorder %v11051, 1
  %vm11068 = vcmp.eq.s32.totalorder %v11052, 1
  %vm11069 = vcmp.eq.s32.totalorder %v11053, 1
  %vm11070 = vcmp.eq.s32.totalorder %v11054, 1
  %vm11071 = vcmp.eq.s32.totalorder %v11055, 1
  %vm11072 = vcmp.eq.s32.totalorder %v11056, 1
  %vm11073 = vcmp.eq.s32.totalorder %v11057, 1
  %vm11074 = vcmp.eq.s32.totalorder %v11058, 1
  %vm11075 = vcmp.eq.s32.totalorder %v11059, 1
  %v11076 = vsub.f32 0.0, %v11012
  %v11077 = vsub.f32 0.0, %v11013
  %v11078 = vsub.f32 0.0, %v11014
  %v11079 = vsub.f32 0.0, %v11015
  %v11080 = vsub.f32 0.0, %v11016
  %v11081 = vsub.f32 0.0, %v11017
  %v11082 = vsub.f32 0.0, %v11018
  %v11083 = vsub.f32 0.0, %v11019
  %v11084 = vsub.f32 0.0, %v11020
  %v11085 = vsub.f32 0.0, %v11021
  %v11086 = vsub.f32 0.0, %v11022
  %v11087 = vsub.f32 0.0, %v11023
  %v11088 = vsub.f32 0.0, %v11024
  %v11089 = vsub.f32 0.0, %v11025
  %v11090 = vsub.f32 0.0, %v11026
  %v11091 = vsub.f32 0.0, %v11027
  %v11092 = vsel %vm11060, %v11076, %v11012
  %v11093 = vsel %vm11061, %v11077, %v11013
  %v11094 = vsel %vm11062, %v11078, %v11014
  %v11095 = vsel %vm11063, %v11079, %v11015
  %v11096 = vsel %vm11064, %v11080, %v11016
  %v11097 = vsel %vm11065, %v11081, %v11017
  %v11098 = vsel %vm11066, %v11082, %v11018
  %v11099 = vsel %vm11067, %v11083, %v11019
  %v11100 = vsel %vm11068, %v11084, %v11020
  %v11101 = vsel %vm11069, %v11085, %v11021
  %v11102 = vsel %vm11070, %v11086, %v11022
  %v11103 = vsel %vm11071, %v11087, %v11023
  %v11104 = vsel %vm11072, %v11088, %v11024
  %v11105 = vsel %vm11073, %v11089, %v11025
  %v11106 = vsel %vm11074, %v11090, %v11026
  %v11107 = vsel %vm11075, %v11091, %v11027
  %v11108 = vand.u32 %v11093, 4294901760
  %11109 = vmatprep.subr.mxu0 %v11108
  %v11110 = vand.u32 %v11092, 4294901760
  %11111 = vmatpush1.msra.mxu0 %v11110
  %v11112 = vand.u32 %v11097, 4294901760
  %11113 = vmatprep.subr.mxu0 %v11112
  %v11114 = vand.u32 %v11096, 4294901760
  %11115 = vmatpush1.msra.mxu0 %v11114
  %v11116 = vand.u32 %v11101, 4294901760
  %11117 = vmatprep.subr.mxu0 %v11116
  %v11118 = vand.u32 %v11100, 4294901760
  %11119 = vmatpush1.msra.mxu0 %v11118
  %v11120 = vand.u32 %v11105, 4294901760
  %11121 = vmatprep.subr.mxu0 %v11120
  %v11122 = vand.u32 %v11104, 4294901760
  %11123 = vmatpush1.msra.mxu0 %v11122
  %11124 = vmatprep.subr.mxu0 0.0
  %11125 = vmatpush1.msra.mxu0 0.0
  %11126 = vmatprep.subr.mxu0 0.0
  %11127 = vmatpush1.msra.mxu0 0.0
  %11128 = vmatprep.subr.mxu0 0.0
  %11129 = vmatpush1.msra.mxu0 0.0
  %11130 = vmatprep.subr.mxu0 0.0
  %11131 = vmatpush1.msra.mxu0 0.0
  %11132 = vmatprep.subr.mxu0 0.0
  %11133 = vmatpush1.msra.mxu0 0.0
  %11134 = vmatprep.subr.mxu0 0.0
  %11135 = vmatpush1.msra.mxu0 0.0
  %11136 = vmatprep.subr.mxu0 0.0
  %11137 = vmatpush1.msra.mxu0 0.0
  %11138 = vmatprep.subr.mxu0 0.0
  %11139 = vmatpush1.msra.mxu0 0.0
  %11140 = vmatprep.subr.mxu0 0.0
  %11141 = vmatpush1.msra.mxu0 0.0
  %11142 = vmatprep.subr.mxu0 0.0
  %11143 = vmatpush1.msra.mxu0 0.0
  %11144 = vmatprep.subr.mxu0 0.0
  %11145 = vmatpush1.msra.mxu0 0.0
  %11146 = vmatprep.subr.mxu0 0.0
  %11147 = vmatpush1.msra.mxu0 0.0
  %11148 = vmatprep.subr.mxu0 0.0
  %11149 = vmatpush1.msra.mxu0 0.0
  %11150 = vmatprep.subr.mxu0 0.0
  %11151 = vmatpush1.msra.mxu0 0.0
  %11152 = vmatprep.subr.mxu0 0.0
  %11153 = vmatpush1.msra.mxu0 0.0
  %11154 = vmatprep.subr.mxu0 0.0
  %11155 = vmatpush1.msra.mxu0 0.0
  %11156 = vmatprep.subr.mxu0 0.0
  %11157 = vmatpush1.msra.mxu0 0.0
  %11158 = vmatprep.subr.mxu0 0.0
  %11159 = vmatpush1.msra.mxu0 0.0
  %11160 = vmatprep.subr.mxu0 0.0
  %11161 = vmatpush1.msra.mxu0 0.0
  %11162 = vmatprep.subr.mxu0 0.0
  %11163 = vmatpush1.msra.mxu0 0.0
  %11164 = vmatprep.subr.mxu0 0.0
  %11165 = vmatpush1.msra.mxu0 0.0
  %11166 = vmatprep.subr.mxu0 0.0
  %11167 = vmatpush1.msra.mxu0 0.0
  %11168 = vmatprep.subr.mxu0 0.0
  %11169 = vmatpush1.msra.mxu0 0.0
  %11170 = vmatprep.subr.mxu0 0.0
  %11171 = vmatpush1.msra.mxu0 0.0
  %11172 = vmatprep.subr.mxu0 0.0
  %11173 = vmatpush1.msra.mxu0 0.0
  %11174 = vmatprep.subr.mxu0 0.0
  %11175 = vmatpush1.msra.mxu0 0.0
  %11176 = vmatprep.subr.mxu0 0.0
  %11177 = vmatpush1.msra.mxu0 0.0
  %11178 = vmatprep.subr.mxu0 0.0
  %11179 = vmatpush1.msra.mxu0 0.0
  %11180 = vmatprep.mubr.f32.mxu0 0.0
  %v11181 = vand.u32 %v5086, 4294901760
  %v11182 = vsub.f32 %v5086, %v11181
  %v11183 = vand.u32 %v11182, 4294901760
  %v11184 = vsub.f32 %v11182, %v11183
  %v11185 = vand.u32 %v11184, 4294901760
  %11186 = vmatmul.mubr.f32.gmra.mrb[0].mxu0 %v11185
  %v11187 = vpop.f32.mrb[0].mxu0
  %v11188 = vadd.f32 %v5083, %v11187
  %v11189 = vpop.f32.mrb[0].mxu0
  %v11190 = vadd.f32 %v5083, %v11189
  %11191 = vdwg.mxu0
  %v11192 = vand.u32 %v11093, 4294901760
  %v11193 = vsub.f32 %v11093, %v11192
  %v11194 = vand.u32 %v11193, 4294901760
  %v11195 = vsub.f32 %v11193, %v11194
  %v11196 = vand.u32 %v11195, 4294901760
  %11197 = vmatprep.subr.mxu0 %v11196
  %v11198 = vand.u32 %v11092, 4294901760
  %v11199 = vsub.f32 %v11092, %v11198
  %v11200 = vand.u32 %v11199, 4294901760
  %v11201 = vsub.f32 %v11199, %v11200
  %v11202 = vand.u32 %v11201, 4294901760
  %11203 = vmatpush1.msra.mxu0 %v11202
  %v11204 = vand.u32 %v11097, 4294901760
  %v11205 = vsub.f32 %v11097, %v11204
  %v11206 = vand.u32 %v11205, 4294901760
  %v11207 = vsub.f32 %v11205, %v11206
  %v11208 = vand.u32 %v11207, 4294901760
  %11209 = vmatprep.subr.mxu0 %v11208
  %v11210 = vand.u32 %v11096, 4294901760
  %v11211 = vsub.f32 %v11096, %v11210
  %v11212 = vand.u32 %v11211, 4294901760
  %v11213 = vsub.f32 %v11211, %v11212
  %v11214 = vand.u32 %v11213, 4294901760
  %11215 = vmatpush1.msra.mxu0 %v11214
  %v11216 = vand.u32 %v11101, 4294901760
  %v11217 = vsub.f32 %v11101, %v11216
  %v11218 = vand.u32 %v11217, 4294901760
  %v11219 = vsub.f32 %v11217, %v11218
  %v11220 = vand.u32 %v11219, 4294901760
  %11221 = vmatprep.subr.mxu0 %v11220
  %v11222 = vand.u32 %v11100, 4294901760
  %v11223 = vsub.f32 %v11100, %v11222
  %v11224 = vand.u32 %v11223, 4294901760
  %v11225 = vsub.f32 %v11223, %v11224
  %v11226 = vand.u32 %v11225, 4294901760
  %11227 = vmatpush1.msra.mxu0 %v11226
  %v11228 = vand.u32 %v11105, 4294901760
  %v11229 = vsub.f32 %v11105, %v11228
  %v11230 = vand.u32 %v11229, 4294901760
  %v11231 = vsub.f32 %v11229, %v11230
  %v11232 = vand.u32 %v11231, 4294901760
  %11233 = vmatprep.subr.mxu0 %v11232
  %v11234 = vand.u32 %v11104, 4294901760
  %v11235 = vsub.f32 %v11104, %v11234
  %v11236 = vand.u32 %v11235, 4294901760
  %v11237 = vsub.f32 %v11235, %v11236
  %v11238 = vand.u32 %v11237, 4294901760
  %11239 = vmatpush1.msra.mxu0 %v11238
  %11240 = vmatprep.subr.mxu0 0.0
  %11241 = vmatpush1.msra.mxu0 0.0
  %11242 = vmatprep.subr.mxu0 0.0
  %11243 = vmatpush1.msra.mxu0 0.0
  %11244 = vmatprep.subr.mxu0 0.0
  %11245 = vmatpush1.msra.mxu0 0.0
  %11246 = vmatprep.subr.mxu0 0.0
  %11247 = vmatpush1.msra.mxu0 0.0
  %11248 = vmatprep.subr.mxu0 0.0
  %11249 = vmatpush1.msra.mxu0 0.0
  %11250 = vmatprep.subr.mxu0 0.0
  %11251 = vmatpush1.msra.mxu0 0.0
  %11252 = vmatprep.subr.mxu0 0.0
  %11253 = vmatpush1.msra.mxu0 0.0
  %11254 = vmatprep.subr.mxu0 0.0
  %11255 = vmatpush1.msra.mxu0 0.0
  %11256 = vmatprep.subr.mxu0 0.0
  %11257 = vmatpush1.msra.mxu0 0.0
  %11258 = vmatprep.subr.mxu0 0.0
  %11259 = vmatpush1.msra.mxu0 0.0
  %11260 = vmatprep.subr.mxu0 0.0
  %11261 = vmatpush1.msra.mxu0 0.0
  %11262 = vmatprep.subr.mxu0 0.0
  %11263 = vmatpush1.msra.mxu0 0.0
  %11264 = vmatprep.subr.mxu0 0.0
  %11265 = vmatpush1.msra.mxu0 0.0
  %11266 = vmatprep.subr.mxu0 0.0
  %11267 = vmatpush1.msra.mxu0 0.0
  %11268 = vmatprep.subr.mxu0 0.0
  %11269 = vmatpush1.msra.mxu0 0.0
  %11270 = vmatprep.subr.mxu0 0.0
  %11271 = vmatpush1.msra.mxu0 0.0
  %11272 = vmatprep.subr.mxu0 0.0
  %11273 = vmatpush1.msra.mxu0 0.0
  %11274 = vmatprep.subr.mxu0 0.0
  %11275 = vmatpush1.msra.mxu0 0.0
  %11276 = vmatprep.subr.mxu0 0.0
  %11277 = vmatpush1.msra.mxu0 0.0
  %11278 = vmatprep.subr.mxu0 0.0
  %11279 = vmatpush1.msra.mxu0 0.0
  %11280 = vmatprep.subr.mxu0 0.0
  %11281 = vmatpush1.msra.mxu0 0.0
  %11282 = vmatprep.subr.mxu0 0.0
  %11283 = vmatpush1.msra.mxu0 0.0
  %11284 = vmatprep.subr.mxu0 0.0
  %11285 = vmatpush1.msra.mxu0 0.0
  %11286 = vmatprep.subr.mxu0 0.0
  %11287 = vmatpush1.msra.mxu0 0.0
  %11288 = vmatprep.subr.mxu0 0.0
  %11289 = vmatpush1.msra.mxu0 0.0
  %11290 = vmatprep.subr.mxu0 0.0
  %11291 = vmatpush1.msra.mxu0 0.0
  %11292 = vmatprep.subr.mxu0 0.0
  %11293 = vmatpush1.msra.mxu0 0.0
  %11294 = vmatprep.subr.mxu0 0.0
  %11295 = vmatpush1.msra.mxu0 0.0
  %11296 = vmatprep.mubr.f32.mxu0 0.0
  %v11297 = vand.u32 %v5086, 4294901760
  %11298 = vmatmul.mubr.f32.gmra.mrb[0].mxu0 %v11297
  %v11299 = vpop.f32.mrb[0].mxu0
  %v11300 = vadd.f32 %v11188, %v11299
  %v11301 = vpop.f32.mrb[0].mxu0
  %v11302 = vadd.f32 %v11190, %v11301
  %11303 = vdwg.mxu0
  %v11304 = vand.u32 %v11093, 4294901760
  %v11305 = vsub.f32 %v11093, %v11304
  %11306 = vmatprep.subr.mxu0 %v11305
  %v11307 = vand.u32 %v11092, 4294901760
  %v11308 = vsub.f32 %v11092, %v11307
  %11309 = vmatpush1.msra.mxu0 %v11308
  %v11310 = vand.u32 %v11097, 4294901760
  %v11311 = vsub.f32 %v11097, %v11310
  %11312 = vmatprep.subr.mxu0 %v11311
  %v11313 = vand.u32 %v11096, 4294901760
  %v11314 = vsub.f32 %v11096, %v11313
  %11315 = vmatpush1.msra.mxu0 %v11314
  %v11316 = vand.u32 %v11101, 4294901760
  %v11317 = vsub.f32 %v11101, %v11316
  %11318 = vmatprep.subr.mxu0 %v11317
  %v11319 = vand.u32 %v11100, 4294901760
  %v11320 = vsub.f32 %v11100, %v11319
  %11321 = vmatpush1.msra.mxu0 %v11320
  %v11322 = vand.u32 %v11105, 4294901760
  %v11323 = vsub.f32 %v11105, %v11322
  %11324 = vmatprep.subr.mxu0 %v11323
  %v11325 = vand.u32 %v11104, 4294901760
  %v11326 = vsub.f32 %v11104, %v11325
  %11327 = vmatpush1.msra.mxu0 %v11326
  %11328 = vmatprep.subr.mxu0 0.0
  %11329 = vmatpush1.msra.mxu0 0.0
  %11330 = vmatprep.subr.mxu0 0.0
  %11331 = vmatpush1.msra.mxu0 0.0
  %11332 = vmatprep.subr.mxu0 0.0
  %11333 = vmatpush1.msra.mxu0 0.0
  %11334 = vmatprep.subr.mxu0 0.0
  %11335 = vmatpush1.msra.mxu0 0.0
  %11336 = vmatprep.subr.mxu0 0.0
  %11337 = vmatpush1.msra.mxu0 0.0
  %11338 = vmatprep.subr.mxu0 0.0
  %11339 = vmatpush1.msra.mxu0 0.0
  %11340 = vmatprep.subr.mxu0 0.0
  %11341 = vmatpush1.msra.mxu0 0.0
  %11342 = vmatprep.subr.mxu0 0.0
  %11343 = vmatpush1.msra.mxu0 0.0
  %11344 = vmatprep.subr.mxu0 0.0
  %11345 = vmatpush1.msra.mxu0 0.0
  %11346 = vmatprep.subr.mxu0 0.0
  %11347 = vmatpush1.msra.mxu0 0.0
  %11348 = vmatprep.subr.mxu0 0.0
  %11349 = vmatpush1.msra.mxu0 0.0
  %11350 = vmatprep.subr.mxu0 0.0
  %11351 = vmatpush1.msra.mxu0 0.0
  %11352 = vmatprep.subr.mxu0 0.0
  %11353 = vmatpush1.msra.mxu0 0.0
  %11354 = vmatprep.subr.mxu0 0.0
  %11355 = vmatpush1.msra.mxu0 0.0
  %11356 = vmatprep.subr.mxu0 0.0
  %11357 = vmatpush1.msra.mxu0 0.0
  %11358 = vmatprep.subr.mxu0 0.0
  %11359 = vmatpush1.msra.mxu0 0.0
  %11360 = vmatprep.subr.mxu0 0.0
  %11361 = vmatpush1.msra.mxu0 0.0
  %11362 = vmatprep.subr.mxu0 0.0
  %11363 = vmatpush1.msra.mxu0 0.0
  %11364 = vmatprep.subr.mxu0 0.0
  %11365 = vmatpush1.msra.mxu0 0.0
  %11366 = vmatprep.subr.mxu0 0.0
  %11367 = vmatpush1.msra.mxu0 0.0
  %11368 = vmatprep.subr.mxu0 0.0
  %11369 = vmatpush1.msra.mxu0 0.0
  %11370 = vmatprep.subr.mxu0 0.0
  %11371 = vmatpush1.msra.mxu0 0.0
  %11372 = vmatprep.subr.mxu0 0.0
  %11373 = vmatpush1.msra.mxu0 0.0
  %11374 = vmatprep.subr.mxu0 0.0
  %11375 = vmatpush1.msra.mxu0 0.0
  %11376 = vmatprep.subr.mxu0 0.0
  %11377 = vmatpush1.msra.mxu0 0.0
  %11378 = vmatprep.subr.mxu0 0.0
  %11379 = vmatpush1.msra.mxu0 0.0
  %11380 = vmatprep.subr.mxu0 0.0
  %11381 = vmatpush1.msra.mxu0 0.0
  %11382 = vmatprep.subr.mxu0 0.0
  %11383 = vmatpush1.msra.mxu0 0.0
  %11384 = vmatprep.mubr.f32.mxu0 0.0
  %v11385 = vand.u32 %v5086, 4294901760
  %v11386 = vsub.f32 %v5086, %v11385
  %11387 = vmatmul.mubr.f32.gmra.mrb[0].mxu0 %v11386
  %v11388 = vpop.f32.mrb[0].mxu0
  %v11389 = vadd.f32 %v11300, %v11388
  %v11390 = vpop.f32.mrb[0].mxu0
  %v11391 = vadd.f32 %v11302, %v11390
  %11392 = vdwg.mxu0
  %v11393 = vand.u32 %v11093, 4294901760
  %11394 = vmatprep.subr.mxu0 %v11393
  %v11395 = vand.u32 %v11092, 4294901760
  %11396 = vmatpush1.msra.mxu0 %v11395
  %v11397 = vand.u32 %v11097, 4294901760
  %11398 = vmatprep.subr.mxu0 %v11397
  %v11399 = vand.u32 %v11096, 4294901760
  %11400 = vmatpush1.msra.mxu0 %v11399
  %v11401 = vand.u32 %v11101, 4294901760
  %11402 = vmatprep.subr.mxu0 %v11401
  %v11403 = vand.u32 %v11100, 4294901760
  %11404 = vmatpush1.msra.mxu0 %v11403
  %v11405 = vand.u32 %v11105, 4294901760
  %11406 = vmatprep.subr.mxu0 %v11405
  %v11407 = vand.u32 %v11104, 4294901760
  %11408 = vmatpush1.msra.mxu0 %v11407
  %11409 = vmatprep.subr.mxu0 0.0
  %11410 = vmatpush1.msra.mxu0 0.0
  %11411 = vmatprep.subr.mxu0 0.0
  %11412 = vmatpush1.msra.mxu0 0.0
  %11413 = vmatprep.subr.mxu0 0.0
  %11414 = vmatpush1.msra.mxu0 0.0
  %11415 = vmatprep.subr.mxu0 0.0
  %11416 = vmatpush1.msra.mxu0 0.0
  %11417 = vmatprep.subr.mxu0 0.0
  %11418 = vmatpush1.msra.mxu0 0.0
  %11419 = vmatprep.subr.mxu0 0.0
  %11420 = vmatpush1.msra.mxu0 0.0
  %11421 = vmatprep.subr.mxu0 0.0
  %11422 = vmatpush1.msra.mxu0 0.0
  %11423 = vmatprep.subr.mxu0 0.0
  %11424 = vmatpush1.msra.mxu0 0.0
  %11425 = vmatprep.subr.mxu0 0.0
  %11426 = vmatpush1.msra.mxu0 0.0
  %11427 = vmatprep.subr.mxu0 0.0
  %11428 = vmatpush1.msra.mxu0 0.0
  %11429 = vmatprep.subr.mxu0 0.0
  %11430 = vmatpush1.msra.mxu0 0.0
  %11431 = vmatprep.subr.mxu0 0.0
  %11432 = vmatpush1.msra.mxu0 0.0
  %11433 = vmatprep.subr.mxu0 0.0
  %11434 = vmatpush1.msra.mxu0 0.0
  %11435 = vmatprep.subr.mxu0 0.0
  %11436 = vmatpush1.msra.mxu0 0.0
  %11437 = vmatprep.subr.mxu0 0.0
  %11438 = vmatpush1.msra.mxu0 0.0
  %11439 = vmatprep.subr.mxu0 0.0
  %11440 = vmatpush1.msra.mxu0 0.0
  %11441 = vmatprep.subr.mxu0 0.0
  %11442 = vmatpush1.msra.mxu0 0.0
  %11443 = vmatprep.subr.mxu0 0.0
  %11444 = vmatpush1.msra.mxu0 0.0
  %11445 = vmatprep.subr.mxu0 0.0
  %11446 = vmatpush1.msra.mxu0 0.0
  %11447 = vmatprep.subr.mxu0 0.0
  %11448 = vmatpush1.msra.mxu0 0.0
  %11449 = vmatprep.subr.mxu0 0.0
  %11450 = vmatpush1.msra.mxu0 0.0
  %11451 = vmatprep.subr.mxu0 0.0
  %11452 = vmatpush1.msra.mxu0 0.0
  %11453 = vmatprep.subr.mxu0 0.0
  %11454 = vmatpush1.msra.mxu0 0.0
  %11455 = vmatprep.subr.mxu0 0.0
  %11456 = vmatpush1.msra.mxu0 0.0
  %11457 = vmatprep.subr.mxu0 0.0
  %11458 = vmatpush1.msra.mxu0 0.0
  %11459 = vmatprep.subr.mxu0 0.0
  %11460 = vmatpush1.msra.mxu0 0.0
  %11461 = vmatprep.subr.mxu0 0.0
  %11462 = vmatpush1.msra.mxu0 0.0
  %11463 = vmatprep.subr.mxu0 0.0
  %11464 = vmatpush1.msra.mxu0 0.0
  %11465 = vmatprep.mubr.f32.mxu0 0.0
  %v11466 = vand.u32 %v5086, 4294901760
  %v11467 = vsub.f32 %v5086, %v11466
  %v11468 = vand.u32 %v11467, 4294901760
  %11469 = vmatmul.mubr.f32.gmra.mrb[0].mxu0 %v11468
  %v11470 = vpop.f32.mrb[0].mxu0
  %v11471 = vadd.f32 %v11389, %v11470
  %v11472 = vpop.f32.mrb[0].mxu0
  %v11473 = vadd.f32 %v11391, %v11472
  %11474 = vdwg.mxu0
  %v11475 = vand.u32 %v11093, 4294901760
  %v11476 = vsub.f32 %v11093, %v11475
  %v11477 = vand.u32 %v11476, 4294901760
  %11478 = vmatprep.subr.mxu0 %v11477
  %v11479 = vand.u32 %v11092, 4294901760
  %v11480 = vsub.f32 %v11092, %v11479
  %v11481 = vand.u32 %v11480, 4294901760
  %11482 = vmatpush1.msra.mxu0 %v11481
  %v11483 = vand.u32 %v11097, 4294901760
  %v11484 = vsub.f32 %v11097, %v11483
  %v11485 = vand.u32 %v11484, 4294901760
  %11486 = vmatprep.subr.mxu0 %v11485
  %v11487 = vand.u32 %v11096, 4294901760
  %v11488 = vsub.f32 %v11096, %v11487
  %v11489 = vand.u32 %v11488, 4294901760
  %11490 = vmatpush1.msra.mxu0 %v11489
  %v11491 = vand.u32 %v11101, 4294901760
  %v11492 = vsub.f32 %v11101, %v11491
  %v11493 = vand.u32 %v11492, 4294901760
  %11494 = vmatprep.subr.mxu0 %v11493
  %v11495 = vand.u32 %v11100, 4294901760
  %v11496 = vsub.f32 %v11100, %v11495
  %v11497 = vand.u32 %v11496, 4294901760
  %11498 = vmatpush1.msra.mxu0 %v11497
  %v11499 = vand.u32 %v11105, 4294901760
  %v11500 = vsub.f32 %v11105, %v11499
  %v11501 = vand.u32 %v11500, 4294901760
  %11502 = vmatprep.subr.mxu0 %v11501
  %v11503 = vand.u32 %v11104, 4294901760
  %v11504 = vsub.f32 %v11104, %v11503
  %v11505 = vand.u32 %v11504, 4294901760
  %11506 = vmatpush1.msra.mxu0 %v11505
  %11507 = vmatprep.subr.mxu0 0.0
  %11508 = vmatpush1.msra.mxu0 0.0
  %11509 = vmatprep.subr.mxu0 0.0
  %11510 = vmatpush1.msra.mxu0 0.0
  %11511 = vmatprep.subr.mxu0 0.0
  %11512 = vmatpush1.msra.mxu0 0.0
  %11513 = vmatprep.subr.mxu0 0.0
  %11514 = vmatpush1.msra.mxu0 0.0
  %11515 = vmatprep.subr.mxu0 0.0
  %11516 = vmatpush1.msra.mxu0 0.0
  %11517 = vmatprep.subr.mxu0 0.0
  %11518 = vmatpush1.msra.mxu0 0.0
  %11519 = vmatprep.subr.mxu0 0.0
  %11520 = vmatpush1.msra.mxu0 0.0
  %11521 = vmatprep.subr.mxu0 0.0
  %11522 = vmatpush1.msra.mxu0 0.0
  %11523 = vmatprep.subr.mxu0 0.0
  %11524 = vmatpush1.msra.mxu0 0.0
  %11525 = vmatprep.subr.mxu0 0.0
  %11526 = vmatpush1.msra.mxu0 0.0
  %11527 = vmatprep.subr.mxu0 0.0
  %11528 = vmatpush1.msra.mxu0 0.0
  %11529 = vmatprep.subr.mxu0 0.0
  %11530 = vmatpush1.msra.mxu0 0.0
  %11531 = vmatprep.subr.mxu0 0.0
  %11532 = vmatpush1.msra.mxu0 0.0
  %11533 = vmatprep.subr.mxu0 0.0
  %11534 = vmatpush1.msra.mxu0 0.0
  %11535 = vmatprep.subr.mxu0 0.0
  %11536 = vmatpush1.msra.mxu0 0.0
  %11537 = vmatprep.subr.mxu0 0.0
  %11538 = vmatpush1.msra.mxu0 0.0
  %11539 = vmatprep.subr.mxu0 0.0
  %11540 = vmatpush1.msra.mxu0 0.0
  %11541 = vmatprep.subr.mxu0 0.0
  %11542 = vmatpush1.msra.mxu0 0.0
  %11543 = vmatprep.subr.mxu0 0.0
  %11544 = vmatpush1.msra.mxu0 0.0
  %11545 = vmatprep.subr.mxu0 0.0
  %11546 = vmatpush1.msra.mxu0 0.0
  %11547 = vmatprep.subr.mxu0 0.0
  %11548 = vmatpush1.msra.mxu0 0.0
  %11549 = vmatprep.subr.mxu0 0.0
  %11550 = vmatpush1.msra.mxu0 0.0
  %11551 = vmatprep.subr.mxu0 0.0
  %11552 = vmatpush1.msra.mxu0 0.0
  %11553 = vmatprep.subr.mxu0 0.0
  %11554 = vmatpush1.msra.mxu0 0.0
  %11555 = vmatprep.subr.mxu0 0.0
  %11556 = vmatpush1.msra.mxu0 0.0
  %11557 = vmatprep.subr.mxu0 0.0
  %11558 = vmatpush1.msra.mxu0 0.0
  %11559 = vmatprep.subr.mxu0 0.0
  %11560 = vmatpush1.msra.mxu0 0.0
  %11561 = vmatprep.subr.mxu0 0.0
  %11562 = vmatpush1.msra.mxu0 0.0
  %11563 = vmatprep.mubr.f32.mxu0 0.0
  %v11564 = vand.u32 %v5086, 4294901760
  %11565 = vmatmul.mubr.f32.gmra.mrb[0].mxu0 %v11564
  %v11566 = vpop.f32.mrb[0].mxu0
  %v11567 = vadd.f32 %v11471, %v11566
  %v11568 = vpop.f32.mrb[0].mxu0
  %v11569 = vadd.f32 %v11473, %v11568
  %11570 = vdwg.mxu0
  %v11571 = vand.u32 %v11093, 4294901760
  %11572 = vmatprep.subr.mxu0 %v11571
  %v11573 = vand.u32 %v11092, 4294901760
  %11574 = vmatpush1.msra.mxu0 %v11573
  %v11575 = vand.u32 %v11097, 4294901760
  %11576 = vmatprep.subr.mxu0 %v11575
  %v11577 = vand.u32 %v11096, 4294901760
  %11578 = vmatpush1.msra.mxu0 %v11577
  %v11579 = vand.u32 %v11101, 4294901760
  %11580 = vmatprep.subr.mxu0 %v11579
  %v11581 = vand.u32 %v11100, 4294901760
  %11582 = vmatpush1.msra.mxu0 %v11581
  %v11583 = vand.u32 %v11105, 4294901760
  %11584 = vmatprep.subr.mxu0 %v11583
  %v11585 = vand.u32 %v11104, 4294901760
  %11586 = vmatpush1.msra.mxu0 %v11585
  %11587 = vmatprep.subr.mxu0 0.0
  %11588 = vmatpush1.msra.mxu0 0.0
  %11589 = vmatprep.subr.mxu0 0.0
  %11590 = vmatpush1.msra.mxu0 0.0
  %11591 = vmatprep.subr.mxu0 0.0
  %11592 = vmatpush1.msra.mxu0 0.0
  %11593 = vmatprep.subr.mxu0 0.0
  %11594 = vmatpush1.msra.mxu0 0.0
  %11595 = vmatprep.subr.mxu0 0.0
  %11596 = vmatpush1.msra.mxu0 0.0
  %11597 = vmatprep.subr.mxu0 0.0
  %11598 = vmatpush1.msra.mxu0 0.0
  %11599 = vmatprep.subr.mxu0 0.0
  %11600 = vmatpush1.msra.mxu0 0.0
  %11601 = vmatprep.subr.mxu0 0.0
  %11602 = vmatpush1.msra.mxu0 0.0
  %11603 = vmatprep.subr.mxu0 0.0
  %11604 = vmatpush1.msra.mxu0 0.0
  %11605 = vmatprep.subr.mxu0 0.0
  %11606 = vmatpush1.msra.mxu0 0.0
  %11607 = vmatprep.subr.mxu0 0.0
  %11608 = vmatpush1.msra.mxu0 0.0
  %11609 = vmatprep.subr.mxu0 0.0
  %11610 = vmatpush1.msra.mxu0 0.0
  %11611 = vmatprep.subr.mxu0 0.0
  %11612 = vmatpush1.msra.mxu0 0.0
  %11613 = vmatprep.subr.mxu0 0.0
  %11614 = vmatpush1.msra.mxu0 0.0
  %11615 = vmatprep.subr.mxu0 0.0
  %11616 = vmatpush1.msra.mxu0 0.0
  %11617 = vmatprep.subr.mxu0 0.0
  %11618 = vmatpush1.msra.mxu0 0.0
  %11619 = vmatprep.subr.mxu0 0.0
  %11620 = vmatpush1.msra.mxu0 0.0
  %11621 = vmatprep.subr.mxu0 0.0
  %11622 = vmatpush1.msra.mxu0 0.0
  %11623 = vmatprep.subr.mxu0 0.0
  %11624 = vmatpush1.msra.mxu0 0.0
  %11625 = vmatprep.subr.mxu0 0.0
  %11626 = vmatpush1.msra.mxu0 0.0
  %11627 = vmatprep.subr.mxu0 0.0
  %11628 = vmatpush1.msra.mxu0 0.0
  %11629 = vmatprep.subr.mxu0 0.0
  %11630 = vmatpush1.msra.mxu0 0.0
  %11631 = vmatprep.subr.mxu0 0.0
  %11632 = vmatpush1.msra.mxu0 0.0
  %11633 = vmatprep.subr.mxu0 0.0
  %11634 = vmatpush1.msra.mxu0 0.0
  %11635 = vmatprep.subr.mxu0 0.0
  %11636 = vmatpush1.msra.mxu0 0.0
  %11637 = vmatprep.subr.mxu0 0.0
  %11638 = vmatpush1.msra.mxu0 0.0
  %11639 = vmatprep.subr.mxu0 0.0
  %11640 = vmatpush1.msra.mxu0 0.0
  %11641 = vmatprep.subr.mxu0 0.0
  %11642 = vmatpush1.msra.mxu0 0.0
  %11643 = vmatprep.mubr.f32.mxu0 0.0
  %v11644 = vand.u32 %v5086, 4294901760
  %11645 = vmatmul.mubr.f32.gmra.mrb[0].mxu0 %v11644
  %v11646 = vpop.f32.mrb[0].mxu0
  %v11647 = vadd.f32 %v11567, %v11646
  %v11648 = vpop.f32.mrb[0].mxu0
  %v11649 = vadd.f32 %v11569, %v11648
  %11650 = vdwg.mxu0
  %v11651 = vand.u32 %v11095, 4294901760
  %11652 = vmatprep.subr.mxu0 %v11651
  %v11653 = vand.u32 %v11094, 4294901760
  %11654 = vmatpush1.msra.mxu0 %v11653
  %v11655 = vand.u32 %v11099, 4294901760
  %11656 = vmatprep.subr.mxu0 %v11655
  %v11657 = vand.u32 %v11098, 4294901760
  %11658 = vmatpush1.msra.mxu0 %v11657
  %v11659 = vand.u32 %v11103, 4294901760
  %11660 = vmatprep.subr.mxu0 %v11659
  %v11661 = vand.u32 %v11102, 4294901760
  %11662 = vmatpush1.msra.mxu0 %v11661
  %v11663 = vand.u32 %v11107, 4294901760
  %11664 = vmatprep.subr.mxu0 %v11663
  %v11665 = vand.u32 %v11106, 4294901760
  %11666 = vmatpush1.msra.mxu0 %v11665
  %11667 = vmatprep.subr.mxu0 0.0
  %11668 = vmatpush1.msra.mxu0 0.0
  %11669 = vmatprep.subr.mxu0 0.0
  %11670 = vmatpush1.msra.mxu0 0.0
  %11671 = vmatprep.subr.mxu0 0.0
  %11672 = vmatpush1.msra.mxu0 0.0
  %11673 = vmatprep.subr.mxu0 0.0
  %11674 = vmatpush1.msra.mxu0 0.0
  %11675 = vmatprep.subr.mxu0 0.0
  %11676 = vmatpush1.msra.mxu0 0.0
  %11677 = vmatprep.subr.mxu0 0.0
  %11678 = vmatpush1.msra.mxu0 0.0
  %11679 = vmatprep.subr.mxu0 0.0
  %11680 = vmatpush1.msra.mxu0 0.0
  %11681 = vmatprep.subr.mxu0 0.0
  %11682 = vmatpush1.msra.mxu0 0.0
  %11683 = vmatprep.subr.mxu0 0.0
  %11684 = vmatpush1.msra.mxu0 0.0
  %11685 = vmatprep.subr.mxu0 0.0
  %11686 = vmatpush1.msra.mxu0 0.0
  %11687 = vmatprep.subr.mxu0 0.0
  %11688 = vmatpush1.msra.mxu0 0.0
  %11689 = vmatprep.subr.mxu0 0.0
  %11690 = vmatpush1.msra.mxu0 0.0
  %11691 = vmatprep.subr.mxu0 0.0
  %11692 = vmatpush1.msra.mxu0 0.0
  %11693 = vmatprep.subr.mxu0 0.0
  %11694 = vmatpush1.msra.mxu0 0.0
  %11695 = vmatprep.subr.mxu0 0.0
  %11696 = vmatpush1.msra.mxu0 0.0
  %11697 = vmatprep.subr.mxu0 0.0
  %11698 = vmatpush1.msra.mxu0 0.0
  %11699 = vmatprep.subr.mxu0 0.0
  %11700 = vmatpush1.msra.mxu0 0.0
  %11701 = vmatprep.subr.mxu0 0.0
  %11702 = vmatpush1.msra.mxu0 0.0
  %11703 = vmatprep.subr.mxu0 0.0
  %11704 = vmatpush1.msra.mxu0 0.0
  %11705 = vmatprep.subr.mxu0 0.0
  %11706 = vmatpush1.msra.mxu0 0.0
  %11707 = vmatprep.subr.mxu0 0.0
  %11708 = vmatpush1.msra.mxu0 0.0
  %11709 = vmatprep.subr.mxu0 0.0
  %11710 = vmatpush1.msra.mxu0 0.0
  %11711 = vmatprep.subr.mxu0 0.0
  %11712 = vmatpush1.msra.mxu0 0.0
  %11713 = vmatprep.subr.mxu0 0.0
  %11714 = vmatpush1.msra.mxu0 0.0
  %11715 = vmatprep.subr.mxu0 0.0
  %11716 = vmatpush1.msra.mxu0 0.0
  %11717 = vmatprep.subr.mxu0 0.0
  %11718 = vmatpush1.msra.mxu0 0.0
  %11719 = vmatprep.subr.mxu0 0.0
  %11720 = vmatpush1.msra.mxu0 0.0
  %11721 = vmatprep.subr.mxu0 0.0
  %11722 = vmatpush1.msra.mxu0 0.0
  %11723 = vmatprep.mubr.f32.mxu0 0.0
  %v11724 = vand.u32 %v5086, 4294901760
  %v11725 = vsub.f32 %v5086, %v11724
  %v11726 = vand.u32 %v11725, 4294901760
  %v11727 = vsub.f32 %v11725, %v11726
  %v11728 = vand.u32 %v11727, 4294901760
  %11729 = vmatmul.mubr.f32.gmra.mrb[0].mxu0 %v11728
  %v11730 = vpop.f32.mrb[0].mxu0
  %v11731 = vadd.f32 %v5083, %v11730
  %v11732 = vpop.f32.mrb[0].mxu0
  %v11733 = vadd.f32 %v5083, %v11732
  %11734 = vdwg.mxu0
  %v11735 = vand.u32 %v11095, 4294901760
  %v11736 = vsub.f32 %v11095, %v11735
  %v11737 = vand.u32 %v11736, 4294901760
  %v11738 = vsub.f32 %v11736, %v11737
  %v11739 = vand.u32 %v11738, 4294901760
  %11740 = vmatprep.subr.mxu0 %v11739
  %v11741 = vand.u32 %v11094, 4294901760
  %v11742 = vsub.f32 %v11094, %v11741
  %v11743 = vand.u32 %v11742, 4294901760
  %v11744 = vsub.f32 %v11742, %v11743
  %v11745 = vand.u32 %v11744, 4294901760
  %11746 = vmatpush1.msra.mxu0 %v11745
  %v11747 = vand.u32 %v11099, 4294901760
  %v11748 = vsub.f32 %v11099, %v11747
  %v11749 = vand.u32 %v11748, 4294901760
  %v11750 = vsub.f32 %v11748, %v11749
  %v11751 = vand.u32 %v11750, 4294901760
  %11752 = vmatprep.subr.mxu0 %v11751
  %v11753 = vand.u32 %v11098, 4294901760
  %v11754 = vsub.f32 %v11098, %v11753
  %v11755 = vand.u32 %v11754, 4294901760
  %v11756 = vsub.f32 %v11754, %v11755
  %v11757 = vand.u32 %v11756, 4294901760
  %11758 = vmatpush1.msra.mxu0 %v11757
  %v11759 = vand.u32 %v11103, 4294901760
  %v11760 = vsub.f32 %v11103, %v11759
  %v11761 = vand.u32 %v11760, 4294901760
  %v11762 = vsub.f32 %v11760, %v11761
  %v11763 = vand.u32 %v11762, 4294901760
  %11764 = vmatprep.subr.mxu0 %v11763
  %v11765 = vand.u32 %v11102, 4294901760
  %v11766 = vsub.f32 %v11102, %v11765
  %v11767 = vand.u32 %v11766, 4294901760
  %v11768 = vsub.f32 %v11766, %v11767
  %v11769 = vand.u32 %v11768, 4294901760
  %11770 = vmatpush1.msra.mxu0 %v11769
  %v11771 = vand.u32 %v11107, 4294901760
  %v11772 = vsub.f32 %v11107, %v11771
  %v11773 = vand.u32 %v11772, 4294901760
  %v11774 = vsub.f32 %v11772, %v11773
  %v11775 = vand.u32 %v11774, 4294901760
  %11776 = vmatprep.subr.mxu0 %v11775
  %v11777 = vand.u32 %v11106, 4294901760
  %v11778 = vsub.f32 %v11106, %v11777
  %v11779 = vand.u32 %v11778, 4294901760
  %v11780 = vsub.f32 %v11778, %v11779
  %v11781 = vand.u32 %v11780, 4294901760
  %11782 = vmatpush1.msra.mxu0 %v11781
  %11783 = vmatprep.subr.mxu0 0.0
  %11784 = vmatpush1.msra.mxu0 0.0
  %11785 = vmatprep.subr.mxu0 0.0
  %11786 = vmatpush1.msra.mxu0 0.0
  %11787 = vmatprep.subr.mxu0 0.0
  %11788 = vmatpush1.msra.mxu0 0.0
  %11789 = vmatprep.subr.mxu0 0.0
  %11790 = vmatpush1.msra.mxu0 0.0
  %11791 = vmatprep.subr.mxu0 0.0
  %11792 = vmatpush1.msra.mxu0 0.0
  %11793 = vmatprep.subr.mxu0 0.0
  %11794 = vmatpush1.msra.mxu0 0.0
  %11795 = vmatprep.subr.mxu0 0.0
  %11796 = vmatpush1.msra.mxu0 0.0
  %11797 = vmatprep.subr.mxu0 0.0
  %11798 = vmatpush1.msra.mxu0 0.0
  %11799 = vmatprep.subr.mxu0 0.0
  %11800 = vmatpush1.msra.mxu0 0.0
  %11801 = vmatprep.subr.mxu0 0.0
  %11802 = vmatpush1.msra.mxu0 0.0
  %11803 = vmatprep.subr.mxu0 0.0
  %11804 = vmatpush1.msra.mxu0 0.0
  %11805 = vmatprep.subr.mxu0 0.0
  %11806 = vmatpush1.msra.mxu0 0.0
  %11807 = vmatprep.subr.mxu0 0.0
  %11808 = vmatpush1.msra.mxu0 0.0
  %11809 = vmatprep.subr.mxu0 0.0
  %11810 = vmatpush1.msra.mxu0 0.0
  %11811 = vmatprep.subr.mxu0 0.0
  %11812 = vmatpush1.msra.mxu0 0.0
  %11813 = vmatprep.subr.mxu0 0.0
  %11814 = vmatpush1.msra.mxu0 0.0
  %11815 = vmatprep.subr.mxu0 0.0
  %11816 = vmatpush1.msra.mxu0 0.0
  %11817 = vmatprep.subr.mxu0 0.0
  %11818 = vmatpush1.msra.mxu0 0.0
  %11819 = vmatprep.subr.mxu0 0.0
  %11820 = vmatpush1.msra.mxu0 0.0
  %11821 = vmatprep.subr.mxu0 0.0
  %11822 = vmatpush1.msra.mxu0 0.0
  %11823 = vmatprep.subr.mxu0 0.0
  %11824 = vmatpush1.msra.mxu0 0.0
  %11825 = vmatprep.subr.mxu0 0.0
  %11826 = vmatpush1.msra.mxu0 0.0
  %11827 = vmatprep.subr.mxu0 0.0
  %11828 = vmatpush1.msra.mxu0 0.0
  %11829 = vmatprep.subr.mxu0 0.0
  %11830 = vmatpush1.msra.mxu0 0.0
  %11831 = vmatprep.subr.mxu0 0.0
  %11832 = vmatpush1.msra.mxu0 0.0
  %11833 = vmatprep.subr.mxu0 0.0
  %11834 = vmatpush1.msra.mxu0 0.0
  %11835 = vmatprep.subr.mxu0 0.0
  %11836 = vmatpush1.msra.mxu0 0.0
  %11837 = vmatprep.subr.mxu0 0.0
  %11838 = vmatpush1.msra.mxu0 0.0
  %11839 = vmatprep.mubr.f32.mxu0 0.0
  %v11840 = vand.u32 %v5086, 4294901760
  %11841 = vmatmul.mubr.f32.gmra.mrb[0].mxu0 %v11840
  %v11842 = vpop.f32.mrb[0].mxu0
  %v11843 = vadd.f32 %v11731, %v11842
  %v11844 = vpop.f32.mrb[0].mxu0
  %v11845 = vadd.f32 %v11733, %v11844
  %11846 = vdwg.mxu0
  %v11847 = vand.u32 %v11095, 4294901760
  %v11848 = vsub.f32 %v11095, %v11847
  %11849 = vmatprep.subr.mxu0 %v11848
  %v11850 = vand.u32 %v11094, 4294901760
  %v11851 = vsub.f32 %v11094, %v11850
  %11852 = vmatpush1.msra.mxu0 %v11851
  %v11853 = vand.u32 %v11099, 4294901760
  %v11854 = vsub.f32 %v11099, %v11853
  %11855 = vmatprep.subr.mxu0 %v11854
  %v11856 = vand.u32 %v11098, 4294901760
  %v11857 = vsub.f32 %v11098, %v11856
  %11858 = vmatpush1.msra.mxu0 %v11857
  %v11859 = vand.u32 %v11103, 4294901760
  %v11860 = vsub.f32 %v11103, %v11859
  %11861 = vmatprep.subr.mxu0 %v11860
  %v11862 = vand.u32 %v11102, 4294901760
  %v11863 = vsub.f32 %v11102, %v11862
  %11864 = vmatpush1.msra.mxu0 %v11863
  %v11865 = vand.u32 %v11107, 4294901760
  %v11866 = vsub.f32 %v11107, %v11865
  %11867 = vmatprep.subr.mxu0 %v11866
  %v11868 = vand.u32 %v11106, 4294901760
  %v11869 = vsub.f32 %v11106, %v11868
  %11870 = vmatpush1.msra.mxu0 %v11869
  %11871 = vmatprep.subr.mxu0 0.0
  %11872 = vmatpush1.msra.mxu0 0.0
  %11873 = vmatprep.subr.mxu0 0.0
  %11874 = vmatpush1.msra.mxu0 0.0
  %11875 = vmatprep.subr.mxu0 0.0
  %11876 = vmatpush1.msra.mxu0 0.0
  %11877 = vmatprep.subr.mxu0 0.0
  %11878 = vmatpush1.msra.mxu0 0.0
  %11879 = vmatprep.subr.mxu0 0.0
  %11880 = vmatpush1.msra.mxu0 0.0
  %11881 = vmatprep.subr.mxu0 0.0
  %11882 = vmatpush1.msra.mxu0 0.0
  %11883 = vmatprep.subr.mxu0 0.0
  %11884 = vmatpush1.msra.mxu0 0.0
  %11885 = vmatprep.subr.mxu0 0.0
  %11886 = vmatpush1.msra.mxu0 0.0
  %11887 = vmatprep.subr.mxu0 0.0
  %11888 = vmatpush1.msra.mxu0 0.0
  %11889 = vmatprep.subr.mxu0 0.0
  %11890 = vmatpush1.msra.mxu0 0.0
  %11891 = vmatprep.subr.mxu0 0.0
  %11892 = vmatpush1.msra.mxu0 0.0
  %11893 = vmatprep.subr.mxu0 0.0
  %11894 = vmatpush1.msra.mxu0 0.0
  %11895 = vmatprep.subr.mxu0 0.0
  %11896 = vmatpush1.msra.mxu0 0.0
  %11897 = vmatprep.subr.mxu0 0.0
  %11898 = vmatpush1.msra.mxu0 0.0
  %11899 = vmatprep.subr.mxu0 0.0
  %11900 = vmatpush1.msra.mxu0 0.0
  %11901 = vmatprep.subr.mxu0 0.0
  %11902 = vmatpush1.msra.mxu0 0.0
  %11903 = vmatprep.subr.mxu0 0.0
  %11904 = vmatpush1.msra.mxu0 0.0
  %11905 = vmatprep.subr.mxu0 0.0
  %11906 = vmatpush1.msra.mxu0 0.0
  %11907 = vmatprep.subr.mxu0 0.0
  %11908 = vmatpush1.msra.mxu0 0.0
  %11909 = vmatprep.subr.mxu0 0.0
  %11910 = vmatpush1.msra.mxu0 0.0
  %11911 = vmatprep.subr.mxu0 0.0
  %11912 = vmatpush1.msra.mxu0 0.0
  %11913 = vmatprep.subr.mxu0 0.0
  %11914 = vmatpush1.msra.mxu0 0.0
  %11915 = vmatprep.subr.mxu0 0.0
  %11916 = vmatpush1.msra.mxu0 0.0
  %11917 = vmatprep.subr.mxu0 0.0
  %11918 = vmatpush1.msra.mxu0 0.0
  %11919 = vmatprep.subr.mxu0 0.0
  %11920 = vmatpush1.msra.mxu0 0.0
  %11921 = vmatprep.subr.mxu0 0.0
  %11922 = vmatpush1.msra.mxu0 0.0
  %11923 = vmatprep.subr.mxu0 0.0
  %11924 = vmatpush1.msra.mxu0 0.0
  %11925 = vmatprep.subr.mxu0 0.0
  %11926 = vmatpush1.msra.mxu0 0.0
  %11927 = vmatprep.mubr.f32.mxu0 0.0
  %v11928 = vand.u32 %v5086, 4294901760
  %v11929 = vsub.f32 %v5086, %v11928
  %11930 = vmatmul.mubr.f32.gmra.mrb[0].mxu0 %v11929
  %v11931 = vpop.f32.mrb[0].mxu0
  %v11932 = vadd.f32 %v11843, %v11931
  %v11933 = vpop.f32.mrb[0].mxu0
  %v11934 = vadd.f32 %v11845, %v11933
  %11935 = vdwg.mxu0
  %v11936 = vand.u32 %v11095, 4294901760
  %11937 = vmatprep.subr.mxu0 %v11936
  %v11938 = vand.u32 %v11094, 4294901760
  %11939 = vmatpush1.msra.mxu0 %v11938
  %v11940 = vand.u32 %v11099, 4294901760
  %11941 = vmatprep.subr.mxu0 %v11940
  %v11942 = vand.u32 %v11098, 4294901760
  %11943 = vmatpush1.msra.mxu0 %v11942
  %v11944 = vand.u32 %v11103, 4294901760
  %11945 = vmatprep.subr.mxu0 %v11944
  %v11946 = vand.u32 %v11102, 4294901760
  %11947 = vmatpush1.msra.mxu0 %v11946
  %v11948 = vand.u32 %v11107, 4294901760
  %11949 = vmatprep.subr.mxu0 %v11948
  %v11950 = vand.u32 %v11106, 4294901760
  %11951 = vmatpush1.msra.mxu0 %v11950
  %11952 = vmatprep.subr.mxu0 0.0
  %11953 = vmatpush1.msra.mxu0 0.0
  %11954 = vmatprep.subr.mxu0 0.0
  %11955 = vmatpush1.msra.mxu0 0.0
  %11956 = vmatprep.subr.mxu0 0.0
  %11957 = vmatpush1.msra.mxu0 0.0
  %11958 = vmatprep.subr.mxu0 0.0
  %11959 = vmatpush1.msra.mxu0 0.0
  %11960 = vmatprep.subr.mxu0 0.0
  %11961 = vmatpush1.msra.mxu0 0.0
  %11962 = vmatprep.subr.mxu0 0.0
  %11963 = vmatpush1.msra.mxu0 0.0
  %11964 = vmatprep.subr.mxu0 0.0
  %11965 = vmatpush1.msra.mxu0 0.0
  %11966 = vmatprep.subr.mxu0 0.0
  %11967 = vmatpush1.msra.mxu0 0.0
  %11968 = vmatprep.subr.mxu0 0.0
  %11969 = vmatpush1.msra.mxu0 0.0
  %11970 = vmatprep.subr.mxu0 0.0
  %11971 = vmatpush1.msra.mxu0 0.0
  %11972 = vmatprep.subr.mxu0 0.0
  %11973 = vmatpush1.msra.mxu0 0.0
  %11974 = vmatprep.subr.mxu0 0.0
  %11975 = vmatpush1.msra.mxu0 0.0
  %11976 = vmatprep.subr.mxu0 0.0
  %11977 = vmatpush1.msra.mxu0 0.0
  %11978 = vmatprep.subr.mxu0 0.0
  %11979 = vmatpush1.msra.mxu0 0.0
  %11980 = vmatprep.subr.mxu0 0.0
  %11981 = vmatpush1.msra.mxu0 0.0
  %11982 = vmatprep.subr.mxu0 0.0
  %11983 = vmatpush1.msra.mxu0 0.0
  %11984 = vmatprep.subr.mxu0 0.0
  %11985 = vmatpush1.msra.mxu0 0.0
  %11986 = vmatprep.subr.mxu0 0.0
  %11987 = vmatpush1.msra.mxu0 0.0
  %11988 = vmatprep.subr.mxu0 0.0
  %11989 = vmatpush1.msra.mxu0 0.0
  %11990 = vmatprep.subr.mxu0 0.0
  %11991 = vmatpush1.msra.mxu0 0.0
  %11992 = vmatprep.subr.mxu0 0.0
  %11993 = vmatpush1.msra.mxu0 0.0
  %11994 = vmatprep.subr.mxu0 0.0
  %11995 = vmatpush1.msra.mxu0 0.0
  %11996 = vmatprep.subr.mxu0 0.0
  %11997 = vmatpush1.msra.mxu0 0.0
  %11998 = vmatprep.subr.mxu0 0.0
  %11999 = vmatpush1.msra.mxu0 0.0
  %12000 = vmatprep.subr.mxu0 0.0
  %12001 = vmatpush1.msra.mxu0 0.0
  %12002 = vmatprep.subr.mxu0 0.0
  %12003 = vmatpush1.msra.mxu0 0.0
  %12004 = vmatprep.subr.mxu0 0.0
  %12005 = vmatpush1.msra.mxu0 0.0
  %12006 = vmatprep.subr.mxu0 0.0
  %12007 = vmatpush1.msra.mxu0 0.0
  %12008 = vmatprep.mubr.f32.mxu0 0.0
  %v12009 = vand.u32 %v5086, 4294901760
  %v12010 = vsub.f32 %v5086, %v12009
  %v12011 = vand.u32 %v12010, 4294901760
  %12012 = vmatmul.mubr.f32.gmra.mrb[0].mxu0 %v12011
  %v12013 = vpop.f32.mrb[0].mxu0
  %v12014 = vadd.f32 %v11932, %v12013
  %v12015 = vpop.f32.mrb[0].mxu0
  %v12016 = vadd.f32 %v11934, %v12015
  %12017 = vdwg.mxu0
  %v12018 = vand.u32 %v11095, 4294901760
  %v12019 = vsub.f32 %v11095, %v12018
  %v12020 = vand.u32 %v12019, 4294901760
  %12021 = vmatprep.subr.mxu0 %v12020
  %v12022 = vand.u32 %v11094, 4294901760
  %v12023 = vsub.f32 %v11094, %v12022
  %v12024 = vand.u32 %v12023, 4294901760
  %12025 = vmatpush1.msra.mxu0 %v12024
  %v12026 = vand.u32 %v11099, 4294901760
  %v12027 = vsub.f32 %v11099, %v12026
  %v12028 = vand.u32 %v12027, 4294901760
  %12029 = vmatprep.subr.mxu0 %v12028
  %v12030 = vand.u32 %v11098, 4294901760
  %v12031 = vsub.f32 %v11098, %v12030
  %v12032 = vand.u32 %v12031, 4294901760
  %12033 = vmatpush1.msra.mxu0 %v12032
  %v12034 = vand.u32 %v11103, 4294901760
  %v12035 = vsub.f32 %v11103, %v12034
  %v12036 = vand.u32 %v12035, 4294901760
  %12037 = vmatprep.subr.mxu0 %v12036
  %v12038 = vand.u32 %v11102, 4294901760
  %v12039 = vsub.f32 %v11102, %v12038
  %v12040 = vand.u32 %v12039, 4294901760
  %12041 = vmatpush1.msra.mxu0 %v12040
  %v12042 = vand.u32 %v11107, 4294901760
  %v12043 = vsub.f32 %v11107, %v12042
  %v12044 = vand.u32 %v12043, 4294901760
  %12045 = vmatprep.subr.mxu0 %v12044
  %v12046 = vand.u32 %v11106, 4294901760
  %v12047 = vsub.f32 %v11106, %v12046
  %v12048 = vand.u32 %v12047, 4294901760
  %12049 = vmatpush1.msra.mxu0 %v12048
  %12050 = vmatprep.subr.mxu0 0.0
  %12051 = vmatpush1.msra.mxu0 0.0
  %12052 = vmatprep.subr.mxu0 0.0
  %12053 = vmatpush1.msra.mxu0 0.0
  %12054 = vmatprep.subr.mxu0 0.0
  %12055 = vmatpush1.msra.mxu0 0.0
  %12056 = vmatprep.subr.mxu0 0.0
  %12057 = vmatpush1.msra.mxu0 0.0
  %12058 = vmatprep.subr.mxu0 0.0
  %12059 = vmatpush1.msra.mxu0 0.0
  %12060 = vmatprep.subr.mxu0 0.0
  %12061 = vmatpush1.msra.mxu0 0.0
  %12062 = vmatprep.subr.mxu0 0.0
  %12063 = vmatpush1.msra.mxu0 0.0
  %12064 = vmatprep.subr.mxu0 0.0
  %12065 = vmatpush1.msra.mxu0 0.0
  %12066 = vmatprep.subr.mxu0 0.0
  %12067 = vmatpush1.msra.mxu0 0.0
  %12068 = vmatprep.subr.mxu0 0.0
  %12069 = vmatpush1.msra.mxu0 0.0
  %12070 = vmatprep.subr.mxu0 0.0
  %12071 = vmatpush1.msra.mxu0 0.0
  %12072 = vmatprep.subr.mxu0 0.0
  %12073 = vmatpush1.msra.mxu0 0.0
  %12074 = vmatprep.subr.mxu0 0.0
  %12075 = vmatpush1.msra.mxu0 0.0
  %12076 = vmatprep.subr.mxu0 0.0
  %12077 = vmatpush1.msra.mxu0 0.0
  %12078 = vmatprep.subr.mxu0 0.0
  %12079 = vmatpush1.msra.mxu0 0.0
  %12080 = vmatprep.subr.mxu0 0.0
  %12081 = vmatpush1.msra.mxu0 0.0
  %12082 = vmatprep.subr.mxu0 0.0
  %12083 = vmatpush1.msra.mxu0 0.0
  %12084 = vmatprep.subr.mxu0 0.0
  %12085 = vmatpush1.msra.mxu0 0.0
  %12086 = vmatprep.subr.mxu0 0.0
  %12087 = vmatpush1.msra.mxu0 0.0
  %12088 = vmatprep.subr.mxu0 0.0
  %12089 = vmatpush1.msra.mxu0 0.0
  %12090 = vmatprep.subr.mxu0 0.0
  %12091 = vmatpush1.msra.mxu0 0.0
  %12092 = vmatprep.subr.mxu0 0.0
  %12093 = vmatpush1.msra.mxu0 0.0
  %12094 = vmatprep.subr.mxu0 0.0
  %12095 = vmatpush1.msra.mxu0 0.0
  %12096 = vmatprep.subr.mxu0 0.0
  %12097 = vmatpush1.msra.mxu0 0.0
  %12098 = vmatprep.subr.mxu0 0.0
  %12099 = vmatpush1.msra.mxu0 0.0
  %12100 = vmatprep.subr.mxu0 0.0
  %12101 = vmatpush1.msra.mxu0 0.0
  %12102 = vmatprep.subr.mxu0 0.0
  %12103 = vmatpush1.msra.mxu0 0.0
  %12104 = vmatprep.subr.mxu0 0.0
  %12105 = vmatpush1.msra.mxu0 0.0
  %12106 = vmatprep.mubr.f32.mxu0 0.0
  %v12107 = vand.u32 %v5086, 4294901760
  %12108 = vmatmul.mubr.f32.gmra.mrb[0].mxu0 %v12107
  %v12109 = vpop.f32.mrb[0].mxu0
  %v12110 = vadd.f32 %v12014, %v12109
  %v12111 = vpop.f32.mrb[0].mxu0
  %v12112 = vadd.f32 %v12016, %v12111
  %12113 = vdwg.mxu0
  %v12114 = vand.u32 %v11095, 4294901760
  %12115 = vmatprep.subr.mxu0 %v12114
  %v12116 = vand.u32 %v11094, 4294901760
  %12117 = vmatpush1.msra.mxu0 %v12116
  %v12118 = vand.u32 %v11099, 4294901760
  %12119 = vmatprep.subr.mxu0 %v12118
  %v12120 = vand.u32 %v11098, 4294901760
  %12121 = vmatpush1.msra.mxu0 %v12120
  %v12122 = vand.u32 %v11103, 4294901760
  %12123 = vmatprep.subr.mxu0 %v12122
  %v12124 = vand.u32 %v11102, 4294901760
  %12125 = vmatpush1.msra.mxu0 %v12124
  %v12126 = vand.u32 %v11107, 4294901760
  %12127 = vmatprep.subr.mxu0 %v12126
  %v12128 = vand.u32 %v11106, 4294901760
  %12129 = vmatpush1.msra.mxu0 %v12128
  %12130 = vmatprep.subr.mxu0 0.0
  %12131 = vmatpush1.msra.mxu0 0.0
  %12132 = vmatprep.subr.mxu0 0.0
  %12133 = vmatpush1.msra.mxu0 0.0
  %12134 = vmatprep.subr.mxu0 0.0
  %12135 = vmatpush1.msra.mxu0 0.0
  %12136 = vmatprep.subr.mxu0 0.0
  %12137 = vmatpush1.msra.mxu0 0.0
  %12138 = vmatprep.subr.mxu0 0.0
  %12139 = vmatpush1.msra.mxu0 0.0
  %12140 = vmatprep.subr.mxu0 0.0
  %12141 = vmatpush1.msra.mxu0 0.0
  %12142 = vmatprep.subr.mxu0 0.0
  %12143 = vmatpush1.msra.mxu0 0.0
  %12144 = vmatprep.subr.mxu0 0.0
  %12145 = vmatpush1.msra.mxu0 0.0
  %12146 = vmatprep.subr.mxu0 0.0
  %12147 = vmatpush1.msra.mxu0 0.0
  %12148 = vmatprep.subr.mxu0 0.0
  %12149 = vmatpush1.msra.mxu0 0.0
  %12150 = vmatprep.subr.mxu0 0.0
  %12151 = vmatpush1.msra.mxu0 0.0
  %12152 = vmatprep.subr.mxu0 0.0
  %12153 = vmatpush1.msra.mxu0 0.0
  %12154 = vmatprep.subr.mxu0 0.0
  %12155 = vmatpush1.msra.mxu0 0.0
  %12156 = vmatprep.subr.mxu0 0.0
  %12157 = vmatpush1.msra.mxu0 0.0
  %12158 = vmatprep.subr.mxu0 0.0
  %12159 = vmatpush1.msra.mxu0 0.0
  %12160 = vmatprep.subr.mxu0 0.0
  %12161 = vmatpush1.msra.mxu0 0.0
  %12162 = vmatprep.subr.mxu0 0.0
  %12163 = vmatpush1.msra.mxu0 0.0
  %12164 = vmatprep.subr.mxu0 0.0
  %12165 = vmatpush1.msra.mxu0 0.0
  %12166 = vmatprep.subr.mxu0 0.0
  %12167 = vmatpush1.msra.mxu0 0.0
  %12168 = vmatprep.subr.mxu0 0.0
  %12169 = vmatpush1.msra.mxu0 0.0
  %12170 = vmatprep.subr.mxu0 0.0
  %12171 = vmatpush1.msra.mxu0 0.0
  %12172 = vmatprep.subr.mxu0 0.0
  %12173 = vmatpush1.msra.mxu0 0.0
  %12174 = vmatprep.subr.mxu0 0.0
  %12175 = vmatpush1.msra.mxu0 0.0
  %12176 = vmatprep.subr.mxu0 0.0
  %12177 = vmatpush1.msra.mxu0 0.0
  %12178 = vmatprep.subr.mxu0 0.0
  %12179 = vmatpush1.msra.mxu0 0.0
  %12180 = vmatprep.subr.mxu0 0.0
  %12181 = vmatpush1.msra.mxu0 0.0
  %12182 = vmatprep.subr.mxu0 0.0
  %12183 = vmatpush1.msra.mxu0 0.0
  %12184 = vmatprep.subr.mxu0 0.0
  %12185 = vmatpush1.msra.mxu0 0.0
  %12186 = vmatprep.mubr.f32.mxu0 0.0
  %v12187 = vand.u32 %v5086, 4294901760
  %12188 = vmatmul.mubr.f32.gmra.mrb[0].mxu0 %v12187
  %v12189 = vpop.f32.mrb[0].mxu0
  %v12190 = vadd.f32 %v12110, %v12189
  %v12191 = vpop.f32.mrb[0].mxu0
  %v12192 = vadd.f32 %v12112, %v12191
  %12193 = vdwg.mxu0
  %v12198 = vcombine.low %v11647, %v11649
  %v12199 = vcombine.low %v12190, %v12192
  %s12202 = scalar_lea.vmem %s9, 16
  %12203 = vst [vmem:[%s12202] sm:$0x77] %v12198
  %12204 = vst [vmem:[%s12202 + $0x8] sm:$0x77] %v12199
  // Predicated region
  $region38: #{siren_ff_forward.1} parent=0 // pred_check
    _
  $region39: #{siren_ff_forward.1} parent=0 // pred_check_branch
    %12206 = sbr.rel (0) target = $region41
  $region40: #{siren_ff_forward.1} parent=0 // pred_region
    _
  $region41: #{siren_ff_forward.1} parent=0 // pred_fallthru
    _
  // Predicated region
  $region42: #{siren_ff_forward.1} parent=0 // pred_check
    _
  $region43: #{siren_ff_forward.1} parent=0 // pred_check_branch
    %12208 = sbr.rel (0) target = $region45
  $region44: #{siren_ff_forward.1} parent=0 // pred_region
    _
  $region45: #{siren_ff_forward.1} parent=0 // pred_fallthru
    _

</llo_original>
